<compile_context>
chip_gen: v7x
topology: tpu7x:2x2x1
jax: 0.10.0
libtpu: 0.0.40
codegen_flags: <defaults>
</compile_context>

<pallas_src>
import math

import jax
import jax.numpy as jnp
from jax.experimental import pallas as pl
from jax.experimental.pallas import tpu as pltpu

REG_MAX = 16
EPS = 1e-7
_CLAMP_HI = REG_MAX - 1 - 0.01


def _atan(x):
    # Cephes single-precision atan approximation using only VPU/EUP ops.
    # TODO(synk): replace with jnp.arctan if/when Mosaic guarantees an atan lowering.
    sign = jnp.where(x < 0.0, -1.0, 1.0)
    ax = jnp.abs(x)
    big = ax > 2.414213562373095                 # tan(3*pi/8)
    mid = jnp.logical_and(ax > 0.4142135623730951, jnp.logical_not(big))
    y0 = jnp.where(big, jnp.float32(math.pi / 2),
                   jnp.where(mid, jnp.float32(math.pi / 4), jnp.float32(0.0)))
    safe = jnp.maximum(ax, 1e-30)
    xr = jnp.where(big, -pl.reciprocal(safe, approx=True),
                   jnp.where(mid, (ax - 1.0) * pl.reciprocal(ax + 1.0, approx=True), ax))
    z = xr * xr
    p = (((8.05374449538e-2 * z - 1.38776856032e-1) * z
          + 1.99777106478e-1) * z - 3.33329491539e-1) * z * xr + xr
    return sign * (y0 + p)


def bbox_loss_kernel(geo_ref, pd_ref, iou_out_ref, dfl_out_ref):
    # geo_ref: (12, R, 128) f32  -- pred box, target box, anchor, weight*mask, mask
    # pd_ref : (64, R, 128) bf16 -- 4*REG_MAX DFL bins on the leading axis
    # outputs: (8, 128) f32 per-lane partial sums for this tile
    f32 = jnp.float32
    R = geo_ref.shape[1]
    n_chunks = R // 8                     # 1024 anchors per chunk -> 1 vreg per quantity

    iou_acc = jnp.zeros((8, 128), f32)
    dfl_acc = jnp.zeros((8, 128), f32)

    for k in range(n_chunks):             # static, fully unrolled; slices are compile-time
        lo, hi = k * 8, (k + 1) * 8
        geo = geo_ref[:, lo:hi, :]        # (12, 8, 128) f32
        b1_x1, b1_y1, b1_x2, b1_y2 = geo[0], geo[1], geo[2], geo[3]
        b2_x1, b2_y1, b2_x2, b2_y2 = geo[4], geo[5], geo[6], geo[7]
        ax_, ay_ = geo[8], geo[9]
        wm = geo[10]                      # target_scores.sum(-1) * fg_mask
        mask = geo[11]                    # fg_mask as {0, 1}

        # ---- CIoU (ultralytics bbox_iou, xywh=False, CIoU=True) -------------
        w1 = b1_x2 - b1_x1
        h1 = b1_y2 - b1_y1 + EPS
        w2 = b2_x2 - b2_x1
        h2 = b2_y2 - b2_y1 + EPS
        inter = (jnp.maximum(jnp.minimum(b1_x2, b2_x2) - jnp.maximum(b1_x1, b2_x1), 0.0) *
                 jnp.maximum(jnp.minimum(b1_y2, b2_y2) - jnp.maximum(b1_y1, b2_y1), 0.0))
        union = w1 * h1 + w2 * h2 - inter + EPS
        iou = inter / union               # dominant term: exact divide
        cw = jnp.maximum(b1_x2, b2_x2) - jnp.minimum(b1_x1, b2_x1)
        ch = jnp.maximum(b1_y2, b2_y2) - jnp.minimum(b1_y1, b2_y1)
        c2 = cw * cw + ch * ch + EPS
        rho2 = ((b2_x1 + b2_x2 - b1_x1 - b1_x2) ** 2 +
                (b2_y1 + b2_y2 - b1_y1 - b1_y2) ** 2) * 0.25
        # small aspect-ratio correction: approx EUP reciprocals are fine here.
        v = (4.0 / (math.pi ** 2)) * (
            _atan(w2 * pl.reciprocal(h2, approx=True)) -
            _atan(w1 * pl.reciprocal(h1, approx=True))) ** 2
        alpha = v * pl.reciprocal(v - iou + (1.0 + EPS), approx=True)
        ciou = iou - (rho2 / c2 + v * alpha)                    # (8, 128)

        # background / padded lanes may hold degenerate boxes -> mask-guard.
        iou_acc = iou_acc + jnp.where(mask > 0.0, (1.0 - ciou) * wm, 0.0)

        # ---- DFL (CE over REG_MAX bins for each of 4 ltrb coords) -----------
        tgt = (jnp.clip(ax_ - b2_x1, 0.0, _CLAMP_HI),
               jnp.clip(ay_ - b2_y1, 0.0, _CLAMP_HI),
               jnp.clip(b2_x2 - ax_, 0.0, _CLAMP_HI),
               jnp.clip(b2_y2 - ay_, 0.0, _CLAMP_HI))
        dfl = jnp.zeros((8, 128), f32)
        for c in range(4):
            logits = pd_ref[c * REG_MAX:(c + 1) * REG_MAX, lo:hi, :].astype(f32)  # (16,8,128)
            m = jnp.max(logits, axis=0)                          # VPU maxes over bins
            t = tgt[c]
            esum = jnp.zeros((8, 128), f32)
            sel = jnp.zeros((8, 128), f32)
            for b in range(REG_MAX):                             # per-bin streaming
                lb = logits[b]
                esum = esum + jnp.exp(lb - m)
                # hat weights: W(b) = max(0, 1 - |b - t|) == {wl at tl, wr at tl+1, else 0}
                sel = sel + jnp.maximum(1.0 - jnp.abs(float(b) - t), 0.0) * lb
            # ce_l*wl + ce_r*wr == m + lse - sum(W * logits)
            dfl = dfl + (m + jnp.log(esum) - sel)
        dfl_acc = dfl_acc + jnp.where(mask > 0.0, dfl * (0.25 * wm), 0.0)

    # dense, unmasked (8,128) per-lane partial-sum stores; grid axis stays "parallel".
    iou_out_ref[...] = iou_acc
    dfl_out_ref[...] = dfl_acc


def bbox_loss(pred_dist, pred_bboxes, anchor_points, target_bboxes,
              target_scores, target_scores_sum, fg_mask, tm=None):
    B, N, _ = pred_bboxes.shape
    M = B * N
    if tm is None:
        # big tiles amortize per-grid-step overhead; don't over-pad tiny inputs.
        tm = min(8192, ((M + 1023) // 1024) * 1024)
    assert tm % 1024 == 0, "tile must be a multiple of 1024 anchors (8 sublanes x 128 lanes)"
    G = (M + tm - 1) // tm
    M_pad = G * tm
    R = tm // 128
    f32 = jnp.float32

    pb = pred_bboxes.reshape(M, 4).astype(f32)
    tb = target_bboxes.reshape(M, 4).astype(f32)
    ap = jnp.broadcast_to(anchor_points[None].astype(f32), (B, N, 2)).reshape(M, 2)
    weight = target_scores.astype(f32).sum(-1).reshape(M)   # computed outside the kernel
    mask = fg_mask.reshape(M).astype(f32)
    wm = weight * mask

    # packed geometry, built directly in the final (12, M//128, 128) layout.
    geo = jnp.concatenate([pb.T, tb.T, ap.T, wm[None], mask[None]], axis=0)   # (12, M)
    if M_pad != M:
        geo = jnp.pad(geo, ((0, 0), (0, M_pad - M)))         # padded lanes carry mask == 0
    geo = geo.reshape(12, M_pad // 128, 128)

    # bf16 halves the dominant HBM stream and the layout transpose.
    # TODO(synk): have the detection head emit pred_dist channel-major (4*reg_max, M)
    # so this transpose disappears entirely.
    pd = pred_dist.reshape(M, 4 * REG_MAX).astype(jnp.bfloat16)
    if M_pad != M:
        pd = jnp.pad(pd, ((0, M_pad - M), (0, 0)))            # finite zeros in padded lanes
    pd = pd.T.reshape(4 * REG_MAX, M_pad // 128, 128)

    cost = pl.CostEstimate(
        flops=700 * M_pad,
        transcendentals=70 * M_pad,
        bytes_accessed=geo.size * 4 + pd.size * 2 + 2 * G * 8 * 128 * 4)

    # Per-step VMEM at tm=8192: geo 384 KiB f32 + pd 1 MiB bf16 (x2 double-buffered)
    # ~= 2.8 MiB -- far below every chip's scoped default, no vmem_limit needed.
    iou_p, dfl_p = pl.pallas_call(
        bbox_loss_kernel,
        out_shape=(jax.ShapeDtypeStruct((G * 8, 128), f32),
                   jax.ShapeDtypeStruct((G * 8, 128), f32)),
        grid=(G,),
        in_specs=[pl.BlockSpec((12, R, 128), lambda i: (0, i, 0)),
                  pl.BlockSpec((4 * REG_MAX, R, 128), lambda i: (0, i, 0))],
        out_specs=(pl.BlockSpec((8, 128), lambda i: (i, 0)),
                   pl.BlockSpec((8, 128), lambda i: (i, 0))),
        compiler_params=pltpu.CompilerParams(
            dimension_semantics=("parallel",)),   # both TensorCores on v7x
        cost_estimate=cost,
    )(geo, pd)

    tss = jnp.asarray(target_scores_sum, f32)
    loss_iou = jnp.sum(iou_p) / tss
    loss_dfl = jnp.sum(dfl_p) / tss
    return loss_iou, loss_dfl


def bbox_loss_reference(pred_dist, pred_bboxes, anchor_points, target_bboxes,
                        target_scores, target_scores_sum, fg_mask):
    """Pure-JAX reference (mask-weighted form of the PyTorch forward)."""
    B, N, _ = pred_bboxes.shape
    w = target_scores.sum(-1)
    m = fg_mask.astype(jnp.float32)

    b1_x1, b1_y1, b1_x2, b1_y2 = jnp.split(pred_bboxes, 4, -1)
    b2_x1, b2_y1, b2_x2, b2_y2 = jnp.split(target_bboxes, 4, -1)
    w1, h1 = b1_x2 - b1_x1, b1_y2 - b1_y1 + EPS
    w2, h2 = b2_x2 - b2_x1, b2_y2 - b2_y1 + EPS
    inter = (jnp.maximum(jnp.minimum(b1_x2, b2_x2) - jnp.maximum(b1_x1, b2_x1), 0.0) *
             jnp.maximum(jnp.minimum(b1_y2, b2_y2) - jnp.maximum(b1_y1, b2_y1), 0.0))
    union = w1 * h1 + w2 * h2 - inter + EPS
    iou = inter / union
    cw = jnp.maximum(b1_x2, b2_x2) - jnp.minimum(b1_x1, b2_x1)
    ch = jnp.maximum(b1_y2, b2_y2) - jnp.minimum(b1_y1, b2_y1)
    c2 = cw * cw + ch * ch + EPS
    rho2 = ((b2_x1 + b2_x2 - b1_x1 - b1_x2) ** 2 +
            (b2_y1 + b2_y2 - b1_y1 - b1_y2) ** 2) / 4.0
    v = (4.0 / (math.pi ** 2)) * (jnp.arctan(w2 / h2) - jnp.arctan(w1 / h1)) ** 2
    alpha = v / (v - iou + (1.0 + EPS))
    ciou = (iou - (rho2 / c2 + v * alpha))[..., 0]
    loss_iou = ((1.0 - ciou) * w * m).sum() / target_scores_sum

    ap = anchor_points[None]
    ltrb = jnp.concatenate([ap - target_bboxes[..., :2],
                            target_bboxes[..., 2:] - ap], -1)
    ltrb = jnp.clip(ltrb, 0.0, REG_MAX - 1 - 0.01)
    logp = jax.nn.log_softmax(pred_dist.reshape(B, N, 4, REG_MAX), axis=-1)
    tl = jnp.floor(ltrb).astype(jnp.int32)
    wl = (tl + 1).astype(jnp.float32) - ltrb
    wr = 1.0 - wl
    ce_l = -jnp.take_along_axis(logp, tl[..., None], -1)[..., 0]
    ce_r = -jnp.take_along_axis(logp, (tl + 1)[..., None], -1)[..., 0]
    dfl = (ce_l * wl + ce_r * wr).mean(-1)
    loss_dfl = (dfl * w * m).sum() / target_scores_sum
    return loss_iou, loss_dfl


if __name__ == "__main__":
    key = jax.random.PRNGKey(0)
    B, N, C = 2, 1200, 8          # M = 2400 anchors -> one 3072-anchor tile (adaptive tm)
    k1, k2, k3, k4, k5 = jax.random.split(key, 5)

    # anchor points on a 40x30 grid (cell centers)
    gx = jnp.arange(40, dtype=jnp.float32) + 0.5
    gy = jnp.arange(30, dtype=jnp.float32) + 0.5
    xs, ys = jnp.meshgrid(gx, gy, indexing="xy")
    anchor_points = jnp.stack([xs.reshape(-1), ys.reshape(-1)], axis=-1)   # (N, 2)

    ax = anchor_points[None, :, 0]
    ay = anchor_points[None, :, 1]
    t_off = jax.random.uniform(k1, (B, N, 4), minval=0.5, maxval=10.0)
    target_bboxes = jnp.stack([ax - t_off[..., 0], ay - t_off[..., 1],
                               ax + t_off[..., 2], ay + t_off[..., 3]], axis=-1)
    p_off = jnp.maximum(t_off + jax.random.uniform(k2, (B, N, 4),
                                                   minval=-0.4, maxval=0.4), 0.1)
    pred_bboxes = jnp.stack([ax - p_off[..., 0], ay - p_off[..., 1],
                             ax + p_off[..., 2], ay + p_off[..., 3]], axis=-1)

    pred_dist = jax.random.normal(k3, (B, N, 4 * REG_MAX), dtype=jnp.float32)
    target_scores = jax.nn.sigmoid(jax.random.normal(k4, (B, N, C), dtype=jnp.float32))
    fg_mask = jax.random.bernoulli(k5, 0.6, (B, N))
    target_scores_sum = jnp.maximum(target_scores.sum(), 1.0)

    loss_iou, loss_dfl = bbox_loss(pred_dist, pred_bboxes, anchor_points,
                                   target_bboxes, target_scores,
                                   target_scores_sum, fg_mask)
    jax.block_until_ready((loss_iou, loss_dfl))

    ref_iou, ref_dfl = bbox_loss_reference(pred_dist, pred_bboxes, anchor_points,
                                           target_bboxes, target_scores,
                                           target_scores_sum, fg_mask)
    # iou tolerance covers the polynomial atan + approx EUP reciprocals in the small
    # aspect-ratio term; dfl tolerance additionally covers the bf16 logits stream.
    assert jnp.allclose(loss_iou, ref_iou, rtol=5e-3, atol=5e-3), (loss_iou, ref_iou)
    assert jnp.allclose(loss_dfl, ref_dfl, rtol=1e-2, atol=1e-2), (loss_dfl, ref_dfl)

    print("KERNEL_OK")
</pallas_src>

<mosaic_0001>
module attributes {stable_mosaic.version = 11 : i64} {
  func.func @bbox_loss_kernel(%arg0: i32, %arg1: memref<12x24x128xf32, #tpu.memory_space<vmem>>, %arg2: memref<64x24x128xbf16, #tpu.memory_space<vmem>>, %arg3: memref<8x128xf32, #tpu.memory_space<vmem>>, %arg4: memref<8x128xf32, #tpu.memory_space<vmem>>) attributes {dimension_semantics = [#tpu.dimension_semantics<parallel>], iteration_bounds = array<i64: 1>, scalar_prefetch = 0 : i64, scratch_operands = 0 : i64, tpu.core_type = #tpu.core_type<tc>, window_params = [{transform_indices = @transform_0, window_bounds = array<i64: 12, 24, 128>}, {transform_indices = @transform_1, window_bounds = array<i64: 64, 24, 128>}, {transform_indices = @transform_2, window_bounds = array<i64: 8, 128>}, {transform_indices = @transform_3, window_bounds = array<i64: 8, 128>}]} {
    %cst = arith.constant 0.000000e+00 : f32
    %0 = vector.broadcast %cst : f32 to vector<8x128xf32>
    %cst_0 = arith.constant 0.000000e+00 : f32
    %1 = vector.broadcast %cst_0 : f32 to vector<8x128xf32>
    %c0 = arith.constant 0 : index
    %c0_1 = arith.constant 0 : index
    %c0_2 = arith.constant 0 : index
    %2 = vector.load %arg1[%c0, %c0_1, %c0_2] : memref<12x24x128xf32, #tpu.memory_space<vmem>>, vector<12x8x128xf32>
    %3 = vector.extract_strided_slice %2 {offsets = [0, 0, 0], sizes = [1, 8, 128], strides = [1, 1, 1]} : vector<12x8x128xf32> to vector<1x8x128xf32>
    %4 = vector.shape_cast %3 : vector<1x8x128xf32> to vector<8x128xf32>
    %5 = vector.extract_strided_slice %2 {offsets = [1, 0, 0], sizes = [1, 8, 128], strides = [1, 1, 1]} : vector<12x8x128xf32> to vector<1x8x128xf32>
    %6 = vector.shape_cast %5 : vector<1x8x128xf32> to vector<8x128xf32>
    %7 = vector.extract_strided_slice %2 {offsets = [2, 0, 0], sizes = [1, 8, 128], strides = [1, 1, 1]} : vector<12x8x128xf32> to vector<1x8x128xf32>
    %8 = vector.shape_cast %7 : vector<1x8x128xf32> to vector<8x128xf32>
    %9 = vector.extract_strided_slice %2 {offsets = [3, 0, 0], sizes = [1, 8, 128], strides = [1, 1, 1]} : vector<12x8x128xf32> to vector<1x8x128xf32>
    %10 = vector.shape_cast %9 : vector<1x8x128xf32> to vector<8x128xf32>
    %11 = vector.extract_strided_slice %2 {offsets = [4, 0, 0], sizes = [1, 8, 128], strides = [1, 1, 1]} : vector<12x8x128xf32> to vector<1x8x128xf32>
    %12 = vector.shape_cast %11 : vector<1x8x128xf32> to vector<8x128xf32>
    %13 = vector.extract_strided_slice %2 {offsets = [5, 0, 0], sizes = [1, 8, 128], strides = [1, 1, 1]} : vector<12x8x128xf32> to vector<1x8x128xf32>
    %14 = vector.shape_cast %13 : vector<1x8x128xf32> to vector<8x128xf32>
    %15 = vector.extract_strided_slice %2 {offsets = [6, 0, 0], sizes = [1, 8, 128], strides = [1, 1, 1]} : vector<12x8x128xf32> to vector<1x8x128xf32>
    %16 = vector.shape_cast %15 : vector<1x8x128xf32> to vector<8x128xf32>
    %17 = vector.extract_strided_slice %2 {offsets = [7, 0, 0], sizes = [1, 8, 128], strides = [1, 1, 1]} : vector<12x8x128xf32> to vector<1x8x128xf32>
    %18 = vector.shape_cast %17 : vector<1x8x128xf32> to vector<8x128xf32>
    %19 = vector.extract_strided_slice %2 {offsets = [8, 0, 0], sizes = [1, 8, 128], strides = [1, 1, 1]} : vector<12x8x128xf32> to vector<1x8x128xf32>
    %20 = vector.shape_cast %19 : vector<1x8x128xf32> to vector<8x128xf32>
    %21 = vector.extract_strided_slice %2 {offsets = [9, 0, 0], sizes = [1, 8, 128], strides = [1, 1, 1]} : vector<12x8x128xf32> to vector<1x8x128xf32>
    %22 = vector.shape_cast %21 : vector<1x8x128xf32> to vector<8x128xf32>
    %23 = vector.extract_strided_slice %2 {offsets = [10, 0, 0], sizes = [1, 8, 128], strides = [1, 1, 1]} : vector<12x8x128xf32> to vector<1x8x128xf32>
    %24 = vector.shape_cast %23 : vector<1x8x128xf32> to vector<8x128xf32>
    %25 = vector.extract_strided_slice %2 {offsets = [11, 0, 0], sizes = [1, 8, 128], strides = [1, 1, 1]} : vector<12x8x128xf32> to vector<1x8x128xf32>
    %26 = vector.shape_cast %25 : vector<1x8x128xf32> to vector<8x128xf32>
    %27 = arith.subf %8, %4 : vector<8x128xf32>
    %28 = arith.subf %10, %6 : vector<8x128xf32>
    %cst_3 = arith.constant 1.000000e-07 : f32
    %29 = vector.broadcast %cst_3 : f32 to vector<8x128xf32>
    %30 = arith.addf %28, %29 : vector<8x128xf32>
    %31 = arith.subf %16, %12 : vector<8x128xf32>
    %32 = arith.subf %18, %14 : vector<8x128xf32>
    %cst_4 = arith.constant 1.000000e-07 : f32
    %33 = vector.broadcast %cst_4 : f32 to vector<8x128xf32>
    %34 = arith.addf %32, %33 : vector<8x128xf32>
    %35 = arith.minimumf %8, %16 : vector<8x128xf32>
    %36 = arith.maximumf %4, %12 : vector<8x128xf32>
    %37 = arith.subf %35, %36 : vector<8x128xf32>
    %cst_5 = arith.constant 0.000000e+00 : f32
    %38 = vector.broadcast %cst_5 : f32 to vector<8x128xf32>
    %39 = arith.maximumf %37, %38 : vector<8x128xf32>
    %40 = arith.minimumf %10, %18 : vector<8x128xf32>
    %41 = arith.maximumf %6, %14 : vector<8x128xf32>
    %42 = arith.subf %40, %41 : vector<8x128xf32>
    %cst_6 = arith.constant 0.000000e+00 : f32
    %43 = vector.broadcast %cst_6 : f32 to vector<8x128xf32>
    %44 = arith.maximumf %42, %43 : vector<8x128xf32>
    %45 = arith.mulf %39, %44 : vector<8x128xf32>
    %46 = arith.mulf %27, %30 : vector<8x128xf32>
    %47 = arith.mulf %31, %34 : vector<8x128xf32>
    %48 = arith.addf %46, %47 : vector<8x128xf32>
    %49 = arith.subf %48, %45 : vector<8x128xf32>
    %cst_7 = arith.constant 1.000000e-07 : f32
    %50 = vector.broadcast %cst_7 : f32 to vector<8x128xf32>
    %51 = arith.addf %49, %50 : vector<8x128xf32>
    %52 = arith.divf %45, %51 : vector<8x128xf32>
    %53 = arith.maximumf %8, %16 : vector<8x128xf32>
    %54 = arith.minimumf %4, %12 : vector<8x128xf32>
    %55 = arith.subf %53, %54 : vector<8x128xf32>
    %56 = arith.maximumf %10, %18 : vector<8x128xf32>
    %57 = arith.minimumf %6, %14 : vector<8x128xf32>
    %58 = arith.subf %56, %57 : vector<8x128xf32>
    %59 = arith.mulf %55, %55 : vector<8x128xf32>
    %60 = arith.mulf %58, %58 : vector<8x128xf32>
    %61 = arith.addf %59, %60 : vector<8x128xf32>
    %cst_8 = arith.constant 1.000000e-07 : f32
    %62 = vector.broadcast %cst_8 : f32 to vector<8x128xf32>
    %63 = arith.addf %61, %62 : vector<8x128xf32>
    %64 = arith.addf %12, %16 : vector<8x128xf32>
    %65 = arith.subf %64, %4 : vector<8x128xf32>
    %66 = arith.subf %65, %8 : vector<8x128xf32>
    %67 = arith.mulf %66, %66 : vector<8x128xf32>
    %68 = arith.addf %14, %18 : vector<8x128xf32>
    %69 = arith.subf %68, %6 : vector<8x128xf32>
    %70 = arith.subf %69, %10 : vector<8x128xf32>
    %71 = arith.mulf %70, %70 : vector<8x128xf32>
    %72 = arith.addf %67, %71 : vector<8x128xf32>
    %cst_9 = arith.constant 2.500000e-01 : f32
    %73 = vector.broadcast %cst_9 : f32 to vector<8x128xf32>
    %74 = arith.mulf %72, %73 : vector<8x128xf32>
    %75 = tpu.reciprocal %34 {approx = true} : vector<8x128xf32> -> vector<8x128xf32>
    %76 = arith.mulf %31, %75 : vector<8x128xf32>
    %cst_10 = arith.constant 0.000000e+00 : f32
    %77 = vector.broadcast %cst_10 : f32 to vector<8x128xf32>
    %78 = arith.cmpf olt, %76, %77 : vector<8x128xf32>
    %cst_11 = arith.constant -1.000000e+00 : f32
    %cst_12 = arith.constant 1.000000e+00 : f32
    %79 = vector.broadcast %cst_11 : f32 to vector<8x128xf32>
    %80 = vector.broadcast %cst_12 : f32 to vector<8x128xf32>
    %81 = arith.select %78, %79, %80 : vector<8x128xi1>, vector<8x128xf32>
    %82 = math.absf %76 : vector<8x128xf32>
    %cst_13 = arith.constant 2.41421366 : f32
    %83 = vector.broadcast %cst_13 : f32 to vector<8x128xf32>
    %84 = arith.cmpf ogt, %82, %83 : vector<8x128xf32>
    %cst_14 = arith.constant 0.414213568 : f32
    %85 = vector.broadcast %cst_14 : f32 to vector<8x128xf32>
    %86 = arith.cmpf ogt, %82, %85 : vector<8x128xf32>
    %cst_15 = arith.constant dense<true> : vector<8x128xi1>
    %87 = arith.xori %84, %cst_15 : vector<8x128xi1>
    %88 = arith.andi %86, %87 : vector<8x128xi1>
    %cst_16 = arith.constant 0.785398185 : f32
    %cst_17 = arith.constant 0.000000e+00 : f32
    %89 = vector.broadcast %cst_16 : f32 to vector<8x128xf32>
    %90 = vector.broadcast %cst_17 : f32 to vector<8x128xf32>
    %91 = arith.select %88, %89, %90 : vector<8x128xi1>, vector<8x128xf32>
    %cst_18 = arith.constant 1.57079637 : f32
    %92 = vector.broadcast %cst_18 : f32 to vector<8x128xf32>
    %93 = arith.select %84, %92, %91 : vector<8x128xi1>, vector<8x128xf32>
    %cst_19 = arith.constant 1.000000e-30 : f32
    %94 = vector.broadcast %cst_19 : f32 to vector<8x128xf32>
    %95 = arith.maximumf %82, %94 : vector<8x128xf32>
    %96 = tpu.reciprocal %95 {approx = true} : vector<8x128xf32> -> vector<8x128xf32>
    %cst_20 = arith.constant 0.000000e+00 : f32
    %97 = vector.broadcast %cst_20 : f32 to vector<8x128xf32>
    %98 = arith.subf %97, %96 : vector<8x128xf32>
    %cst_21 = arith.constant 1.000000e+00 : f32
    %99 = vector.broadcast %cst_21 : f32 to vector<8x128xf32>
    %100 = arith.subf %82, %99 : vector<8x128xf32>
    %cst_22 = arith.constant 1.000000e+00 : f32
    %101 = vector.broadcast %cst_22 : f32 to vector<8x128xf32>
    %102 = arith.addf %82, %101 : vector<8x128xf32>
    %103 = tpu.reciprocal %102 {approx = true} : vector<8x128xf32> -> vector<8x128xf32>
    %104 = arith.mulf %100, %103 : vector<8x128xf32>
    %105 = arith.select %88, %104, %82 : vector<8x128xi1>, vector<8x128xf32>
    %106 = arith.select %84, %98, %105 : vector<8x128xi1>, vector<8x128xf32>
    %107 = arith.mulf %106, %106 : vector<8x128xf32>
    %cst_23 = arith.constant 0.0805374458 : f32
    %108 = vector.broadcast %cst_23 : f32 to vector<8x128xf32>
    %109 = arith.mulf %108, %107 : vector<8x128xf32>
    %cst_24 = arith.constant 0.138776854 : f32
    %110 = vector.broadcast %cst_24 : f32 to vector<8x128xf32>
    %111 = arith.subf %109, %110 : vector<8x128xf32>
    %112 = arith.mulf %111, %107 : vector<8x128xf32>
    %cst_25 = arith.constant 0.199777111 : f32
    %113 = vector.broadcast %cst_25 : f32 to vector<8x128xf32>
    %114 = arith.addf %112, %113 : vector<8x128xf32>
    %115 = arith.mulf %114, %107 : vector<8x128xf32>
    %cst_26 = arith.constant 0.333329499 : f32
    %116 = vector.broadcast %cst_26 : f32 to vector<8x128xf32>
    %117 = arith.subf %115, %116 : vector<8x128xf32>
    %118 = arith.mulf %117, %107 : vector<8x128xf32>
    %119 = arith.mulf %118, %106 : vector<8x128xf32>
    %120 = arith.addf %119, %106 : vector<8x128xf32>
    %121 = arith.addf %93, %120 : vector<8x128xf32>
    %122 = arith.mulf %81, %121 : vector<8x128xf32>
    %123 = tpu.reciprocal %30 {approx = true} : vector<8x128xf32> -> vector<8x128xf32>
    %124 = arith.mulf %27, %123 : vector<8x128xf32>
    %cst_27 = arith.constant 0.000000e+00 : f32
    %125 = vector.broadcast %cst_27 : f32 to vector<8x128xf32>
    %126 = arith.cmpf olt, %124, %125 : vector<8x128xf32>
    %cst_28 = arith.constant -1.000000e+00 : f32
    %cst_29 = arith.constant 1.000000e+00 : f32
    %127 = vector.broadcast %cst_28 : f32 to vector<8x128xf32>
    %128 = vector.broadcast %cst_29 : f32 to vector<8x128xf32>
    %129 = arith.select %126, %127, %128 : vector<8x128xi1>, vector<8x128xf32>
    %130 = math.absf %124 : vector<8x128xf32>
    %cst_30 = arith.constant 2.41421366 : f32
    %131 = vector.broadcast %cst_30 : f32 to vector<8x128xf32>
    %132 = arith.cmpf ogt, %130, %131 : vector<8x128xf32>
    %cst_31 = arith.constant 0.414213568 : f32
    %133 = vector.broadcast %cst_31 : f32 to vector<8x128xf32>
    %134 = arith.cmpf ogt, %130, %133 : vector<8x128xf32>
    %cst_32 = arith.constant dense<true> : vector<8x128xi1>
    %135 = arith.xori %132, %cst_32 : vector<8x128xi1>
    %136 = arith.andi %134, %135 : vector<8x128xi1>
    %cst_33 = arith.constant 0.785398185 : f32
    %cst_34 = arith.constant 0.000000e+00 : f32
    %137 = vector.broadcast %cst_33 : f32 to vector<8x128xf32>
    %138 = vector.broadcast %cst_34 : f32 to vector<8x128xf32>
    %139 = arith.select %136, %137, %138 : vector<8x128xi1>, vector<8x128xf32>
    %cst_35 = arith.constant 1.57079637 : f32
    %140 = vector.broadcast %cst_35 : f32 to vector<8x128xf32>
    %141 = arith.select %132, %140, %139 : vector<8x128xi1>, vector<8x128xf32>
    %cst_36 = arith.constant 1.000000e-30 : f32
    %142 = vector.broadcast %cst_36 : f32 to vector<8x128xf32>
    %143 = arith.maximumf %130, %142 : vector<8x128xf32>
    %144 = tpu.reciprocal %143 {approx = true} : vector<8x128xf32> -> vector<8x128xf32>
    %cst_37 = arith.constant 0.000000e+00 : f32
    %145 = vector.broadcast %cst_37 : f32 to vector<8x128xf32>
    %146 = arith.subf %145, %144 : vector<8x128xf32>
    %cst_38 = arith.constant 1.000000e+00 : f32
    %147 = vector.broadcast %cst_38 : f32 to vector<8x128xf32>
    %148 = arith.subf %130, %147 : vector<8x128xf32>
    %cst_39 = arith.constant 1.000000e+00 : f32
    %149 = vector.broadcast %cst_39 : f32 to vector<8x128xf32>
    %150 = arith.addf %130, %149 : vector<8x128xf32>
    %151 = tpu.reciprocal %150 {approx = true} : vector<8x128xf32> -> vector<8x128xf32>
    %152 = arith.mulf %148, %151 : vector<8x128xf32>
    %153 = arith.select %136, %152, %130 : vector<8x128xi1>, vector<8x128xf32>
    %154 = arith.select %132, %146, %153 : vector<8x128xi1>, vector<8x128xf32>
    %155 = arith.mulf %154, %154 : vector<8x128xf32>
    %cst_40 = arith.constant 0.0805374458 : f32
    %156 = vector.broadcast %cst_40 : f32 to vector<8x128xf32>
    %157 = arith.mulf %156, %155 : vector<8x128xf32>
    %cst_41 = arith.constant 0.138776854 : f32
    %158 = vector.broadcast %cst_41 : f32 to vector<8x128xf32>
    %159 = arith.subf %157, %158 : vector<8x128xf32>
    %160 = arith.mulf %159, %155 : vector<8x128xf32>
    %cst_42 = arith.constant 0.199777111 : f32
    %161 = vector.broadcast %cst_42 : f32 to vector<8x128xf32>
    %162 = arith.addf %160, %161 : vector<8x128xf32>
    %163 = arith.mulf %162, %155 : vector<8x128xf32>
    %cst_43 = arith.constant 0.333329499 : f32
    %164 = vector.broadcast %cst_43 : f32 to vector<8x128xf32>
    %165 = arith.subf %163, %164 : vector<8x128xf32>
    %166 = arith.mulf %165, %155 : vector<8x128xf32>
    %167 = arith.mulf %166, %154 : vector<8x128xf32>
    %168 = arith.addf %167, %154 : vector<8x128xf32>
    %169 = arith.addf %141, %168 : vector<8x128xf32>
    %170 = arith.mulf %129, %169 : vector<8x128xf32>
    %171 = arith.subf %122, %170 : vector<8x128xf32>
    %172 = arith.mulf %171, %171 : vector<8x128xf32>
    %cst_44 = arith.constant 0.405284733 : f32
    %173 = vector.broadcast %cst_44 : f32 to vector<8x128xf32>
    %174 = arith.mulf %173, %172 : vector<8x128xf32>
    %175 = arith.subf %174, %52 : vector<8x128xf32>
    %cst_45 = arith.constant 1.00000012 : f32
    %176 = vector.broadcast %cst_45 : f32 to vector<8x128xf32>
    %177 = arith.addf %175, %176 : vector<8x128xf32>
    %178 = tpu.reciprocal %177 {approx = true} : vector<8x128xf32> -> vector<8x128xf32>
    %179 = arith.mulf %174, %178 : vector<8x128xf32>
    %180 = arith.divf %74, %63 : vector<8x128xf32>
    %181 = arith.mulf %174, %179 : vector<8x128xf32>
    %182 = arith.addf %180, %181 : vector<8x128xf32>
    %183 = arith.subf %52, %182 : vector<8x128xf32>
    %cst_46 = arith.constant 0.000000e+00 : f32
    %184 = vector.broadcast %cst_46 : f32 to vector<8x128xf32>
    %185 = arith.cmpf ogt, %26, %184 : vector<8x128xf32>
    %cst_47 = arith.constant 1.000000e+00 : f32
    %186 = vector.broadcast %cst_47 : f32 to vector<8x128xf32>
    %187 = arith.subf %186, %183 : vector<8x128xf32>
    %188 = arith.mulf %187, %24 : vector<8x128xf32>
    %cst_48 = arith.constant 0.000000e+00 : f32
    %189 = vector.broadcast %cst_48 : f32 to vector<8x128xf32>
    %190 = arith.select %185, %188, %189 : vector<8x128xi1>, vector<8x128xf32>
    %191 = arith.addf %0, %190 : vector<8x128xf32>
    %192 = arith.subf %20, %12 : vector<8x128xf32>
    %cst_49 = arith.constant 0.000000e+00 : f32
    %cst_50 = arith.constant 1.499000e+01 : f32
    %193 = vector.broadcast %cst_49 : f32 to vector<8x128xf32>
    %194 = arith.maximumf %193, %192 : vector<8x128xf32>
    %195 = vector.broadcast %cst_50 : f32 to vector<8x128xf32>
    %196 = arith.minimumf %195, %194 : vector<8x128xf32>
    %197 = arith.subf %22, %14 : vector<8x128xf32>
    %cst_51 = arith.constant 0.000000e+00 : f32
    %cst_52 = arith.constant 1.499000e+01 : f32
    %198 = vector.broadcast %cst_51 : f32 to vector<8x128xf32>
    %199 = arith.maximumf %198, %197 : vector<8x128xf32>
    %200 = vector.broadcast %cst_52 : f32 to vector<8x128xf32>
    %201 = arith.minimumf %200, %199 : vector<8x128xf32>
    %202 = arith.subf %16, %20 : vector<8x128xf32>
    %cst_53 = arith.constant 0.000000e+00 : f32
    %cst_54 = arith.constant 1.499000e+01 : f32
    %203 = vector.broadcast %cst_53 : f32 to vector<8x128xf32>
    %204 = arith.maximumf %203, %202 : vector<8x128xf32>
    %205 = vector.broadcast %cst_54 : f32 to vector<8x128xf32>
    %206 = arith.minimumf %205, %204 : vector<8x128xf32>
    %207 = arith.subf %18, %22 : vector<8x128xf32>
    %cst_55 = arith.constant 0.000000e+00 : f32
    %cst_56 = arith.constant 1.499000e+01 : f32
    %208 = vector.broadcast %cst_55 : f32 to vector<8x128xf32>
    %209 = arith.maximumf %208, %207 : vector<8x128xf32>
    %210 = vector.broadcast %cst_56 : f32 to vector<8x128xf32>
    %211 = arith.minimumf %210, %209 : vector<8x128xf32>
    %cst_57 = arith.constant 0.000000e+00 : f32
    %212 = vector.broadcast %cst_57 : f32 to vector<8x128xf32>
    %c0_58 = arith.constant 0 : index
    %c0_59 = arith.constant 0 : index
    %c0_60 = arith.constant 0 : index
    %213 = vector.load %arg2[%c0_58, %c0_59, %c0_60] : memref<64x24x128xbf16, #tpu.memory_space<vmem>>, vector<16x8x128xbf16>
    %214 = arith.extf %213 : vector<16x8x128xbf16> to vector<16x8x128xf32>
    %cst_61 = arith.constant dense<0xFF800000> : vector<8x128xf32>
    %215 = vector.multi_reduction <maximumf>, %214, %cst_61 [0] : vector<16x8x128xf32> to vector<8x128xf32>
    %cst_62 = arith.constant 0.000000e+00 : f32
    %216 = vector.broadcast %cst_62 : f32 to vector<8x128xf32>
    %cst_63 = arith.constant 0.000000e+00 : f32
    %217 = vector.broadcast %cst_63 : f32 to vector<8x128xf32>
    %218 = vector.extract_strided_slice %214 {offsets = [0, 0, 0], sizes = [1, 8, 128], strides = [1, 1, 1]} : vector<16x8x128xf32> to vector<1x8x128xf32>
    %219 = vector.shape_cast %218 : vector<1x8x128xf32> to vector<8x128xf32>
    %220 = arith.subf %219, %215 : vector<8x128xf32>
    %221 = math.exp %220 : vector<8x128xf32>
    %222 = arith.addf %216, %221 : vector<8x128xf32>
    %cst_64 = arith.constant 0.000000e+00 : f32
    %223 = vector.broadcast %cst_64 : f32 to vector<8x128xf32>
    %224 = arith.subf %223, %196 : vector<8x128xf32>
    %225 = math.absf %224 : vector<8x128xf32>
    %cst_65 = arith.constant 1.000000e+00 : f32
    %226 = vector.broadcast %cst_65 : f32 to vector<8x128xf32>
    %227 = arith.subf %226, %225 : vector<8x128xf32>
    %cst_66 = arith.constant 0.000000e+00 : f32
    %228 = vector.broadcast %cst_66 : f32 to vector<8x128xf32>
    %229 = arith.maximumf %227, %228 : vector<8x128xf32>
    %230 = arith.mulf %229, %219 : vector<8x128xf32>
    %231 = arith.addf %217, %230 : vector<8x128xf32>
    %232 = vector.extract_strided_slice %214 {offsets = [1, 0, 0], sizes = [1, 8, 128], strides = [1, 1, 1]} : vector<16x8x128xf32> to vector<1x8x128xf32>
    %233 = vector.shape_cast %232 : vector<1x8x128xf32> to vector<8x128xf32>
    %234 = arith.subf %233, %215 : vector<8x128xf32>
    %235 = math.exp %234 : vector<8x128xf32>
    %236 = arith.addf %222, %235 : vector<8x128xf32>
    %cst_67 = arith.constant 1.000000e+00 : f32
    %237 = vector.broadcast %cst_67 : f32 to vector<8x128xf32>
    %238 = arith.subf %237, %196 : vector<8x128xf32>
    %239 = math.absf %238 : vector<8x128xf32>
    %cst_68 = arith.constant 1.000000e+00 : f32
    %240 = vector.broadcast %cst_68 : f32 to vector<8x128xf32>
    %241 = arith.subf %240, %239 : vector<8x128xf32>
    %cst_69 = arith.constant 0.000000e+00 : f32
    %242 = vector.broadcast %cst_69 : f32 to vector<8x128xf32>
    %243 = arith.maximumf %241, %242 : vector<8x128xf32>
    %244 = arith.mulf %243, %233 : vector<8x128xf32>
    %245 = arith.addf %231, %244 : vector<8x128xf32>
    %246 = vector.extract_strided_slice %214 {offsets = [2, 0, 0], sizes = [1, 8, 128], strides = [1, 1, 1]} : vector<16x8x128xf32> to vector<1x8x128xf32>
    %247 = vector.shape_cast %246 : vector<1x8x128xf32> to vector<8x128xf32>
    %248 = arith.subf %247, %215 : vector<8x128xf32>
    %249 = math.exp %248 : vector<8x128xf32>
    %250 = arith.addf %236, %249 : vector<8x128xf32>
    %cst_70 = arith.constant 2.000000e+00 : f32
    %251 = vector.broadcast %cst_70 : f32 to vector<8x128xf32>
    %252 = arith.subf %251, %196 : vector<8x128xf32>
    %253 = math.absf %252 : vector<8x128xf32>
    %cst_71 = arith.constant 1.000000e+00 : f32
    %254 = vector.broadcast %cst_71 : f32 to vector<8x128xf32>
    %255 = arith.subf %254, %253 : vector<8x128xf32>
    %cst_72 = arith.constant 0.000000e+00 : f32
    %256 = vector.broadcast %cst_72 : f32 to vector<8x128xf32>
    %257 = arith.maximumf %255, %256 : vector<8x128xf32>
    %258 = arith.mulf %257, %247 : vector<8x128xf32>
    %259 = arith.addf %245, %258 : vector<8x128xf32>
    %260 = vector.extract_strided_slice %214 {offsets = [3, 0, 0], sizes = [1, 8, 128], strides = [1, 1, 1]} : vector<16x8x128xf32> to vector<1x8x128xf32>
    %261 = vector.shape_cast %260 : vector<1x8x128xf32> to vector<8x128xf32>
    %262 = arith.subf %261, %215 : vector<8x128xf32>
    %263 = math.exp %262 : vector<8x128xf32>
    %264 = arith.addf %250, %263 : vector<8x128xf32>
    %cst_73 = arith.constant 3.000000e+00 : f32
    %265 = vector.broadcast %cst_73 : f32 to vector<8x128xf32>
    %266 = arith.subf %265, %196 : vector<8x128xf32>
    %267 = math.absf %266 : vector<8x128xf32>
    %cst_74 = arith.constant 1.000000e+00 : f32
    %268 = vector.broadcast %cst_74 : f32 to vector<8x128xf32>
    %269 = arith.subf %268, %267 : vector<8x128xf32>
    %cst_75 = arith.constant 0.000000e+00 : f32
    %270 = vector.broadcast %cst_75 : f32 to vector<8x128xf32>
    %271 = arith.maximumf %269, %270 : vector<8x128xf32>
    %272 = arith.mulf %271, %261 : vector<8x128xf32>
    %273 = arith.addf %259, %272 : vector<8x128xf32>
    %274 = vector.extract_strided_slice %214 {offsets = [4, 0, 0], sizes = [1, 8, 128], strides = [1, 1, 1]} : vector<16x8x128xf32> to vector<1x8x128xf32>
    %275 = vector.shape_cast %274 : vector<1x8x128xf32> to vector<8x128xf32>
    %276 = arith.subf %275, %215 : vector<8x128xf32>
    %277 = math.exp %276 : vector<8x128xf32>
    %278 = arith.addf %264, %277 : vector<8x128xf32>
    %cst_76 = arith.constant 4.000000e+00 : f32
    %279 = vector.broadcast %cst_76 : f32 to vector<8x128xf32>
    %280 = arith.subf %279, %196 : vector<8x128xf32>
    %281 = math.absf %280 : vector<8x128xf32>
    %cst_77 = arith.constant 1.000000e+00 : f32
    %282 = vector.broadcast %cst_77 : f32 to vector<8x128xf32>
    %283 = arith.subf %282, %281 : vector<8x128xf32>
    %cst_78 = arith.constant 0.000000e+00 : f32
    %284 = vector.broadcast %cst_78 : f32 to vector<8x128xf32>
    %285 = arith.maximumf %283, %284 : vector<8x128xf32>
    %286 = arith.mulf %285, %275 : vector<8x128xf32>
    %287 = arith.addf %273, %286 : vector<8x128xf32>
    %288 = vector.extract_strided_slice %214 {offsets = [5, 0, 0], sizes = [1, 8, 128], strides = [1, 1, 1]} : vector<16x8x128xf32> to vector<1x8x128xf32>
    %289 = vector.shape_cast %288 : vector<1x8x128xf32> to vector<8x128xf32>
    %290 = arith.subf %289, %215 : vector<8x128xf32>
    %291 = math.exp %290 : vector<8x128xf32>
    %292 = arith.addf %278, %291 : vector<8x128xf32>
    %cst_79 = arith.constant 5.000000e+00 : f32
    %293 = vector.broadcast %cst_79 : f32 to vector<8x128xf32>
    %294 = arith.subf %293, %196 : vector<8x128xf32>
    %295 = math.absf %294 : vector<8x128xf32>
    %cst_80 = arith.constant 1.000000e+00 : f32
    %296 = vector.broadcast %cst_80 : f32 to vector<8x128xf32>
    %297 = arith.subf %296, %295 : vector<8x128xf32>
    %cst_81 = arith.constant 0.000000e+00 : f32
    %298 = vector.broadcast %cst_81 : f32 to vector<8x128xf32>
    %299 = arith.maximumf %297, %298 : vector<8x128xf32>
    %300 = arith.mulf %299, %289 : vector<8x128xf32>
    %301 = arith.addf %287, %300 : vector<8x128xf32>
    %302 = vector.extract_strided_slice %214 {offsets = [6, 0, 0], sizes = [1, 8, 128], strides = [1, 1, 1]} : vector<16x8x128xf32> to vector<1x8x128xf32>
    %303 = vector.shape_cast %302 : vector<1x8x128xf32> to vector<8x128xf32>
    %304 = arith.subf %303, %215 : vector<8x128xf32>
    %305 = math.exp %304 : vector<8x128xf32>
    %306 = arith.addf %292, %305 : vector<8x128xf32>
    %cst_82 = arith.constant 6.000000e+00 : f32
    %307 = vector.broadcast %cst_82 : f32 to vector<8x128xf32>
    %308 = arith.subf %307, %196 : vector<8x128xf32>
    %309 = math.absf %308 : vector<8x128xf32>
    %cst_83 = arith.constant 1.000000e+00 : f32
    %310 = vector.broadcast %cst_83 : f32 to vector<8x128xf32>
    %311 = arith.subf %310, %309 : vector<8x128xf32>
    %cst_84 = arith.constant 0.000000e+00 : f32
    %312 = vector.broadcast %cst_84 : f32 to vector<8x128xf32>
    %313 = arith.maximumf %311, %312 : vector<8x128xf32>
    %314 = arith.mulf %313, %303 : vector<8x128xf32>
    %315 = arith.addf %301, %314 : vector<8x128xf32>
    %316 = vector.extract_strided_slice %214 {offsets = [7, 0, 0], sizes = [1, 8, 128], strides = [1, 1, 1]} : vector<16x8x128xf32> to vector<1x8x128xf32>
    %317 = vector.shape_cast %316 : vector<1x8x128xf32> to vector<8x128xf32>
    %318 = arith.subf %317, %215 : vector<8x128xf32>
    %319 = math.exp %318 : vector<8x128xf32>
    %320 = arith.addf %306, %319 : vector<8x128xf32>
    %cst_85 = arith.constant 7.000000e+00 : f32
    %321 = vector.broadcast %cst_85 : f32 to vector<8x128xf32>
    %322 = arith.subf %321, %196 : vector<8x128xf32>
    %323 = math.absf %322 : vector<8x128xf32>
    %cst_86 = arith.constant 1.000000e+00 : f32
    %324 = vector.broadcast %cst_86 : f32 to vector<8x128xf32>
    %325 = arith.subf %324, %323 : vector<8x128xf32>
    %cst_87 = arith.constant 0.000000e+00 : f32
    %326 = vector.broadcast %cst_87 : f32 to vector<8x128xf32>
    %327 = arith.maximumf %325, %326 : vector<8x128xf32>
    %328 = arith.mulf %327, %317 : vector<8x128xf32>
    %329 = arith.addf %315, %328 : vector<8x128xf32>
    %330 = vector.extract_strided_slice %214 {offsets = [8, 0, 0], sizes = [1, 8, 128], strides = [1, 1, 1]} : vector<16x8x128xf32> to vector<1x8x128xf32>
    %331 = vector.shape_cast %330 : vector<1x8x128xf32> to vector<8x128xf32>
    %332 = arith.subf %331, %215 : vector<8x128xf32>
    %333 = math.exp %332 : vector<8x128xf32>
    %334 = arith.addf %320, %333 : vector<8x128xf32>
    %cst_88 = arith.constant 8.000000e+00 : f32
    %335 = vector.broadcast %cst_88 : f32 to vector<8x128xf32>
    %336 = arith.subf %335, %196 : vector<8x128xf32>
    %337 = math.absf %336 : vector<8x128xf32>
    %cst_89 = arith.constant 1.000000e+00 : f32
    %338 = vector.broadcast %cst_89 : f32 to vector<8x128xf32>
    %339 = arith.subf %338, %337 : vector<8x128xf32>
    %cst_90 = arith.constant 0.000000e+00 : f32
    %340 = vector.broadcast %cst_90 : f32 to vector<8x128xf32>
    %341 = arith.maximumf %339, %340 : vector<8x128xf32>
    %342 = arith.mulf %341, %331 : vector<8x128xf32>
    %343 = arith.addf %329, %342 : vector<8x128xf32>
    %344 = vector.extract_strided_slice %214 {offsets = [9, 0, 0], sizes = [1, 8, 128], strides = [1, 1, 1]} : vector<16x8x128xf32> to vector<1x8x128xf32>
    %345 = vector.shape_cast %344 : vector<1x8x128xf32> to vector<8x128xf32>
    %346 = arith.subf %345, %215 : vector<8x128xf32>
    %347 = math.exp %346 : vector<8x128xf32>
    %348 = arith.addf %334, %347 : vector<8x128xf32>
    %cst_91 = arith.constant 9.000000e+00 : f32
    %349 = vector.broadcast %cst_91 : f32 to vector<8x128xf32>
    %350 = arith.subf %349, %196 : vector<8x128xf32>
    %351 = math.absf %350 : vector<8x128xf32>
    %cst_92 = arith.constant 1.000000e+00 : f32
    %352 = vector.broadcast %cst_92 : f32 to vector<8x128xf32>
    %353 = arith.subf %352, %351 : vector<8x128xf32>
    %cst_93 = arith.constant 0.000000e+00 : f32
    %354 = vector.broadcast %cst_93 : f32 to vector<8x128xf32>
    %355 = arith.maximumf %353, %354 : vector<8x128xf32>
    %356 = arith.mulf %355, %345 : vector<8x128xf32>
    %357 = arith.addf %343, %356 : vector<8x128xf32>
    %358 = vector.extract_strided_slice %214 {offsets = [10, 0, 0], sizes = [1, 8, 128], strides = [1, 1, 1]} : vector<16x8x128xf32> to vector<1x8x128xf32>
    %359 = vector.shape_cast %358 : vector<1x8x128xf32> to vector<8x128xf32>
    %360 = arith.subf %359, %215 : vector<8x128xf32>
    %361 = math.exp %360 : vector<8x128xf32>
    %362 = arith.addf %348, %361 : vector<8x128xf32>
    %cst_94 = arith.constant 1.000000e+01 : f32
    %363 = vector.broadcast %cst_94 : f32 to vector<8x128xf32>
    %364 = arith.subf %363, %196 : vector<8x128xf32>
    %365 = math.absf %364 : vector<8x128xf32>
    %cst_95 = arith.constant 1.000000e+00 : f32
    %366 = vector.broadcast %cst_95 : f32 to vector<8x128xf32>
    %367 = arith.subf %366, %365 : vector<8x128xf32>
    %cst_96 = arith.constant 0.000000e+00 : f32
    %368 = vector.broadcast %cst_96 : f32 to vector<8x128xf32>
    %369 = arith.maximumf %367, %368 : vector<8x128xf32>
    %370 = arith.mulf %369, %359 : vector<8x128xf32>
    %371 = arith.addf %357, %370 : vector<8x128xf32>
    %372 = vector.extract_strided_slice %214 {offsets = [11, 0, 0], sizes = [1, 8, 128], strides = [1, 1, 1]} : vector<16x8x128xf32> to vector<1x8x128xf32>
    %373 = vector.shape_cast %372 : vector<1x8x128xf32> to vector<8x128xf32>
    %374 = arith.subf %373, %215 : vector<8x128xf32>
    %375 = math.exp %374 : vector<8x128xf32>
    %376 = arith.addf %362, %375 : vector<8x128xf32>
    %cst_97 = arith.constant 1.100000e+01 : f32
    %377 = vector.broadcast %cst_97 : f32 to vector<8x128xf32>
    %378 = arith.subf %377, %196 : vector<8x128xf32>
    %379 = math.absf %378 : vector<8x128xf32>
    %cst_98 = arith.constant 1.000000e+00 : f32
    %380 = vector.broadcast %cst_98 : f32 to vector<8x128xf32>
    %381 = arith.subf %380, %379 : vector<8x128xf32>
    %cst_99 = arith.constant 0.000000e+00 : f32
    %382 = vector.broadcast %cst_99 : f32 to vector<8x128xf32>
    %383 = arith.maximumf %381, %382 : vector<8x128xf32>
    %384 = arith.mulf %383, %373 : vector<8x128xf32>
    %385 = arith.addf %371, %384 : vector<8x128xf32>
    %386 = vector.extract_strided_slice %214 {offsets = [12, 0, 0], sizes = [1, 8, 128], strides = [1, 1, 1]} : vector<16x8x128xf32> to vector<1x8x128xf32>
    %387 = vector.shape_cast %386 : vector<1x8x128xf32> to vector<8x128xf32>
    %388 = arith.subf %387, %215 : vector<8x128xf32>
    %389 = math.exp %388 : vector<8x128xf32>
    %390 = arith.addf %376, %389 : vector<8x128xf32>
    %cst_100 = arith.constant 1.200000e+01 : f32
    %391 = vector.broadcast %cst_100 : f32 to vector<8x128xf32>
    %392 = arith.subf %391, %196 : vector<8x128xf32>
    %393 = math.absf %392 : vector<8x128xf32>
    %cst_101 = arith.constant 1.000000e+00 : f32
    %394 = vector.broadcast %cst_101 : f32 to vector<8x128xf32>
    %395 = arith.subf %394, %393 : vector<8x128xf32>
    %cst_102 = arith.constant 0.000000e+00 : f32
    %396 = vector.broadcast %cst_102 : f32 to vector<8x128xf32>
    %397 = arith.maximumf %395, %396 : vector<8x128xf32>
    %398 = arith.mulf %397, %387 : vector<8x128xf32>
    %399 = arith.addf %385, %398 : vector<8x128xf32>
    %400 = vector.extract_strided_slice %214 {offsets = [13, 0, 0], sizes = [1, 8, 128], strides = [1, 1, 1]} : vector<16x8x128xf32> to vector<1x8x128xf32>
    %401 = vector.shape_cast %400 : vector<1x8x128xf32> to vector<8x128xf32>
    %402 = arith.subf %401, %215 : vector<8x128xf32>
    %403 = math.exp %402 : vector<8x128xf32>
    %404 = arith.addf %390, %403 : vector<8x128xf32>
    %cst_103 = arith.constant 1.300000e+01 : f32
    %405 = vector.broadcast %cst_103 : f32 to vector<8x128xf32>
    %406 = arith.subf %405, %196 : vector<8x128xf32>
    %407 = math.absf %406 : vector<8x128xf32>
    %cst_104 = arith.constant 1.000000e+00 : f32
    %408 = vector.broadcast %cst_104 : f32 to vector<8x128xf32>
    %409 = arith.subf %408, %407 : vector<8x128xf32>
    %cst_105 = arith.constant 0.000000e+00 : f32
    %410 = vector.broadcast %cst_105 : f32 to vector<8x128xf32>
    %411 = arith.maximumf %409, %410 : vector<8x128xf32>
    %412 = arith.mulf %411, %401 : vector<8x128xf32>
    %413 = arith.addf %399, %412 : vector<8x128xf32>
    %414 = vector.extract_strided_slice %214 {offsets = [14, 0, 0], sizes = [1, 8, 128], strides = [1, 1, 1]} : vector<16x8x128xf32> to vector<1x8x128xf32>
    %415 = vector.shape_cast %414 : vector<1x8x128xf32> to vector<8x128xf32>
    %416 = arith.subf %415, %215 : vector<8x128xf32>
    %417 = math.exp %416 : vector<8x128xf32>
    %418 = arith.addf %404, %417 : vector<8x128xf32>
    %cst_106 = arith.constant 1.400000e+01 : f32
    %419 = vector.broadcast %cst_106 : f32 to vector<8x128xf32>
    %420 = arith.subf %419, %196 : vector<8x128xf32>
    %421 = math.absf %420 : vector<8x128xf32>
    %cst_107 = arith.constant 1.000000e+00 : f32
    %422 = vector.broadcast %cst_107 : f32 to vector<8x128xf32>
    %423 = arith.subf %422, %421 : vector<8x128xf32>
    %cst_108 = arith.constant 0.000000e+00 : f32
    %424 = vector.broadcast %cst_108 : f32 to vector<8x128xf32>
    %425 = arith.maximumf %423, %424 : vector<8x128xf32>
    %426 = arith.mulf %425, %415 : vector<8x128xf32>
    %427 = arith.addf %413, %426 : vector<8x128xf32>
    %428 = vector.extract_strided_slice %214 {offsets = [15, 0, 0], sizes = [1, 8, 128], strides = [1, 1, 1]} : vector<16x8x128xf32> to vector<1x8x128xf32>
    %429 = vector.shape_cast %428 : vector<1x8x128xf32> to vector<8x128xf32>
    %430 = arith.subf %429, %215 : vector<8x128xf32>
    %431 = math.exp %430 : vector<8x128xf32>
    %432 = arith.addf %418, %431 : vector<8x128xf32>
    %cst_109 = arith.constant 1.500000e+01 : f32
    %433 = vector.broadcast %cst_109 : f32 to vector<8x128xf32>
    %434 = arith.subf %433, %196 : vector<8x128xf32>
    %435 = math.absf %434 : vector<8x128xf32>
    %cst_110 = arith.constant 1.000000e+00 : f32
    %436 = vector.broadcast %cst_110 : f32 to vector<8x128xf32>
    %437 = arith.subf %436, %435 : vector<8x128xf32>
    %cst_111 = arith.constant 0.000000e+00 : f32
    %438 = vector.broadcast %cst_111 : f32 to vector<8x128xf32>
    %439 = arith.maximumf %437, %438 : vector<8x128xf32>
    %440 = arith.mulf %439, %429 : vector<8x128xf32>
    %441 = arith.addf %427, %440 : vector<8x128xf32>
    %442 = math.log %432 : vector<8x128xf32>
    %443 = arith.addf %215, %442 : vector<8x128xf32>
    %444 = arith.subf %443, %441 : vector<8x128xf32>
    %445 = arith.addf %212, %444 : vector<8x128xf32>
    %c16 = arith.constant 16 : index
    %c0_112 = arith.constant 0 : index
    %c0_113 = arith.constant 0 : index
    %446 = vector.load %arg2[%c16, %c0_112, %c0_113] : memref<64x24x128xbf16, #tpu.memory_space<vmem>>, vector<16x8x128xbf16>
    %447 = arith.extf %446 : vector<16x8x128xbf16> to vector<16x8x128xf32>
    %cst_114 = arith.constant dense<0xFF800000> : vector<8x128xf32>
    %448 = vector.multi_reduction <maximumf>, %447, %cst_114 [0] : vector<16x8x128xf32> to vector<8x128xf32>
    %cst_115 = arith.constant 0.000000e+00 : f32
    %449 = vector.broadcast %cst_115 : f32 to vector<8x128xf32>
    %cst_116 = arith.constant 0.000000e+00 : f32
    %450 = vector.broadcast %cst_116 : f32 to vector<8x128xf32>
    %451 = vector.extract_strided_slice %447 {offsets = [0, 0, 0], sizes = [1, 8, 128], strides = [1, 1, 1]} : vector<16x8x128xf32> to vector<1x8x128xf32>
    %452 = vector.shape_cast %451 : vector<1x8x128xf32> to vector<8x128xf32>
    %453 = arith.subf %452, %448 : vector<8x128xf32>
    %454 = math.exp %453 : vector<8x128xf32>
    %455 = arith.addf %449, %454 : vector<8x128xf32>
    %cst_117 = arith.constant 0.000000e+00 : f32
    %456 = vector.broadcast %cst_117 : f32 to vector<8x128xf32>
    %457 = arith.subf %456, %201 : vector<8x128xf32>
    %458 = math.absf %457 : vector<8x128xf32>
    %cst_118 = arith.constant 1.000000e+00 : f32
    %459 = vector.broadcast %cst_118 : f32 to vector<8x128xf32>
    %460 = arith.subf %459, %458 : vector<8x128xf32>
    %cst_119 = arith.constant 0.000000e+00 : f32
    %461 = vector.broadcast %cst_119 : f32 to vector<8x128xf32>
    %462 = arith.maximumf %460, %461 : vector<8x128xf32>
    %463 = arith.mulf %462, %452 : vector<8x128xf32>
    %464 = arith.addf %450, %463 : vector<8x128xf32>
    %465 = vector.extract_strided_slice %447 {offsets = [1, 0, 0], sizes = [1, 8, 128], strides = [1, 1, 1]} : vector<16x8x128xf32> to vector<1x8x128xf32>
    %466 = vector.shape_cast %465 : vector<1x8x128xf32> to vector<8x128xf32>
    %467 = arith.subf %466, %448 : vector<8x128xf32>
    %468 = math.exp %467 : vector<8x128xf32>
    %469 = arith.addf %455, %468 : vector<8x128xf32>
    %cst_120 = arith.constant 1.000000e+00 : f32
    %470 = vector.broadcast %cst_120 : f32 to vector<8x128xf32>
    %471 = arith.subf %470, %201 : vector<8x128xf32>
    %472 = math.absf %471 : vector<8x128xf32>
    %cst_121 = arith.constant 1.000000e+00 : f32
    %473 = vector.broadcast %cst_121 : f32 to vector<8x128xf32>
    %474 = arith.subf %473, %472 : vector<8x128xf32>
    %cst_122 = arith.constant 0.000000e+00 : f32
    %475 = vector.broadcast %cst_122 : f32 to vector<8x128xf32>
    %476 = arith.maximumf %474, %475 : vector<8x128xf32>
    %477 = arith.mulf %476, %466 : vector<8x128xf32>
    %478 = arith.addf %464, %477 : vector<8x128xf32>
    %479 = vector.extract_strided_slice %447 {offsets = [2, 0, 0], sizes = [1, 8, 128], strides = [1, 1, 1]} : vector<16x8x128xf32> to vector<1x8x128xf32>
    %480 = vector.shape_cast %479 : vector<1x8x128xf32> to vector<8x128xf32>
    %481 = arith.subf %480, %448 : vector<8x128xf32>
    %482 = math.exp %481 : vector<8x128xf32>
    %483 = arith.addf %469, %482 : vector<8x128xf32>
    %cst_123 = arith.constant 2.000000e+00 : f32
    %484 = vector.broadcast %cst_123 : f32 to vector<8x128xf32>
    %485 = arith.subf %484, %201 : vector<8x128xf32>
    %486 = math.absf %485 : vector<8x128xf32>
    %cst_124 = arith.constant 1.000000e+00 : f32
    %487 = vector.broadcast %cst_124 : f32 to vector<8x128xf32>
    %488 = arith.subf %487, %486 : vector<8x128xf32>
    %cst_125 = arith.constant 0.000000e+00 : f32
    %489 = vector.broadcast %cst_125 : f32 to vector<8x128xf32>
    %490 = arith.maximumf %488, %489 : vector<8x128xf32>
    %491 = arith.mulf %490, %480 : vector<8x128xf32>
    %492 = arith.addf %478, %491 : vector<8x128xf32>
    %493 = vector.extract_strided_slice %447 {offsets = [3, 0, 0], sizes = [1, 8, 128], strides = [1, 1, 1]} : vector<16x8x128xf32> to vector<1x8x128xf32>
    %494 = vector.shape_cast %493 : vector<1x8x128xf32> to vector<8x128xf32>
    %495 = arith.subf %494, %448 : vector<8x128xf32>
    %496 = math.exp %495 : vector<8x128xf32>
    %497 = arith.addf %483, %496 : vector<8x128xf32>
    %cst_126 = arith.constant 3.000000e+00 : f32
    %498 = vector.broadcast %cst_126 : f32 to vector<8x128xf32>
    %499 = arith.subf %498, %201 : vector<8x128xf32>
    %500 = math.absf %499 : vector<8x128xf32>
    %cst_127 = arith.constant 1.000000e+00 : f32
    %501 = vector.broadcast %cst_127 : f32 to vector<8x128xf32>
    %502 = arith.subf %501, %500 : vector<8x128xf32>
    %cst_128 = arith.constant 0.000000e+00 : f32
    %503 = vector.broadcast %cst_128 : f32 to vector<8x128xf32>
    %504 = arith.maximumf %502, %503 : vector<8x128xf32>
    %505 = arith.mulf %504, %494 : vector<8x128xf32>
    %506 = arith.addf %492, %505 : vector<8x128xf32>
    %507 = vector.extract_strided_slice %447 {offsets = [4, 0, 0], sizes = [1, 8, 128], strides = [1, 1, 1]} : vector<16x8x128xf32> to vector<1x8x128xf32>
    %508 = vector.shape_cast %507 : vector<1x8x128xf32> to vector<8x128xf32>
    %509 = arith.subf %508, %448 : vector<8x128xf32>
    %510 = math.exp %509 : vector<8x128xf32>
    %511 = arith.addf %497, %510 : vector<8x128xf32>
    %cst_129 = arith.constant 4.000000e+00 : f32
    %512 = vector.broadcast %cst_129 : f32 to vector<8x128xf32>
    %513 = arith.subf %512, %201 : vector<8x128xf32>
    %514 = math.absf %513 : vector<8x128xf32>
    %cst_130 = arith.constant 1.000000e+00 : f32
    %515 = vector.broadcast %cst_130 : f32 to vector<8x128xf32>
    %516 = arith.subf %515, %514 : vector<8x128xf32>
    %cst_131 = arith.constant 0.000000e+00 : f32
    %517 = vector.broadcast %cst_131 : f32 to vector<8x128xf32>
    %518 = arith.maximumf %516, %517 : vector<8x128xf32>
    %519 = arith.mulf %518, %508 : vector<8x128xf32>
    %520 = arith.addf %506, %519 : vector<8x128xf32>
    %521 = vector.extract_strided_slice %447 {offsets = [5, 0, 0], sizes = [1, 8, 128], strides = [1, 1, 1]} : vector<16x8x128xf32> to vector<1x8x128xf32>
    %522 = vector.shape_cast %521 : vector<1x8x128xf32> to vector<8x128xf32>
    %523 = arith.subf %522, %448 : vector<8x128xf32>
    %524 = math.exp %523 : vector<8x128xf32>
    %525 = arith.addf %511, %524 : vector<8x128xf32>
    %cst_132 = arith.constant 5.000000e+00 : f32
    %526 = vector.broadcast %cst_132 : f32 to vector<8x128xf32>
    %527 = arith.subf %526, %201 : vector<8x128xf32>
    %528 = math.absf %527 : vector<8x128xf32>
    %cst_133 = arith.constant 1.000000e+00 : f32
    %529 = vector.broadcast %cst_133 : f32 to vector<8x128xf32>
    %530 = arith.subf %529, %528 : vector<8x128xf32>
    %cst_134 = arith.constant 0.000000e+00 : f32
    %531 = vector.broadcast %cst_134 : f32 to vector<8x128xf32>
    %532 = arith.maximumf %530, %531 : vector<8x128xf32>
    %533 = arith.mulf %532, %522 : vector<8x128xf32>
    %534 = arith.addf %520, %533 : vector<8x128xf32>
    %535 = vector.extract_strided_slice %447 {offsets = [6, 0, 0], sizes = [1, 8, 128], strides = [1, 1, 1]} : vector<16x8x128xf32> to vector<1x8x128xf32>
    %536 = vector.shape_cast %535 : vector<1x8x128xf32> to vector<8x128xf32>
    %537 = arith.subf %536, %448 : vector<8x128xf32>
    %538 = math.exp %537 : vector<8x128xf32>
    %539 = arith.addf %525, %538 : vector<8x128xf32>
    %cst_135 = arith.constant 6.000000e+00 : f32
    %540 = vector.broadcast %cst_135 : f32 to vector<8x128xf32>
    %541 = arith.subf %540, %201 : vector<8x128xf32>
    %542 = math.absf %541 : vector<8x128xf32>
    %cst_136 = arith.constant 1.000000e+00 : f32
    %543 = vector.broadcast %cst_136 : f32 to vector<8x128xf32>
    %544 = arith.subf %543, %542 : vector<8x128xf32>
    %cst_137 = arith.constant 0.000000e+00 : f32
    %545 = vector.broadcast %cst_137 : f32 to vector<8x128xf32>
    %546 = arith.maximumf %544, %545 : vector<8x128xf32>
    %547 = arith.mulf %546, %536 : vector<8x128xf32>
    %548 = arith.addf %534, %547 : vector<8x128xf32>
    %549 = vector.extract_strided_slice %447 {offsets = [7, 0, 0], sizes = [1, 8, 128], strides = [1, 1, 1]} : vector<16x8x128xf32> to vector<1x8x128xf32>
    %550 = vector.shape_cast %549 : vector<1x8x128xf32> to vector<8x128xf32>
    %551 = arith.subf %550, %448 : vector<8x128xf32>
    %552 = math.exp %551 : vector<8x128xf32>
    %553 = arith.addf %539, %552 : vector<8x128xf32>
    %cst_138 = arith.constant 7.000000e+00 : f32
    %554 = vector.broadcast %cst_138 : f32 to vector<8x128xf32>
    %555 = arith.subf %554, %201 : vector<8x128xf32>
    %556 = math.absf %555 : vector<8x128xf32>
    %cst_139 = arith.constant 1.000000e+00 : f32
    %557 = vector.broadcast %cst_139 : f32 to vector<8x128xf32>
    %558 = arith.subf %557, %556 : vector<8x128xf32>
    %cst_140 = arith.constant 0.000000e+00 : f32
    %559 = vector.broadcast %cst_140 : f32 to vector<8x128xf32>
    %560 = arith.maximumf %558, %559 : vector<8x128xf32>
    %561 = arith.mulf %560, %550 : vector<8x128xf32>
    %562 = arith.addf %548, %561 : vector<8x128xf32>
    %563 = vector.extract_strided_slice %447 {offsets = [8, 0, 0], sizes = [1, 8, 128], strides = [1, 1, 1]} : vector<16x8x128xf32> to vector<1x8x128xf32>
    %564 = vector.shape_cast %563 : vector<1x8x128xf32> to vector<8x128xf32>
    %565 = arith.subf %564, %448 : vector<8x128xf32>
    %566 = math.exp %565 : vector<8x128xf32>
    %567 = arith.addf %553, %566 : vector<8x128xf32>
    %cst_141 = arith.constant 8.000000e+00 : f32
    %568 = vector.broadcast %cst_141 : f32 to vector<8x128xf32>
    %569 = arith.subf %568, %201 : vector<8x128xf32>
    %570 = math.absf %569 : vector<8x128xf32>
    %cst_142 = arith.constant 1.000000e+00 : f32
    %571 = vector.broadcast %cst_142 : f32 to vector<8x128xf32>
    %572 = arith.subf %571, %570 : vector<8x128xf32>
    %cst_143 = arith.constant 0.000000e+00 : f32
    %573 = vector.broadcast %cst_143 : f32 to vector<8x128xf32>
    %574 = arith.maximumf %572, %573 : vector<8x128xf32>
    %575 = arith.mulf %574, %564 : vector<8x128xf32>
    %576 = arith.addf %562, %575 : vector<8x128xf32>
    %577 = vector.extract_strided_slice %447 {offsets = [9, 0, 0], sizes = [1, 8, 128], strides = [1, 1, 1]} : vector<16x8x128xf32> to vector<1x8x128xf32>
    %578 = vector.shape_cast %577 : vector<1x8x128xf32> to vector<8x128xf32>
    %579 = arith.subf %578, %448 : vector<8x128xf32>
    %580 = math.exp %579 : vector<8x128xf32>
    %581 = arith.addf %567, %580 : vector<8x128xf32>
    %cst_144 = arith.constant 9.000000e+00 : f32
    %582 = vector.broadcast %cst_144 : f32 to vector<8x128xf32>
    %583 = arith.subf %582, %201 : vector<8x128xf32>
    %584 = math.absf %583 : vector<8x128xf32>
    %cst_145 = arith.constant 1.000000e+00 : f32
    %585 = vector.broadcast %cst_145 : f32 to vector<8x128xf32>
    %586 = arith.subf %585, %584 : vector<8x128xf32>
    %cst_146 = arith.constant 0.000000e+00 : f32
    %587 = vector.broadcast %cst_146 : f32 to vector<8x128xf32>
    %588 = arith.maximumf %586, %587 : vector<8x128xf32>
    %589 = arith.mulf %588, %578 : vector<8x128xf32>
    %590 = arith.addf %576, %589 : vector<8x128xf32>
    %591 = vector.extract_strided_slice %447 {offsets = [10, 0, 0], sizes = [1, 8, 128], strides = [1, 1, 1]} : vector<16x8x128xf32> to vector<1x8x128xf32>
    %592 = vector.shape_cast %591 : vector<1x8x128xf32> to vector<8x128xf32>
    %593 = arith.subf %592, %448 : vector<8x128xf32>
    %594 = math.exp %593 : vector<8x128xf32>
    %595 = arith.addf %581, %594 : vector<8x128xf32>
    %cst_147 = arith.constant 1.000000e+01 : f32
    %596 = vector.broadcast %cst_147 : f32 to vector<8x128xf32>
    %597 = arith.subf %596, %201 : vector<8x128xf32>
    %598 = math.absf %597 : vector<8x128xf32>
    %cst_148 = arith.constant 1.000000e+00 : f32
    %599 = vector.broadcast %cst_148 : f32 to vector<8x128xf32>
    %600 = arith.subf %599, %598 : vector<8x128xf32>
    %cst_149 = arith.constant 0.000000e+00 : f32
    %601 = vector.broadcast %cst_149 : f32 to vector<8x128xf32>
    %602 = arith.maximumf %600, %601 : vector<8x128xf32>
    %603 = arith.mulf %602, %592 : vector<8x128xf32>
    %604 = arith.addf %590, %603 : vector<8x128xf32>
    %605 = vector.extract_strided_slice %447 {offsets = [11, 0, 0], sizes = [1, 8, 128], strides = [1, 1, 1]} : vector<16x8x128xf32> to vector<1x8x128xf32>
    %606 = vector.shape_cast %605 : vector<1x8x128xf32> to vector<8x128xf32>
    %607 = arith.subf %606, %448 : vector<8x128xf32>
    %608 = math.exp %607 : vector<8x128xf32>
    %609 = arith.addf %595, %608 : vector<8x128xf32>
    %cst_150 = arith.constant 1.100000e+01 : f32
    %610 = vector.broadcast %cst_150 : f32 to vector<8x128xf32>
    %611 = arith.subf %610, %201 : vector<8x128xf32>
    %612 = math.absf %611 : vector<8x128xf32>
    %cst_151 = arith.constant 1.000000e+00 : f32
    %613 = vector.broadcast %cst_151 : f32 to vector<8x128xf32>
    %614 = arith.subf %613, %612 : vector<8x128xf32>
    %cst_152 = arith.constant 0.000000e+00 : f32
    %615 = vector.broadcast %cst_152 : f32 to vector<8x128xf32>
    %616 = arith.maximumf %614, %615 : vector<8x128xf32>
    %617 = arith.mulf %616, %606 : vector<8x128xf32>
    %618 = arith.addf %604, %617 : vector<8x128xf32>
    %619 = vector.extract_strided_slice %447 {offsets = [12, 0, 0], sizes = [1, 8, 128], strides = [1, 1, 1]} : vector<16x8x128xf32> to vector<1x8x128xf32>
    %620 = vector.shape_cast %619 : vector<1x8x128xf32> to vector<8x128xf32>
    %621 = arith.subf %620, %448 : vector<8x128xf32>
    %622 = math.exp %621 : vector<8x128xf32>
    %623 = arith.addf %609, %622 : vector<8x128xf32>
    %cst_153 = arith.constant 1.200000e+01 : f32
    %624 = vector.broadcast %cst_153 : f32 to vector<8x128xf32>
    %625 = arith.subf %624, %201 : vector<8x128xf32>
    %626 = math.absf %625 : vector<8x128xf32>
    %cst_154 = arith.constant 1.000000e+00 : f32
    %627 = vector.broadcast %cst_154 : f32 to vector<8x128xf32>
    %628 = arith.subf %627, %626 : vector<8x128xf32>
    %cst_155 = arith.constant 0.000000e+00 : f32
    %629 = vector.broadcast %cst_155 : f32 to vector<8x128xf32>
    %630 = arith.maximumf %628, %629 : vector<8x128xf32>
    %631 = arith.mulf %630, %620 : vector<8x128xf32>
    %632 = arith.addf %618, %631 : vector<8x128xf32>
    %633 = vector.extract_strided_slice %447 {offsets = [13, 0, 0], sizes = [1, 8, 128], strides = [1, 1, 1]} : vector<16x8x128xf32> to vector<1x8x128xf32>
    %634 = vector.shape_cast %633 : vector<1x8x128xf32> to vector<8x128xf32>
    %635 = arith.subf %634, %448 : vector<8x128xf32>
    %636 = math.exp %635 : vector<8x128xf32>
    %637 = arith.addf %623, %636 : vector<8x128xf32>
    %cst_156 = arith.constant 1.300000e+01 : f32
    %638 = vector.broadcast %cst_156 : f32 to vector<8x128xf32>
    %639 = arith.subf %638, %201 : vector<8x128xf32>
    %640 = math.absf %639 : vector<8x128xf32>
    %cst_157 = arith.constant 1.000000e+00 : f32
    %641 = vector.broadcast %cst_157 : f32 to vector<8x128xf32>
    %642 = arith.subf %641, %640 : vector<8x128xf32>
    %cst_158 = arith.constant 0.000000e+00 : f32
    %643 = vector.broadcast %cst_158 : f32 to vector<8x128xf32>
    %644 = arith.maximumf %642, %643 : vector<8x128xf32>
    %645 = arith.mulf %644, %634 : vector<8x128xf32>
    %646 = arith.addf %632, %645 : vector<8x128xf32>
    %647 = vector.extract_strided_slice %447 {offsets = [14, 0, 0], sizes = [1, 8, 128], strides = [1, 1, 1]} : vector<16x8x128xf32> to vector<1x8x128xf32>
    %648 = vector.shape_cast %647 : vector<1x8x128xf32> to vector<8x128xf32>
    %649 = arith.subf %648, %448 : vector<8x128xf32>
    %650 = math.exp %649 : vector<8x128xf32>
    %651 = arith.addf %637, %650 : vector<8x128xf32>
    %cst_159 = arith.constant 1.400000e+01 : f32
    %652 = vector.broadcast %cst_159 : f32 to vector<8x128xf32>
    %653 = arith.subf %652, %201 : vector<8x128xf32>
    %654 = math.absf %653 : vector<8x128xf32>
    %cst_160 = arith.constant 1.000000e+00 : f32
    %655 = vector.broadcast %cst_160 : f32 to vector<8x128xf32>
    %656 = arith.subf %655, %654 : vector<8x128xf32>
    %cst_161 = arith.constant 0.000000e+00 : f32
    %657 = vector.broadcast %cst_161 : f32 to vector<8x128xf32>
    %658 = arith.maximumf %656, %657 : vector<8x128xf32>
    %659 = arith.mulf %658, %648 : vector<8x128xf32>
    %660 = arith.addf %646, %659 : vector<8x128xf32>
    %661 = vector.extract_strided_slice %447 {offsets = [15, 0, 0], sizes = [1, 8, 128], strides = [1, 1, 1]} : vector<16x8x128xf32> to vector<1x8x128xf32>
    %662 = vector.shape_cast %661 : vector<1x8x128xf32> to vector<8x128xf32>
    %663 = arith.subf %662, %448 : vector<8x128xf32>
    %664 = math.exp %663 : vector<8x128xf32>
    %665 = arith.addf %651, %664 : vector<8x128xf32>
    %cst_162 = arith.constant 1.500000e+01 : f32
    %666 = vector.broadcast %cst_162 : f32 to vector<8x128xf32>
    %667 = arith.subf %666, %201 : vector<8x128xf32>
    %668 = math.absf %667 : vector<8x128xf32>
    %cst_163 = arith.constant 1.000000e+00 : f32
    %669 = vector.broadcast %cst_163 : f32 to vector<8x128xf32>
    %670 = arith.subf %669, %668 : vector<8x128xf32>
    %cst_164 = arith.constant 0.000000e+00 : f32
    %671 = vector.broadcast %cst_164 : f32 to vector<8x128xf32>
    %672 = arith.maximumf %670, %671 : vector<8x128xf32>
    %673 = arith.mulf %672, %662 : vector<8x128xf32>
    %674 = arith.addf %660, %673 : vector<8x128xf32>
    %675 = math.log %665 : vector<8x128xf32>
    %676 = arith.addf %448, %675 : vector<8x128xf32>
    %677 = arith.subf %676, %674 : vector<8x128xf32>
    %678 = arith.addf %445, %677 : vector<8x128xf32>
    %c32 = arith.constant 32 : index
    %c0_165 = arith.constant 0 : index
    %c0_166 = arith.constant 0 : index
    %679 = vector.load %arg2[%c32, %c0_165, %c0_166] : memref<64x24x128xbf16, #tpu.memory_space<vmem>>, vector<16x8x128xbf16>
    %680 = arith.extf %679 : vector<16x8x128xbf16> to vector<16x8x128xf32>
    %cst_167 = arith.constant dense<0xFF800000> : vector<8x128xf32>
    %681 = vector.multi_reduction <maximumf>, %680, %cst_167 [0] : vector<16x8x128xf32> to vector<8x128xf32>
    %cst_168 = arith.constant 0.000000e+00 : f32
    %682 = vector.broadcast %cst_168 : f32 to vector<8x128xf32>
    %cst_169 = arith.constant 0.000000e+00 : f32
    %683 = vector.broadcast %cst_169 : f32 to vector<8x128xf32>
    %684 = vector.extract_strided_slice %680 {offsets = [0, 0, 0], sizes = [1, 8, 128], strides = [1, 1, 1]} : vector<16x8x128xf32> to vector<1x8x128xf32>
    %685 = vector.shape_cast %684 : vector<1x8x128xf32> to vector<8x128xf32>
    %686 = arith.subf %685, %681 : vector<8x128xf32>
    %687 = math.exp %686 : vector<8x128xf32>
    %688 = arith.addf %682, %687 : vector<8x128xf32>
    %cst_170 = arith.constant 0.000000e+00 : f32
    %689 = vector.broadcast %cst_170 : f32 to vector<8x128xf32>
    %690 = arith.subf %689, %206 : vector<8x128xf32>
    %691 = math.absf %690 : vector<8x128xf32>
    %cst_171 = arith.constant 1.000000e+00 : f32
    %692 = vector.broadcast %cst_171 : f32 to vector<8x128xf32>
    %693 = arith.subf %692, %691 : vector<8x128xf32>
    %cst_172 = arith.constant 0.000000e+00 : f32
    %694 = vector.broadcast %cst_172 : f32 to vector<8x128xf32>
    %695 = arith.maximumf %693, %694 : vector<8x128xf32>
    %696 = arith.mulf %695, %685 : vector<8x128xf32>
    %697 = arith.addf %683, %696 : vector<8x128xf32>
    %698 = vector.extract_strided_slice %680 {offsets = [1, 0, 0], sizes = [1, 8, 128], strides = [1, 1, 1]} : vector<16x8x128xf32> to vector<1x8x128xf32>
    %699 = vector.shape_cast %698 : vector<1x8x128xf32> to vector<8x128xf32>
    %700 = arith.subf %699, %681 : vector<8x128xf32>
    %701 = math.exp %700 : vector<8x128xf32>
    %702 = arith.addf %688, %701 : vector<8x128xf32>
    %cst_173 = arith.constant 1.000000e+00 : f32
    %703 = vector.broadcast %cst_173 : f32 to vector<8x128xf32>
    %704 = arith.subf %703, %206 : vector<8x128xf32>
    %705 = math.absf %704 : vector<8x128xf32>
    %cst_174 = arith.constant 1.000000e+00 : f32
    %706 = vector.broadcast %cst_174 : f32 to vector<8x128xf32>
    %707 = arith.subf %706, %705 : vector<8x128xf32>
    %cst_175 = arith.constant 0.000000e+00 : f32
    %708 = vector.broadcast %cst_175 : f32 to vector<8x128xf32>
    %709 = arith.maximumf %707, %708 : vector<8x128xf32>
    %710 = arith.mulf %709, %699 : vector<8x128xf32>
    %711 = arith.addf %697, %710 : vector<8x128xf32>
    %712 = vector.extract_strided_slice %680 {offsets = [2, 0, 0], sizes = [1, 8, 128], strides = [1, 1, 1]} : vector<16x8x128xf32> to vector<1x8x128xf32>
    %713 = vector.shape_cast %712 : vector<1x8x128xf32> to vector<8x128xf32>
    %714 = arith.subf %713, %681 : vector<8x128xf32>
    %715 = math.exp %714 : vector<8x128xf32>
    %716 = arith.addf %702, %715 : vector<8x128xf32>
    %cst_176 = arith.constant 2.000000e+00 : f32
    %717 = vector.broadcast %cst_176 : f32 to vector<8x128xf32>
    %718 = arith.subf %717, %206 : vector<8x128xf32>
    %719 = math.absf %718 : vector<8x128xf32>
    %cst_177 = arith.constant 1.000000e+00 : f32
    %720 = vector.broadcast %cst_177 : f32 to vector<8x128xf32>
    %721 = arith.subf %720, %719 : vector<8x128xf32>
    %cst_178 = arith.constant 0.000000e+00 : f32
    %722 = vector.broadcast %cst_178 : f32 to vector<8x128xf32>
    %723 = arith.maximumf %721, %722 : vector<8x128xf32>
    %724 = arith.mulf %723, %713 : vector<8x128xf32>
    %725 = arith.addf %711, %724 : vector<8x128xf32>
    %726 = vector.extract_strided_slice %680 {offsets = [3, 0, 0], sizes = [1, 8, 128], strides = [1, 1, 1]} : vector<16x8x128xf32> to vector<1x8x128xf32>
    %727 = vector.shape_cast %726 : vector<1x8x128xf32> to vector<8x128xf32>
    %728 = arith.subf %727, %681 : vector<8x128xf32>
    %729 = math.exp %728 : vector<8x128xf32>
    %730 = arith.addf %716, %729 : vector<8x128xf32>
    %cst_179 = arith.constant 3.000000e+00 : f32
    %731 = vector.broadcast %cst_179 : f32 to vector<8x128xf32>
    %732 = arith.subf %731, %206 : vector<8x128xf32>
    %733 = math.absf %732 : vector<8x128xf32>
    %cst_180 = arith.constant 1.000000e+00 : f32
    %734 = vector.broadcast %cst_180 : f32 to vector<8x128xf32>
    %735 = arith.subf %734, %733 : vector<8x128xf32>
    %cst_181 = arith.constant 0.000000e+00 : f32
    %736 = vector.broadcast %cst_181 : f32 to vector<8x128xf32>
    %737 = arith.maximumf %735, %736 : vector<8x128xf32>
    %738 = arith.mulf %737, %727 : vector<8x128xf32>
    %739 = arith.addf %725, %738 : vector<8x128xf32>
    %740 = vector.extract_strided_slice %680 {offsets = [4, 0, 0], sizes = [1, 8, 128], strides = [1, 1, 1]} : vector<16x8x128xf32> to vector<1x8x128xf32>
    %741 = vector.shape_cast %740 : vector<1x8x128xf32> to vector<8x128xf32>
    %742 = arith.subf %741, %681 : vector<8x128xf32>
    %743 = math.exp %742 : vector<8x128xf32>
    %744 = arith.addf %730, %743 : vector<8x128xf32>
    %cst_182 = arith.constant 4.000000e+00 : f32
    %745 = vector.broadcast %cst_182 : f32 to vector<8x128xf32>
    %746 = arith.subf %745, %206 : vector<8x128xf32>
    %747 = math.absf %746 : vector<8x128xf32>
    %cst_183 = arith.constant 1.000000e+00 : f32
    %748 = vector.broadcast %cst_183 : f32 to vector<8x128xf32>
    %749 = arith.subf %748, %747 : vector<8x128xf32>
    %cst_184 = arith.constant 0.000000e+00 : f32
    %750 = vector.broadcast %cst_184 : f32 to vector<8x128xf32>
    %751 = arith.maximumf %749, %750 : vector<8x128xf32>
    %752 = arith.mulf %751, %741 : vector<8x128xf32>
    %753 = arith.addf %739, %752 : vector<8x128xf32>
    %754 = vector.extract_strided_slice %680 {offsets = [5, 0, 0], sizes = [1, 8, 128], strides = [1, 1, 1]} : vector<16x8x128xf32> to vector<1x8x128xf32>
    %755 = vector.shape_cast %754 : vector<1x8x128xf32> to vector<8x128xf32>
    %756 = arith.subf %755, %681 : vector<8x128xf32>
    %757 = math.exp %756 : vector<8x128xf32>
    %758 = arith.addf %744, %757 : vector<8x128xf32>
    %cst_185 = arith.constant 5.000000e+00 : f32
    %759 = vector.broadcast %cst_185 : f32 to vector<8x128xf32>
    %760 = arith.subf %759, %206 : vector<8x128xf32>
    %761 = math.absf %760 : vector<8x128xf32>
    %cst_186 = arith.constant 1.000000e+00 : f32
    %762 = vector.broadcast %cst_186 : f32 to vector<8x128xf32>
    %763 = arith.subf %762, %761 : vector<8x128xf32>
    %cst_187 = arith.constant 0.000000e+00 : f32
    %764 = vector.broadcast %cst_187 : f32 to vector<8x128xf32>
    %765 = arith.maximumf %763, %764 : vector<8x128xf32>
    %766 = arith.mulf %765, %755 : vector<8x128xf32>
    %767 = arith.addf %753, %766 : vector<8x128xf32>
    %768 = vector.extract_strided_slice %680 {offsets = [6, 0, 0], sizes = [1, 8, 128], strides = [1, 1, 1]} : vector<16x8x128xf32> to vector<1x8x128xf32>
    %769 = vector.shape_cast %768 : vector<1x8x128xf32> to vector<8x128xf32>
    %770 = arith.subf %769, %681 : vector<8x128xf32>
    %771 = math.exp %770 : vector<8x128xf32>
    %772 = arith.addf %758, %771 : vector<8x128xf32>
    %cst_188 = arith.constant 6.000000e+00 : f32
    %773 = vector.broadcast %cst_188 : f32 to vector<8x128xf32>
    %774 = arith.subf %773, %206 : vector<8x128xf32>
    %775 = math.absf %774 : vector<8x128xf32>
    %cst_189 = arith.constant 1.000000e+00 : f32
    %776 = vector.broadcast %cst_189 : f32 to vector<8x128xf32>
    %777 = arith.subf %776, %775 : vector<8x128xf32>
    %cst_190 = arith.constant 0.000000e+00 : f32
    %778 = vector.broadcast %cst_190 : f32 to vector<8x128xf32>
    %779 = arith.maximumf %777, %778 : vector<8x128xf32>
    %780 = arith.mulf %779, %769 : vector<8x128xf32>
    %781 = arith.addf %767, %780 : vector<8x128xf32>
    %782 = vector.extract_strided_slice %680 {offsets = [7, 0, 0], sizes = [1, 8, 128], strides = [1, 1, 1]} : vector<16x8x128xf32> to vector<1x8x128xf32>
    %783 = vector.shape_cast %782 : vector<1x8x128xf32> to vector<8x128xf32>
    %784 = arith.subf %783, %681 : vector<8x128xf32>
    %785 = math.exp %784 : vector<8x128xf32>
    %786 = arith.addf %772, %785 : vector<8x128xf32>
    %cst_191 = arith.constant 7.000000e+00 : f32
    %787 = vector.broadcast %cst_191 : f32 to vector<8x128xf32>
    %788 = arith.subf %787, %206 : vector<8x128xf32>
    %789 = math.absf %788 : vector<8x128xf32>
    %cst_192 = arith.constant 1.000000e+00 : f32
    %790 = vector.broadcast %cst_192 : f32 to vector<8x128xf32>
    %791 = arith.subf %790, %789 : vector<8x128xf32>
    %cst_193 = arith.constant 0.000000e+00 : f32
    %792 = vector.broadcast %cst_193 : f32 to vector<8x128xf32>
    %793 = arith.maximumf %791, %792 : vector<8x128xf32>
    %794 = arith.mulf %793, %783 : vector<8x128xf32>
    %795 = arith.addf %781, %794 : vector<8x128xf32>
    %796 = vector.extract_strided_slice %680 {offsets = [8, 0, 0], sizes = [1, 8, 128], strides = [1, 1, 1]} : vector<16x8x128xf32> to vector<1x8x128xf32>
    %797 = vector.shape_cast %796 : vector<1x8x128xf32> to vector<8x128xf32>
    %798 = arith.subf %797, %681 : vector<8x128xf32>
    %799 = math.exp %798 : vector<8x128xf32>
    %800 = arith.addf %786, %799 : vector<8x128xf32>
    %cst_194 = arith.constant 8.000000e+00 : f32
    %801 = vector.broadcast %cst_194 : f32 to vector<8x128xf32>
    %802 = arith.subf %801, %206 : vector<8x128xf32>
    %803 = math.absf %802 : vector<8x128xf32>
    %cst_195 = arith.constant 1.000000e+00 : f32
    %804 = vector.broadcast %cst_195 : f32 to vector<8x128xf32>
    %805 = arith.subf %804, %803 : vector<8x128xf32>
    %cst_196 = arith.constant 0.000000e+00 : f32
    %806 = vector.broadcast %cst_196 : f32 to vector<8x128xf32>
    %807 = arith.maximumf %805, %806 : vector<8x128xf32>
    %808 = arith.mulf %807, %797 : vector<8x128xf32>
    %809 = arith.addf %795, %808 : vector<8x128xf32>
    %810 = vector.extract_strided_slice %680 {offsets = [9, 0, 0], sizes = [1, 8, 128], strides = [1, 1, 1]} : vector<16x8x128xf32> to vector<1x8x128xf32>
    %811 = vector.shape_cast %810 : vector<1x8x128xf32> to vector<8x128xf32>
    %812 = arith.subf %811, %681 : vector<8x128xf32>
    %813 = math.exp %812 : vector<8x128xf32>
    %814 = arith.addf %800, %813 : vector<8x128xf32>
    %cst_197 = arith.constant 9.000000e+00 : f32
    %815 = vector.broadcast %cst_197 : f32 to vector<8x128xf32>
    %816 = arith.subf %815, %206 : vector<8x128xf32>
    %817 = math.absf %816 : vector<8x128xf32>
    %cst_198 = arith.constant 1.000000e+00 : f32
    %818 = vector.broadcast %cst_198 : f32 to vector<8x128xf32>
    %819 = arith.subf %818, %817 : vector<8x128xf32>
    %cst_199 = arith.constant 0.000000e+00 : f32
    %820 = vector.broadcast %cst_199 : f32 to vector<8x128xf32>
    %821 = arith.maximumf %819, %820 : vector<8x128xf32>
    %822 = arith.mulf %821, %811 : vector<8x128xf32>
    %823 = arith.addf %809, %822 : vector<8x128xf32>
    %824 = vector.extract_strided_slice %680 {offsets = [10, 0, 0], sizes = [1, 8, 128], strides = [1, 1, 1]} : vector<16x8x128xf32> to vector<1x8x128xf32>
    %825 = vector.shape_cast %824 : vector<1x8x128xf32> to vector<8x128xf32>
    %826 = arith.subf %825, %681 : vector<8x128xf32>
    %827 = math.exp %826 : vector<8x128xf32>
    %828 = arith.addf %814, %827 : vector<8x128xf32>
    %cst_200 = arith.constant 1.000000e+01 : f32
    %829 = vector.broadcast %cst_200 : f32 to vector<8x128xf32>
    %830 = arith.subf %829, %206 : vector<8x128xf32>
    %831 = math.absf %830 : vector<8x128xf32>
    %cst_201 = arith.constant 1.000000e+00 : f32
    %832 = vector.broadcast %cst_201 : f32 to vector<8x128xf32>
    %833 = arith.subf %832, %831 : vector<8x128xf32>
    %cst_202 = arith.constant 0.000000e+00 : f32
    %834 = vector.broadcast %cst_202 : f32 to vector<8x128xf32>
    %835 = arith.maximumf %833, %834 : vector<8x128xf32>
    %836 = arith.mulf %835, %825 : vector<8x128xf32>
    %837 = arith.addf %823, %836 : vector<8x128xf32>
    %838 = vector.extract_strided_slice %680 {offsets = [11, 0, 0], sizes = [1, 8, 128], strides = [1, 1, 1]} : vector<16x8x128xf32> to vector<1x8x128xf32>
    %839 = vector.shape_cast %838 : vector<1x8x128xf32> to vector<8x128xf32>
    %840 = arith.subf %839, %681 : vector<8x128xf32>
    %841 = math.exp %840 : vector<8x128xf32>
    %842 = arith.addf %828, %841 : vector<8x128xf32>
    %cst_203 = arith.constant 1.100000e+01 : f32
    %843 = vector.broadcast %cst_203 : f32 to vector<8x128xf32>
    %844 = arith.subf %843, %206 : vector<8x128xf32>
    %845 = math.absf %844 : vector<8x128xf32>
    %cst_204 = arith.constant 1.000000e+00 : f32
    %846 = vector.broadcast %cst_204 : f32 to vector<8x128xf32>
    %847 = arith.subf %846, %845 : vector<8x128xf32>
    %cst_205 = arith.constant 0.000000e+00 : f32
    %848 = vector.broadcast %cst_205 : f32 to vector<8x128xf32>
    %849 = arith.maximumf %847, %848 : vector<8x128xf32>
    %850 = arith.mulf %849, %839 : vector<8x128xf32>
    %851 = arith.addf %837, %850 : vector<8x128xf32>
    %852 = vector.extract_strided_slice %680 {offsets = [12, 0, 0], sizes = [1, 8, 128], strides = [1, 1, 1]} : vector<16x8x128xf32> to vector<1x8x128xf32>
    %853 = vector.shape_cast %852 : vector<1x8x128xf32> to vector<8x128xf32>
    %854 = arith.subf %853, %681 : vector<8x128xf32>
    %855 = math.exp %854 : vector<8x128xf32>
    %856 = arith.addf %842, %855 : vector<8x128xf32>
    %cst_206 = arith.constant 1.200000e+01 : f32
    %857 = vector.broadcast %cst_206 : f32 to vector<8x128xf32>
    %858 = arith.subf %857, %206 : vector<8x128xf32>
    %859 = math.absf %858 : vector<8x128xf32>
    %cst_207 = arith.constant 1.000000e+00 : f32
    %860 = vector.broadcast %cst_207 : f32 to vector<8x128xf32>
    %861 = arith.subf %860, %859 : vector<8x128xf32>
    %cst_208 = arith.constant 0.000000e+00 : f32
    %862 = vector.broadcast %cst_208 : f32 to vector<8x128xf32>
    %863 = arith.maximumf %861, %862 : vector<8x128xf32>
    %864 = arith.mulf %863, %853 : vector<8x128xf32>
    %865 = arith.addf %851, %864 : vector<8x128xf32>
    %866 = vector.extract_strided_slice %680 {offsets = [13, 0, 0], sizes = [1, 8, 128], strides = [1, 1, 1]} : vector<16x8x128xf32> to vector<1x8x128xf32>
    %867 = vector.shape_cast %866 : vector<1x8x128xf32> to vector<8x128xf32>
    %868 = arith.subf %867, %681 : vector<8x128xf32>
    %869 = math.exp %868 : vector<8x128xf32>
    %870 = arith.addf %856, %869 : vector<8x128xf32>
    %cst_209 = arith.constant 1.300000e+01 : f32
    %871 = vector.broadcast %cst_209 : f32 to vector<8x128xf32>
    %872 = arith.subf %871, %206 : vector<8x128xf32>
    %873 = math.absf %872 : vector<8x128xf32>
    %cst_210 = arith.constant 1.000000e+00 : f32
    %874 = vector.broadcast %cst_210 : f32 to vector<8x128xf32>
    %875 = arith.subf %874, %873 : vector<8x128xf32>
    %cst_211 = arith.constant 0.000000e+00 : f32
    %876 = vector.broadcast %cst_211 : f32 to vector<8x128xf32>
    %877 = arith.maximumf %875, %876 : vector<8x128xf32>
    %878 = arith.mulf %877, %867 : vector<8x128xf32>
    %879 = arith.addf %865, %878 : vector<8x128xf32>
    %880 = vector.extract_strided_slice %680 {offsets = [14, 0, 0], sizes = [1, 8, 128], strides = [1, 1, 1]} : vector<16x8x128xf32> to vector<1x8x128xf32>
    %881 = vector.shape_cast %880 : vector<1x8x128xf32> to vector<8x128xf32>
    %882 = arith.subf %881, %681 : vector<8x128xf32>
    %883 = math.exp %882 : vector<8x128xf32>
    %884 = arith.addf %870, %883 : vector<8x128xf32>
    %cst_212 = arith.constant 1.400000e+01 : f32
    %885 = vector.broadcast %cst_212 : f32 to vector<8x128xf32>
    %886 = arith.subf %885, %206 : vector<8x128xf32>
    %887 = math.absf %886 : vector<8x128xf32>
    %cst_213 = arith.constant 1.000000e+00 : f32
    %888 = vector.broadcast %cst_213 : f32 to vector<8x128xf32>
    %889 = arith.subf %888, %887 : vector<8x128xf32>
    %cst_214 = arith.constant 0.000000e+00 : f32
    %890 = vector.broadcast %cst_214 : f32 to vector<8x128xf32>
    %891 = arith.maximumf %889, %890 : vector<8x128xf32>
    %892 = arith.mulf %891, %881 : vector<8x128xf32>
    %893 = arith.addf %879, %892 : vector<8x128xf32>
    %894 = vector.extract_strided_slice %680 {offsets = [15, 0, 0], sizes = [1, 8, 128], strides = [1, 1, 1]} : vector<16x8x128xf32> to vector<1x8x128xf32>
    %895 = vector.shape_cast %894 : vector<1x8x128xf32> to vector<8x128xf32>
    %896 = arith.subf %895, %681 : vector<8x128xf32>
    %897 = math.exp %896 : vector<8x128xf32>
    %898 = arith.addf %884, %897 : vector<8x128xf32>
    %cst_215 = arith.constant 1.500000e+01 : f32
    %899 = vector.broadcast %cst_215 : f32 to vector<8x128xf32>
    %900 = arith.subf %899, %206 : vector<8x128xf32>
    %901 = math.absf %900 : vector<8x128xf32>
    %cst_216 = arith.constant 1.000000e+00 : f32
    %902 = vector.broadcast %cst_216 : f32 to vector<8x128xf32>
    %903 = arith.subf %902, %901 : vector<8x128xf32>
    %cst_217 = arith.constant 0.000000e+00 : f32
    %904 = vector.broadcast %cst_217 : f32 to vector<8x128xf32>
    %905 = arith.maximumf %903, %904 : vector<8x128xf32>
    %906 = arith.mulf %905, %895 : vector<8x128xf32>
    %907 = arith.addf %893, %906 : vector<8x128xf32>
    %908 = math.log %898 : vector<8x128xf32>
    %909 = arith.addf %681, %908 : vector<8x128xf32>
    %910 = arith.subf %909, %907 : vector<8x128xf32>
    %911 = arith.addf %678, %910 : vector<8x128xf32>
    %c48 = arith.constant 48 : index
    %c0_218 = arith.constant 0 : index
    %c0_219 = arith.constant 0 : index
    %912 = vector.load %arg2[%c48, %c0_218, %c0_219] : memref<64x24x128xbf16, #tpu.memory_space<vmem>>, vector<16x8x128xbf16>
    %913 = arith.extf %912 : vector<16x8x128xbf16> to vector<16x8x128xf32>
    %cst_220 = arith.constant dense<0xFF800000> : vector<8x128xf32>
    %914 = vector.multi_reduction <maximumf>, %913, %cst_220 [0] : vector<16x8x128xf32> to vector<8x128xf32>
    %cst_221 = arith.constant 0.000000e+00 : f32
    %915 = vector.broadcast %cst_221 : f32 to vector<8x128xf32>
    %cst_222 = arith.constant 0.000000e+00 : f32
    %916 = vector.broadcast %cst_222 : f32 to vector<8x128xf32>
    %917 = vector.extract_strided_slice %913 {offsets = [0, 0, 0], sizes = [1, 8, 128], strides = [1, 1, 1]} : vector<16x8x128xf32> to vector<1x8x128xf32>
    %918 = vector.shape_cast %917 : vector<1x8x128xf32> to vector<8x128xf32>
    %919 = arith.subf %918, %914 : vector<8x128xf32>
    %920 = math.exp %919 : vector<8x128xf32>
    %921 = arith.addf %915, %920 : vector<8x128xf32>
    %cst_223 = arith.constant 0.000000e+00 : f32
    %922 = vector.broadcast %cst_223 : f32 to vector<8x128xf32>
    %923 = arith.subf %922, %211 : vector<8x128xf32>
    %924 = math.absf %923 : vector<8x128xf32>
    %cst_224 = arith.constant 1.000000e+00 : f32
    %925 = vector.broadcast %cst_224 : f32 to vector<8x128xf32>
    %926 = arith.subf %925, %924 : vector<8x128xf32>
    %cst_225 = arith.constant 0.000000e+00 : f32
    %927 = vector.broadcast %cst_225 : f32 to vector<8x128xf32>
    %928 = arith.maximumf %926, %927 : vector<8x128xf32>
    %929 = arith.mulf %928, %918 : vector<8x128xf32>
    %930 = arith.addf %916, %929 : vector<8x128xf32>
    %931 = vector.extract_strided_slice %913 {offsets = [1, 0, 0], sizes = [1, 8, 128], strides = [1, 1, 1]} : vector<16x8x128xf32> to vector<1x8x128xf32>
    %932 = vector.shape_cast %931 : vector<1x8x128xf32> to vector<8x128xf32>
    %933 = arith.subf %932, %914 : vector<8x128xf32>
    %934 = math.exp %933 : vector<8x128xf32>
    %935 = arith.addf %921, %934 : vector<8x128xf32>
    %cst_226 = arith.constant 1.000000e+00 : f32
    %936 = vector.broadcast %cst_226 : f32 to vector<8x128xf32>
    %937 = arith.subf %936, %211 : vector<8x128xf32>
    %938 = math.absf %937 : vector<8x128xf32>
    %cst_227 = arith.constant 1.000000e+00 : f32
    %939 = vector.broadcast %cst_227 : f32 to vector<8x128xf32>
    %940 = arith.subf %939, %938 : vector<8x128xf32>
    %cst_228 = arith.constant 0.000000e+00 : f32
    %941 = vector.broadcast %cst_228 : f32 to vector<8x128xf32>
    %942 = arith.maximumf %940, %941 : vector<8x128xf32>
    %943 = arith.mulf %942, %932 : vector<8x128xf32>
    %944 = arith.addf %930, %943 : vector<8x128xf32>
    %945 = vector.extract_strided_slice %913 {offsets = [2, 0, 0], sizes = [1, 8, 128], strides = [1, 1, 1]} : vector<16x8x128xf32> to vector<1x8x128xf32>
    %946 = vector.shape_cast %945 : vector<1x8x128xf32> to vector<8x128xf32>
    %947 = arith.subf %946, %914 : vector<8x128xf32>
    %948 = math.exp %947 : vector<8x128xf32>
    %949 = arith.addf %935, %948 : vector<8x128xf32>
    %cst_229 = arith.constant 2.000000e+00 : f32
    %950 = vector.broadcast %cst_229 : f32 to vector<8x128xf32>
    %951 = arith.subf %950, %211 : vector<8x128xf32>
    %952 = math.absf %951 : vector<8x128xf32>
    %cst_230 = arith.constant 1.000000e+00 : f32
    %953 = vector.broadcast %cst_230 : f32 to vector<8x128xf32>
    %954 = arith.subf %953, %952 : vector<8x128xf32>
    %cst_231 = arith.constant 0.000000e+00 : f32
    %955 = vector.broadcast %cst_231 : f32 to vector<8x128xf32>
    %956 = arith.maximumf %954, %955 : vector<8x128xf32>
    %957 = arith.mulf %956, %946 : vector<8x128xf32>
    %958 = arith.addf %944, %957 : vector<8x128xf32>
    %959 = vector.extract_strided_slice %913 {offsets = [3, 0, 0], sizes = [1, 8, 128], strides = [1, 1, 1]} : vector<16x8x128xf32> to vector<1x8x128xf32>
    %960 = vector.shape_cast %959 : vector<1x8x128xf32> to vector<8x128xf32>
    %961 = arith.subf %960, %914 : vector<8x128xf32>
    %962 = math.exp %961 : vector<8x128xf32>
    %963 = arith.addf %949, %962 : vector<8x128xf32>
    %cst_232 = arith.constant 3.000000e+00 : f32
    %964 = vector.broadcast %cst_232 : f32 to vector<8x128xf32>
    %965 = arith.subf %964, %211 : vector<8x128xf32>
    %966 = math.absf %965 : vector<8x128xf32>
    %cst_233 = arith.constant 1.000000e+00 : f32
    %967 = vector.broadcast %cst_233 : f32 to vector<8x128xf32>
    %968 = arith.subf %967, %966 : vector<8x128xf32>
    %cst_234 = arith.constant 0.000000e+00 : f32
    %969 = vector.broadcast %cst_234 : f32 to vector<8x128xf32>
    %970 = arith.maximumf %968, %969 : vector<8x128xf32>
    %971 = arith.mulf %970, %960 : vector<8x128xf32>
    %972 = arith.addf %958, %971 : vector<8x128xf32>
    %973 = vector.extract_strided_slice %913 {offsets = [4, 0, 0], sizes = [1, 8, 128], strides = [1, 1, 1]} : vector<16x8x128xf32> to vector<1x8x128xf32>
    %974 = vector.shape_cast %973 : vector<1x8x128xf32> to vector<8x128xf32>
    %975 = arith.subf %974, %914 : vector<8x128xf32>
    %976 = math.exp %975 : vector<8x128xf32>
    %977 = arith.addf %963, %976 : vector<8x128xf32>
    %cst_235 = arith.constant 4.000000e+00 : f32
    %978 = vector.broadcast %cst_235 : f32 to vector<8x128xf32>
    %979 = arith.subf %978, %211 : vector<8x128xf32>
    %980 = math.absf %979 : vector<8x128xf32>
    %cst_236 = arith.constant 1.000000e+00 : f32
    %981 = vector.broadcast %cst_236 : f32 to vector<8x128xf32>
    %982 = arith.subf %981, %980 : vector<8x128xf32>
    %cst_237 = arith.constant 0.000000e+00 : f32
    %983 = vector.broadcast %cst_237 : f32 to vector<8x128xf32>
    %984 = arith.maximumf %982, %983 : vector<8x128xf32>
    %985 = arith.mulf %984, %974 : vector<8x128xf32>
    %986 = arith.addf %972, %985 : vector<8x128xf32>
    %987 = vector.extract_strided_slice %913 {offsets = [5, 0, 0], sizes = [1, 8, 128], strides = [1, 1, 1]} : vector<16x8x128xf32> to vector<1x8x128xf32>
    %988 = vector.shape_cast %987 : vector<1x8x128xf32> to vector<8x128xf32>
    %989 = arith.subf %988, %914 : vector<8x128xf32>
    %990 = math.exp %989 : vector<8x128xf32>
    %991 = arith.addf %977, %990 : vector<8x128xf32>
    %cst_238 = arith.constant 5.000000e+00 : f32
    %992 = vector.broadcast %cst_238 : f32 to vector<8x128xf32>
    %993 = arith.subf %992, %211 : vector<8x128xf32>
    %994 = math.absf %993 : vector<8x128xf32>
    %cst_239 = arith.constant 1.000000e+00 : f32
    %995 = vector.broadcast %cst_239 : f32 to vector<8x128xf32>
    %996 = arith.subf %995, %994 : vector<8x128xf32>
    %cst_240 = arith.constant 0.000000e+00 : f32
    %997 = vector.broadcast %cst_240 : f32 to vector<8x128xf32>
    %998 = arith.maximumf %996, %997 : vector<8x128xf32>
    %999 = arith.mulf %998, %988 : vector<8x128xf32>
    %1000 = arith.addf %986, %999 : vector<8x128xf32>
    %1001 = vector.extract_strided_slice %913 {offsets = [6, 0, 0], sizes = [1, 8, 128], strides = [1, 1, 1]} : vector<16x8x128xf32> to vector<1x8x128xf32>
    %1002 = vector.shape_cast %1001 : vector<1x8x128xf32> to vector<8x128xf32>
    %1003 = arith.subf %1002, %914 : vector<8x128xf32>
    %1004 = math.exp %1003 : vector<8x128xf32>
    %1005 = arith.addf %991, %1004 : vector<8x128xf32>
    %cst_241 = arith.constant 6.000000e+00 : f32
    %1006 = vector.broadcast %cst_241 : f32 to vector<8x128xf32>
    %1007 = arith.subf %1006, %211 : vector<8x128xf32>
    %1008 = math.absf %1007 : vector<8x128xf32>
    %cst_242 = arith.constant 1.000000e+00 : f32
    %1009 = vector.broadcast %cst_242 : f32 to vector<8x128xf32>
    %1010 = arith.subf %1009, %1008 : vector<8x128xf32>
    %cst_243 = arith.constant 0.000000e+00 : f32
    %1011 = vector.broadcast %cst_243 : f32 to vector<8x128xf32>
    %1012 = arith.maximumf %1010, %1011 : vector<8x128xf32>
    %1013 = arith.mulf %1012, %1002 : vector<8x128xf32>
    %1014 = arith.addf %1000, %1013 : vector<8x128xf32>
    %1015 = vector.extract_strided_slice %913 {offsets = [7, 0, 0], sizes = [1, 8, 128], strides = [1, 1, 1]} : vector<16x8x128xf32> to vector<1x8x128xf32>
    %1016 = vector.shape_cast %1015 : vector<1x8x128xf32> to vector<8x128xf32>
    %1017 = arith.subf %1016, %914 : vector<8x128xf32>
    %1018 = math.exp %1017 : vector<8x128xf32>
    %1019 = arith.addf %1005, %1018 : vector<8x128xf32>
    %cst_244 = arith.constant 7.000000e+00 : f32
    %1020 = vector.broadcast %cst_244 : f32 to vector<8x128xf32>
    %1021 = arith.subf %1020, %211 : vector<8x128xf32>
    %1022 = math.absf %1021 : vector<8x128xf32>
    %cst_245 = arith.constant 1.000000e+00 : f32
    %1023 = vector.broadcast %cst_245 : f32 to vector<8x128xf32>
    %1024 = arith.subf %1023, %1022 : vector<8x128xf32>
    %cst_246 = arith.constant 0.000000e+00 : f32
    %1025 = vector.broadcast %cst_246 : f32 to vector<8x128xf32>
    %1026 = arith.maximumf %1024, %1025 : vector<8x128xf32>
    %1027 = arith.mulf %1026, %1016 : vector<8x128xf32>
    %1028 = arith.addf %1014, %1027 : vector<8x128xf32>
    %1029 = vector.extract_strided_slice %913 {offsets = [8, 0, 0], sizes = [1, 8, 128], strides = [1, 1, 1]} : vector<16x8x128xf32> to vector<1x8x128xf32>
    %1030 = vector.shape_cast %1029 : vector<1x8x128xf32> to vector<8x128xf32>
    %1031 = arith.subf %1030, %914 : vector<8x128xf32>
    %1032 = math.exp %1031 : vector<8x128xf32>
    %1033 = arith.addf %1019, %1032 : vector<8x128xf32>
    %cst_247 = arith.constant 8.000000e+00 : f32
    %1034 = vector.broadcast %cst_247 : f32 to vector<8x128xf32>
    %1035 = arith.subf %1034, %211 : vector<8x128xf32>
    %1036 = math.absf %1035 : vector<8x128xf32>
    %cst_248 = arith.constant 1.000000e+00 : f32
    %1037 = vector.broadcast %cst_248 : f32 to vector<8x128xf32>
    %1038 = arith.subf %1037, %1036 : vector<8x128xf32>
    %cst_249 = arith.constant 0.000000e+00 : f32
    %1039 = vector.broadcast %cst_249 : f32 to vector<8x128xf32>
    %1040 = arith.maximumf %1038, %1039 : vector<8x128xf32>
    %1041 = arith.mulf %1040, %1030 : vector<8x128xf32>
    %1042 = arith.addf %1028, %1041 : vector<8x128xf32>
    %1043 = vector.extract_strided_slice %913 {offsets = [9, 0, 0], sizes = [1, 8, 128], strides = [1, 1, 1]} : vector<16x8x128xf32> to vector<1x8x128xf32>
    %1044 = vector.shape_cast %1043 : vector<1x8x128xf32> to vector<8x128xf32>
    %1045 = arith.subf %1044, %914 : vector<8x128xf32>
    %1046 = math.exp %1045 : vector<8x128xf32>
    %1047 = arith.addf %1033, %1046 : vector<8x128xf32>
    %cst_250 = arith.constant 9.000000e+00 : f32
    %1048 = vector.broadcast %cst_250 : f32 to vector<8x128xf32>
    %1049 = arith.subf %1048, %211 : vector<8x128xf32>
    %1050 = math.absf %1049 : vector<8x128xf32>
    %cst_251 = arith.constant 1.000000e+00 : f32
    %1051 = vector.broadcast %cst_251 : f32 to vector<8x128xf32>
    %1052 = arith.subf %1051, %1050 : vector<8x128xf32>
    %cst_252 = arith.constant 0.000000e+00 : f32
    %1053 = vector.broadcast %cst_252 : f32 to vector<8x128xf32>
    %1054 = arith.maximumf %1052, %1053 : vector<8x128xf32>
    %1055 = arith.mulf %1054, %1044 : vector<8x128xf32>
    %1056 = arith.addf %1042, %1055 : vector<8x128xf32>
    %1057 = vector.extract_strided_slice %913 {offsets = [10, 0, 0], sizes = [1, 8, 128], strides = [1, 1, 1]} : vector<16x8x128xf32> to vector<1x8x128xf32>
    %1058 = vector.shape_cast %1057 : vector<1x8x128xf32> to vector<8x128xf32>
    %1059 = arith.subf %1058, %914 : vector<8x128xf32>
    %1060 = math.exp %1059 : vector<8x128xf32>
    %1061 = arith.addf %1047, %1060 : vector<8x128xf32>
    %cst_253 = arith.constant 1.000000e+01 : f32
    %1062 = vector.broadcast %cst_253 : f32 to vector<8x128xf32>
    %1063 = arith.subf %1062, %211 : vector<8x128xf32>
    %1064 = math.absf %1063 : vector<8x128xf32>
    %cst_254 = arith.constant 1.000000e+00 : f32
    %1065 = vector.broadcast %cst_254 : f32 to vector<8x128xf32>
    %1066 = arith.subf %1065, %1064 : vector<8x128xf32>
    %cst_255 = arith.constant 0.000000e+00 : f32
    %1067 = vector.broadcast %cst_255 : f32 to vector<8x128xf32>
    %1068 = arith.maximumf %1066, %1067 : vector<8x128xf32>
    %1069 = arith.mulf %1068, %1058 : vector<8x128xf32>
    %1070 = arith.addf %1056, %1069 : vector<8x128xf32>
    %1071 = vector.extract_strided_slice %913 {offsets = [11, 0, 0], sizes = [1, 8, 128], strides = [1, 1, 1]} : vector<16x8x128xf32> to vector<1x8x128xf32>
    %1072 = vector.shape_cast %1071 : vector<1x8x128xf32> to vector<8x128xf32>
    %1073 = arith.subf %1072, %914 : vector<8x128xf32>
    %1074 = math.exp %1073 : vector<8x128xf32>
    %1075 = arith.addf %1061, %1074 : vector<8x128xf32>
    %cst_256 = arith.constant 1.100000e+01 : f32
    %1076 = vector.broadcast %cst_256 : f32 to vector<8x128xf32>
    %1077 = arith.subf %1076, %211 : vector<8x128xf32>
    %1078 = math.absf %1077 : vector<8x128xf32>
    %cst_257 = arith.constant 1.000000e+00 : f32
    %1079 = vector.broadcast %cst_257 : f32 to vector<8x128xf32>
    %1080 = arith.subf %1079, %1078 : vector<8x128xf32>
    %cst_258 = arith.constant 0.000000e+00 : f32
    %1081 = vector.broadcast %cst_258 : f32 to vector<8x128xf32>
    %1082 = arith.maximumf %1080, %1081 : vector<8x128xf32>
    %1083 = arith.mulf %1082, %1072 : vector<8x128xf32>
    %1084 = arith.addf %1070, %1083 : vector<8x128xf32>
    %1085 = vector.extract_strided_slice %913 {offsets = [12, 0, 0], sizes = [1, 8, 128], strides = [1, 1, 1]} : vector<16x8x128xf32> to vector<1x8x128xf32>
    %1086 = vector.shape_cast %1085 : vector<1x8x128xf32> to vector<8x128xf32>
    %1087 = arith.subf %1086, %914 : vector<8x128xf32>
    %1088 = math.exp %1087 : vector<8x128xf32>
    %1089 = arith.addf %1075, %1088 : vector<8x128xf32>
    %cst_259 = arith.constant 1.200000e+01 : f32
    %1090 = vector.broadcast %cst_259 : f32 to vector<8x128xf32>
    %1091 = arith.subf %1090, %211 : vector<8x128xf32>
    %1092 = math.absf %1091 : vector<8x128xf32>
    %cst_260 = arith.constant 1.000000e+00 : f32
    %1093 = vector.broadcast %cst_260 : f32 to vector<8x128xf32>
    %1094 = arith.subf %1093, %1092 : vector<8x128xf32>
    %cst_261 = arith.constant 0.000000e+00 : f32
    %1095 = vector.broadcast %cst_261 : f32 to vector<8x128xf32>
    %1096 = arith.maximumf %1094, %1095 : vector<8x128xf32>
    %1097 = arith.mulf %1096, %1086 : vector<8x128xf32>
    %1098 = arith.addf %1084, %1097 : vector<8x128xf32>
    %1099 = vector.extract_strided_slice %913 {offsets = [13, 0, 0], sizes = [1, 8, 128], strides = [1, 1, 1]} : vector<16x8x128xf32> to vector<1x8x128xf32>
    %1100 = vector.shape_cast %1099 : vector<1x8x128xf32> to vector<8x128xf32>
    %1101 = arith.subf %1100, %914 : vector<8x128xf32>
    %1102 = math.exp %1101 : vector<8x128xf32>
    %1103 = arith.addf %1089, %1102 : vector<8x128xf32>
    %cst_262 = arith.constant 1.300000e+01 : f32
    %1104 = vector.broadcast %cst_262 : f32 to vector<8x128xf32>
    %1105 = arith.subf %1104, %211 : vector<8x128xf32>
    %1106 = math.absf %1105 : vector<8x128xf32>
    %cst_263 = arith.constant 1.000000e+00 : f32
    %1107 = vector.broadcast %cst_263 : f32 to vector<8x128xf32>
    %1108 = arith.subf %1107, %1106 : vector<8x128xf32>
    %cst_264 = arith.constant 0.000000e+00 : f32
    %1109 = vector.broadcast %cst_264 : f32 to vector<8x128xf32>
    %1110 = arith.maximumf %1108, %1109 : vector<8x128xf32>
    %1111 = arith.mulf %1110, %1100 : vector<8x128xf32>
    %1112 = arith.addf %1098, %1111 : vector<8x128xf32>
    %1113 = vector.extract_strided_slice %913 {offsets = [14, 0, 0], sizes = [1, 8, 128], strides = [1, 1, 1]} : vector<16x8x128xf32> to vector<1x8x128xf32>
    %1114 = vector.shape_cast %1113 : vector<1x8x128xf32> to vector<8x128xf32>
    %1115 = arith.subf %1114, %914 : vector<8x128xf32>
    %1116 = math.exp %1115 : vector<8x128xf32>
    %1117 = arith.addf %1103, %1116 : vector<8x128xf32>
    %cst_265 = arith.constant 1.400000e+01 : f32
    %1118 = vector.broadcast %cst_265 : f32 to vector<8x128xf32>
    %1119 = arith.subf %1118, %211 : vector<8x128xf32>
    %1120 = math.absf %1119 : vector<8x128xf32>
    %cst_266 = arith.constant 1.000000e+00 : f32
    %1121 = vector.broadcast %cst_266 : f32 to vector<8x128xf32>
    %1122 = arith.subf %1121, %1120 : vector<8x128xf32>
    %cst_267 = arith.constant 0.000000e+00 : f32
    %1123 = vector.broadcast %cst_267 : f32 to vector<8x128xf32>
    %1124 = arith.maximumf %1122, %1123 : vector<8x128xf32>
    %1125 = arith.mulf %1124, %1114 : vector<8x128xf32>
    %1126 = arith.addf %1112, %1125 : vector<8x128xf32>
    %1127 = vector.extract_strided_slice %913 {offsets = [15, 0, 0], sizes = [1, 8, 128], strides = [1, 1, 1]} : vector<16x8x128xf32> to vector<1x8x128xf32>
    %1128 = vector.shape_cast %1127 : vector<1x8x128xf32> to vector<8x128xf32>
    %1129 = arith.subf %1128, %914 : vector<8x128xf32>
    %1130 = math.exp %1129 : vector<8x128xf32>
    %1131 = arith.addf %1117, %1130 : vector<8x128xf32>
    %cst_268 = arith.constant 1.500000e+01 : f32
    %1132 = vector.broadcast %cst_268 : f32 to vector<8x128xf32>
    %1133 = arith.subf %1132, %211 : vector<8x128xf32>
    %1134 = math.absf %1133 : vector<8x128xf32>
    %cst_269 = arith.constant 1.000000e+00 : f32
    %1135 = vector.broadcast %cst_269 : f32 to vector<8x128xf32>
    %1136 = arith.subf %1135, %1134 : vector<8x128xf32>
    %cst_270 = arith.constant 0.000000e+00 : f32
    %1137 = vector.broadcast %cst_270 : f32 to vector<8x128xf32>
    %1138 = arith.maximumf %1136, %1137 : vector<8x128xf32>
    %1139 = arith.mulf %1138, %1128 : vector<8x128xf32>
    %1140 = arith.addf %1126, %1139 : vector<8x128xf32>
    %1141 = math.log %1131 : vector<8x128xf32>
    %1142 = arith.addf %914, %1141 : vector<8x128xf32>
    %1143 = arith.subf %1142, %1140 : vector<8x128xf32>
    %1144 = arith.addf %911, %1143 : vector<8x128xf32>
    %cst_271 = arith.constant 0.000000e+00 : f32
    %1145 = vector.broadcast %cst_271 : f32 to vector<8x128xf32>
    %1146 = arith.cmpf ogt, %26, %1145 : vector<8x128xf32>
    %cst_272 = arith.constant 2.500000e-01 : f32
    %1147 = vector.broadcast %cst_272 : f32 to vector<8x128xf32>
    %1148 = arith.mulf %1147, %24 : vector<8x128xf32>
    %1149 = arith.mulf %1144, %1148 : vector<8x128xf32>
    %cst_273 = arith.constant 0.000000e+00 : f32
    %1150 = vector.broadcast %cst_273 : f32 to vector<8x128xf32>
    %1151 = arith.select %1146, %1149, %1150 : vector<8x128xi1>, vector<8x128xf32>
    %1152 = arith.addf %1, %1151 : vector<8x128xf32>
    %c0_274 = arith.constant 0 : index
    %c8 = arith.constant 8 : index
    %c0_275 = arith.constant 0 : index
    %1153 = vector.load %arg1[%c0_274, %c8, %c0_275] : memref<12x24x128xf32, #tpu.memory_space<vmem>>, vector<12x8x128xf32>
    %1154 = vector.extract_strided_slice %1153 {offsets = [0, 0, 0], sizes = [1, 8, 128], strides = [1, 1, 1]} : vector<12x8x128xf32> to vector<1x8x128xf32>
    %1155 = vector.shape_cast %1154 : vector<1x8x128xf32> to vector<8x128xf32>
    %1156 = vector.extract_strided_slice %1153 {offsets = [1, 0, 0], sizes = [1, 8, 128], strides = [1, 1, 1]} : vector<12x8x128xf32> to vector<1x8x128xf32>
    %1157 = vector.shape_cast %1156 : vector<1x8x128xf32> to vector<8x128xf32>
    %1158 = vector.extract_strided_slice %1153 {offsets = [2, 0, 0], sizes = [1, 8, 128], strides = [1, 1, 1]} : vector<12x8x128xf32> to vector<1x8x128xf32>
    %1159 = vector.shape_cast %1158 : vector<1x8x128xf32> to vector<8x128xf32>
    %1160 = vector.extract_strided_slice %1153 {offsets = [3, 0, 0], sizes = [1, 8, 128], strides = [1, 1, 1]} : vector<12x8x128xf32> to vector<1x8x128xf32>
    %1161 = vector.shape_cast %1160 : vector<1x8x128xf32> to vector<8x128xf32>
    %1162 = vector.extract_strided_slice %1153 {offsets = [4, 0, 0], sizes = [1, 8, 128], strides = [1, 1, 1]} : vector<12x8x128xf32> to vector<1x8x128xf32>
    %1163 = vector.shape_cast %1162 : vector<1x8x128xf32> to vector<8x128xf32>
    %1164 = vector.extract_strided_slice %1153 {offsets = [5, 0, 0], sizes = [1, 8, 128], strides = [1, 1, 1]} : vector<12x8x128xf32> to vector<1x8x128xf32>
    %1165 = vector.shape_cast %1164 : vector<1x8x128xf32> to vector<8x128xf32>
    %1166 = vector.extract_strided_slice %1153 {offsets = [6, 0, 0], sizes = [1, 8, 128], strides = [1, 1, 1]} : vector<12x8x128xf32> to vector<1x8x128xf32>
    %1167 = vector.shape_cast %1166 : vector<1x8x128xf32> to vector<8x128xf32>
    %1168 = vector.extract_strided_slice %1153 {offsets = [7, 0, 0], sizes = [1, 8, 128], strides = [1, 1, 1]} : vector<12x8x128xf32> to vector<1x8x128xf32>
    %1169 = vector.shape_cast %1168 : vector<1x8x128xf32> to vector<8x128xf32>
    %1170 = vector.extract_strided_slice %1153 {offsets = [8, 0, 0], sizes = [1, 8, 128], strides = [1, 1, 1]} : vector<12x8x128xf32> to vector<1x8x128xf32>
    %1171 = vector.shape_cast %1170 : vector<1x8x128xf32> to vector<8x128xf32>
    %1172 = vector.extract_strided_slice %1153 {offsets = [9, 0, 0], sizes = [1, 8, 128], strides = [1, 1, 1]} : vector<12x8x128xf32> to vector<1x8x128xf32>
    %1173 = vector.shape_cast %1172 : vector<1x8x128xf32> to vector<8x128xf32>
    %1174 = vector.extract_strided_slice %1153 {offsets = [10, 0, 0], sizes = [1, 8, 128], strides = [1, 1, 1]} : vector<12x8x128xf32> to vector<1x8x128xf32>
    %1175 = vector.shape_cast %1174 : vector<1x8x128xf32> to vector<8x128xf32>
    %1176 = vector.extract_strided_slice %1153 {offsets = [11, 0, 0], sizes = [1, 8, 128], strides = [1, 1, 1]} : vector<12x8x128xf32> to vector<1x8x128xf32>
    %1177 = vector.shape_cast %1176 : vector<1x8x128xf32> to vector<8x128xf32>
    %1178 = arith.subf %1159, %1155 : vector<8x128xf32>
    %1179 = arith.subf %1161, %1157 : vector<8x128xf32>
    %cst_276 = arith.constant 1.000000e-07 : f32
    %1180 = vector.broadcast %cst_276 : f32 to vector<8x128xf32>
    %1181 = arith.addf %1179, %1180 : vector<8x128xf32>
    %1182 = arith.subf %1167, %1163 : vector<8x128xf32>
    %1183 = arith.subf %1169, %1165 : vector<8x128xf32>
    %cst_277 = arith.constant 1.000000e-07 : f32
    %1184 = vector.broadcast %cst_277 : f32 to vector<8x128xf32>
    %1185 = arith.addf %1183, %1184 : vector<8x128xf32>
    %1186 = arith.minimumf %1159, %1167 : vector<8x128xf32>
    %1187 = arith.maximumf %1155, %1163 : vector<8x128xf32>
    %1188 = arith.subf %1186, %1187 : vector<8x128xf32>
    %cst_278 = arith.constant 0.000000e+00 : f32
    %1189 = vector.broadcast %cst_278 : f32 to vector<8x128xf32>
    %1190 = arith.maximumf %1188, %1189 : vector<8x128xf32>
    %1191 = arith.minimumf %1161, %1169 : vector<8x128xf32>
    %1192 = arith.maximumf %1157, %1165 : vector<8x128xf32>
    %1193 = arith.subf %1191, %1192 : vector<8x128xf32>
    %cst_279 = arith.constant 0.000000e+00 : f32
    %1194 = vector.broadcast %cst_279 : f32 to vector<8x128xf32>
    %1195 = arith.maximumf %1193, %1194 : vector<8x128xf32>
    %1196 = arith.mulf %1190, %1195 : vector<8x128xf32>
    %1197 = arith.mulf %1178, %1181 : vector<8x128xf32>
    %1198 = arith.mulf %1182, %1185 : vector<8x128xf32>
    %1199 = arith.addf %1197, %1198 : vector<8x128xf32>
    %1200 = arith.subf %1199, %1196 : vector<8x128xf32>
    %cst_280 = arith.constant 1.000000e-07 : f32
    %1201 = vector.broadcast %cst_280 : f32 to vector<8x128xf32>
    %1202 = arith.addf %1200, %1201 : vector<8x128xf32>
    %1203 = arith.divf %1196, %1202 : vector<8x128xf32>
    %1204 = arith.maximumf %1159, %1167 : vector<8x128xf32>
    %1205 = arith.minimumf %1155, %1163 : vector<8x128xf32>
    %1206 = arith.subf %1204, %1205 : vector<8x128xf32>
    %1207 = arith.maximumf %1161, %1169 : vector<8x128xf32>
    %1208 = arith.minimumf %1157, %1165 : vector<8x128xf32>
    %1209 = arith.subf %1207, %1208 : vector<8x128xf32>
    %1210 = arith.mulf %1206, %1206 : vector<8x128xf32>
    %1211 = arith.mulf %1209, %1209 : vector<8x128xf32>
    %1212 = arith.addf %1210, %1211 : vector<8x128xf32>
    %cst_281 = arith.constant 1.000000e-07 : f32
    %1213 = vector.broadcast %cst_281 : f32 to vector<8x128xf32>
    %1214 = arith.addf %1212, %1213 : vector<8x128xf32>
    %1215 = arith.addf %1163, %1167 : vector<8x128xf32>
    %1216 = arith.subf %1215, %1155 : vector<8x128xf32>
    %1217 = arith.subf %1216, %1159 : vector<8x128xf32>
    %1218 = arith.mulf %1217, %1217 : vector<8x128xf32>
    %1219 = arith.addf %1165, %1169 : vector<8x128xf32>
    %1220 = arith.subf %1219, %1157 : vector<8x128xf32>
    %1221 = arith.subf %1220, %1161 : vector<8x128xf32>
    %1222 = arith.mulf %1221, %1221 : vector<8x128xf32>
    %1223 = arith.addf %1218, %1222 : vector<8x128xf32>
    %cst_282 = arith.constant 2.500000e-01 : f32
    %1224 = vector.broadcast %cst_282 : f32 to vector<8x128xf32>
    %1225 = arith.mulf %1223, %1224 : vector<8x128xf32>
    %1226 = tpu.reciprocal %1185 {approx = true} : vector<8x128xf32> -> vector<8x128xf32>
    %1227 = arith.mulf %1182, %1226 : vector<8x128xf32>
    %cst_283 = arith.constant 0.000000e+00 : f32
    %1228 = vector.broadcast %cst_283 : f32 to vector<8x128xf32>
    %1229 = arith.cmpf olt, %1227, %1228 : vector<8x128xf32>
    %cst_284 = arith.constant -1.000000e+00 : f32
    %cst_285 = arith.constant 1.000000e+00 : f32
    %1230 = vector.broadcast %cst_284 : f32 to vector<8x128xf32>
    %1231 = vector.broadcast %cst_285 : f32 to vector<8x128xf32>
    %1232 = arith.select %1229, %1230, %1231 : vector<8x128xi1>, vector<8x128xf32>
    %1233 = math.absf %1227 : vector<8x128xf32>
    %cst_286 = arith.constant 2.41421366 : f32
    %1234 = vector.broadcast %cst_286 : f32 to vector<8x128xf32>
    %1235 = arith.cmpf ogt, %1233, %1234 : vector<8x128xf32>
    %cst_287 = arith.constant 0.414213568 : f32
    %1236 = vector.broadcast %cst_287 : f32 to vector<8x128xf32>
    %1237 = arith.cmpf ogt, %1233, %1236 : vector<8x128xf32>
    %cst_288 = arith.constant dense<true> : vector<8x128xi1>
    %1238 = arith.xori %1235, %cst_288 : vector<8x128xi1>
    %1239 = arith.andi %1237, %1238 : vector<8x128xi1>
    %cst_289 = arith.constant 0.785398185 : f32
    %cst_290 = arith.constant 0.000000e+00 : f32
    %1240 = vector.broadcast %cst_289 : f32 to vector<8x128xf32>
    %1241 = vector.broadcast %cst_290 : f32 to vector<8x128xf32>
    %1242 = arith.select %1239, %1240, %1241 : vector<8x128xi1>, vector<8x128xf32>
    %cst_291 = arith.constant 1.57079637 : f32
    %1243 = vector.broadcast %cst_291 : f32 to vector<8x128xf32>
    %1244 = arith.select %1235, %1243, %1242 : vector<8x128xi1>, vector<8x128xf32>
    %cst_292 = arith.constant 1.000000e-30 : f32
    %1245 = vector.broadcast %cst_292 : f32 to vector<8x128xf32>
    %1246 = arith.maximumf %1233, %1245 : vector<8x128xf32>
    %1247 = tpu.reciprocal %1246 {approx = true} : vector<8x128xf32> -> vector<8x128xf32>
    %cst_293 = arith.constant 0.000000e+00 : f32
    %1248 = vector.broadcast %cst_293 : f32 to vector<8x128xf32>
    %1249 = arith.subf %1248, %1247 : vector<8x128xf32>
    %cst_294 = arith.constant 1.000000e+00 : f32
    %1250 = vector.broadcast %cst_294 : f32 to vector<8x128xf32>
    %1251 = arith.subf %1233, %1250 : vector<8x128xf32>
    %cst_295 = arith.constant 1.000000e+00 : f32
    %1252 = vector.broadcast %cst_295 : f32 to vector<8x128xf32>
    %1253 = arith.addf %1233, %1252 : vector<8x128xf32>
    %1254 = tpu.reciprocal %1253 {approx = true} : vector<8x128xf32> -> vector<8x128xf32>
    %1255 = arith.mulf %1251, %1254 : vector<8x128xf32>
    %1256 = arith.select %1239, %1255, %1233 : vector<8x128xi1>, vector<8x128xf32>
    %1257 = arith.select %1235, %1249, %1256 : vector<8x128xi1>, vector<8x128xf32>
    %1258 = arith.mulf %1257, %1257 : vector<8x128xf32>
    %cst_296 = arith.constant 0.0805374458 : f32
    %1259 = vector.broadcast %cst_296 : f32 to vector<8x128xf32>
    %1260 = arith.mulf %1259, %1258 : vector<8x128xf32>
    %cst_297 = arith.constant 0.138776854 : f32
    %1261 = vector.broadcast %cst_297 : f32 to vector<8x128xf32>
    %1262 = arith.subf %1260, %1261 : vector<8x128xf32>
    %1263 = arith.mulf %1262, %1258 : vector<8x128xf32>
    %cst_298 = arith.constant 0.199777111 : f32
    %1264 = vector.broadcast %cst_298 : f32 to vector<8x128xf32>
    %1265 = arith.addf %1263, %1264 : vector<8x128xf32>
    %1266 = arith.mulf %1265, %1258 : vector<8x128xf32>
    %cst_299 = arith.constant 0.333329499 : f32
    %1267 = vector.broadcast %cst_299 : f32 to vector<8x128xf32>
    %1268 = arith.subf %1266, %1267 : vector<8x128xf32>
    %1269 = arith.mulf %1268, %1258 : vector<8x128xf32>
    %1270 = arith.mulf %1269, %1257 : vector<8x128xf32>
    %1271 = arith.addf %1270, %1257 : vector<8x128xf32>
    %1272 = arith.addf %1244, %1271 : vector<8x128xf32>
    %1273 = arith.mulf %1232, %1272 : vector<8x128xf32>
    %1274 = tpu.reciprocal %1181 {approx = true} : vector<8x128xf32> -> vector<8x128xf32>
    %1275 = arith.mulf %1178, %1274 : vector<8x128xf32>
    %cst_300 = arith.constant 0.000000e+00 : f32
    %1276 = vector.broadcast %cst_300 : f32 to vector<8x128xf32>
    %1277 = arith.cmpf olt, %1275, %1276 : vector<8x128xf32>
    %cst_301 = arith.constant -1.000000e+00 : f32
    %cst_302 = arith.constant 1.000000e+00 : f32
    %1278 = vector.broadcast %cst_301 : f32 to vector<8x128xf32>
    %1279 = vector.broadcast %cst_302 : f32 to vector<8x128xf32>
    %1280 = arith.select %1277, %1278, %1279 : vector<8x128xi1>, vector<8x128xf32>
    %1281 = math.absf %1275 : vector<8x128xf32>
    %cst_303 = arith.constant 2.41421366 : f32
    %1282 = vector.broadcast %cst_303 : f32 to vector<8x128xf32>
    %1283 = arith.cmpf ogt, %1281, %1282 : vector<8x128xf32>
    %cst_304 = arith.constant 0.414213568 : f32
    %1284 = vector.broadcast %cst_304 : f32 to vector<8x128xf32>
    %1285 = arith.cmpf ogt, %1281, %1284 : vector<8x128xf32>
    %cst_305 = arith.constant dense<true> : vector<8x128xi1>
    %1286 = arith.xori %1283, %cst_305 : vector<8x128xi1>
    %1287 = arith.andi %1285, %1286 : vector<8x128xi1>
    %cst_306 = arith.constant 0.785398185 : f32
    %cst_307 = arith.constant 0.000000e+00 : f32
    %1288 = vector.broadcast %cst_306 : f32 to vector<8x128xf32>
    %1289 = vector.broadcast %cst_307 : f32 to vector<8x128xf32>
    %1290 = arith.select %1287, %1288, %1289 : vector<8x128xi1>, vector<8x128xf32>
    %cst_308 = arith.constant 1.57079637 : f32
    %1291 = vector.broadcast %cst_308 : f32 to vector<8x128xf32>
    %1292 = arith.select %1283, %1291, %1290 : vector<8x128xi1>, vector<8x128xf32>
    %cst_309 = arith.constant 1.000000e-30 : f32
    %1293 = vector.broadcast %cst_309 : f32 to vector<8x128xf32>
    %1294 = arith.maximumf %1281, %1293 : vector<8x128xf32>
    %1295 = tpu.reciprocal %1294 {approx = true} : vector<8x128xf32> -> vector<8x128xf32>
    %cst_310 = arith.constant 0.000000e+00 : f32
    %1296 = vector.broadcast %cst_310 : f32 to vector<8x128xf32>
    %1297 = arith.subf %1296, %1295 : vector<8x128xf32>
    %cst_311 = arith.constant 1.000000e+00 : f32
    %1298 = vector.broadcast %cst_311 : f32 to vector<8x128xf32>
    %1299 = arith.subf %1281, %1298 : vector<8x128xf32>
    %cst_312 = arith.constant 1.000000e+00 : f32
    %1300 = vector.broadcast %cst_312 : f32 to vector<8x128xf32>
    %1301 = arith.addf %1281, %1300 : vector<8x128xf32>
    %1302 = tpu.reciprocal %1301 {approx = true} : vector<8x128xf32> -> vector<8x128xf32>
    %1303 = arith.mulf %1299, %1302 : vector<8x128xf32>
    %1304 = arith.select %1287, %1303, %1281 : vector<8x128xi1>, vector<8x128xf32>
    %1305 = arith.select %1283, %1297, %1304 : vector<8x128xi1>, vector<8x128xf32>
    %1306 = arith.mulf %1305, %1305 : vector<8x128xf32>
    %cst_313 = arith.constant 0.0805374458 : f32
    %1307 = vector.broadcast %cst_313 : f32 to vector<8x128xf32>
    %1308 = arith.mulf %1307, %1306 : vector<8x128xf32>
    %cst_314 = arith.constant 0.138776854 : f32
    %1309 = vector.broadcast %cst_314 : f32 to vector<8x128xf32>
    %1310 = arith.subf %1308, %1309 : vector<8x128xf32>
    %1311 = arith.mulf %1310, %1306 : vector<8x128xf32>
    %cst_315 = arith.constant 0.199777111 : f32
    %1312 = vector.broadcast %cst_315 : f32 to vector<8x128xf32>
    %1313 = arith.addf %1311, %1312 : vector<8x128xf32>
    %1314 = arith.mulf %1313, %1306 : vector<8x128xf32>
    %cst_316 = arith.constant 0.333329499 : f32
    %1315 = vector.broadcast %cst_316 : f32 to vector<8x128xf32>
    %1316 = arith.subf %1314, %1315 : vector<8x128xf32>
    %1317 = arith.mulf %1316, %1306 : vector<8x128xf32>
    %1318 = arith.mulf %1317, %1305 : vector<8x128xf32>
    %1319 = arith.addf %1318, %1305 : vector<8x128xf32>
    %1320 = arith.addf %1292, %1319 : vector<8x128xf32>
    %1321 = arith.mulf %1280, %1320 : vector<8x128xf32>
    %1322 = arith.subf %1273, %1321 : vector<8x128xf32>
    %1323 = arith.mulf %1322, %1322 : vector<8x128xf32>
    %cst_317 = arith.constant 0.405284733 : f32
    %1324 = vector.broadcast %cst_317 : f32 to vector<8x128xf32>
    %1325 = arith.mulf %1324, %1323 : vector<8x128xf32>
    %1326 = arith.subf %1325, %1203 : vector<8x128xf32>
    %cst_318 = arith.constant 1.00000012 : f32
    %1327 = vector.broadcast %cst_318 : f32 to vector<8x128xf32>
    %1328 = arith.addf %1326, %1327 : vector<8x128xf32>
    %1329 = tpu.reciprocal %1328 {approx = true} : vector<8x128xf32> -> vector<8x128xf32>
    %1330 = arith.mulf %1325, %1329 : vector<8x128xf32>
    %1331 = arith.divf %1225, %1214 : vector<8x128xf32>
    %1332 = arith.mulf %1325, %1330 : vector<8x128xf32>
    %1333 = arith.addf %1331, %1332 : vector<8x128xf32>
    %1334 = arith.subf %1203, %1333 : vector<8x128xf32>
    %cst_319 = arith.constant 0.000000e+00 : f32
    %1335 = vector.broadcast %cst_319 : f32 to vector<8x128xf32>
    %1336 = arith.cmpf ogt, %1177, %1335 : vector<8x128xf32>
    %cst_320 = arith.constant 1.000000e+00 : f32
    %1337 = vector.broadcast %cst_320 : f32 to vector<8x128xf32>
    %1338 = arith.subf %1337, %1334 : vector<8x128xf32>
    %1339 = arith.mulf %1338, %1175 : vector<8x128xf32>
    %cst_321 = arith.constant 0.000000e+00 : f32
    %1340 = vector.broadcast %cst_321 : f32 to vector<8x128xf32>
    %1341 = arith.select %1336, %1339, %1340 : vector<8x128xi1>, vector<8x128xf32>
    %1342 = arith.addf %191, %1341 : vector<8x128xf32>
    %1343 = arith.subf %1171, %1163 : vector<8x128xf32>
    %cst_322 = arith.constant 0.000000e+00 : f32
    %cst_323 = arith.constant 1.499000e+01 : f32
    %1344 = vector.broadcast %cst_322 : f32 to vector<8x128xf32>
    %1345 = arith.maximumf %1344, %1343 : vector<8x128xf32>
    %1346 = vector.broadcast %cst_323 : f32 to vector<8x128xf32>
    %1347 = arith.minimumf %1346, %1345 : vector<8x128xf32>
    %1348 = arith.subf %1173, %1165 : vector<8x128xf32>
    %cst_324 = arith.constant 0.000000e+00 : f32
    %cst_325 = arith.constant 1.499000e+01 : f32
    %1349 = vector.broadcast %cst_324 : f32 to vector<8x128xf32>
    %1350 = arith.maximumf %1349, %1348 : vector<8x128xf32>
    %1351 = vector.broadcast %cst_325 : f32 to vector<8x128xf32>
    %1352 = arith.minimumf %1351, %1350 : vector<8x128xf32>
    %1353 = arith.subf %1167, %1171 : vector<8x128xf32>
    %cst_326 = arith.constant 0.000000e+00 : f32
    %cst_327 = arith.constant 1.499000e+01 : f32
    %1354 = vector.broadcast %cst_326 : f32 to vector<8x128xf32>
    %1355 = arith.maximumf %1354, %1353 : vector<8x128xf32>
    %1356 = vector.broadcast %cst_327 : f32 to vector<8x128xf32>
    %1357 = arith.minimumf %1356, %1355 : vector<8x128xf32>
    %1358 = arith.subf %1169, %1173 : vector<8x128xf32>
    %cst_328 = arith.constant 0.000000e+00 : f32
    %cst_329 = arith.constant 1.499000e+01 : f32
    %1359 = vector.broadcast %cst_328 : f32 to vector<8x128xf32>
    %1360 = arith.maximumf %1359, %1358 : vector<8x128xf32>
    %1361 = vector.broadcast %cst_329 : f32 to vector<8x128xf32>
    %1362 = arith.minimumf %1361, %1360 : vector<8x128xf32>
    %cst_330 = arith.constant 0.000000e+00 : f32
    %1363 = vector.broadcast %cst_330 : f32 to vector<8x128xf32>
    %c0_331 = arith.constant 0 : index
    %c8_332 = arith.constant 8 : index
    %c0_333 = arith.constant 0 : index
    %1364 = vector.load %arg2[%c0_331, %c8_332, %c0_333] : memref<64x24x128xbf16, #tpu.memory_space<vmem>>, vector<16x8x128xbf16>
    %1365 = arith.extf %1364 : vector<16x8x128xbf16> to vector<16x8x128xf32>
    %cst_334 = arith.constant dense<0xFF800000> : vector<8x128xf32>
    %1366 = vector.multi_reduction <maximumf>, %1365, %cst_334 [0] : vector<16x8x128xf32> to vector<8x128xf32>
    %cst_335 = arith.constant 0.000000e+00 : f32
    %1367 = vector.broadcast %cst_335 : f32 to vector<8x128xf32>
    %cst_336 = arith.constant 0.000000e+00 : f32
    %1368 = vector.broadcast %cst_336 : f32 to vector<8x128xf32>
    %1369 = vector.extract_strided_slice %1365 {offsets = [0, 0, 0], sizes = [1, 8, 128], strides = [1, 1, 1]} : vector<16x8x128xf32> to vector<1x8x128xf32>
    %1370 = vector.shape_cast %1369 : vector<1x8x128xf32> to vector<8x128xf32>
    %1371 = arith.subf %1370, %1366 : vector<8x128xf32>
    %1372 = math.exp %1371 : vector<8x128xf32>
    %1373 = arith.addf %1367, %1372 : vector<8x128xf32>
    %cst_337 = arith.constant 0.000000e+00 : f32
    %1374 = vector.broadcast %cst_337 : f32 to vector<8x128xf32>
    %1375 = arith.subf %1374, %1347 : vector<8x128xf32>
    %1376 = math.absf %1375 : vector<8x128xf32>
    %cst_338 = arith.constant 1.000000e+00 : f32
    %1377 = vector.broadcast %cst_338 : f32 to vector<8x128xf32>
    %1378 = arith.subf %1377, %1376 : vector<8x128xf32>
    %cst_339 = arith.constant 0.000000e+00 : f32
    %1379 = vector.broadcast %cst_339 : f32 to vector<8x128xf32>
    %1380 = arith.maximumf %1378, %1379 : vector<8x128xf32>
    %1381 = arith.mulf %1380, %1370 : vector<8x128xf32>
    %1382 = arith.addf %1368, %1381 : vector<8x128xf32>
    %1383 = vector.extract_strided_slice %1365 {offsets = [1, 0, 0], sizes = [1, 8, 128], strides = [1, 1, 1]} : vector<16x8x128xf32> to vector<1x8x128xf32>
    %1384 = vector.shape_cast %1383 : vector<1x8x128xf32> to vector<8x128xf32>
    %1385 = arith.subf %1384, %1366 : vector<8x128xf32>
    %1386 = math.exp %1385 : vector<8x128xf32>
    %1387 = arith.addf %1373, %1386 : vector<8x128xf32>
    %cst_340 = arith.constant 1.000000e+00 : f32
    %1388 = vector.broadcast %cst_340 : f32 to vector<8x128xf32>
    %1389 = arith.subf %1388, %1347 : vector<8x128xf32>
    %1390 = math.absf %1389 : vector<8x128xf32>
    %cst_341 = arith.constant 1.000000e+00 : f32
    %1391 = vector.broadcast %cst_341 : f32 to vector<8x128xf32>
    %1392 = arith.subf %1391, %1390 : vector<8x128xf32>
    %cst_342 = arith.constant 0.000000e+00 : f32
    %1393 = vector.broadcast %cst_342 : f32 to vector<8x128xf32>
    %1394 = arith.maximumf %1392, %1393 : vector<8x128xf32>
    %1395 = arith.mulf %1394, %1384 : vector<8x128xf32>
    %1396 = arith.addf %1382, %1395 : vector<8x128xf32>
    %1397 = vector.extract_strided_slice %1365 {offsets = [2, 0, 0], sizes = [1, 8, 128], strides = [1, 1, 1]} : vector<16x8x128xf32> to vector<1x8x128xf32>
    %1398 = vector.shape_cast %1397 : vector<1x8x128xf32> to vector<8x128xf32>
    %1399 = arith.subf %1398, %1366 : vector<8x128xf32>
    %1400 = math.exp %1399 : vector<8x128xf32>
    %1401 = arith.addf %1387, %1400 : vector<8x128xf32>
    %cst_343 = arith.constant 2.000000e+00 : f32
    %1402 = vector.broadcast %cst_343 : f32 to vector<8x128xf32>
    %1403 = arith.subf %1402, %1347 : vector<8x128xf32>
    %1404 = math.absf %1403 : vector<8x128xf32>
    %cst_344 = arith.constant 1.000000e+00 : f32
    %1405 = vector.broadcast %cst_344 : f32 to vector<8x128xf32>
    %1406 = arith.subf %1405, %1404 : vector<8x128xf32>
    %cst_345 = arith.constant 0.000000e+00 : f32
    %1407 = vector.broadcast %cst_345 : f32 to vector<8x128xf32>
    %1408 = arith.maximumf %1406, %1407 : vector<8x128xf32>
    %1409 = arith.mulf %1408, %1398 : vector<8x128xf32>
    %1410 = arith.addf %1396, %1409 : vector<8x128xf32>
    %1411 = vector.extract_strided_slice %1365 {offsets = [3, 0, 0], sizes = [1, 8, 128], strides = [1, 1, 1]} : vector<16x8x128xf32> to vector<1x8x128xf32>
    %1412 = vector.shape_cast %1411 : vector<1x8x128xf32> to vector<8x128xf32>
    %1413 = arith.subf %1412, %1366 : vector<8x128xf32>
    %1414 = math.exp %1413 : vector<8x128xf32>
    %1415 = arith.addf %1401, %1414 : vector<8x128xf32>
    %cst_346 = arith.constant 3.000000e+00 : f32
    %1416 = vector.broadcast %cst_346 : f32 to vector<8x128xf32>
    %1417 = arith.subf %1416, %1347 : vector<8x128xf32>
    %1418 = math.absf %1417 : vector<8x128xf32>
    %cst_347 = arith.constant 1.000000e+00 : f32
    %1419 = vector.broadcast %cst_347 : f32 to vector<8x128xf32>
    %1420 = arith.subf %1419, %1418 : vector<8x128xf32>
    %cst_348 = arith.constant 0.000000e+00 : f32
    %1421 = vector.broadcast %cst_348 : f32 to vector<8x128xf32>
    %1422 = arith.maximumf %1420, %1421 : vector<8x128xf32>
    %1423 = arith.mulf %1422, %1412 : vector<8x128xf32>
    %1424 = arith.addf %1410, %1423 : vector<8x128xf32>
    %1425 = vector.extract_strided_slice %1365 {offsets = [4, 0, 0], sizes = [1, 8, 128], strides = [1, 1, 1]} : vector<16x8x128xf32> to vector<1x8x128xf32>
    %1426 = vector.shape_cast %1425 : vector<1x8x128xf32> to vector<8x128xf32>
    %1427 = arith.subf %1426, %1366 : vector<8x128xf32>
    %1428 = math.exp %1427 : vector<8x128xf32>
    %1429 = arith.addf %1415, %1428 : vector<8x128xf32>
    %cst_349 = arith.constant 4.000000e+00 : f32
    %1430 = vector.broadcast %cst_349 : f32 to vector<8x128xf32>
    %1431 = arith.subf %1430, %1347 : vector<8x128xf32>
    %1432 = math.absf %1431 : vector<8x128xf32>
    %cst_350 = arith.constant 1.000000e+00 : f32
    %1433 = vector.broadcast %cst_350 : f32 to vector<8x128xf32>
    %1434 = arith.subf %1433, %1432 : vector<8x128xf32>
    %cst_351 = arith.constant 0.000000e+00 : f32
    %1435 = vector.broadcast %cst_351 : f32 to vector<8x128xf32>
    %1436 = arith.maximumf %1434, %1435 : vector<8x128xf32>
    %1437 = arith.mulf %1436, %1426 : vector<8x128xf32>
    %1438 = arith.addf %1424, %1437 : vector<8x128xf32>
    %1439 = vector.extract_strided_slice %1365 {offsets = [5, 0, 0], sizes = [1, 8, 128], strides = [1, 1, 1]} : vector<16x8x128xf32> to vector<1x8x128xf32>
    %1440 = vector.shape_cast %1439 : vector<1x8x128xf32> to vector<8x128xf32>
    %1441 = arith.subf %1440, %1366 : vector<8x128xf32>
    %1442 = math.exp %1441 : vector<8x128xf32>
    %1443 = arith.addf %1429, %1442 : vector<8x128xf32>
    %cst_352 = arith.constant 5.000000e+00 : f32
    %1444 = vector.broadcast %cst_352 : f32 to vector<8x128xf32>
    %1445 = arith.subf %1444, %1347 : vector<8x128xf32>
    %1446 = math.absf %1445 : vector<8x128xf32>
    %cst_353 = arith.constant 1.000000e+00 : f32
    %1447 = vector.broadcast %cst_353 : f32 to vector<8x128xf32>
    %1448 = arith.subf %1447, %1446 : vector<8x128xf32>
    %cst_354 = arith.constant 0.000000e+00 : f32
    %1449 = vector.broadcast %cst_354 : f32 to vector<8x128xf32>
    %1450 = arith.maximumf %1448, %1449 : vector<8x128xf32>
    %1451 = arith.mulf %1450, %1440 : vector<8x128xf32>
    %1452 = arith.addf %1438, %1451 : vector<8x128xf32>
    %1453 = vector.extract_strided_slice %1365 {offsets = [6, 0, 0], sizes = [1, 8, 128], strides = [1, 1, 1]} : vector<16x8x128xf32> to vector<1x8x128xf32>
    %1454 = vector.shape_cast %1453 : vector<1x8x128xf32> to vector<8x128xf32>
    %1455 = arith.subf %1454, %1366 : vector<8x128xf32>
    %1456 = math.exp %1455 : vector<8x128xf32>
    %1457 = arith.addf %1443, %1456 : vector<8x128xf32>
    %cst_355 = arith.constant 6.000000e+00 : f32
    %1458 = vector.broadcast %cst_355 : f32 to vector<8x128xf32>
    %1459 = arith.subf %1458, %1347 : vector<8x128xf32>
    %1460 = math.absf %1459 : vector<8x128xf32>
    %cst_356 = arith.constant 1.000000e+00 : f32
    %1461 = vector.broadcast %cst_356 : f32 to vector<8x128xf32>
    %1462 = arith.subf %1461, %1460 : vector<8x128xf32>
    %cst_357 = arith.constant 0.000000e+00 : f32
    %1463 = vector.broadcast %cst_357 : f32 to vector<8x128xf32>
    %1464 = arith.maximumf %1462, %1463 : vector<8x128xf32>
    %1465 = arith.mulf %1464, %1454 : vector<8x128xf32>
    %1466 = arith.addf %1452, %1465 : vector<8x128xf32>
    %1467 = vector.extract_strided_slice %1365 {offsets = [7, 0, 0], sizes = [1, 8, 128], strides = [1, 1, 1]} : vector<16x8x128xf32> to vector<1x8x128xf32>
    %1468 = vector.shape_cast %1467 : vector<1x8x128xf32> to vector<8x128xf32>
    %1469 = arith.subf %1468, %1366 : vector<8x128xf32>
    %1470 = math.exp %1469 : vector<8x128xf32>
    %1471 = arith.addf %1457, %1470 : vector<8x128xf32>
    %cst_358 = arith.constant 7.000000e+00 : f32
    %1472 = vector.broadcast %cst_358 : f32 to vector<8x128xf32>
    %1473 = arith.subf %1472, %1347 : vector<8x128xf32>
    %1474 = math.absf %1473 : vector<8x128xf32>
    %cst_359 = arith.constant 1.000000e+00 : f32
    %1475 = vector.broadcast %cst_359 : f32 to vector<8x128xf32>
    %1476 = arith.subf %1475, %1474 : vector<8x128xf32>
    %cst_360 = arith.constant 0.000000e+00 : f32
    %1477 = vector.broadcast %cst_360 : f32 to vector<8x128xf32>
    %1478 = arith.maximumf %1476, %1477 : vector<8x128xf32>
    %1479 = arith.mulf %1478, %1468 : vector<8x128xf32>
    %1480 = arith.addf %1466, %1479 : vector<8x128xf32>
    %1481 = vector.extract_strided_slice %1365 {offsets = [8, 0, 0], sizes = [1, 8, 128], strides = [1, 1, 1]} : vector<16x8x128xf32> to vector<1x8x128xf32>
    %1482 = vector.shape_cast %1481 : vector<1x8x128xf32> to vector<8x128xf32>
    %1483 = arith.subf %1482, %1366 : vector<8x128xf32>
    %1484 = math.exp %1483 : vector<8x128xf32>
    %1485 = arith.addf %1471, %1484 : vector<8x128xf32>
    %cst_361 = arith.constant 8.000000e+00 : f32
    %1486 = vector.broadcast %cst_361 : f32 to vector<8x128xf32>
    %1487 = arith.subf %1486, %1347 : vector<8x128xf32>
    %1488 = math.absf %1487 : vector<8x128xf32>
    %cst_362 = arith.constant 1.000000e+00 : f32
    %1489 = vector.broadcast %cst_362 : f32 to vector<8x128xf32>
    %1490 = arith.subf %1489, %1488 : vector<8x128xf32>
    %cst_363 = arith.constant 0.000000e+00 : f32
    %1491 = vector.broadcast %cst_363 : f32 to vector<8x128xf32>
    %1492 = arith.maximumf %1490, %1491 : vector<8x128xf32>
    %1493 = arith.mulf %1492, %1482 : vector<8x128xf32>
    %1494 = arith.addf %1480, %1493 : vector<8x128xf32>
    %1495 = vector.extract_strided_slice %1365 {offsets = [9, 0, 0], sizes = [1, 8, 128], strides = [1, 1, 1]} : vector<16x8x128xf32> to vector<1x8x128xf32>
    %1496 = vector.shape_cast %1495 : vector<1x8x128xf32> to vector<8x128xf32>
    %1497 = arith.subf %1496, %1366 : vector<8x128xf32>
    %1498 = math.exp %1497 : vector<8x128xf32>
    %1499 = arith.addf %1485, %1498 : vector<8x128xf32>
    %cst_364 = arith.constant 9.000000e+00 : f32
    %1500 = vector.broadcast %cst_364 : f32 to vector<8x128xf32>
    %1501 = arith.subf %1500, %1347 : vector<8x128xf32>
    %1502 = math.absf %1501 : vector<8x128xf32>
    %cst_365 = arith.constant 1.000000e+00 : f32
    %1503 = vector.broadcast %cst_365 : f32 to vector<8x128xf32>
    %1504 = arith.subf %1503, %1502 : vector<8x128xf32>
    %cst_366 = arith.constant 0.000000e+00 : f32
    %1505 = vector.broadcast %cst_366 : f32 to vector<8x128xf32>
    %1506 = arith.maximumf %1504, %1505 : vector<8x128xf32>
    %1507 = arith.mulf %1506, %1496 : vector<8x128xf32>
    %1508 = arith.addf %1494, %1507 : vector<8x128xf32>
    %1509 = vector.extract_strided_slice %1365 {offsets = [10, 0, 0], sizes = [1, 8, 128], strides = [1, 1, 1]} : vector<16x8x128xf32> to vector<1x8x128xf32>
    %1510 = vector.shape_cast %1509 : vector<1x8x128xf32> to vector<8x128xf32>
    %1511 = arith.subf %1510, %1366 : vector<8x128xf32>
    %1512 = math.exp %1511 : vector<8x128xf32>
    %1513 = arith.addf %1499, %1512 : vector<8x128xf32>
    %cst_367 = arith.constant 1.000000e+01 : f32
    %1514 = vector.broadcast %cst_367 : f32 to vector<8x128xf32>
    %1515 = arith.subf %1514, %1347 : vector<8x128xf32>
    %1516 = math.absf %1515 : vector<8x128xf32>
    %cst_368 = arith.constant 1.000000e+00 : f32
    %1517 = vector.broadcast %cst_368 : f32 to vector<8x128xf32>
    %1518 = arith.subf %1517, %1516 : vector<8x128xf32>
    %cst_369 = arith.constant 0.000000e+00 : f32
    %1519 = vector.broadcast %cst_369 : f32 to vector<8x128xf32>
    %1520 = arith.maximumf %1518, %1519 : vector<8x128xf32>
    %1521 = arith.mulf %1520, %1510 : vector<8x128xf32>
    %1522 = arith.addf %1508, %1521 : vector<8x128xf32>
    %1523 = vector.extract_strided_slice %1365 {offsets = [11, 0, 0], sizes = [1, 8, 128], strides = [1, 1, 1]} : vector<16x8x128xf32> to vector<1x8x128xf32>
    %1524 = vector.shape_cast %1523 : vector<1x8x128xf32> to vector<8x128xf32>
    %1525 = arith.subf %1524, %1366 : vector<8x128xf32>
    %1526 = math.exp %1525 : vector<8x128xf32>
    %1527 = arith.addf %1513, %1526 : vector<8x128xf32>
    %cst_370 = arith.constant 1.100000e+01 : f32
    %1528 = vector.broadcast %cst_370 : f32 to vector<8x128xf32>
    %1529 = arith.subf %1528, %1347 : vector<8x128xf32>
    %1530 = math.absf %1529 : vector<8x128xf32>
    %cst_371 = arith.constant 1.000000e+00 : f32
    %1531 = vector.broadcast %cst_371 : f32 to vector<8x128xf32>
    %1532 = arith.subf %1531, %1530 : vector<8x128xf32>
    %cst_372 = arith.constant 0.000000e+00 : f32
    %1533 = vector.broadcast %cst_372 : f32 to vector<8x128xf32>
    %1534 = arith.maximumf %1532, %1533 : vector<8x128xf32>
    %1535 = arith.mulf %1534, %1524 : vector<8x128xf32>
    %1536 = arith.addf %1522, %1535 : vector<8x128xf32>
    %1537 = vector.extract_strided_slice %1365 {offsets = [12, 0, 0], sizes = [1, 8, 128], strides = [1, 1, 1]} : vector<16x8x128xf32> to vector<1x8x128xf32>
    %1538 = vector.shape_cast %1537 : vector<1x8x128xf32> to vector<8x128xf32>
    %1539 = arith.subf %1538, %1366 : vector<8x128xf32>
    %1540 = math.exp %1539 : vector<8x128xf32>
    %1541 = arith.addf %1527, %1540 : vector<8x128xf32>
    %cst_373 = arith.constant 1.200000e+01 : f32
    %1542 = vector.broadcast %cst_373 : f32 to vector<8x128xf32>
    %1543 = arith.subf %1542, %1347 : vector<8x128xf32>
    %1544 = math.absf %1543 : vector<8x128xf32>
    %cst_374 = arith.constant 1.000000e+00 : f32
    %1545 = vector.broadcast %cst_374 : f32 to vector<8x128xf32>
    %1546 = arith.subf %1545, %1544 : vector<8x128xf32>
    %cst_375 = arith.constant 0.000000e+00 : f32
    %1547 = vector.broadcast %cst_375 : f32 to vector<8x128xf32>
    %1548 = arith.maximumf %1546, %1547 : vector<8x128xf32>
    %1549 = arith.mulf %1548, %1538 : vector<8x128xf32>
    %1550 = arith.addf %1536, %1549 : vector<8x128xf32>
    %1551 = vector.extract_strided_slice %1365 {offsets = [13, 0, 0], sizes = [1, 8, 128], strides = [1, 1, 1]} : vector<16x8x128xf32> to vector<1x8x128xf32>
    %1552 = vector.shape_cast %1551 : vector<1x8x128xf32> to vector<8x128xf32>
    %1553 = arith.subf %1552, %1366 : vector<8x128xf32>
    %1554 = math.exp %1553 : vector<8x128xf32>
    %1555 = arith.addf %1541, %1554 : vector<8x128xf32>
    %cst_376 = arith.constant 1.300000e+01 : f32
    %1556 = vector.broadcast %cst_376 : f32 to vector<8x128xf32>
    %1557 = arith.subf %1556, %1347 : vector<8x128xf32>
    %1558 = math.absf %1557 : vector<8x128xf32>
    %cst_377 = arith.constant 1.000000e+00 : f32
    %1559 = vector.broadcast %cst_377 : f32 to vector<8x128xf32>
    %1560 = arith.subf %1559, %1558 : vector<8x128xf32>
    %cst_378 = arith.constant 0.000000e+00 : f32
    %1561 = vector.broadcast %cst_378 : f32 to vector<8x128xf32>
    %1562 = arith.maximumf %1560, %1561 : vector<8x128xf32>
    %1563 = arith.mulf %1562, %1552 : vector<8x128xf32>
    %1564 = arith.addf %1550, %1563 : vector<8x128xf32>
    %1565 = vector.extract_strided_slice %1365 {offsets = [14, 0, 0], sizes = [1, 8, 128], strides = [1, 1, 1]} : vector<16x8x128xf32> to vector<1x8x128xf32>
    %1566 = vector.shape_cast %1565 : vector<1x8x128xf32> to vector<8x128xf32>
    %1567 = arith.subf %1566, %1366 : vector<8x128xf32>
    %1568 = math.exp %1567 : vector<8x128xf32>
    %1569 = arith.addf %1555, %1568 : vector<8x128xf32>
    %cst_379 = arith.constant 1.400000e+01 : f32
    %1570 = vector.broadcast %cst_379 : f32 to vector<8x128xf32>
    %1571 = arith.subf %1570, %1347 : vector<8x128xf32>
    %1572 = math.absf %1571 : vector<8x128xf32>
    %cst_380 = arith.constant 1.000000e+00 : f32
    %1573 = vector.broadcast %cst_380 : f32 to vector<8x128xf32>
    %1574 = arith.subf %1573, %1572 : vector<8x128xf32>
    %cst_381 = arith.constant 0.000000e+00 : f32
    %1575 = vector.broadcast %cst_381 : f32 to vector<8x128xf32>
    %1576 = arith.maximumf %1574, %1575 : vector<8x128xf32>
    %1577 = arith.mulf %1576, %1566 : vector<8x128xf32>
    %1578 = arith.addf %1564, %1577 : vector<8x128xf32>
    %1579 = vector.extract_strided_slice %1365 {offsets = [15, 0, 0], sizes = [1, 8, 128], strides = [1, 1, 1]} : vector<16x8x128xf32> to vector<1x8x128xf32>
    %1580 = vector.shape_cast %1579 : vector<1x8x128xf32> to vector<8x128xf32>
    %1581 = arith.subf %1580, %1366 : vector<8x128xf32>
    %1582 = math.exp %1581 : vector<8x128xf32>
    %1583 = arith.addf %1569, %1582 : vector<8x128xf32>
    %cst_382 = arith.constant 1.500000e+01 : f32
    %1584 = vector.broadcast %cst_382 : f32 to vector<8x128xf32>
    %1585 = arith.subf %1584, %1347 : vector<8x128xf32>
    %1586 = math.absf %1585 : vector<8x128xf32>
    %cst_383 = arith.constant 1.000000e+00 : f32
    %1587 = vector.broadcast %cst_383 : f32 to vector<8x128xf32>
    %1588 = arith.subf %1587, %1586 : vector<8x128xf32>
    %cst_384 = arith.constant 0.000000e+00 : f32
    %1589 = vector.broadcast %cst_384 : f32 to vector<8x128xf32>
    %1590 = arith.maximumf %1588, %1589 : vector<8x128xf32>
    %1591 = arith.mulf %1590, %1580 : vector<8x128xf32>
    %1592 = arith.addf %1578, %1591 : vector<8x128xf32>
    %1593 = math.log %1583 : vector<8x128xf32>
    %1594 = arith.addf %1366, %1593 : vector<8x128xf32>
    %1595 = arith.subf %1594, %1592 : vector<8x128xf32>
    %1596 = arith.addf %1363, %1595 : vector<8x128xf32>
    %c16_385 = arith.constant 16 : index
    %c8_386 = arith.constant 8 : index
    %c0_387 = arith.constant 0 : index
    %1597 = vector.load %arg2[%c16_385, %c8_386, %c0_387] : memref<64x24x128xbf16, #tpu.memory_space<vmem>>, vector<16x8x128xbf16>
    %1598 = arith.extf %1597 : vector<16x8x128xbf16> to vector<16x8x128xf32>
    %cst_388 = arith.constant dense<0xFF800000> : vector<8x128xf32>
    %1599 = vector.multi_reduction <maximumf>, %1598, %cst_388 [0] : vector<16x8x128xf32> to vector<8x128xf32>
    %cst_389 = arith.constant 0.000000e+00 : f32
    %1600 = vector.broadcast %cst_389 : f32 to vector<8x128xf32>
    %cst_390 = arith.constant 0.000000e+00 : f32
    %1601 = vector.broadcast %cst_390 : f32 to vector<8x128xf32>
    %1602 = vector.extract_strided_slice %1598 {offsets = [0, 0, 0], sizes = [1, 8, 128], strides = [1, 1, 1]} : vector<16x8x128xf32> to vector<1x8x128xf32>
    %1603 = vector.shape_cast %1602 : vector<1x8x128xf32> to vector<8x128xf32>
    %1604 = arith.subf %1603, %1599 : vector<8x128xf32>
    %1605 = math.exp %1604 : vector<8x128xf32>
    %1606 = arith.addf %1600, %1605 : vector<8x128xf32>
    %cst_391 = arith.constant 0.000000e+00 : f32
    %1607 = vector.broadcast %cst_391 : f32 to vector<8x128xf32>
    %1608 = arith.subf %1607, %1352 : vector<8x128xf32>
    %1609 = math.absf %1608 : vector<8x128xf32>
    %cst_392 = arith.constant 1.000000e+00 : f32
    %1610 = vector.broadcast %cst_392 : f32 to vector<8x128xf32>
    %1611 = arith.subf %1610, %1609 : vector<8x128xf32>
    %cst_393 = arith.constant 0.000000e+00 : f32
    %1612 = vector.broadcast %cst_393 : f32 to vector<8x128xf32>
    %1613 = arith.maximumf %1611, %1612 : vector<8x128xf32>
    %1614 = arith.mulf %1613, %1603 : vector<8x128xf32>
    %1615 = arith.addf %1601, %1614 : vector<8x128xf32>
    %1616 = vector.extract_strided_slice %1598 {offsets = [1, 0, 0], sizes = [1, 8, 128], strides = [1, 1, 1]} : vector<16x8x128xf32> to vector<1x8x128xf32>
    %1617 = vector.shape_cast %1616 : vector<1x8x128xf32> to vector<8x128xf32>
    %1618 = arith.subf %1617, %1599 : vector<8x128xf32>
    %1619 = math.exp %1618 : vector<8x128xf32>
    %1620 = arith.addf %1606, %1619 : vector<8x128xf32>
    %cst_394 = arith.constant 1.000000e+00 : f32
    %1621 = vector.broadcast %cst_394 : f32 to vector<8x128xf32>
    %1622 = arith.subf %1621, %1352 : vector<8x128xf32>
    %1623 = math.absf %1622 : vector<8x128xf32>
    %cst_395 = arith.constant 1.000000e+00 : f32
    %1624 = vector.broadcast %cst_395 : f32 to vector<8x128xf32>
    %1625 = arith.subf %1624, %1623 : vector<8x128xf32>
    %cst_396 = arith.constant 0.000000e+00 : f32
    %1626 = vector.broadcast %cst_396 : f32 to vector<8x128xf32>
    %1627 = arith.maximumf %1625, %1626 : vector<8x128xf32>
    %1628 = arith.mulf %1627, %1617 : vector<8x128xf32>
    %1629 = arith.addf %1615, %1628 : vector<8x128xf32>
    %1630 = vector.extract_strided_slice %1598 {offsets = [2, 0, 0], sizes = [1, 8, 128], strides = [1, 1, 1]} : vector<16x8x128xf32> to vector<1x8x128xf32>
    %1631 = vector.shape_cast %1630 : vector<1x8x128xf32> to vector<8x128xf32>
    %1632 = arith.subf %1631, %1599 : vector<8x128xf32>
    %1633 = math.exp %1632 : vector<8x128xf32>
    %1634 = arith.addf %1620, %1633 : vector<8x128xf32>
    %cst_397 = arith.constant 2.000000e+00 : f32
    %1635 = vector.broadcast %cst_397 : f32 to vector<8x128xf32>
    %1636 = arith.subf %1635, %1352 : vector<8x128xf32>
    %1637 = math.absf %1636 : vector<8x128xf32>
    %cst_398 = arith.constant 1.000000e+00 : f32
    %1638 = vector.broadcast %cst_398 : f32 to vector<8x128xf32>
    %1639 = arith.subf %1638, %1637 : vector<8x128xf32>
    %cst_399 = arith.constant 0.000000e+00 : f32
    %1640 = vector.broadcast %cst_399 : f32 to vector<8x128xf32>
    %1641 = arith.maximumf %1639, %1640 : vector<8x128xf32>
    %1642 = arith.mulf %1641, %1631 : vector<8x128xf32>
    %1643 = arith.addf %1629, %1642 : vector<8x128xf32>
    %1644 = vector.extract_strided_slice %1598 {offsets = [3, 0, 0], sizes = [1, 8, 128], strides = [1, 1, 1]} : vector<16x8x128xf32> to vector<1x8x128xf32>
    %1645 = vector.shape_cast %1644 : vector<1x8x128xf32> to vector<8x128xf32>
    %1646 = arith.subf %1645, %1599 : vector<8x128xf32>
    %1647 = math.exp %1646 : vector<8x128xf32>
    %1648 = arith.addf %1634, %1647 : vector<8x128xf32>
    %cst_400 = arith.constant 3.000000e+00 : f32
    %1649 = vector.broadcast %cst_400 : f32 to vector<8x128xf32>
    %1650 = arith.subf %1649, %1352 : vector<8x128xf32>
    %1651 = math.absf %1650 : vector<8x128xf32>
    %cst_401 = arith.constant 1.000000e+00 : f32
    %1652 = vector.broadcast %cst_401 : f32 to vector<8x128xf32>
    %1653 = arith.subf %1652, %1651 : vector<8x128xf32>
    %cst_402 = arith.constant 0.000000e+00 : f32
    %1654 = vector.broadcast %cst_402 : f32 to vector<8x128xf32>
    %1655 = arith.maximumf %1653, %1654 : vector<8x128xf32>
    %1656 = arith.mulf %1655, %1645 : vector<8x128xf32>
    %1657 = arith.addf %1643, %1656 : vector<8x128xf32>
    %1658 = vector.extract_strided_slice %1598 {offsets = [4, 0, 0], sizes = [1, 8, 128], strides = [1, 1, 1]} : vector<16x8x128xf32> to vector<1x8x128xf32>
    %1659 = vector.shape_cast %1658 : vector<1x8x128xf32> to vector<8x128xf32>
    %1660 = arith.subf %1659, %1599 : vector<8x128xf32>
    %1661 = math.exp %1660 : vector<8x128xf32>
    %1662 = arith.addf %1648, %1661 : vector<8x128xf32>
    %cst_403 = arith.constant 4.000000e+00 : f32
    %1663 = vector.broadcast %cst_403 : f32 to vector<8x128xf32>
    %1664 = arith.subf %1663, %1352 : vector<8x128xf32>
    %1665 = math.absf %1664 : vector<8x128xf32>
    %cst_404 = arith.constant 1.000000e+00 : f32
    %1666 = vector.broadcast %cst_404 : f32 to vector<8x128xf32>
    %1667 = arith.subf %1666, %1665 : vector<8x128xf32>
    %cst_405 = arith.constant 0.000000e+00 : f32
    %1668 = vector.broadcast %cst_405 : f32 to vector<8x128xf32>
    %1669 = arith.maximumf %1667, %1668 : vector<8x128xf32>
    %1670 = arith.mulf %1669, %1659 : vector<8x128xf32>
    %1671 = arith.addf %1657, %1670 : vector<8x128xf32>
    %1672 = vector.extract_strided_slice %1598 {offsets = [5, 0, 0], sizes = [1, 8, 128], strides = [1, 1, 1]} : vector<16x8x128xf32> to vector<1x8x128xf32>
    %1673 = vector.shape_cast %1672 : vector<1x8x128xf32> to vector<8x128xf32>
    %1674 = arith.subf %1673, %1599 : vector<8x128xf32>
    %1675 = math.exp %1674 : vector<8x128xf32>
    %1676 = arith.addf %1662, %1675 : vector<8x128xf32>
    %cst_406 = arith.constant 5.000000e+00 : f32
    %1677 = vector.broadcast %cst_406 : f32 to vector<8x128xf32>
    %1678 = arith.subf %1677, %1352 : vector<8x128xf32>
    %1679 = math.absf %1678 : vector<8x128xf32>
    %cst_407 = arith.constant 1.000000e+00 : f32
    %1680 = vector.broadcast %cst_407 : f32 to vector<8x128xf32>
    %1681 = arith.subf %1680, %1679 : vector<8x128xf32>
    %cst_408 = arith.constant 0.000000e+00 : f32
    %1682 = vector.broadcast %cst_408 : f32 to vector<8x128xf32>
    %1683 = arith.maximumf %1681, %1682 : vector<8x128xf32>
    %1684 = arith.mulf %1683, %1673 : vector<8x128xf32>
    %1685 = arith.addf %1671, %1684 : vector<8x128xf32>
    %1686 = vector.extract_strided_slice %1598 {offsets = [6, 0, 0], sizes = [1, 8, 128], strides = [1, 1, 1]} : vector<16x8x128xf32> to vector<1x8x128xf32>
    %1687 = vector.shape_cast %1686 : vector<1x8x128xf32> to vector<8x128xf32>
    %1688 = arith.subf %1687, %1599 : vector<8x128xf32>
    %1689 = math.exp %1688 : vector<8x128xf32>
    %1690 = arith.addf %1676, %1689 : vector<8x128xf32>
    %cst_409 = arith.constant 6.000000e+00 : f32
    %1691 = vector.broadcast %cst_409 : f32 to vector<8x128xf32>
    %1692 = arith.subf %1691, %1352 : vector<8x128xf32>
    %1693 = math.absf %1692 : vector<8x128xf32>
    %cst_410 = arith.constant 1.000000e+00 : f32
    %1694 = vector.broadcast %cst_410 : f32 to vector<8x128xf32>
    %1695 = arith.subf %1694, %1693 : vector<8x128xf32>
    %cst_411 = arith.constant 0.000000e+00 : f32
    %1696 = vector.broadcast %cst_411 : f32 to vector<8x128xf32>
    %1697 = arith.maximumf %1695, %1696 : vector<8x128xf32>
    %1698 = arith.mulf %1697, %1687 : vector<8x128xf32>
    %1699 = arith.addf %1685, %1698 : vector<8x128xf32>
    %1700 = vector.extract_strided_slice %1598 {offsets = [7, 0, 0], sizes = [1, 8, 128], strides = [1, 1, 1]} : vector<16x8x128xf32> to vector<1x8x128xf32>
    %1701 = vector.shape_cast %1700 : vector<1x8x128xf32> to vector<8x128xf32>
    %1702 = arith.subf %1701, %1599 : vector<8x128xf32>
    %1703 = math.exp %1702 : vector<8x128xf32>
    %1704 = arith.addf %1690, %1703 : vector<8x128xf32>
    %cst_412 = arith.constant 7.000000e+00 : f32
    %1705 = vector.broadcast %cst_412 : f32 to vector<8x128xf32>
    %1706 = arith.subf %1705, %1352 : vector<8x128xf32>
    %1707 = math.absf %1706 : vector<8x128xf32>
    %cst_413 = arith.constant 1.000000e+00 : f32
    %1708 = vector.broadcast %cst_413 : f32 to vector<8x128xf32>
    %1709 = arith.subf %1708, %1707 : vector<8x128xf32>
    %cst_414 = arith.constant 0.000000e+00 : f32
    %1710 = vector.broadcast %cst_414 : f32 to vector<8x128xf32>
    %1711 = arith.maximumf %1709, %1710 : vector<8x128xf32>
    %1712 = arith.mulf %1711, %1701 : vector<8x128xf32>
    %1713 = arith.addf %1699, %1712 : vector<8x128xf32>
    %1714 = vector.extract_strided_slice %1598 {offsets = [8, 0, 0], sizes = [1, 8, 128], strides = [1, 1, 1]} : vector<16x8x128xf32> to vector<1x8x128xf32>
    %1715 = vector.shape_cast %1714 : vector<1x8x128xf32> to vector<8x128xf32>
    %1716 = arith.subf %1715, %1599 : vector<8x128xf32>
    %1717 = math.exp %1716 : vector<8x128xf32>
    %1718 = arith.addf %1704, %1717 : vector<8x128xf32>
    %cst_415 = arith.constant 8.000000e+00 : f32
    %1719 = vector.broadcast %cst_415 : f32 to vector<8x128xf32>
    %1720 = arith.subf %1719, %1352 : vector<8x128xf32>
    %1721 = math.absf %1720 : vector<8x128xf32>
    %cst_416 = arith.constant 1.000000e+00 : f32
    %1722 = vector.broadcast %cst_416 : f32 to vector<8x128xf32>
    %1723 = arith.subf %1722, %1721 : vector<8x128xf32>
    %cst_417 = arith.constant 0.000000e+00 : f32
    %1724 = vector.broadcast %cst_417 : f32 to vector<8x128xf32>
    %1725 = arith.maximumf %1723, %1724 : vector<8x128xf32>
    %1726 = arith.mulf %1725, %1715 : vector<8x128xf32>
    %1727 = arith.addf %1713, %1726 : vector<8x128xf32>
    %1728 = vector.extract_strided_slice %1598 {offsets = [9, 0, 0], sizes = [1, 8, 128], strides = [1, 1, 1]} : vector<16x8x128xf32> to vector<1x8x128xf32>
    %1729 = vector.shape_cast %1728 : vector<1x8x128xf32> to vector<8x128xf32>
    %1730 = arith.subf %1729, %1599 : vector<8x128xf32>
    %1731 = math.exp %1730 : vector<8x128xf32>
    %1732 = arith.addf %1718, %1731 : vector<8x128xf32>
    %cst_418 = arith.constant 9.000000e+00 : f32
    %1733 = vector.broadcast %cst_418 : f32 to vector<8x128xf32>
    %1734 = arith.subf %1733, %1352 : vector<8x128xf32>
    %1735 = math.absf %1734 : vector<8x128xf32>
    %cst_419 = arith.constant 1.000000e+00 : f32
    %1736 = vector.broadcast %cst_419 : f32 to vector<8x128xf32>
    %1737 = arith.subf %1736, %1735 : vector<8x128xf32>
    %cst_420 = arith.constant 0.000000e+00 : f32
    %1738 = vector.broadcast %cst_420 : f32 to vector<8x128xf32>
    %1739 = arith.maximumf %1737, %1738 : vector<8x128xf32>
    %1740 = arith.mulf %1739, %1729 : vector<8x128xf32>
    %1741 = arith.addf %1727, %1740 : vector<8x128xf32>
    %1742 = vector.extract_strided_slice %1598 {offsets = [10, 0, 0], sizes = [1, 8, 128], strides = [1, 1, 1]} : vector<16x8x128xf32> to vector<1x8x128xf32>
    %1743 = vector.shape_cast %1742 : vector<1x8x128xf32> to vector<8x128xf32>
    %1744 = arith.subf %1743, %1599 : vector<8x128xf32>
    %1745 = math.exp %1744 : vector<8x128xf32>
    %1746 = arith.addf %1732, %1745 : vector<8x128xf32>
    %cst_421 = arith.constant 1.000000e+01 : f32
    %1747 = vector.broadcast %cst_421 : f32 to vector<8x128xf32>
    %1748 = arith.subf %1747, %1352 : vector<8x128xf32>
    %1749 = math.absf %1748 : vector<8x128xf32>
    %cst_422 = arith.constant 1.000000e+00 : f32
    %1750 = vector.broadcast %cst_422 : f32 to vector<8x128xf32>
    %1751 = arith.subf %1750, %1749 : vector<8x128xf32>
    %cst_423 = arith.constant 0.000000e+00 : f32
    %1752 = vector.broadcast %cst_423 : f32 to vector<8x128xf32>
    %1753 = arith.maximumf %1751, %1752 : vector<8x128xf32>
    %1754 = arith.mulf %1753, %1743 : vector<8x128xf32>
    %1755 = arith.addf %1741, %1754 : vector<8x128xf32>
    %1756 = vector.extract_strided_slice %1598 {offsets = [11, 0, 0], sizes = [1, 8, 128], strides = [1, 1, 1]} : vector<16x8x128xf32> to vector<1x8x128xf32>
    %1757 = vector.shape_cast %1756 : vector<1x8x128xf32> to vector<8x128xf32>
    %1758 = arith.subf %1757, %1599 : vector<8x128xf32>
    %1759 = math.exp %1758 : vector<8x128xf32>
    %1760 = arith.addf %1746, %1759 : vector<8x128xf32>
    %cst_424 = arith.constant 1.100000e+01 : f32
    %1761 = vector.broadcast %cst_424 : f32 to vector<8x128xf32>
    %1762 = arith.subf %1761, %1352 : vector<8x128xf32>
    %1763 = math.absf %1762 : vector<8x128xf32>
    %cst_425 = arith.constant 1.000000e+00 : f32
    %1764 = vector.broadcast %cst_425 : f32 to vector<8x128xf32>
    %1765 = arith.subf %1764, %1763 : vector<8x128xf32>
    %cst_426 = arith.constant 0.000000e+00 : f32
    %1766 = vector.broadcast %cst_426 : f32 to vector<8x128xf32>
    %1767 = arith.maximumf %1765, %1766 : vector<8x128xf32>
    %1768 = arith.mulf %1767, %1757 : vector<8x128xf32>
    %1769 = arith.addf %1755, %1768 : vector<8x128xf32>
    %1770 = vector.extract_strided_slice %1598 {offsets = [12, 0, 0], sizes = [1, 8, 128], strides = [1, 1, 1]} : vector<16x8x128xf32> to vector<1x8x128xf32>
    %1771 = vector.shape_cast %1770 : vector<1x8x128xf32> to vector<8x128xf32>
    %1772 = arith.subf %1771, %1599 : vector<8x128xf32>
    %1773 = math.exp %1772 : vector<8x128xf32>
    %1774 = arith.addf %1760, %1773 : vector<8x128xf32>
    %cst_427 = arith.constant 1.200000e+01 : f32
    %1775 = vector.broadcast %cst_427 : f32 to vector<8x128xf32>
    %1776 = arith.subf %1775, %1352 : vector<8x128xf32>
    %1777 = math.absf %1776 : vector<8x128xf32>
    %cst_428 = arith.constant 1.000000e+00 : f32
    %1778 = vector.broadcast %cst_428 : f32 to vector<8x128xf32>
    %1779 = arith.subf %1778, %1777 : vector<8x128xf32>
    %cst_429 = arith.constant 0.000000e+00 : f32
    %1780 = vector.broadcast %cst_429 : f32 to vector<8x128xf32>
    %1781 = arith.maximumf %1779, %1780 : vector<8x128xf32>
    %1782 = arith.mulf %1781, %1771 : vector<8x128xf32>
    %1783 = arith.addf %1769, %1782 : vector<8x128xf32>
    %1784 = vector.extract_strided_slice %1598 {offsets = [13, 0, 0], sizes = [1, 8, 128], strides = [1, 1, 1]} : vector<16x8x128xf32> to vector<1x8x128xf32>
    %1785 = vector.shape_cast %1784 : vector<1x8x128xf32> to vector<8x128xf32>
    %1786 = arith.subf %1785, %1599 : vector<8x128xf32>
    %1787 = math.exp %1786 : vector<8x128xf32>
    %1788 = arith.addf %1774, %1787 : vector<8x128xf32>
    %cst_430 = arith.constant 1.300000e+01 : f32
    %1789 = vector.broadcast %cst_430 : f32 to vector<8x128xf32>
    %1790 = arith.subf %1789, %1352 : vector<8x128xf32>
    %1791 = math.absf %1790 : vector<8x128xf32>
    %cst_431 = arith.constant 1.000000e+00 : f32
    %1792 = vector.broadcast %cst_431 : f32 to vector<8x128xf32>
    %1793 = arith.subf %1792, %1791 : vector<8x128xf32>
    %cst_432 = arith.constant 0.000000e+00 : f32
    %1794 = vector.broadcast %cst_432 : f32 to vector<8x128xf32>
    %1795 = arith.maximumf %1793, %1794 : vector<8x128xf32>
    %1796 = arith.mulf %1795, %1785 : vector<8x128xf32>
    %1797 = arith.addf %1783, %1796 : vector<8x128xf32>
    %1798 = vector.extract_strided_slice %1598 {offsets = [14, 0, 0], sizes = [1, 8, 128], strides = [1, 1, 1]} : vector<16x8x128xf32> to vector<1x8x128xf32>
    %1799 = vector.shape_cast %1798 : vector<1x8x128xf32> to vector<8x128xf32>
    %1800 = arith.subf %1799, %1599 : vector<8x128xf32>
    %1801 = math.exp %1800 : vector<8x128xf32>
    %1802 = arith.addf %1788, %1801 : vector<8x128xf32>
    %cst_433 = arith.constant 1.400000e+01 : f32
    %1803 = vector.broadcast %cst_433 : f32 to vector<8x128xf32>
    %1804 = arith.subf %1803, %1352 : vector<8x128xf32>
    %1805 = math.absf %1804 : vector<8x128xf32>
    %cst_434 = arith.constant 1.000000e+00 : f32
    %1806 = vector.broadcast %cst_434 : f32 to vector<8x128xf32>
    %1807 = arith.subf %1806, %1805 : vector<8x128xf32>
    %cst_435 = arith.constant 0.000000e+00 : f32
    %1808 = vector.broadcast %cst_435 : f32 to vector<8x128xf32>
    %1809 = arith.maximumf %1807, %1808 : vector<8x128xf32>
    %1810 = arith.mulf %1809, %1799 : vector<8x128xf32>
    %1811 = arith.addf %1797, %1810 : vector<8x128xf32>
    %1812 = vector.extract_strided_slice %1598 {offsets = [15, 0, 0], sizes = [1, 8, 128], strides = [1, 1, 1]} : vector<16x8x128xf32> to vector<1x8x128xf32>
    %1813 = vector.shape_cast %1812 : vector<1x8x128xf32> to vector<8x128xf32>
    %1814 = arith.subf %1813, %1599 : vector<8x128xf32>
    %1815 = math.exp %1814 : vector<8x128xf32>
    %1816 = arith.addf %1802, %1815 : vector<8x128xf32>
    %cst_436 = arith.constant 1.500000e+01 : f32
    %1817 = vector.broadcast %cst_436 : f32 to vector<8x128xf32>
    %1818 = arith.subf %1817, %1352 : vector<8x128xf32>
    %1819 = math.absf %1818 : vector<8x128xf32>
    %cst_437 = arith.constant 1.000000e+00 : f32
    %1820 = vector.broadcast %cst_437 : f32 to vector<8x128xf32>
    %1821 = arith.subf %1820, %1819 : vector<8x128xf32>
    %cst_438 = arith.constant 0.000000e+00 : f32
    %1822 = vector.broadcast %cst_438 : f32 to vector<8x128xf32>
    %1823 = arith.maximumf %1821, %1822 : vector<8x128xf32>
    %1824 = arith.mulf %1823, %1813 : vector<8x128xf32>
    %1825 = arith.addf %1811, %1824 : vector<8x128xf32>
    %1826 = math.log %1816 : vector<8x128xf32>
    %1827 = arith.addf %1599, %1826 : vector<8x128xf32>
    %1828 = arith.subf %1827, %1825 : vector<8x128xf32>
    %1829 = arith.addf %1596, %1828 : vector<8x128xf32>
    %c32_439 = arith.constant 32 : index
    %c8_440 = arith.constant 8 : index
    %c0_441 = arith.constant 0 : index
    %1830 = vector.load %arg2[%c32_439, %c8_440, %c0_441] : memref<64x24x128xbf16, #tpu.memory_space<vmem>>, vector<16x8x128xbf16>
    %1831 = arith.extf %1830 : vector<16x8x128xbf16> to vector<16x8x128xf32>
    %cst_442 = arith.constant dense<0xFF800000> : vector<8x128xf32>
    %1832 = vector.multi_reduction <maximumf>, %1831, %cst_442 [0] : vector<16x8x128xf32> to vector<8x128xf32>
    %cst_443 = arith.constant 0.000000e+00 : f32
    %1833 = vector.broadcast %cst_443 : f32 to vector<8x128xf32>
    %cst_444 = arith.constant 0.000000e+00 : f32
    %1834 = vector.broadcast %cst_444 : f32 to vector<8x128xf32>
    %1835 = vector.extract_strided_slice %1831 {offsets = [0, 0, 0], sizes = [1, 8, 128], strides = [1, 1, 1]} : vector<16x8x128xf32> to vector<1x8x128xf32>
    %1836 = vector.shape_cast %1835 : vector<1x8x128xf32> to vector<8x128xf32>
    %1837 = arith.subf %1836, %1832 : vector<8x128xf32>
    %1838 = math.exp %1837 : vector<8x128xf32>
    %1839 = arith.addf %1833, %1838 : vector<8x128xf32>
    %cst_445 = arith.constant 0.000000e+00 : f32
    %1840 = vector.broadcast %cst_445 : f32 to vector<8x128xf32>
    %1841 = arith.subf %1840, %1357 : vector<8x128xf32>
    %1842 = math.absf %1841 : vector<8x128xf32>
    %cst_446 = arith.constant 1.000000e+00 : f32
    %1843 = vector.broadcast %cst_446 : f32 to vector<8x128xf32>
    %1844 = arith.subf %1843, %1842 : vector<8x128xf32>
    %cst_447 = arith.constant 0.000000e+00 : f32
    %1845 = vector.broadcast %cst_447 : f32 to vector<8x128xf32>
    %1846 = arith.maximumf %1844, %1845 : vector<8x128xf32>
    %1847 = arith.mulf %1846, %1836 : vector<8x128xf32>
    %1848 = arith.addf %1834, %1847 : vector<8x128xf32>
    %1849 = vector.extract_strided_slice %1831 {offsets = [1, 0, 0], sizes = [1, 8, 128], strides = [1, 1, 1]} : vector<16x8x128xf32> to vector<1x8x128xf32>
    %1850 = vector.shape_cast %1849 : vector<1x8x128xf32> to vector<8x128xf32>
    %1851 = arith.subf %1850, %1832 : vector<8x128xf32>
    %1852 = math.exp %1851 : vector<8x128xf32>
    %1853 = arith.addf %1839, %1852 : vector<8x128xf32>
    %cst_448 = arith.constant 1.000000e+00 : f32
    %1854 = vector.broadcast %cst_448 : f32 to vector<8x128xf32>
    %1855 = arith.subf %1854, %1357 : vector<8x128xf32>
    %1856 = math.absf %1855 : vector<8x128xf32>
    %cst_449 = arith.constant 1.000000e+00 : f32
    %1857 = vector.broadcast %cst_449 : f32 to vector<8x128xf32>
    %1858 = arith.subf %1857, %1856 : vector<8x128xf32>
    %cst_450 = arith.constant 0.000000e+00 : f32
    %1859 = vector.broadcast %cst_450 : f32 to vector<8x128xf32>
    %1860 = arith.maximumf %1858, %1859 : vector<8x128xf32>
    %1861 = arith.mulf %1860, %1850 : vector<8x128xf32>
    %1862 = arith.addf %1848, %1861 : vector<8x128xf32>
    %1863 = vector.extract_strided_slice %1831 {offsets = [2, 0, 0], sizes = [1, 8, 128], strides = [1, 1, 1]} : vector<16x8x128xf32> to vector<1x8x128xf32>
    %1864 = vector.shape_cast %1863 : vector<1x8x128xf32> to vector<8x128xf32>
    %1865 = arith.subf %1864, %1832 : vector<8x128xf32>
    %1866 = math.exp %1865 : vector<8x128xf32>
    %1867 = arith.addf %1853, %1866 : vector<8x128xf32>
    %cst_451 = arith.constant 2.000000e+00 : f32
    %1868 = vector.broadcast %cst_451 : f32 to vector<8x128xf32>
    %1869 = arith.subf %1868, %1357 : vector<8x128xf32>
    %1870 = math.absf %1869 : vector<8x128xf32>
    %cst_452 = arith.constant 1.000000e+00 : f32
    %1871 = vector.broadcast %cst_452 : f32 to vector<8x128xf32>
    %1872 = arith.subf %1871, %1870 : vector<8x128xf32>
    %cst_453 = arith.constant 0.000000e+00 : f32
    %1873 = vector.broadcast %cst_453 : f32 to vector<8x128xf32>
    %1874 = arith.maximumf %1872, %1873 : vector<8x128xf32>
    %1875 = arith.mulf %1874, %1864 : vector<8x128xf32>
    %1876 = arith.addf %1862, %1875 : vector<8x128xf32>
    %1877 = vector.extract_strided_slice %1831 {offsets = [3, 0, 0], sizes = [1, 8, 128], strides = [1, 1, 1]} : vector<16x8x128xf32> to vector<1x8x128xf32>
    %1878 = vector.shape_cast %1877 : vector<1x8x128xf32> to vector<8x128xf32>
    %1879 = arith.subf %1878, %1832 : vector<8x128xf32>
    %1880 = math.exp %1879 : vector<8x128xf32>
    %1881 = arith.addf %1867, %1880 : vector<8x128xf32>
    %cst_454 = arith.constant 3.000000e+00 : f32
    %1882 = vector.broadcast %cst_454 : f32 to vector<8x128xf32>
    %1883 = arith.subf %1882, %1357 : vector<8x128xf32>
    %1884 = math.absf %1883 : vector<8x128xf32>
    %cst_455 = arith.constant 1.000000e+00 : f32
    %1885 = vector.broadcast %cst_455 : f32 to vector<8x128xf32>
    %1886 = arith.subf %1885, %1884 : vector<8x128xf32>
    %cst_456 = arith.constant 0.000000e+00 : f32
    %1887 = vector.broadcast %cst_456 : f32 to vector<8x128xf32>
    %1888 = arith.maximumf %1886, %1887 : vector<8x128xf32>
    %1889 = arith.mulf %1888, %1878 : vector<8x128xf32>
    %1890 = arith.addf %1876, %1889 : vector<8x128xf32>
    %1891 = vector.extract_strided_slice %1831 {offsets = [4, 0, 0], sizes = [1, 8, 128], strides = [1, 1, 1]} : vector<16x8x128xf32> to vector<1x8x128xf32>
    %1892 = vector.shape_cast %1891 : vector<1x8x128xf32> to vector<8x128xf32>
    %1893 = arith.subf %1892, %1832 : vector<8x128xf32>
    %1894 = math.exp %1893 : vector<8x128xf32>
    %1895 = arith.addf %1881, %1894 : vector<8x128xf32>
    %cst_457 = arith.constant 4.000000e+00 : f32
    %1896 = vector.broadcast %cst_457 : f32 to vector<8x128xf32>
    %1897 = arith.subf %1896, %1357 : vector<8x128xf32>
    %1898 = math.absf %1897 : vector<8x128xf32>
    %cst_458 = arith.constant 1.000000e+00 : f32
    %1899 = vector.broadcast %cst_458 : f32 to vector<8x128xf32>
    %1900 = arith.subf %1899, %1898 : vector<8x128xf32>
    %cst_459 = arith.constant 0.000000e+00 : f32
    %1901 = vector.broadcast %cst_459 : f32 to vector<8x128xf32>
    %1902 = arith.maximumf %1900, %1901 : vector<8x128xf32>
    %1903 = arith.mulf %1902, %1892 : vector<8x128xf32>
    %1904 = arith.addf %1890, %1903 : vector<8x128xf32>
    %1905 = vector.extract_strided_slice %1831 {offsets = [5, 0, 0], sizes = [1, 8, 128], strides = [1, 1, 1]} : vector<16x8x128xf32> to vector<1x8x128xf32>
    %1906 = vector.shape_cast %1905 : vector<1x8x128xf32> to vector<8x128xf32>
    %1907 = arith.subf %1906, %1832 : vector<8x128xf32>
    %1908 = math.exp %1907 : vector<8x128xf32>
    %1909 = arith.addf %1895, %1908 : vector<8x128xf32>
    %cst_460 = arith.constant 5.000000e+00 : f32
    %1910 = vector.broadcast %cst_460 : f32 to vector<8x128xf32>
    %1911 = arith.subf %1910, %1357 : vector<8x128xf32>
    %1912 = math.absf %1911 : vector<8x128xf32>
    %cst_461 = arith.constant 1.000000e+00 : f32
    %1913 = vector.broadcast %cst_461 : f32 to vector<8x128xf32>
    %1914 = arith.subf %1913, %1912 : vector<8x128xf32>
    %cst_462 = arith.constant 0.000000e+00 : f32
    %1915 = vector.broadcast %cst_462 : f32 to vector<8x128xf32>
    %1916 = arith.maximumf %1914, %1915 : vector<8x128xf32>
    %1917 = arith.mulf %1916, %1906 : vector<8x128xf32>
    %1918 = arith.addf %1904, %1917 : vector<8x128xf32>
    %1919 = vector.extract_strided_slice %1831 {offsets = [6, 0, 0], sizes = [1, 8, 128], strides = [1, 1, 1]} : vector<16x8x128xf32> to vector<1x8x128xf32>
    %1920 = vector.shape_cast %1919 : vector<1x8x128xf32> to vector<8x128xf32>
    %1921 = arith.subf %1920, %1832 : vector<8x128xf32>
    %1922 = math.exp %1921 : vector<8x128xf32>
    %1923 = arith.addf %1909, %1922 : vector<8x128xf32>
    %cst_463 = arith.constant 6.000000e+00 : f32
    %1924 = vector.broadcast %cst_463 : f32 to vector<8x128xf32>
    %1925 = arith.subf %1924, %1357 : vector<8x128xf32>
    %1926 = math.absf %1925 : vector<8x128xf32>
    %cst_464 = arith.constant 1.000000e+00 : f32
    %1927 = vector.broadcast %cst_464 : f32 to vector<8x128xf32>
    %1928 = arith.subf %1927, %1926 : vector<8x128xf32>
    %cst_465 = arith.constant 0.000000e+00 : f32
    %1929 = vector.broadcast %cst_465 : f32 to vector<8x128xf32>
    %1930 = arith.maximumf %1928, %1929 : vector<8x128xf32>
    %1931 = arith.mulf %1930, %1920 : vector<8x128xf32>
    %1932 = arith.addf %1918, %1931 : vector<8x128xf32>
    %1933 = vector.extract_strided_slice %1831 {offsets = [7, 0, 0], sizes = [1, 8, 128], strides = [1, 1, 1]} : vector<16x8x128xf32> to vector<1x8x128xf32>
    %1934 = vector.shape_cast %1933 : vector<1x8x128xf32> to vector<8x128xf32>
    %1935 = arith.subf %1934, %1832 : vector<8x128xf32>
    %1936 = math.exp %1935 : vector<8x128xf32>
    %1937 = arith.addf %1923, %1936 : vector<8x128xf32>
    %cst_466 = arith.constant 7.000000e+00 : f32
    %1938 = vector.broadcast %cst_466 : f32 to vector<8x128xf32>
    %1939 = arith.subf %1938, %1357 : vector<8x128xf32>
    %1940 = math.absf %1939 : vector<8x128xf32>
    %cst_467 = arith.constant 1.000000e+00 : f32
    %1941 = vector.broadcast %cst_467 : f32 to vector<8x128xf32>
    %1942 = arith.subf %1941, %1940 : vector<8x128xf32>
    %cst_468 = arith.constant 0.000000e+00 : f32
    %1943 = vector.broadcast %cst_468 : f32 to vector<8x128xf32>
    %1944 = arith.maximumf %1942, %1943 : vector<8x128xf32>
    %1945 = arith.mulf %1944, %1934 : vector<8x128xf32>
    %1946 = arith.addf %1932, %1945 : vector<8x128xf32>
    %1947 = vector.extract_strided_slice %1831 {offsets = [8, 0, 0], sizes = [1, 8, 128], strides = [1, 1, 1]} : vector<16x8x128xf32> to vector<1x8x128xf32>
    %1948 = vector.shape_cast %1947 : vector<1x8x128xf32> to vector<8x128xf32>
    %1949 = arith.subf %1948, %1832 : vector<8x128xf32>
    %1950 = math.exp %1949 : vector<8x128xf32>
    %1951 = arith.addf %1937, %1950 : vector<8x128xf32>
    %cst_469 = arith.constant 8.000000e+00 : f32
    %1952 = vector.broadcast %cst_469 : f32 to vector<8x128xf32>
    %1953 = arith.subf %1952, %1357 : vector<8x128xf32>
    %1954 = math.absf %1953 : vector<8x128xf32>
    %cst_470 = arith.constant 1.000000e+00 : f32
    %1955 = vector.broadcast %cst_470 : f32 to vector<8x128xf32>
    %1956 = arith.subf %1955, %1954 : vector<8x128xf32>
    %cst_471 = arith.constant 0.000000e+00 : f32
    %1957 = vector.broadcast %cst_471 : f32 to vector<8x128xf32>
    %1958 = arith.maximumf %1956, %1957 : vector<8x128xf32>
    %1959 = arith.mulf %1958, %1948 : vector<8x128xf32>
    %1960 = arith.addf %1946, %1959 : vector<8x128xf32>
    %1961 = vector.extract_strided_slice %1831 {offsets = [9, 0, 0], sizes = [1, 8, 128], strides = [1, 1, 1]} : vector<16x8x128xf32> to vector<1x8x128xf32>
    %1962 = vector.shape_cast %1961 : vector<1x8x128xf32> to vector<8x128xf32>
    %1963 = arith.subf %1962, %1832 : vector<8x128xf32>
    %1964 = math.exp %1963 : vector<8x128xf32>
    %1965 = arith.addf %1951, %1964 : vector<8x128xf32>
    %cst_472 = arith.constant 9.000000e+00 : f32
    %1966 = vector.broadcast %cst_472 : f32 to vector<8x128xf32>
    %1967 = arith.subf %1966, %1357 : vector<8x128xf32>
    %1968 = math.absf %1967 : vector<8x128xf32>
    %cst_473 = arith.constant 1.000000e+00 : f32
    %1969 = vector.broadcast %cst_473 : f32 to vector<8x128xf32>
    %1970 = arith.subf %1969, %1968 : vector<8x128xf32>
    %cst_474 = arith.constant 0.000000e+00 : f32
    %1971 = vector.broadcast %cst_474 : f32 to vector<8x128xf32>
    %1972 = arith.maximumf %1970, %1971 : vector<8x128xf32>
    %1973 = arith.mulf %1972, %1962 : vector<8x128xf32>
    %1974 = arith.addf %1960, %1973 : vector<8x128xf32>
    %1975 = vector.extract_strided_slice %1831 {offsets = [10, 0, 0], sizes = [1, 8, 128], strides = [1, 1, 1]} : vector<16x8x128xf32> to vector<1x8x128xf32>
    %1976 = vector.shape_cast %1975 : vector<1x8x128xf32> to vector<8x128xf32>
    %1977 = arith.subf %1976, %1832 : vector<8x128xf32>
    %1978 = math.exp %1977 : vector<8x128xf32>
    %1979 = arith.addf %1965, %1978 : vector<8x128xf32>
    %cst_475 = arith.constant 1.000000e+01 : f32
    %1980 = vector.broadcast %cst_475 : f32 to vector<8x128xf32>
    %1981 = arith.subf %1980, %1357 : vector<8x128xf32>
    %1982 = math.absf %1981 : vector<8x128xf32>
    %cst_476 = arith.constant 1.000000e+00 : f32
    %1983 = vector.broadcast %cst_476 : f32 to vector<8x128xf32>
    %1984 = arith.subf %1983, %1982 : vector<8x128xf32>
    %cst_477 = arith.constant 0.000000e+00 : f32
    %1985 = vector.broadcast %cst_477 : f32 to vector<8x128xf32>
    %1986 = arith.maximumf %1984, %1985 : vector<8x128xf32>
    %1987 = arith.mulf %1986, %1976 : vector<8x128xf32>
    %1988 = arith.addf %1974, %1987 : vector<8x128xf32>
    %1989 = vector.extract_strided_slice %1831 {offsets = [11, 0, 0], sizes = [1, 8, 128], strides = [1, 1, 1]} : vector<16x8x128xf32> to vector<1x8x128xf32>
    %1990 = vector.shape_cast %1989 : vector<1x8x128xf32> to vector<8x128xf32>
    %1991 = arith.subf %1990, %1832 : vector<8x128xf32>
    %1992 = math.exp %1991 : vector<8x128xf32>
    %1993 = arith.addf %1979, %1992 : vector<8x128xf32>
    %cst_478 = arith.constant 1.100000e+01 : f32
    %1994 = vector.broadcast %cst_478 : f32 to vector<8x128xf32>
    %1995 = arith.subf %1994, %1357 : vector<8x128xf32>
    %1996 = math.absf %1995 : vector<8x128xf32>
    %cst_479 = arith.constant 1.000000e+00 : f32
    %1997 = vector.broadcast %cst_479 : f32 to vector<8x128xf32>
    %1998 = arith.subf %1997, %1996 : vector<8x128xf32>
    %cst_480 = arith.constant 0.000000e+00 : f32
    %1999 = vector.broadcast %cst_480 : f32 to vector<8x128xf32>
    %2000 = arith.maximumf %1998, %1999 : vector<8x128xf32>
    %2001 = arith.mulf %2000, %1990 : vector<8x128xf32>
    %2002 = arith.addf %1988, %2001 : vector<8x128xf32>
    %2003 = vector.extract_strided_slice %1831 {offsets = [12, 0, 0], sizes = [1, 8, 128], strides = [1, 1, 1]} : vector<16x8x128xf32> to vector<1x8x128xf32>
    %2004 = vector.shape_cast %2003 : vector<1x8x128xf32> to vector<8x128xf32>
    %2005 = arith.subf %2004, %1832 : vector<8x128xf32>
    %2006 = math.exp %2005 : vector<8x128xf32>
    %2007 = arith.addf %1993, %2006 : vector<8x128xf32>
    %cst_481 = arith.constant 1.200000e+01 : f32
    %2008 = vector.broadcast %cst_481 : f32 to vector<8x128xf32>
    %2009 = arith.subf %2008, %1357 : vector<8x128xf32>
    %2010 = math.absf %2009 : vector<8x128xf32>
    %cst_482 = arith.constant 1.000000e+00 : f32
    %2011 = vector.broadcast %cst_482 : f32 to vector<8x128xf32>
    %2012 = arith.subf %2011, %2010 : vector<8x128xf32>
    %cst_483 = arith.constant 0.000000e+00 : f32
    %2013 = vector.broadcast %cst_483 : f32 to vector<8x128xf32>
    %2014 = arith.maximumf %2012, %2013 : vector<8x128xf32>
    %2015 = arith.mulf %2014, %2004 : vector<8x128xf32>
    %2016 = arith.addf %2002, %2015 : vector<8x128xf32>
    %2017 = vector.extract_strided_slice %1831 {offsets = [13, 0, 0], sizes = [1, 8, 128], strides = [1, 1, 1]} : vector<16x8x128xf32> to vector<1x8x128xf32>
    %2018 = vector.shape_cast %2017 : vector<1x8x128xf32> to vector<8x128xf32>
    %2019 = arith.subf %2018, %1832 : vector<8x128xf32>
    %2020 = math.exp %2019 : vector<8x128xf32>
    %2021 = arith.addf %2007, %2020 : vector<8x128xf32>
    %cst_484 = arith.constant 1.300000e+01 : f32
    %2022 = vector.broadcast %cst_484 : f32 to vector<8x128xf32>
    %2023 = arith.subf %2022, %1357 : vector<8x128xf32>
    %2024 = math.absf %2023 : vector<8x128xf32>
    %cst_485 = arith.constant 1.000000e+00 : f32
    %2025 = vector.broadcast %cst_485 : f32 to vector<8x128xf32>
    %2026 = arith.subf %2025, %2024 : vector<8x128xf32>
    %cst_486 = arith.constant 0.000000e+00 : f32
    %2027 = vector.broadcast %cst_486 : f32 to vector<8x128xf32>
    %2028 = arith.maximumf %2026, %2027 : vector<8x128xf32>
    %2029 = arith.mulf %2028, %2018 : vector<8x128xf32>
    %2030 = arith.addf %2016, %2029 : vector<8x128xf32>
    %2031 = vector.extract_strided_slice %1831 {offsets = [14, 0, 0], sizes = [1, 8, 128], strides = [1, 1, 1]} : vector<16x8x128xf32> to vector<1x8x128xf32>
    %2032 = vector.shape_cast %2031 : vector<1x8x128xf32> to vector<8x128xf32>
    %2033 = arith.subf %2032, %1832 : vector<8x128xf32>
    %2034 = math.exp %2033 : vector<8x128xf32>
    %2035 = arith.addf %2021, %2034 : vector<8x128xf32>
    %cst_487 = arith.constant 1.400000e+01 : f32
    %2036 = vector.broadcast %cst_487 : f32 to vector<8x128xf32>
    %2037 = arith.subf %2036, %1357 : vector<8x128xf32>
    %2038 = math.absf %2037 : vector<8x128xf32>
    %cst_488 = arith.constant 1.000000e+00 : f32
    %2039 = vector.broadcast %cst_488 : f32 to vector<8x128xf32>
    %2040 = arith.subf %2039, %2038 : vector<8x128xf32>
    %cst_489 = arith.constant 0.000000e+00 : f32
    %2041 = vector.broadcast %cst_489 : f32 to vector<8x128xf32>
    %2042 = arith.maximumf %2040, %2041 : vector<8x128xf32>
    %2043 = arith.mulf %2042, %2032 : vector<8x128xf32>
    %2044 = arith.addf %2030, %2043 : vector<8x128xf32>
    %2045 = vector.extract_strided_slice %1831 {offsets = [15, 0, 0], sizes = [1, 8, 128], strides = [1, 1, 1]} : vector<16x8x128xf32> to vector<1x8x128xf32>
    %2046 = vector.shape_cast %2045 : vector<1x8x128xf32> to vector<8x128xf32>
    %2047 = arith.subf %2046, %1832 : vector<8x128xf32>
    %2048 = math.exp %2047 : vector<8x128xf32>
    %2049 = arith.addf %2035, %2048 : vector<8x128xf32>
    %cst_490 = arith.constant 1.500000e+01 : f32
    %2050 = vector.broadcast %cst_490 : f32 to vector<8x128xf32>
    %2051 = arith.subf %2050, %1357 : vector<8x128xf32>
    %2052 = math.absf %2051 : vector<8x128xf32>
    %cst_491 = arith.constant 1.000000e+00 : f32
    %2053 = vector.broadcast %cst_491 : f32 to vector<8x128xf32>
    %2054 = arith.subf %2053, %2052 : vector<8x128xf32>
    %cst_492 = arith.constant 0.000000e+00 : f32
    %2055 = vector.broadcast %cst_492 : f32 to vector<8x128xf32>
    %2056 = arith.maximumf %2054, %2055 : vector<8x128xf32>
    %2057 = arith.mulf %2056, %2046 : vector<8x128xf32>
    %2058 = arith.addf %2044, %2057 : vector<8x128xf32>
    %2059 = math.log %2049 : vector<8x128xf32>
    %2060 = arith.addf %1832, %2059 : vector<8x128xf32>
    %2061 = arith.subf %2060, %2058 : vector<8x128xf32>
    %2062 = arith.addf %1829, %2061 : vector<8x128xf32>
    %c48_493 = arith.constant 48 : index
    %c8_494 = arith.constant 8 : index
    %c0_495 = arith.constant 0 : index
    %2063 = vector.load %arg2[%c48_493, %c8_494, %c0_495] : memref<64x24x128xbf16, #tpu.memory_space<vmem>>, vector<16x8x128xbf16>
    %2064 = arith.extf %2063 : vector<16x8x128xbf16> to vector<16x8x128xf32>
    %cst_496 = arith.constant dense<0xFF800000> : vector<8x128xf32>
    %2065 = vector.multi_reduction <maximumf>, %2064, %cst_496 [0] : vector<16x8x128xf32> to vector<8x128xf32>
    %cst_497 = arith.constant 0.000000e+00 : f32
    %2066 = vector.broadcast %cst_497 : f32 to vector<8x128xf32>
    %cst_498 = arith.constant 0.000000e+00 : f32
    %2067 = vector.broadcast %cst_498 : f32 to vector<8x128xf32>
    %2068 = vector.extract_strided_slice %2064 {offsets = [0, 0, 0], sizes = [1, 8, 128], strides = [1, 1, 1]} : vector<16x8x128xf32> to vector<1x8x128xf32>
    %2069 = vector.shape_cast %2068 : vector<1x8x128xf32> to vector<8x128xf32>
    %2070 = arith.subf %2069, %2065 : vector<8x128xf32>
    %2071 = math.exp %2070 : vector<8x128xf32>
    %2072 = arith.addf %2066, %2071 : vector<8x128xf32>
    %cst_499 = arith.constant 0.000000e+00 : f32
    %2073 = vector.broadcast %cst_499 : f32 to vector<8x128xf32>
    %2074 = arith.subf %2073, %1362 : vector<8x128xf32>
    %2075 = math.absf %2074 : vector<8x128xf32>
    %cst_500 = arith.constant 1.000000e+00 : f32
    %2076 = vector.broadcast %cst_500 : f32 to vector<8x128xf32>
    %2077 = arith.subf %2076, %2075 : vector<8x128xf32>
    %cst_501 = arith.constant 0.000000e+00 : f32
    %2078 = vector.broadcast %cst_501 : f32 to vector<8x128xf32>
    %2079 = arith.maximumf %2077, %2078 : vector<8x128xf32>
    %2080 = arith.mulf %2079, %2069 : vector<8x128xf32>
    %2081 = arith.addf %2067, %2080 : vector<8x128xf32>
    %2082 = vector.extract_strided_slice %2064 {offsets = [1, 0, 0], sizes = [1, 8, 128], strides = [1, 1, 1]} : vector<16x8x128xf32> to vector<1x8x128xf32>
    %2083 = vector.shape_cast %2082 : vector<1x8x128xf32> to vector<8x128xf32>
    %2084 = arith.subf %2083, %2065 : vector<8x128xf32>
    %2085 = math.exp %2084 : vector<8x128xf32>
    %2086 = arith.addf %2072, %2085 : vector<8x128xf32>
    %cst_502 = arith.constant 1.000000e+00 : f32
    %2087 = vector.broadcast %cst_502 : f32 to vector<8x128xf32>
    %2088 = arith.subf %2087, %1362 : vector<8x128xf32>
    %2089 = math.absf %2088 : vector<8x128xf32>
    %cst_503 = arith.constant 1.000000e+00 : f32
    %2090 = vector.broadcast %cst_503 : f32 to vector<8x128xf32>
    %2091 = arith.subf %2090, %2089 : vector<8x128xf32>
    %cst_504 = arith.constant 0.000000e+00 : f32
    %2092 = vector.broadcast %cst_504 : f32 to vector<8x128xf32>
    %2093 = arith.maximumf %2091, %2092 : vector<8x128xf32>
    %2094 = arith.mulf %2093, %2083 : vector<8x128xf32>
    %2095 = arith.addf %2081, %2094 : vector<8x128xf32>
    %2096 = vector.extract_strided_slice %2064 {offsets = [2, 0, 0], sizes = [1, 8, 128], strides = [1, 1, 1]} : vector<16x8x128xf32> to vector<1x8x128xf32>
    %2097 = vector.shape_cast %2096 : vector<1x8x128xf32> to vector<8x128xf32>
    %2098 = arith.subf %2097, %2065 : vector<8x128xf32>
    %2099 = math.exp %2098 : vector<8x128xf32>
    %2100 = arith.addf %2086, %2099 : vector<8x128xf32>
    %cst_505 = arith.constant 2.000000e+00 : f32
    %2101 = vector.broadcast %cst_505 : f32 to vector<8x128xf32>
    %2102 = arith.subf %2101, %1362 : vector<8x128xf32>
    %2103 = math.absf %2102 : vector<8x128xf32>
    %cst_506 = arith.constant 1.000000e+00 : f32
    %2104 = vector.broadcast %cst_506 : f32 to vector<8x128xf32>
    %2105 = arith.subf %2104, %2103 : vector<8x128xf32>
    %cst_507 = arith.constant 0.000000e+00 : f32
    %2106 = vector.broadcast %cst_507 : f32 to vector<8x128xf32>
    %2107 = arith.maximumf %2105, %2106 : vector<8x128xf32>
    %2108 = arith.mulf %2107, %2097 : vector<8x128xf32>
    %2109 = arith.addf %2095, %2108 : vector<8x128xf32>
    %2110 = vector.extract_strided_slice %2064 {offsets = [3, 0, 0], sizes = [1, 8, 128], strides = [1, 1, 1]} : vector<16x8x128xf32> to vector<1x8x128xf32>
    %2111 = vector.shape_cast %2110 : vector<1x8x128xf32> to vector<8x128xf32>
    %2112 = arith.subf %2111, %2065 : vector<8x128xf32>
    %2113 = math.exp %2112 : vector<8x128xf32>
    %2114 = arith.addf %2100, %2113 : vector<8x128xf32>
    %cst_508 = arith.constant 3.000000e+00 : f32
    %2115 = vector.broadcast %cst_508 : f32 to vector<8x128xf32>
    %2116 = arith.subf %2115, %1362 : vector<8x128xf32>
    %2117 = math.absf %2116 : vector<8x128xf32>
    %cst_509 = arith.constant 1.000000e+00 : f32
    %2118 = vector.broadcast %cst_509 : f32 to vector<8x128xf32>
    %2119 = arith.subf %2118, %2117 : vector<8x128xf32>
    %cst_510 = arith.constant 0.000000e+00 : f32
    %2120 = vector.broadcast %cst_510 : f32 to vector<8x128xf32>
    %2121 = arith.maximumf %2119, %2120 : vector<8x128xf32>
    %2122 = arith.mulf %2121, %2111 : vector<8x128xf32>
    %2123 = arith.addf %2109, %2122 : vector<8x128xf32>
    %2124 = vector.extract_strided_slice %2064 {offsets = [4, 0, 0], sizes = [1, 8, 128], strides = [1, 1, 1]} : vector<16x8x128xf32> to vector<1x8x128xf32>
    %2125 = vector.shape_cast %2124 : vector<1x8x128xf32> to vector<8x128xf32>
    %2126 = arith.subf %2125, %2065 : vector<8x128xf32>
    %2127 = math.exp %2126 : vector<8x128xf32>
    %2128 = arith.addf %2114, %2127 : vector<8x128xf32>
    %cst_511 = arith.constant 4.000000e+00 : f32
    %2129 = vector.broadcast %cst_511 : f32 to vector<8x128xf32>
    %2130 = arith.subf %2129, %1362 : vector<8x128xf32>
    %2131 = math.absf %2130 : vector<8x128xf32>
    %cst_512 = arith.constant 1.000000e+00 : f32
    %2132 = vector.broadcast %cst_512 : f32 to vector<8x128xf32>
    %2133 = arith.subf %2132, %2131 : vector<8x128xf32>
    %cst_513 = arith.constant 0.000000e+00 : f32
    %2134 = vector.broadcast %cst_513 : f32 to vector<8x128xf32>
    %2135 = arith.maximumf %2133, %2134 : vector<8x128xf32>
    %2136 = arith.mulf %2135, %2125 : vector<8x128xf32>
    %2137 = arith.addf %2123, %2136 : vector<8x128xf32>
    %2138 = vector.extract_strided_slice %2064 {offsets = [5, 0, 0], sizes = [1, 8, 128], strides = [1, 1, 1]} : vector<16x8x128xf32> to vector<1x8x128xf32>
    %2139 = vector.shape_cast %2138 : vector<1x8x128xf32> to vector<8x128xf32>
    %2140 = arith.subf %2139, %2065 : vector<8x128xf32>
    %2141 = math.exp %2140 : vector<8x128xf32>
    %2142 = arith.addf %2128, %2141 : vector<8x128xf32>
    %cst_514 = arith.constant 5.000000e+00 : f32
    %2143 = vector.broadcast %cst_514 : f32 to vector<8x128xf32>
    %2144 = arith.subf %2143, %1362 : vector<8x128xf32>
    %2145 = math.absf %2144 : vector<8x128xf32>
    %cst_515 = arith.constant 1.000000e+00 : f32
    %2146 = vector.broadcast %cst_515 : f32 to vector<8x128xf32>
    %2147 = arith.subf %2146, %2145 : vector<8x128xf32>
    %cst_516 = arith.constant 0.000000e+00 : f32
    %2148 = vector.broadcast %cst_516 : f32 to vector<8x128xf32>
    %2149 = arith.maximumf %2147, %2148 : vector<8x128xf32>
    %2150 = arith.mulf %2149, %2139 : vector<8x128xf32>
    %2151 = arith.addf %2137, %2150 : vector<8x128xf32>
    %2152 = vector.extract_strided_slice %2064 {offsets = [6, 0, 0], sizes = [1, 8, 128], strides = [1, 1, 1]} : vector<16x8x128xf32> to vector<1x8x128xf32>
    %2153 = vector.shape_cast %2152 : vector<1x8x128xf32> to vector<8x128xf32>
    %2154 = arith.subf %2153, %2065 : vector<8x128xf32>
    %2155 = math.exp %2154 : vector<8x128xf32>
    %2156 = arith.addf %2142, %2155 : vector<8x128xf32>
    %cst_517 = arith.constant 6.000000e+00 : f32
    %2157 = vector.broadcast %cst_517 : f32 to vector<8x128xf32>
    %2158 = arith.subf %2157, %1362 : vector<8x128xf32>
    %2159 = math.absf %2158 : vector<8x128xf32>
    %cst_518 = arith.constant 1.000000e+00 : f32
    %2160 = vector.broadcast %cst_518 : f32 to vector<8x128xf32>
    %2161 = arith.subf %2160, %2159 : vector<8x128xf32>
    %cst_519 = arith.constant 0.000000e+00 : f32
    %2162 = vector.broadcast %cst_519 : f32 to vector<8x128xf32>
    %2163 = arith.maximumf %2161, %2162 : vector<8x128xf32>
    %2164 = arith.mulf %2163, %2153 : vector<8x128xf32>
    %2165 = arith.addf %2151, %2164 : vector<8x128xf32>
    %2166 = vector.extract_strided_slice %2064 {offsets = [7, 0, 0], sizes = [1, 8, 128], strides = [1, 1, 1]} : vector<16x8x128xf32> to vector<1x8x128xf32>
    %2167 = vector.shape_cast %2166 : vector<1x8x128xf32> to vector<8x128xf32>
    %2168 = arith.subf %2167, %2065 : vector<8x128xf32>
    %2169 = math.exp %2168 : vector<8x128xf32>
    %2170 = arith.addf %2156, %2169 : vector<8x128xf32>
    %cst_520 = arith.constant 7.000000e+00 : f32
    %2171 = vector.broadcast %cst_520 : f32 to vector<8x128xf32>
    %2172 = arith.subf %2171, %1362 : vector<8x128xf32>
    %2173 = math.absf %2172 : vector<8x128xf32>
    %cst_521 = arith.constant 1.000000e+00 : f32
    %2174 = vector.broadcast %cst_521 : f32 to vector<8x128xf32>
    %2175 = arith.subf %2174, %2173 : vector<8x128xf32>
    %cst_522 = arith.constant 0.000000e+00 : f32
    %2176 = vector.broadcast %cst_522 : f32 to vector<8x128xf32>
    %2177 = arith.maximumf %2175, %2176 : vector<8x128xf32>
    %2178 = arith.mulf %2177, %2167 : vector<8x128xf32>
    %2179 = arith.addf %2165, %2178 : vector<8x128xf32>
    %2180 = vector.extract_strided_slice %2064 {offsets = [8, 0, 0], sizes = [1, 8, 128], strides = [1, 1, 1]} : vector<16x8x128xf32> to vector<1x8x128xf32>
    %2181 = vector.shape_cast %2180 : vector<1x8x128xf32> to vector<8x128xf32>
    %2182 = arith.subf %2181, %2065 : vector<8x128xf32>
    %2183 = math.exp %2182 : vector<8x128xf32>
    %2184 = arith.addf %2170, %2183 : vector<8x128xf32>
    %cst_523 = arith.constant 8.000000e+00 : f32
    %2185 = vector.broadcast %cst_523 : f32 to vector<8x128xf32>
    %2186 = arith.subf %2185, %1362 : vector<8x128xf32>
    %2187 = math.absf %2186 : vector<8x128xf32>
    %cst_524 = arith.constant 1.000000e+00 : f32
    %2188 = vector.broadcast %cst_524 : f32 to vector<8x128xf32>
    %2189 = arith.subf %2188, %2187 : vector<8x128xf32>
    %cst_525 = arith.constant 0.000000e+00 : f32
    %2190 = vector.broadcast %cst_525 : f32 to vector<8x128xf32>
    %2191 = arith.maximumf %2189, %2190 : vector<8x128xf32>
    %2192 = arith.mulf %2191, %2181 : vector<8x128xf32>
    %2193 = arith.addf %2179, %2192 : vector<8x128xf32>
    %2194 = vector.extract_strided_slice %2064 {offsets = [9, 0, 0], sizes = [1, 8, 128], strides = [1, 1, 1]} : vector<16x8x128xf32> to vector<1x8x128xf32>
    %2195 = vector.shape_cast %2194 : vector<1x8x128xf32> to vector<8x128xf32>
    %2196 = arith.subf %2195, %2065 : vector<8x128xf32>
    %2197 = math.exp %2196 : vector<8x128xf32>
    %2198 = arith.addf %2184, %2197 : vector<8x128xf32>
    %cst_526 = arith.constant 9.000000e+00 : f32
    %2199 = vector.broadcast %cst_526 : f32 to vector<8x128xf32>
    %2200 = arith.subf %2199, %1362 : vector<8x128xf32>
    %2201 = math.absf %2200 : vector<8x128xf32>
    %cst_527 = arith.constant 1.000000e+00 : f32
    %2202 = vector.broadcast %cst_527 : f32 to vector<8x128xf32>
    %2203 = arith.subf %2202, %2201 : vector<8x128xf32>
    %cst_528 = arith.constant 0.000000e+00 : f32
    %2204 = vector.broadcast %cst_528 : f32 to vector<8x128xf32>
    %2205 = arith.maximumf %2203, %2204 : vector<8x128xf32>
    %2206 = arith.mulf %2205, %2195 : vector<8x128xf32>
    %2207 = arith.addf %2193, %2206 : vector<8x128xf32>
    %2208 = vector.extract_strided_slice %2064 {offsets = [10, 0, 0], sizes = [1, 8, 128], strides = [1, 1, 1]} : vector<16x8x128xf32> to vector<1x8x128xf32>
    %2209 = vector.shape_cast %2208 : vector<1x8x128xf32> to vector<8x128xf32>
    %2210 = arith.subf %2209, %2065 : vector<8x128xf32>
    %2211 = math.exp %2210 : vector<8x128xf32>
    %2212 = arith.addf %2198, %2211 : vector<8x128xf32>
    %cst_529 = arith.constant 1.000000e+01 : f32
    %2213 = vector.broadcast %cst_529 : f32 to vector<8x128xf32>
    %2214 = arith.subf %2213, %1362 : vector<8x128xf32>
    %2215 = math.absf %2214 : vector<8x128xf32>
    %cst_530 = arith.constant 1.000000e+00 : f32
    %2216 = vector.broadcast %cst_530 : f32 to vector<8x128xf32>
    %2217 = arith.subf %2216, %2215 : vector<8x128xf32>
    %cst_531 = arith.constant 0.000000e+00 : f32
    %2218 = vector.broadcast %cst_531 : f32 to vector<8x128xf32>
    %2219 = arith.maximumf %2217, %2218 : vector<8x128xf32>
    %2220 = arith.mulf %2219, %2209 : vector<8x128xf32>
    %2221 = arith.addf %2207, %2220 : vector<8x128xf32>
    %2222 = vector.extract_strided_slice %2064 {offsets = [11, 0, 0], sizes = [1, 8, 128], strides = [1, 1, 1]} : vector<16x8x128xf32> to vector<1x8x128xf32>
    %2223 = vector.shape_cast %2222 : vector<1x8x128xf32> to vector<8x128xf32>
    %2224 = arith.subf %2223, %2065 : vector<8x128xf32>
    %2225 = math.exp %2224 : vector<8x128xf32>
    %2226 = arith.addf %2212, %2225 : vector<8x128xf32>
    %cst_532 = arith.constant 1.100000e+01 : f32
    %2227 = vector.broadcast %cst_532 : f32 to vector<8x128xf32>
    %2228 = arith.subf %2227, %1362 : vector<8x128xf32>
    %2229 = math.absf %2228 : vector<8x128xf32>
    %cst_533 = arith.constant 1.000000e+00 : f32
    %2230 = vector.broadcast %cst_533 : f32 to vector<8x128xf32>
    %2231 = arith.subf %2230, %2229 : vector<8x128xf32>
    %cst_534 = arith.constant 0.000000e+00 : f32
    %2232 = vector.broadcast %cst_534 : f32 to vector<8x128xf32>
    %2233 = arith.maximumf %2231, %2232 : vector<8x128xf32>
    %2234 = arith.mulf %2233, %2223 : vector<8x128xf32>
    %2235 = arith.addf %2221, %2234 : vector<8x128xf32>
    %2236 = vector.extract_strided_slice %2064 {offsets = [12, 0, 0], sizes = [1, 8, 128], strides = [1, 1, 1]} : vector<16x8x128xf32> to vector<1x8x128xf32>
    %2237 = vector.shape_cast %2236 : vector<1x8x128xf32> to vector<8x128xf32>
    %2238 = arith.subf %2237, %2065 : vector<8x128xf32>
    %2239 = math.exp %2238 : vector<8x128xf32>
    %2240 = arith.addf %2226, %2239 : vector<8x128xf32>
    %cst_535 = arith.constant 1.200000e+01 : f32
    %2241 = vector.broadcast %cst_535 : f32 to vector<8x128xf32>
    %2242 = arith.subf %2241, %1362 : vector<8x128xf32>
    %2243 = math.absf %2242 : vector<8x128xf32>
    %cst_536 = arith.constant 1.000000e+00 : f32
    %2244 = vector.broadcast %cst_536 : f32 to vector<8x128xf32>
    %2245 = arith.subf %2244, %2243 : vector<8x128xf32>
    %cst_537 = arith.constant 0.000000e+00 : f32
    %2246 = vector.broadcast %cst_537 : f32 to vector<8x128xf32>
    %2247 = arith.maximumf %2245, %2246 : vector<8x128xf32>
    %2248 = arith.mulf %2247, %2237 : vector<8x128xf32>
    %2249 = arith.addf %2235, %2248 : vector<8x128xf32>
    %2250 = vector.extract_strided_slice %2064 {offsets = [13, 0, 0], sizes = [1, 8, 128], strides = [1, 1, 1]} : vector<16x8x128xf32> to vector<1x8x128xf32>
    %2251 = vector.shape_cast %2250 : vector<1x8x128xf32> to vector<8x128xf32>
    %2252 = arith.subf %2251, %2065 : vector<8x128xf32>
    %2253 = math.exp %2252 : vector<8x128xf32>
    %2254 = arith.addf %2240, %2253 : vector<8x128xf32>
    %cst_538 = arith.constant 1.300000e+01 : f32
    %2255 = vector.broadcast %cst_538 : f32 to vector<8x128xf32>
    %2256 = arith.subf %2255, %1362 : vector<8x128xf32>
    %2257 = math.absf %2256 : vector<8x128xf32>
    %cst_539 = arith.constant 1.000000e+00 : f32
    %2258 = vector.broadcast %cst_539 : f32 to vector<8x128xf32>
    %2259 = arith.subf %2258, %2257 : vector<8x128xf32>
    %cst_540 = arith.constant 0.000000e+00 : f32
    %2260 = vector.broadcast %cst_540 : f32 to vector<8x128xf32>
    %2261 = arith.maximumf %2259, %2260 : vector<8x128xf32>
    %2262 = arith.mulf %2261, %2251 : vector<8x128xf32>
    %2263 = arith.addf %2249, %2262 : vector<8x128xf32>
    %2264 = vector.extract_strided_slice %2064 {offsets = [14, 0, 0], sizes = [1, 8, 128], strides = [1, 1, 1]} : vector<16x8x128xf32> to vector<1x8x128xf32>
    %2265 = vector.shape_cast %2264 : vector<1x8x128xf32> to vector<8x128xf32>
    %2266 = arith.subf %2265, %2065 : vector<8x128xf32>
    %2267 = math.exp %2266 : vector<8x128xf32>
    %2268 = arith.addf %2254, %2267 : vector<8x128xf32>
    %cst_541 = arith.constant 1.400000e+01 : f32
    %2269 = vector.broadcast %cst_541 : f32 to vector<8x128xf32>
    %2270 = arith.subf %2269, %1362 : vector<8x128xf32>
    %2271 = math.absf %2270 : vector<8x128xf32>
    %cst_542 = arith.constant 1.000000e+00 : f32
    %2272 = vector.broadcast %cst_542 : f32 to vector<8x128xf32>
    %2273 = arith.subf %2272, %2271 : vector<8x128xf32>
    %cst_543 = arith.constant 0.000000e+00 : f32
    %2274 = vector.broadcast %cst_543 : f32 to vector<8x128xf32>
    %2275 = arith.maximumf %2273, %2274 : vector<8x128xf32>
    %2276 = arith.mulf %2275, %2265 : vector<8x128xf32>
    %2277 = arith.addf %2263, %2276 : vector<8x128xf32>
    %2278 = vector.extract_strided_slice %2064 {offsets = [15, 0, 0], sizes = [1, 8, 128], strides = [1, 1, 1]} : vector<16x8x128xf32> to vector<1x8x128xf32>
    %2279 = vector.shape_cast %2278 : vector<1x8x128xf32> to vector<8x128xf32>
    %2280 = arith.subf %2279, %2065 : vector<8x128xf32>
    %2281 = math.exp %2280 : vector<8x128xf32>
    %2282 = arith.addf %2268, %2281 : vector<8x128xf32>
    %cst_544 = arith.constant 1.500000e+01 : f32
    %2283 = vector.broadcast %cst_544 : f32 to vector<8x128xf32>
    %2284 = arith.subf %2283, %1362 : vector<8x128xf32>
    %2285 = math.absf %2284 : vector<8x128xf32>
    %cst_545 = arith.constant 1.000000e+00 : f32
    %2286 = vector.broadcast %cst_545 : f32 to vector<8x128xf32>
    %2287 = arith.subf %2286, %2285 : vector<8x128xf32>
    %cst_546 = arith.constant 0.000000e+00 : f32
    %2288 = vector.broadcast %cst_546 : f32 to vector<8x128xf32>
    %2289 = arith.maximumf %2287, %2288 : vector<8x128xf32>
    %2290 = arith.mulf %2289, %2279 : vector<8x128xf32>
    %2291 = arith.addf %2277, %2290 : vector<8x128xf32>
    %2292 = math.log %2282 : vector<8x128xf32>
    %2293 = arith.addf %2065, %2292 : vector<8x128xf32>
    %2294 = arith.subf %2293, %2291 : vector<8x128xf32>
    %2295 = arith.addf %2062, %2294 : vector<8x128xf32>
    %cst_547 = arith.constant 0.000000e+00 : f32
    %2296 = vector.broadcast %cst_547 : f32 to vector<8x128xf32>
    %2297 = arith.cmpf ogt, %1177, %2296 : vector<8x128xf32>
    %cst_548 = arith.constant 2.500000e-01 : f32
    %2298 = vector.broadcast %cst_548 : f32 to vector<8x128xf32>
    %2299 = arith.mulf %2298, %1175 : vector<8x128xf32>
    %2300 = arith.mulf %2295, %2299 : vector<8x128xf32>
    %cst_549 = arith.constant 0.000000e+00 : f32
    %2301 = vector.broadcast %cst_549 : f32 to vector<8x128xf32>
    %2302 = arith.select %2297, %2300, %2301 : vector<8x128xi1>, vector<8x128xf32>
    %2303 = arith.addf %1152, %2302 : vector<8x128xf32>
    %c0_550 = arith.constant 0 : index
    %c16_551 = arith.constant 16 : index
    %c0_552 = arith.constant 0 : index
    %2304 = vector.load %arg1[%c0_550, %c16_551, %c0_552] : memref<12x24x128xf32, #tpu.memory_space<vmem>>, vector<12x8x128xf32>
    %2305 = vector.extract_strided_slice %2304 {offsets = [0, 0, 0], sizes = [1, 8, 128], strides = [1, 1, 1]} : vector<12x8x128xf32> to vector<1x8x128xf32>
    %2306 = vector.shape_cast %2305 : vector<1x8x128xf32> to vector<8x128xf32>
    %2307 = vector.extract_strided_slice %2304 {offsets = [1, 0, 0], sizes = [1, 8, 128], strides = [1, 1, 1]} : vector<12x8x128xf32> to vector<1x8x128xf32>
    %2308 = vector.shape_cast %2307 : vector<1x8x128xf32> to vector<8x128xf32>
    %2309 = vector.extract_strided_slice %2304 {offsets = [2, 0, 0], sizes = [1, 8, 128], strides = [1, 1, 1]} : vector<12x8x128xf32> to vector<1x8x128xf32>
    %2310 = vector.shape_cast %2309 : vector<1x8x128xf32> to vector<8x128xf32>
    %2311 = vector.extract_strided_slice %2304 {offsets = [3, 0, 0], sizes = [1, 8, 128], strides = [1, 1, 1]} : vector<12x8x128xf32> to vector<1x8x128xf32>
    %2312 = vector.shape_cast %2311 : vector<1x8x128xf32> to vector<8x128xf32>
    %2313 = vector.extract_strided_slice %2304 {offsets = [4, 0, 0], sizes = [1, 8, 128], strides = [1, 1, 1]} : vector<12x8x128xf32> to vector<1x8x128xf32>
    %2314 = vector.shape_cast %2313 : vector<1x8x128xf32> to vector<8x128xf32>
    %2315 = vector.extract_strided_slice %2304 {offsets = [5, 0, 0], sizes = [1, 8, 128], strides = [1, 1, 1]} : vector<12x8x128xf32> to vector<1x8x128xf32>
    %2316 = vector.shape_cast %2315 : vector<1x8x128xf32> to vector<8x128xf32>
    %2317 = vector.extract_strided_slice %2304 {offsets = [6, 0, 0], sizes = [1, 8, 128], strides = [1, 1, 1]} : vector<12x8x128xf32> to vector<1x8x128xf32>
    %2318 = vector.shape_cast %2317 : vector<1x8x128xf32> to vector<8x128xf32>
    %2319 = vector.extract_strided_slice %2304 {offsets = [7, 0, 0], sizes = [1, 8, 128], strides = [1, 1, 1]} : vector<12x8x128xf32> to vector<1x8x128xf32>
    %2320 = vector.shape_cast %2319 : vector<1x8x128xf32> to vector<8x128xf32>
    %2321 = vector.extract_strided_slice %2304 {offsets = [8, 0, 0], sizes = [1, 8, 128], strides = [1, 1, 1]} : vector<12x8x128xf32> to vector<1x8x128xf32>
    %2322 = vector.shape_cast %2321 : vector<1x8x128xf32> to vector<8x128xf32>
    %2323 = vector.extract_strided_slice %2304 {offsets = [9, 0, 0], sizes = [1, 8, 128], strides = [1, 1, 1]} : vector<12x8x128xf32> to vector<1x8x128xf32>
    %2324 = vector.shape_cast %2323 : vector<1x8x128xf32> to vector<8x128xf32>
    %2325 = vector.extract_strided_slice %2304 {offsets = [10, 0, 0], sizes = [1, 8, 128], strides = [1, 1, 1]} : vector<12x8x128xf32> to vector<1x8x128xf32>
    %2326 = vector.shape_cast %2325 : vector<1x8x128xf32> to vector<8x128xf32>
    %2327 = vector.extract_strided_slice %2304 {offsets = [11, 0, 0], sizes = [1, 8, 128], strides = [1, 1, 1]} : vector<12x8x128xf32> to vector<1x8x128xf32>
    %2328 = vector.shape_cast %2327 : vector<1x8x128xf32> to vector<8x128xf32>
    %2329 = arith.subf %2310, %2306 : vector<8x128xf32>
    %2330 = arith.subf %2312, %2308 : vector<8x128xf32>
    %cst_553 = arith.constant 1.000000e-07 : f32
    %2331 = vector.broadcast %cst_553 : f32 to vector<8x128xf32>
    %2332 = arith.addf %2330, %2331 : vector<8x128xf32>
    %2333 = arith.subf %2318, %2314 : vector<8x128xf32>
    %2334 = arith.subf %2320, %2316 : vector<8x128xf32>
    %cst_554 = arith.constant 1.000000e-07 : f32
    %2335 = vector.broadcast %cst_554 : f32 to vector<8x128xf32>
    %2336 = arith.addf %2334, %2335 : vector<8x128xf32>
    %2337 = arith.minimumf %2310, %2318 : vector<8x128xf32>
    %2338 = arith.maximumf %2306, %2314 : vector<8x128xf32>
    %2339 = arith.subf %2337, %2338 : vector<8x128xf32>
    %cst_555 = arith.constant 0.000000e+00 : f32
    %2340 = vector.broadcast %cst_555 : f32 to vector<8x128xf32>
    %2341 = arith.maximumf %2339, %2340 : vector<8x128xf32>
    %2342 = arith.minimumf %2312, %2320 : vector<8x128xf32>
    %2343 = arith.maximumf %2308, %2316 : vector<8x128xf32>
    %2344 = arith.subf %2342, %2343 : vector<8x128xf32>
    %cst_556 = arith.constant 0.000000e+00 : f32
    %2345 = vector.broadcast %cst_556 : f32 to vector<8x128xf32>
    %2346 = arith.maximumf %2344, %2345 : vector<8x128xf32>
    %2347 = arith.mulf %2341, %2346 : vector<8x128xf32>
    %2348 = arith.mulf %2329, %2332 : vector<8x128xf32>
    %2349 = arith.mulf %2333, %2336 : vector<8x128xf32>
    %2350 = arith.addf %2348, %2349 : vector<8x128xf32>
    %2351 = arith.subf %2350, %2347 : vector<8x128xf32>
    %cst_557 = arith.constant 1.000000e-07 : f32
    %2352 = vector.broadcast %cst_557 : f32 to vector<8x128xf32>
    %2353 = arith.addf %2351, %2352 : vector<8x128xf32>
    %2354 = arith.divf %2347, %2353 : vector<8x128xf32>
    %2355 = arith.maximumf %2310, %2318 : vector<8x128xf32>
    %2356 = arith.minimumf %2306, %2314 : vector<8x128xf32>
    %2357 = arith.subf %2355, %2356 : vector<8x128xf32>
    %2358 = arith.maximumf %2312, %2320 : vector<8x128xf32>
    %2359 = arith.minimumf %2308, %2316 : vector<8x128xf32>
    %2360 = arith.subf %2358, %2359 : vector<8x128xf32>
    %2361 = arith.mulf %2357, %2357 : vector<8x128xf32>
    %2362 = arith.mulf %2360, %2360 : vector<8x128xf32>
    %2363 = arith.addf %2361, %2362 : vector<8x128xf32>
    %cst_558 = arith.constant 1.000000e-07 : f32
    %2364 = vector.broadcast %cst_558 : f32 to vector<8x128xf32>
    %2365 = arith.addf %2363, %2364 : vector<8x128xf32>
    %2366 = arith.addf %2314, %2318 : vector<8x128xf32>
    %2367 = arith.subf %2366, %2306 : vector<8x128xf32>
    %2368 = arith.subf %2367, %2310 : vector<8x128xf32>
    %2369 = arith.mulf %2368, %2368 : vector<8x128xf32>
    %2370 = arith.addf %2316, %2320 : vector<8x128xf32>
    %2371 = arith.subf %2370, %2308 : vector<8x128xf32>
    %2372 = arith.subf %2371, %2312 : vector<8x128xf32>
    %2373 = arith.mulf %2372, %2372 : vector<8x128xf32>
    %2374 = arith.addf %2369, %2373 : vector<8x128xf32>
    %cst_559 = arith.constant 2.500000e-01 : f32
    %2375 = vector.broadcast %cst_559 : f32 to vector<8x128xf32>
    %2376 = arith.mulf %2374, %2375 : vector<8x128xf32>
    %2377 = tpu.reciprocal %2336 {approx = true} : vector<8x128xf32> -> vector<8x128xf32>
    %2378 = arith.mulf %2333, %2377 : vector<8x128xf32>
    %cst_560 = arith.constant 0.000000e+00 : f32
    %2379 = vector.broadcast %cst_560 : f32 to vector<8x128xf32>
    %2380 = arith.cmpf olt, %2378, %2379 : vector<8x128xf32>
    %cst_561 = arith.constant -1.000000e+00 : f32
    %cst_562 = arith.constant 1.000000e+00 : f32
    %2381 = vector.broadcast %cst_561 : f32 to vector<8x128xf32>
    %2382 = vector.broadcast %cst_562 : f32 to vector<8x128xf32>
    %2383 = arith.select %2380, %2381, %2382 : vector<8x128xi1>, vector<8x128xf32>
    %2384 = math.absf %2378 : vector<8x128xf32>
    %cst_563 = arith.constant 2.41421366 : f32
    %2385 = vector.broadcast %cst_563 : f32 to vector<8x128xf32>
    %2386 = arith.cmpf ogt, %2384, %2385 : vector<8x128xf32>
    %cst_564 = arith.constant 0.414213568 : f32
    %2387 = vector.broadcast %cst_564 : f32 to vector<8x128xf32>
    %2388 = arith.cmpf ogt, %2384, %2387 : vector<8x128xf32>
    %cst_565 = arith.constant dense<true> : vector<8x128xi1>
    %2389 = arith.xori %2386, %cst_565 : vector<8x128xi1>
    %2390 = arith.andi %2388, %2389 : vector<8x128xi1>
    %cst_566 = arith.constant 0.785398185 : f32
    %cst_567 = arith.constant 0.000000e+00 : f32
    %2391 = vector.broadcast %cst_566 : f32 to vector<8x128xf32>
    %2392 = vector.broadcast %cst_567 : f32 to vector<8x128xf32>
    %2393 = arith.select %2390, %2391, %2392 : vector<8x128xi1>, vector<8x128xf32>
    %cst_568 = arith.constant 1.57079637 : f32
    %2394 = vector.broadcast %cst_568 : f32 to vector<8x128xf32>
    %2395 = arith.select %2386, %2394, %2393 : vector<8x128xi1>, vector<8x128xf32>
    %cst_569 = arith.constant 1.000000e-30 : f32
    %2396 = vector.broadcast %cst_569 : f32 to vector<8x128xf32>
    %2397 = arith.maximumf %2384, %2396 : vector<8x128xf32>
    %2398 = tpu.reciprocal %2397 {approx = true} : vector<8x128xf32> -> vector<8x128xf32>
    %cst_570 = arith.constant 0.000000e+00 : f32
    %2399 = vector.broadcast %cst_570 : f32 to vector<8x128xf32>
    %2400 = arith.subf %2399, %2398 : vector<8x128xf32>
    %cst_571 = arith.constant 1.000000e+00 : f32
    %2401 = vector.broadcast %cst_571 : f32 to vector<8x128xf32>
    %2402 = arith.subf %2384, %2401 : vector<8x128xf32>
    %cst_572 = arith.constant 1.000000e+00 : f32
    %2403 = vector.broadcast %cst_572 : f32 to vector<8x128xf32>
    %2404 = arith.addf %2384, %2403 : vector<8x128xf32>
    %2405 = tpu.reciprocal %2404 {approx = true} : vector<8x128xf32> -> vector<8x128xf32>
    %2406 = arith.mulf %2402, %2405 : vector<8x128xf32>
    %2407 = arith.select %2390, %2406, %2384 : vector<8x128xi1>, vector<8x128xf32>
    %2408 = arith.select %2386, %2400, %2407 : vector<8x128xi1>, vector<8x128xf32>
    %2409 = arith.mulf %2408, %2408 : vector<8x128xf32>
    %cst_573 = arith.constant 0.0805374458 : f32
    %2410 = vector.broadcast %cst_573 : f32 to vector<8x128xf32>
    %2411 = arith.mulf %2410, %2409 : vector<8x128xf32>
    %cst_574 = arith.constant 0.138776854 : f32
    %2412 = vector.broadcast %cst_574 : f32 to vector<8x128xf32>
    %2413 = arith.subf %2411, %2412 : vector<8x128xf32>
    %2414 = arith.mulf %2413, %2409 : vector<8x128xf32>
    %cst_575 = arith.constant 0.199777111 : f32
    %2415 = vector.broadcast %cst_575 : f32 to vector<8x128xf32>
    %2416 = arith.addf %2414, %2415 : vector<8x128xf32>
    %2417 = arith.mulf %2416, %2409 : vector<8x128xf32>
    %cst_576 = arith.constant 0.333329499 : f32
    %2418 = vector.broadcast %cst_576 : f32 to vector<8x128xf32>
    %2419 = arith.subf %2417, %2418 : vector<8x128xf32>
    %2420 = arith.mulf %2419, %2409 : vector<8x128xf32>
    %2421 = arith.mulf %2420, %2408 : vector<8x128xf32>
    %2422 = arith.addf %2421, %2408 : vector<8x128xf32>
    %2423 = arith.addf %2395, %2422 : vector<8x128xf32>
    %2424 = arith.mulf %2383, %2423 : vector<8x128xf32>
    %2425 = tpu.reciprocal %2332 {approx = true} : vector<8x128xf32> -> vector<8x128xf32>
    %2426 = arith.mulf %2329, %2425 : vector<8x128xf32>
    %cst_577 = arith.constant 0.000000e+00 : f32
    %2427 = vector.broadcast %cst_577 : f32 to vector<8x128xf32>
    %2428 = arith.cmpf olt, %2426, %2427 : vector<8x128xf32>
    %cst_578 = arith.constant -1.000000e+00 : f32
    %cst_579 = arith.constant 1.000000e+00 : f32
    %2429 = vector.broadcast %cst_578 : f32 to vector<8x128xf32>
    %2430 = vector.broadcast %cst_579 : f32 to vector<8x128xf32>
    %2431 = arith.select %2428, %2429, %2430 : vector<8x128xi1>, vector<8x128xf32>
    %2432 = math.absf %2426 : vector<8x128xf32>
    %cst_580 = arith.constant 2.41421366 : f32
    %2433 = vector.broadcast %cst_580 : f32 to vector<8x128xf32>
    %2434 = arith.cmpf ogt, %2432, %2433 : vector<8x128xf32>
    %cst_581 = arith.constant 0.414213568 : f32
    %2435 = vector.broadcast %cst_581 : f32 to vector<8x128xf32>
    %2436 = arith.cmpf ogt, %2432, %2435 : vector<8x128xf32>
    %cst_582 = arith.constant dense<true> : vector<8x128xi1>
    %2437 = arith.xori %2434, %cst_582 : vector<8x128xi1>
    %2438 = arith.andi %2436, %2437 : vector<8x128xi1>
    %cst_583 = arith.constant 0.785398185 : f32
    %cst_584 = arith.constant 0.000000e+00 : f32
    %2439 = vector.broadcast %cst_583 : f32 to vector<8x128xf32>
    %2440 = vector.broadcast %cst_584 : f32 to vector<8x128xf32>
    %2441 = arith.select %2438, %2439, %2440 : vector<8x128xi1>, vector<8x128xf32>
    %cst_585 = arith.constant 1.57079637 : f32
    %2442 = vector.broadcast %cst_585 : f32 to vector<8x128xf32>
    %2443 = arith.select %2434, %2442, %2441 : vector<8x128xi1>, vector<8x128xf32>
    %cst_586 = arith.constant 1.000000e-30 : f32
    %2444 = vector.broadcast %cst_586 : f32 to vector<8x128xf32>
    %2445 = arith.maximumf %2432, %2444 : vector<8x128xf32>
    %2446 = tpu.reciprocal %2445 {approx = true} : vector<8x128xf32> -> vector<8x128xf32>
    %cst_587 = arith.constant 0.000000e+00 : f32
    %2447 = vector.broadcast %cst_587 : f32 to vector<8x128xf32>
    %2448 = arith.subf %2447, %2446 : vector<8x128xf32>
    %cst_588 = arith.constant 1.000000e+00 : f32
    %2449 = vector.broadcast %cst_588 : f32 to vector<8x128xf32>
    %2450 = arith.subf %2432, %2449 : vector<8x128xf32>
    %cst_589 = arith.constant 1.000000e+00 : f32
    %2451 = vector.broadcast %cst_589 : f32 to vector<8x128xf32>
    %2452 = arith.addf %2432, %2451 : vector<8x128xf32>
    %2453 = tpu.reciprocal %2452 {approx = true} : vector<8x128xf32> -> vector<8x128xf32>
    %2454 = arith.mulf %2450, %2453 : vector<8x128xf32>
    %2455 = arith.select %2438, %2454, %2432 : vector<8x128xi1>, vector<8x128xf32>
    %2456 = arith.select %2434, %2448, %2455 : vector<8x128xi1>, vector<8x128xf32>
    %2457 = arith.mulf %2456, %2456 : vector<8x128xf32>
    %cst_590 = arith.constant 0.0805374458 : f32
    %2458 = vector.broadcast %cst_590 : f32 to vector<8x128xf32>
    %2459 = arith.mulf %2458, %2457 : vector<8x128xf32>
    %cst_591 = arith.constant 0.138776854 : f32
    %2460 = vector.broadcast %cst_591 : f32 to vector<8x128xf32>
    %2461 = arith.subf %2459, %2460 : vector<8x128xf32>
    %2462 = arith.mulf %2461, %2457 : vector<8x128xf32>
    %cst_592 = arith.constant 0.199777111 : f32
    %2463 = vector.broadcast %cst_592 : f32 to vector<8x128xf32>
    %2464 = arith.addf %2462, %2463 : vector<8x128xf32>
    %2465 = arith.mulf %2464, %2457 : vector<8x128xf32>
    %cst_593 = arith.constant 0.333329499 : f32
    %2466 = vector.broadcast %cst_593 : f32 to vector<8x128xf32>
    %2467 = arith.subf %2465, %2466 : vector<8x128xf32>
    %2468 = arith.mulf %2467, %2457 : vector<8x128xf32>
    %2469 = arith.mulf %2468, %2456 : vector<8x128xf32>
    %2470 = arith.addf %2469, %2456 : vector<8x128xf32>
    %2471 = arith.addf %2443, %2470 : vector<8x128xf32>
    %2472 = arith.mulf %2431, %2471 : vector<8x128xf32>
    %2473 = arith.subf %2424, %2472 : vector<8x128xf32>
    %2474 = arith.mulf %2473, %2473 : vector<8x128xf32>
    %cst_594 = arith.constant 0.405284733 : f32
    %2475 = vector.broadcast %cst_594 : f32 to vector<8x128xf32>
    %2476 = arith.mulf %2475, %2474 : vector<8x128xf32>
    %2477 = arith.subf %2476, %2354 : vector<8x128xf32>
    %cst_595 = arith.constant 1.00000012 : f32
    %2478 = vector.broadcast %cst_595 : f32 to vector<8x128xf32>
    %2479 = arith.addf %2477, %2478 : vector<8x128xf32>
    %2480 = tpu.reciprocal %2479 {approx = true} : vector<8x128xf32> -> vector<8x128xf32>
    %2481 = arith.mulf %2476, %2480 : vector<8x128xf32>
    %2482 = arith.divf %2376, %2365 : vector<8x128xf32>
    %2483 = arith.mulf %2476, %2481 : vector<8x128xf32>
    %2484 = arith.addf %2482, %2483 : vector<8x128xf32>
    %2485 = arith.subf %2354, %2484 : vector<8x128xf32>
    %cst_596 = arith.constant 0.000000e+00 : f32
    %2486 = vector.broadcast %cst_596 : f32 to vector<8x128xf32>
    %2487 = arith.cmpf ogt, %2328, %2486 : vector<8x128xf32>
    %cst_597 = arith.constant 1.000000e+00 : f32
    %2488 = vector.broadcast %cst_597 : f32 to vector<8x128xf32>
    %2489 = arith.subf %2488, %2485 : vector<8x128xf32>
    %2490 = arith.mulf %2489, %2326 : vector<8x128xf32>
    %cst_598 = arith.constant 0.000000e+00 : f32
    %2491 = vector.broadcast %cst_598 : f32 to vector<8x128xf32>
    %2492 = arith.select %2487, %2490, %2491 : vector<8x128xi1>, vector<8x128xf32>
    %2493 = arith.addf %1342, %2492 : vector<8x128xf32>
    %2494 = arith.subf %2322, %2314 : vector<8x128xf32>
    %cst_599 = arith.constant 0.000000e+00 : f32
    %cst_600 = arith.constant 1.499000e+01 : f32
    %2495 = vector.broadcast %cst_599 : f32 to vector<8x128xf32>
    %2496 = arith.maximumf %2495, %2494 : vector<8x128xf32>
    %2497 = vector.broadcast %cst_600 : f32 to vector<8x128xf32>
    %2498 = arith.minimumf %2497, %2496 : vector<8x128xf32>
    %2499 = arith.subf %2324, %2316 : vector<8x128xf32>
    %cst_601 = arith.constant 0.000000e+00 : f32
    %cst_602 = arith.constant 1.499000e+01 : f32
    %2500 = vector.broadcast %cst_601 : f32 to vector<8x128xf32>
    %2501 = arith.maximumf %2500, %2499 : vector<8x128xf32>
    %2502 = vector.broadcast %cst_602 : f32 to vector<8x128xf32>
    %2503 = arith.minimumf %2502, %2501 : vector<8x128xf32>
    %2504 = arith.subf %2318, %2322 : vector<8x128xf32>
    %cst_603 = arith.constant 0.000000e+00 : f32
    %cst_604 = arith.constant 1.499000e+01 : f32
    %2505 = vector.broadcast %cst_603 : f32 to vector<8x128xf32>
    %2506 = arith.maximumf %2505, %2504 : vector<8x128xf32>
    %2507 = vector.broadcast %cst_604 : f32 to vector<8x128xf32>
    %2508 = arith.minimumf %2507, %2506 : vector<8x128xf32>
    %2509 = arith.subf %2320, %2324 : vector<8x128xf32>
    %cst_605 = arith.constant 0.000000e+00 : f32
    %cst_606 = arith.constant 1.499000e+01 : f32
    %2510 = vector.broadcast %cst_605 : f32 to vector<8x128xf32>
    %2511 = arith.maximumf %2510, %2509 : vector<8x128xf32>
    %2512 = vector.broadcast %cst_606 : f32 to vector<8x128xf32>
    %2513 = arith.minimumf %2512, %2511 : vector<8x128xf32>
    %cst_607 = arith.constant 0.000000e+00 : f32
    %2514 = vector.broadcast %cst_607 : f32 to vector<8x128xf32>
    %c0_608 = arith.constant 0 : index
    %c16_609 = arith.constant 16 : index
    %c0_610 = arith.constant 0 : index
    %2515 = vector.load %arg2[%c0_608, %c16_609, %c0_610] : memref<64x24x128xbf16, #tpu.memory_space<vmem>>, vector<16x8x128xbf16>
    %2516 = arith.extf %2515 : vector<16x8x128xbf16> to vector<16x8x128xf32>
    %cst_611 = arith.constant dense<0xFF800000> : vector<8x128xf32>
    %2517 = vector.multi_reduction <maximumf>, %2516, %cst_611 [0] : vector<16x8x128xf32> to vector<8x128xf32>
    %cst_612 = arith.constant 0.000000e+00 : f32
    %2518 = vector.broadcast %cst_612 : f32 to vector<8x128xf32>
    %cst_613 = arith.constant 0.000000e+00 : f32
    %2519 = vector.broadcast %cst_613 : f32 to vector<8x128xf32>
    %2520 = vector.extract_strided_slice %2516 {offsets = [0, 0, 0], sizes = [1, 8, 128], strides = [1, 1, 1]} : vector<16x8x128xf32> to vector<1x8x128xf32>
    %2521 = vector.shape_cast %2520 : vector<1x8x128xf32> to vector<8x128xf32>
    %2522 = arith.subf %2521, %2517 : vector<8x128xf32>
    %2523 = math.exp %2522 : vector<8x128xf32>
    %2524 = arith.addf %2518, %2523 : vector<8x128xf32>
    %cst_614 = arith.constant 0.000000e+00 : f32
    %2525 = vector.broadcast %cst_614 : f32 to vector<8x128xf32>
    %2526 = arith.subf %2525, %2498 : vector<8x128xf32>
    %2527 = math.absf %2526 : vector<8x128xf32>
    %cst_615 = arith.constant 1.000000e+00 : f32
    %2528 = vector.broadcast %cst_615 : f32 to vector<8x128xf32>
    %2529 = arith.subf %2528, %2527 : vector<8x128xf32>
    %cst_616 = arith.constant 0.000000e+00 : f32
    %2530 = vector.broadcast %cst_616 : f32 to vector<8x128xf32>
    %2531 = arith.maximumf %2529, %2530 : vector<8x128xf32>
    %2532 = arith.mulf %2531, %2521 : vector<8x128xf32>
    %2533 = arith.addf %2519, %2532 : vector<8x128xf32>
    %2534 = vector.extract_strided_slice %2516 {offsets = [1, 0, 0], sizes = [1, 8, 128], strides = [1, 1, 1]} : vector<16x8x128xf32> to vector<1x8x128xf32>
    %2535 = vector.shape_cast %2534 : vector<1x8x128xf32> to vector<8x128xf32>
    %2536 = arith.subf %2535, %2517 : vector<8x128xf32>
    %2537 = math.exp %2536 : vector<8x128xf32>
    %2538 = arith.addf %2524, %2537 : vector<8x128xf32>
    %cst_617 = arith.constant 1.000000e+00 : f32
    %2539 = vector.broadcast %cst_617 : f32 to vector<8x128xf32>
    %2540 = arith.subf %2539, %2498 : vector<8x128xf32>
    %2541 = math.absf %2540 : vector<8x128xf32>
    %cst_618 = arith.constant 1.000000e+00 : f32
    %2542 = vector.broadcast %cst_618 : f32 to vector<8x128xf32>
    %2543 = arith.subf %2542, %2541 : vector<8x128xf32>
    %cst_619 = arith.constant 0.000000e+00 : f32
    %2544 = vector.broadcast %cst_619 : f32 to vector<8x128xf32>
    %2545 = arith.maximumf %2543, %2544 : vector<8x128xf32>
    %2546 = arith.mulf %2545, %2535 : vector<8x128xf32>
    %2547 = arith.addf %2533, %2546 : vector<8x128xf32>
    %2548 = vector.extract_strided_slice %2516 {offsets = [2, 0, 0], sizes = [1, 8, 128], strides = [1, 1, 1]} : vector<16x8x128xf32> to vector<1x8x128xf32>
    %2549 = vector.shape_cast %2548 : vector<1x8x128xf32> to vector<8x128xf32>
    %2550 = arith.subf %2549, %2517 : vector<8x128xf32>
    %2551 = math.exp %2550 : vector<8x128xf32>
    %2552 = arith.addf %2538, %2551 : vector<8x128xf32>
    %cst_620 = arith.constant 2.000000e+00 : f32
    %2553 = vector.broadcast %cst_620 : f32 to vector<8x128xf32>
    %2554 = arith.subf %2553, %2498 : vector<8x128xf32>
    %2555 = math.absf %2554 : vector<8x128xf32>
    %cst_621 = arith.constant 1.000000e+00 : f32
    %2556 = vector.broadcast %cst_621 : f32 to vector<8x128xf32>
    %2557 = arith.subf %2556, %2555 : vector<8x128xf32>
    %cst_622 = arith.constant 0.000000e+00 : f32
    %2558 = vector.broadcast %cst_622 : f32 to vector<8x128xf32>
    %2559 = arith.maximumf %2557, %2558 : vector<8x128xf32>
    %2560 = arith.mulf %2559, %2549 : vector<8x128xf32>
    %2561 = arith.addf %2547, %2560 : vector<8x128xf32>
    %2562 = vector.extract_strided_slice %2516 {offsets = [3, 0, 0], sizes = [1, 8, 128], strides = [1, 1, 1]} : vector<16x8x128xf32> to vector<1x8x128xf32>
    %2563 = vector.shape_cast %2562 : vector<1x8x128xf32> to vector<8x128xf32>
    %2564 = arith.subf %2563, %2517 : vector<8x128xf32>
    %2565 = math.exp %2564 : vector<8x128xf32>
    %2566 = arith.addf %2552, %2565 : vector<8x128xf32>
    %cst_623 = arith.constant 3.000000e+00 : f32
    %2567 = vector.broadcast %cst_623 : f32 to vector<8x128xf32>
    %2568 = arith.subf %2567, %2498 : vector<8x128xf32>
    %2569 = math.absf %2568 : vector<8x128xf32>
    %cst_624 = arith.constant 1.000000e+00 : f32
    %2570 = vector.broadcast %cst_624 : f32 to vector<8x128xf32>
    %2571 = arith.subf %2570, %2569 : vector<8x128xf32>
    %cst_625 = arith.constant 0.000000e+00 : f32
    %2572 = vector.broadcast %cst_625 : f32 to vector<8x128xf32>
    %2573 = arith.maximumf %2571, %2572 : vector<8x128xf32>
    %2574 = arith.mulf %2573, %2563 : vector<8x128xf32>
    %2575 = arith.addf %2561, %2574 : vector<8x128xf32>
    %2576 = vector.extract_strided_slice %2516 {offsets = [4, 0, 0], sizes = [1, 8, 128], strides = [1, 1, 1]} : vector<16x8x128xf32> to vector<1x8x128xf32>
    %2577 = vector.shape_cast %2576 : vector<1x8x128xf32> to vector<8x128xf32>
    %2578 = arith.subf %2577, %2517 : vector<8x128xf32>
    %2579 = math.exp %2578 : vector<8x128xf32>
    %2580 = arith.addf %2566, %2579 : vector<8x128xf32>
    %cst_626 = arith.constant 4.000000e+00 : f32
    %2581 = vector.broadcast %cst_626 : f32 to vector<8x128xf32>
    %2582 = arith.subf %2581, %2498 : vector<8x128xf32>
    %2583 = math.absf %2582 : vector<8x128xf32>
    %cst_627 = arith.constant 1.000000e+00 : f32
    %2584 = vector.broadcast %cst_627 : f32 to vector<8x128xf32>
    %2585 = arith.subf %2584, %2583 : vector<8x128xf32>
    %cst_628 = arith.constant 0.000000e+00 : f32
    %2586 = vector.broadcast %cst_628 : f32 to vector<8x128xf32>
    %2587 = arith.maximumf %2585, %2586 : vector<8x128xf32>
    %2588 = arith.mulf %2587, %2577 : vector<8x128xf32>
    %2589 = arith.addf %2575, %2588 : vector<8x128xf32>
    %2590 = vector.extract_strided_slice %2516 {offsets = [5, 0, 0], sizes = [1, 8, 128], strides = [1, 1, 1]} : vector<16x8x128xf32> to vector<1x8x128xf32>
    %2591 = vector.shape_cast %2590 : vector<1x8x128xf32> to vector<8x128xf32>
    %2592 = arith.subf %2591, %2517 : vector<8x128xf32>
    %2593 = math.exp %2592 : vector<8x128xf32>
    %2594 = arith.addf %2580, %2593 : vector<8x128xf32>
    %cst_629 = arith.constant 5.000000e+00 : f32
    %2595 = vector.broadcast %cst_629 : f32 to vector<8x128xf32>
    %2596 = arith.subf %2595, %2498 : vector<8x128xf32>
    %2597 = math.absf %2596 : vector<8x128xf32>
    %cst_630 = arith.constant 1.000000e+00 : f32
    %2598 = vector.broadcast %cst_630 : f32 to vector<8x128xf32>
    %2599 = arith.subf %2598, %2597 : vector<8x128xf32>
    %cst_631 = arith.constant 0.000000e+00 : f32
    %2600 = vector.broadcast %cst_631 : f32 to vector<8x128xf32>
    %2601 = arith.maximumf %2599, %2600 : vector<8x128xf32>
    %2602 = arith.mulf %2601, %2591 : vector<8x128xf32>
    %2603 = arith.addf %2589, %2602 : vector<8x128xf32>
    %2604 = vector.extract_strided_slice %2516 {offsets = [6, 0, 0], sizes = [1, 8, 128], strides = [1, 1, 1]} : vector<16x8x128xf32> to vector<1x8x128xf32>
    %2605 = vector.shape_cast %2604 : vector<1x8x128xf32> to vector<8x128xf32>
    %2606 = arith.subf %2605, %2517 : vector<8x128xf32>
    %2607 = math.exp %2606 : vector<8x128xf32>
    %2608 = arith.addf %2594, %2607 : vector<8x128xf32>
    %cst_632 = arith.constant 6.000000e+00 : f32
    %2609 = vector.broadcast %cst_632 : f32 to vector<8x128xf32>
    %2610 = arith.subf %2609, %2498 : vector<8x128xf32>
    %2611 = math.absf %2610 : vector<8x128xf32>
    %cst_633 = arith.constant 1.000000e+00 : f32
    %2612 = vector.broadcast %cst_633 : f32 to vector<8x128xf32>
    %2613 = arith.subf %2612, %2611 : vector<8x128xf32>
    %cst_634 = arith.constant 0.000000e+00 : f32
    %2614 = vector.broadcast %cst_634 : f32 to vector<8x128xf32>
    %2615 = arith.maximumf %2613, %2614 : vector<8x128xf32>
    %2616 = arith.mulf %2615, %2605 : vector<8x128xf32>
    %2617 = arith.addf %2603, %2616 : vector<8x128xf32>
    %2618 = vector.extract_strided_slice %2516 {offsets = [7, 0, 0], sizes = [1, 8, 128], strides = [1, 1, 1]} : vector<16x8x128xf32> to vector<1x8x128xf32>
    %2619 = vector.shape_cast %2618 : vector<1x8x128xf32> to vector<8x128xf32>
    %2620 = arith.subf %2619, %2517 : vector<8x128xf32>
    %2621 = math.exp %2620 : vector<8x128xf32>
    %2622 = arith.addf %2608, %2621 : vector<8x128xf32>
    %cst_635 = arith.constant 7.000000e+00 : f32
    %2623 = vector.broadcast %cst_635 : f32 to vector<8x128xf32>
    %2624 = arith.subf %2623, %2498 : vector<8x128xf32>
    %2625 = math.absf %2624 : vector<8x128xf32>
    %cst_636 = arith.constant 1.000000e+00 : f32
    %2626 = vector.broadcast %cst_636 : f32 to vector<8x128xf32>
    %2627 = arith.subf %2626, %2625 : vector<8x128xf32>
    %cst_637 = arith.constant 0.000000e+00 : f32
    %2628 = vector.broadcast %cst_637 : f32 to vector<8x128xf32>
    %2629 = arith.maximumf %2627, %2628 : vector<8x128xf32>
    %2630 = arith.mulf %2629, %2619 : vector<8x128xf32>
    %2631 = arith.addf %2617, %2630 : vector<8x128xf32>
    %2632 = vector.extract_strided_slice %2516 {offsets = [8, 0, 0], sizes = [1, 8, 128], strides = [1, 1, 1]} : vector<16x8x128xf32> to vector<1x8x128xf32>
    %2633 = vector.shape_cast %2632 : vector<1x8x128xf32> to vector<8x128xf32>
    %2634 = arith.subf %2633, %2517 : vector<8x128xf32>
    %2635 = math.exp %2634 : vector<8x128xf32>
    %2636 = arith.addf %2622, %2635 : vector<8x128xf32>
    %cst_638 = arith.constant 8.000000e+00 : f32
    %2637 = vector.broadcast %cst_638 : f32 to vector<8x128xf32>
    %2638 = arith.subf %2637, %2498 : vector<8x128xf32>
    %2639 = math.absf %2638 : vector<8x128xf32>
    %cst_639 = arith.constant 1.000000e+00 : f32
    %2640 = vector.broadcast %cst_639 : f32 to vector<8x128xf32>
    %2641 = arith.subf %2640, %2639 : vector<8x128xf32>
    %cst_640 = arith.constant 0.000000e+00 : f32
    %2642 = vector.broadcast %cst_640 : f32 to vector<8x128xf32>
    %2643 = arith.maximumf %2641, %2642 : vector<8x128xf32>
    %2644 = arith.mulf %2643, %2633 : vector<8x128xf32>
    %2645 = arith.addf %2631, %2644 : vector<8x128xf32>
    %2646 = vector.extract_strided_slice %2516 {offsets = [9, 0, 0], sizes = [1, 8, 128], strides = [1, 1, 1]} : vector<16x8x128xf32> to vector<1x8x128xf32>
    %2647 = vector.shape_cast %2646 : vector<1x8x128xf32> to vector<8x128xf32>
    %2648 = arith.subf %2647, %2517 : vector<8x128xf32>
    %2649 = math.exp %2648 : vector<8x128xf32>
    %2650 = arith.addf %2636, %2649 : vector<8x128xf32>
    %cst_641 = arith.constant 9.000000e+00 : f32
    %2651 = vector.broadcast %cst_641 : f32 to vector<8x128xf32>
    %2652 = arith.subf %2651, %2498 : vector<8x128xf32>
    %2653 = math.absf %2652 : vector<8x128xf32>
    %cst_642 = arith.constant 1.000000e+00 : f32
    %2654 = vector.broadcast %cst_642 : f32 to vector<8x128xf32>
    %2655 = arith.subf %2654, %2653 : vector<8x128xf32>
    %cst_643 = arith.constant 0.000000e+00 : f32
    %2656 = vector.broadcast %cst_643 : f32 to vector<8x128xf32>
    %2657 = arith.maximumf %2655, %2656 : vector<8x128xf32>
    %2658 = arith.mulf %2657, %2647 : vector<8x128xf32>
    %2659 = arith.addf %2645, %2658 : vector<8x128xf32>
    %2660 = vector.extract_strided_slice %2516 {offsets = [10, 0, 0], sizes = [1, 8, 128], strides = [1, 1, 1]} : vector<16x8x128xf32> to vector<1x8x128xf32>
    %2661 = vector.shape_cast %2660 : vector<1x8x128xf32> to vector<8x128xf32>
    %2662 = arith.subf %2661, %2517 : vector<8x128xf32>
    %2663 = math.exp %2662 : vector<8x128xf32>
    %2664 = arith.addf %2650, %2663 : vector<8x128xf32>
    %cst_644 = arith.constant 1.000000e+01 : f32
    %2665 = vector.broadcast %cst_644 : f32 to vector<8x128xf32>
    %2666 = arith.subf %2665, %2498 : vector<8x128xf32>
    %2667 = math.absf %2666 : vector<8x128xf32>
    %cst_645 = arith.constant 1.000000e+00 : f32
    %2668 = vector.broadcast %cst_645 : f32 to vector<8x128xf32>
    %2669 = arith.subf %2668, %2667 : vector<8x128xf32>
    %cst_646 = arith.constant 0.000000e+00 : f32
    %2670 = vector.broadcast %cst_646 : f32 to vector<8x128xf32>
    %2671 = arith.maximumf %2669, %2670 : vector<8x128xf32>
    %2672 = arith.mulf %2671, %2661 : vector<8x128xf32>
    %2673 = arith.addf %2659, %2672 : vector<8x128xf32>
    %2674 = vector.extract_strided_slice %2516 {offsets = [11, 0, 0], sizes = [1, 8, 128], strides = [1, 1, 1]} : vector<16x8x128xf32> to vector<1x8x128xf32>
    %2675 = vector.shape_cast %2674 : vector<1x8x128xf32> to vector<8x128xf32>
    %2676 = arith.subf %2675, %2517 : vector<8x128xf32>
    %2677 = math.exp %2676 : vector<8x128xf32>
    %2678 = arith.addf %2664, %2677 : vector<8x128xf32>
    %cst_647 = arith.constant 1.100000e+01 : f32
    %2679 = vector.broadcast %cst_647 : f32 to vector<8x128xf32>
    %2680 = arith.subf %2679, %2498 : vector<8x128xf32>
    %2681 = math.absf %2680 : vector<8x128xf32>
    %cst_648 = arith.constant 1.000000e+00 : f32
    %2682 = vector.broadcast %cst_648 : f32 to vector<8x128xf32>
    %2683 = arith.subf %2682, %2681 : vector<8x128xf32>
    %cst_649 = arith.constant 0.000000e+00 : f32
    %2684 = vector.broadcast %cst_649 : f32 to vector<8x128xf32>
    %2685 = arith.maximumf %2683, %2684 : vector<8x128xf32>
    %2686 = arith.mulf %2685, %2675 : vector<8x128xf32>
    %2687 = arith.addf %2673, %2686 : vector<8x128xf32>
    %2688 = vector.extract_strided_slice %2516 {offsets = [12, 0, 0], sizes = [1, 8, 128], strides = [1, 1, 1]} : vector<16x8x128xf32> to vector<1x8x128xf32>
    %2689 = vector.shape_cast %2688 : vector<1x8x128xf32> to vector<8x128xf32>
    %2690 = arith.subf %2689, %2517 : vector<8x128xf32>
    %2691 = math.exp %2690 : vector<8x128xf32>
    %2692 = arith.addf %2678, %2691 : vector<8x128xf32>
    %cst_650 = arith.constant 1.200000e+01 : f32
    %2693 = vector.broadcast %cst_650 : f32 to vector<8x128xf32>
    %2694 = arith.subf %2693, %2498 : vector<8x128xf32>
    %2695 = math.absf %2694 : vector<8x128xf32>
    %cst_651 = arith.constant 1.000000e+00 : f32
    %2696 = vector.broadcast %cst_651 : f32 to vector<8x128xf32>
    %2697 = arith.subf %2696, %2695 : vector<8x128xf32>
    %cst_652 = arith.constant 0.000000e+00 : f32
    %2698 = vector.broadcast %cst_652 : f32 to vector<8x128xf32>
    %2699 = arith.maximumf %2697, %2698 : vector<8x128xf32>
    %2700 = arith.mulf %2699, %2689 : vector<8x128xf32>
    %2701 = arith.addf %2687, %2700 : vector<8x128xf32>
    %2702 = vector.extract_strided_slice %2516 {offsets = [13, 0, 0], sizes = [1, 8, 128], strides = [1, 1, 1]} : vector<16x8x128xf32> to vector<1x8x128xf32>
    %2703 = vector.shape_cast %2702 : vector<1x8x128xf32> to vector<8x128xf32>
    %2704 = arith.subf %2703, %2517 : vector<8x128xf32>
    %2705 = math.exp %2704 : vector<8x128xf32>
    %2706 = arith.addf %2692, %2705 : vector<8x128xf32>
    %cst_653 = arith.constant 1.300000e+01 : f32
    %2707 = vector.broadcast %cst_653 : f32 to vector<8x128xf32>
    %2708 = arith.subf %2707, %2498 : vector<8x128xf32>
    %2709 = math.absf %2708 : vector<8x128xf32>
    %cst_654 = arith.constant 1.000000e+00 : f32
    %2710 = vector.broadcast %cst_654 : f32 to vector<8x128xf32>
    %2711 = arith.subf %2710, %2709 : vector<8x128xf32>
    %cst_655 = arith.constant 0.000000e+00 : f32
    %2712 = vector.broadcast %cst_655 : f32 to vector<8x128xf32>
    %2713 = arith.maximumf %2711, %2712 : vector<8x128xf32>
    %2714 = arith.mulf %2713, %2703 : vector<8x128xf32>
    %2715 = arith.addf %2701, %2714 : vector<8x128xf32>
    %2716 = vector.extract_strided_slice %2516 {offsets = [14, 0, 0], sizes = [1, 8, 128], strides = [1, 1, 1]} : vector<16x8x128xf32> to vector<1x8x128xf32>
    %2717 = vector.shape_cast %2716 : vector<1x8x128xf32> to vector<8x128xf32>
    %2718 = arith.subf %2717, %2517 : vector<8x128xf32>
    %2719 = math.exp %2718 : vector<8x128xf32>
    %2720 = arith.addf %2706, %2719 : vector<8x128xf32>
    %cst_656 = arith.constant 1.400000e+01 : f32
    %2721 = vector.broadcast %cst_656 : f32 to vector<8x128xf32>
    %2722 = arith.subf %2721, %2498 : vector<8x128xf32>
    %2723 = math.absf %2722 : vector<8x128xf32>
    %cst_657 = arith.constant 1.000000e+00 : f32
    %2724 = vector.broadcast %cst_657 : f32 to vector<8x128xf32>
    %2725 = arith.subf %2724, %2723 : vector<8x128xf32>
    %cst_658 = arith.constant 0.000000e+00 : f32
    %2726 = vector.broadcast %cst_658 : f32 to vector<8x128xf32>
    %2727 = arith.maximumf %2725, %2726 : vector<8x128xf32>
    %2728 = arith.mulf %2727, %2717 : vector<8x128xf32>
    %2729 = arith.addf %2715, %2728 : vector<8x128xf32>
    %2730 = vector.extract_strided_slice %2516 {offsets = [15, 0, 0], sizes = [1, 8, 128], strides = [1, 1, 1]} : vector<16x8x128xf32> to vector<1x8x128xf32>
    %2731 = vector.shape_cast %2730 : vector<1x8x128xf32> to vector<8x128xf32>
    %2732 = arith.subf %2731, %2517 : vector<8x128xf32>
    %2733 = math.exp %2732 : vector<8x128xf32>
    %2734 = arith.addf %2720, %2733 : vector<8x128xf32>
    %cst_659 = arith.constant 1.500000e+01 : f32
    %2735 = vector.broadcast %cst_659 : f32 to vector<8x128xf32>
    %2736 = arith.subf %2735, %2498 : vector<8x128xf32>
    %2737 = math.absf %2736 : vector<8x128xf32>
    %cst_660 = arith.constant 1.000000e+00 : f32
    %2738 = vector.broadcast %cst_660 : f32 to vector<8x128xf32>
    %2739 = arith.subf %2738, %2737 : vector<8x128xf32>
    %cst_661 = arith.constant 0.000000e+00 : f32
    %2740 = vector.broadcast %cst_661 : f32 to vector<8x128xf32>
    %2741 = arith.maximumf %2739, %2740 : vector<8x128xf32>
    %2742 = arith.mulf %2741, %2731 : vector<8x128xf32>
    %2743 = arith.addf %2729, %2742 : vector<8x128xf32>
    %2744 = math.log %2734 : vector<8x128xf32>
    %2745 = arith.addf %2517, %2744 : vector<8x128xf32>
    %2746 = arith.subf %2745, %2743 : vector<8x128xf32>
    %2747 = arith.addf %2514, %2746 : vector<8x128xf32>
    %c16_662 = arith.constant 16 : index
    %c16_663 = arith.constant 16 : index
    %c0_664 = arith.constant 0 : index
    %2748 = vector.load %arg2[%c16_662, %c16_663, %c0_664] : memref<64x24x128xbf16, #tpu.memory_space<vmem>>, vector<16x8x128xbf16>
    %2749 = arith.extf %2748 : vector<16x8x128xbf16> to vector<16x8x128xf32>
    %cst_665 = arith.constant dense<0xFF800000> : vector<8x128xf32>
    %2750 = vector.multi_reduction <maximumf>, %2749, %cst_665 [0] : vector<16x8x128xf32> to vector<8x128xf32>
    %cst_666 = arith.constant 0.000000e+00 : f32
    %2751 = vector.broadcast %cst_666 : f32 to vector<8x128xf32>
    %cst_667 = arith.constant 0.000000e+00 : f32
    %2752 = vector.broadcast %cst_667 : f32 to vector<8x128xf32>
    %2753 = vector.extract_strided_slice %2749 {offsets = [0, 0, 0], sizes = [1, 8, 128], strides = [1, 1, 1]} : vector<16x8x128xf32> to vector<1x8x128xf32>
    %2754 = vector.shape_cast %2753 : vector<1x8x128xf32> to vector<8x128xf32>
    %2755 = arith.subf %2754, %2750 : vector<8x128xf32>
    %2756 = math.exp %2755 : vector<8x128xf32>
    %2757 = arith.addf %2751, %2756 : vector<8x128xf32>
    %cst_668 = arith.constant 0.000000e+00 : f32
    %2758 = vector.broadcast %cst_668 : f32 to vector<8x128xf32>
    %2759 = arith.subf %2758, %2503 : vector<8x128xf32>
    %2760 = math.absf %2759 : vector<8x128xf32>
    %cst_669 = arith.constant 1.000000e+00 : f32
    %2761 = vector.broadcast %cst_669 : f32 to vector<8x128xf32>
    %2762 = arith.subf %2761, %2760 : vector<8x128xf32>
    %cst_670 = arith.constant 0.000000e+00 : f32
    %2763 = vector.broadcast %cst_670 : f32 to vector<8x128xf32>
    %2764 = arith.maximumf %2762, %2763 : vector<8x128xf32>
    %2765 = arith.mulf %2764, %2754 : vector<8x128xf32>
    %2766 = arith.addf %2752, %2765 : vector<8x128xf32>
    %2767 = vector.extract_strided_slice %2749 {offsets = [1, 0, 0], sizes = [1, 8, 128], strides = [1, 1, 1]} : vector<16x8x128xf32> to vector<1x8x128xf32>
    %2768 = vector.shape_cast %2767 : vector<1x8x128xf32> to vector<8x128xf32>
    %2769 = arith.subf %2768, %2750 : vector<8x128xf32>
    %2770 = math.exp %2769 : vector<8x128xf32>
    %2771 = arith.addf %2757, %2770 : vector<8x128xf32>
    %cst_671 = arith.constant 1.000000e+00 : f32
    %2772 = vector.broadcast %cst_671 : f32 to vector<8x128xf32>
    %2773 = arith.subf %2772, %2503 : vector<8x128xf32>
    %2774 = math.absf %2773 : vector<8x128xf32>
    %cst_672 = arith.constant 1.000000e+00 : f32
    %2775 = vector.broadcast %cst_672 : f32 to vector<8x128xf32>
    %2776 = arith.subf %2775, %2774 : vector<8x128xf32>
    %cst_673 = arith.constant 0.000000e+00 : f32
    %2777 = vector.broadcast %cst_673 : f32 to vector<8x128xf32>
    %2778 = arith.maximumf %2776, %2777 : vector<8x128xf32>
    %2779 = arith.mulf %2778, %2768 : vector<8x128xf32>
    %2780 = arith.addf %2766, %2779 : vector<8x128xf32>
    %2781 = vector.extract_strided_slice %2749 {offsets = [2, 0, 0], sizes = [1, 8, 128], strides = [1, 1, 1]} : vector<16x8x128xf32> to vector<1x8x128xf32>
    %2782 = vector.shape_cast %2781 : vector<1x8x128xf32> to vector<8x128xf32>
    %2783 = arith.subf %2782, %2750 : vector<8x128xf32>
    %2784 = math.exp %2783 : vector<8x128xf32>
    %2785 = arith.addf %2771, %2784 : vector<8x128xf32>
    %cst_674 = arith.constant 2.000000e+00 : f32
    %2786 = vector.broadcast %cst_674 : f32 to vector<8x128xf32>
    %2787 = arith.subf %2786, %2503 : vector<8x128xf32>
    %2788 = math.absf %2787 : vector<8x128xf32>
    %cst_675 = arith.constant 1.000000e+00 : f32
    %2789 = vector.broadcast %cst_675 : f32 to vector<8x128xf32>
    %2790 = arith.subf %2789, %2788 : vector<8x128xf32>
    %cst_676 = arith.constant 0.000000e+00 : f32
    %2791 = vector.broadcast %cst_676 : f32 to vector<8x128xf32>
    %2792 = arith.maximumf %2790, %2791 : vector<8x128xf32>
    %2793 = arith.mulf %2792, %2782 : vector<8x128xf32>
    %2794 = arith.addf %2780, %2793 : vector<8x128xf32>
    %2795 = vector.extract_strided_slice %2749 {offsets = [3, 0, 0], sizes = [1, 8, 128], strides = [1, 1, 1]} : vector<16x8x128xf32> to vector<1x8x128xf32>
    %2796 = vector.shape_cast %2795 : vector<1x8x128xf32> to vector<8x128xf32>
    %2797 = arith.subf %2796, %2750 : vector<8x128xf32>
    %2798 = math.exp %2797 : vector<8x128xf32>
    %2799 = arith.addf %2785, %2798 : vector<8x128xf32>
    %cst_677 = arith.constant 3.000000e+00 : f32
    %2800 = vector.broadcast %cst_677 : f32 to vector<8x128xf32>
    %2801 = arith.subf %2800, %2503 : vector<8x128xf32>
    %2802 = math.absf %2801 : vector<8x128xf32>
    %cst_678 = arith.constant 1.000000e+00 : f32
    %2803 = vector.broadcast %cst_678 : f32 to vector<8x128xf32>
    %2804 = arith.subf %2803, %2802 : vector<8x128xf32>
    %cst_679 = arith.constant 0.000000e+00 : f32
    %2805 = vector.broadcast %cst_679 : f32 to vector<8x128xf32>
    %2806 = arith.maximumf %2804, %2805 : vector<8x128xf32>
    %2807 = arith.mulf %2806, %2796 : vector<8x128xf32>
    %2808 = arith.addf %2794, %2807 : vector<8x128xf32>
    %2809 = vector.extract_strided_slice %2749 {offsets = [4, 0, 0], sizes = [1, 8, 128], strides = [1, 1, 1]} : vector<16x8x128xf32> to vector<1x8x128xf32>
    %2810 = vector.shape_cast %2809 : vector<1x8x128xf32> to vector<8x128xf32>
    %2811 = arith.subf %2810, %2750 : vector<8x128xf32>
    %2812 = math.exp %2811 : vector<8x128xf32>
    %2813 = arith.addf %2799, %2812 : vector<8x128xf32>
    %cst_680 = arith.constant 4.000000e+00 : f32
    %2814 = vector.broadcast %cst_680 : f32 to vector<8x128xf32>
    %2815 = arith.subf %2814, %2503 : vector<8x128xf32>
    %2816 = math.absf %2815 : vector<8x128xf32>
    %cst_681 = arith.constant 1.000000e+00 : f32
    %2817 = vector.broadcast %cst_681 : f32 to vector<8x128xf32>
    %2818 = arith.subf %2817, %2816 : vector<8x128xf32>
    %cst_682 = arith.constant 0.000000e+00 : f32
    %2819 = vector.broadcast %cst_682 : f32 to vector<8x128xf32>
    %2820 = arith.maximumf %2818, %2819 : vector<8x128xf32>
    %2821 = arith.mulf %2820, %2810 : vector<8x128xf32>
    %2822 = arith.addf %2808, %2821 : vector<8x128xf32>
    %2823 = vector.extract_strided_slice %2749 {offsets = [5, 0, 0], sizes = [1, 8, 128], strides = [1, 1, 1]} : vector<16x8x128xf32> to vector<1x8x128xf32>
    %2824 = vector.shape_cast %2823 : vector<1x8x128xf32> to vector<8x128xf32>
    %2825 = arith.subf %2824, %2750 : vector<8x128xf32>
    %2826 = math.exp %2825 : vector<8x128xf32>
    %2827 = arith.addf %2813, %2826 : vector<8x128xf32>
    %cst_683 = arith.constant 5.000000e+00 : f32
    %2828 = vector.broadcast %cst_683 : f32 to vector<8x128xf32>
    %2829 = arith.subf %2828, %2503 : vector<8x128xf32>
    %2830 = math.absf %2829 : vector<8x128xf32>
    %cst_684 = arith.constant 1.000000e+00 : f32
    %2831 = vector.broadcast %cst_684 : f32 to vector<8x128xf32>
    %2832 = arith.subf %2831, %2830 : vector<8x128xf32>
    %cst_685 = arith.constant 0.000000e+00 : f32
    %2833 = vector.broadcast %cst_685 : f32 to vector<8x128xf32>
    %2834 = arith.maximumf %2832, %2833 : vector<8x128xf32>
    %2835 = arith.mulf %2834, %2824 : vector<8x128xf32>
    %2836 = arith.addf %2822, %2835 : vector<8x128xf32>
    %2837 = vector.extract_strided_slice %2749 {offsets = [6, 0, 0], sizes = [1, 8, 128], strides = [1, 1, 1]} : vector<16x8x128xf32> to vector<1x8x128xf32>
    %2838 = vector.shape_cast %2837 : vector<1x8x128xf32> to vector<8x128xf32>
    %2839 = arith.subf %2838, %2750 : vector<8x128xf32>
    %2840 = math.exp %2839 : vector<8x128xf32>
    %2841 = arith.addf %2827, %2840 : vector<8x128xf32>
    %cst_686 = arith.constant 6.000000e+00 : f32
    %2842 = vector.broadcast %cst_686 : f32 to vector<8x128xf32>
    %2843 = arith.subf %2842, %2503 : vector<8x128xf32>
    %2844 = math.absf %2843 : vector<8x128xf32>
    %cst_687 = arith.constant 1.000000e+00 : f32
    %2845 = vector.broadcast %cst_687 : f32 to vector<8x128xf32>
    %2846 = arith.subf %2845, %2844 : vector<8x128xf32>
    %cst_688 = arith.constant 0.000000e+00 : f32
    %2847 = vector.broadcast %cst_688 : f32 to vector<8x128xf32>
    %2848 = arith.maximumf %2846, %2847 : vector<8x128xf32>
    %2849 = arith.mulf %2848, %2838 : vector<8x128xf32>
    %2850 = arith.addf %2836, %2849 : vector<8x128xf32>
    %2851 = vector.extract_strided_slice %2749 {offsets = [7, 0, 0], sizes = [1, 8, 128], strides = [1, 1, 1]} : vector<16x8x128xf32> to vector<1x8x128xf32>
    %2852 = vector.shape_cast %2851 : vector<1x8x128xf32> to vector<8x128xf32>
    %2853 = arith.subf %2852, %2750 : vector<8x128xf32>
    %2854 = math.exp %2853 : vector<8x128xf32>
    %2855 = arith.addf %2841, %2854 : vector<8x128xf32>
    %cst_689 = arith.constant 7.000000e+00 : f32
    %2856 = vector.broadcast %cst_689 : f32 to vector<8x128xf32>
    %2857 = arith.subf %2856, %2503 : vector<8x128xf32>
    %2858 = math.absf %2857 : vector<8x128xf32>
    %cst_690 = arith.constant 1.000000e+00 : f32
    %2859 = vector.broadcast %cst_690 : f32 to vector<8x128xf32>
    %2860 = arith.subf %2859, %2858 : vector<8x128xf32>
    %cst_691 = arith.constant 0.000000e+00 : f32
    %2861 = vector.broadcast %cst_691 : f32 to vector<8x128xf32>
    %2862 = arith.maximumf %2860, %2861 : vector<8x128xf32>
    %2863 = arith.mulf %2862, %2852 : vector<8x128xf32>
    %2864 = arith.addf %2850, %2863 : vector<8x128xf32>
    %2865 = vector.extract_strided_slice %2749 {offsets = [8, 0, 0], sizes = [1, 8, 128], strides = [1, 1, 1]} : vector<16x8x128xf32> to vector<1x8x128xf32>
    %2866 = vector.shape_cast %2865 : vector<1x8x128xf32> to vector<8x128xf32>
    %2867 = arith.subf %2866, %2750 : vector<8x128xf32>
    %2868 = math.exp %2867 : vector<8x128xf32>
    %2869 = arith.addf %2855, %2868 : vector<8x128xf32>
    %cst_692 = arith.constant 8.000000e+00 : f32
    %2870 = vector.broadcast %cst_692 : f32 to vector<8x128xf32>
    %2871 = arith.subf %2870, %2503 : vector<8x128xf32>
    %2872 = math.absf %2871 : vector<8x128xf32>
    %cst_693 = arith.constant 1.000000e+00 : f32
    %2873 = vector.broadcast %cst_693 : f32 to vector<8x128xf32>
    %2874 = arith.subf %2873, %2872 : vector<8x128xf32>
    %cst_694 = arith.constant 0.000000e+00 : f32
    %2875 = vector.broadcast %cst_694 : f32 to vector<8x128xf32>
    %2876 = arith.maximumf %2874, %2875 : vector<8x128xf32>
    %2877 = arith.mulf %2876, %2866 : vector<8x128xf32>
    %2878 = arith.addf %2864, %2877 : vector<8x128xf32>
    %2879 = vector.extract_strided_slice %2749 {offsets = [9, 0, 0], sizes = [1, 8, 128], strides = [1, 1, 1]} : vector<16x8x128xf32> to vector<1x8x128xf32>
    %2880 = vector.shape_cast %2879 : vector<1x8x128xf32> to vector<8x128xf32>
    %2881 = arith.subf %2880, %2750 : vector<8x128xf32>
    %2882 = math.exp %2881 : vector<8x128xf32>
    %2883 = arith.addf %2869, %2882 : vector<8x128xf32>
    %cst_695 = arith.constant 9.000000e+00 : f32
    %2884 = vector.broadcast %cst_695 : f32 to vector<8x128xf32>
    %2885 = arith.subf %2884, %2503 : vector<8x128xf32>
    %2886 = math.absf %2885 : vector<8x128xf32>
    %cst_696 = arith.constant 1.000000e+00 : f32
    %2887 = vector.broadcast %cst_696 : f32 to vector<8x128xf32>
    %2888 = arith.subf %2887, %2886 : vector<8x128xf32>
    %cst_697 = arith.constant 0.000000e+00 : f32
    %2889 = vector.broadcast %cst_697 : f32 to vector<8x128xf32>
    %2890 = arith.maximumf %2888, %2889 : vector<8x128xf32>
    %2891 = arith.mulf %2890, %2880 : vector<8x128xf32>
    %2892 = arith.addf %2878, %2891 : vector<8x128xf32>
    %2893 = vector.extract_strided_slice %2749 {offsets = [10, 0, 0], sizes = [1, 8, 128], strides = [1, 1, 1]} : vector<16x8x128xf32> to vector<1x8x128xf32>
    %2894 = vector.shape_cast %2893 : vector<1x8x128xf32> to vector<8x128xf32>
    %2895 = arith.subf %2894, %2750 : vector<8x128xf32>
    %2896 = math.exp %2895 : vector<8x128xf32>
    %2897 = arith.addf %2883, %2896 : vector<8x128xf32>
    %cst_698 = arith.constant 1.000000e+01 : f32
    %2898 = vector.broadcast %cst_698 : f32 to vector<8x128xf32>
    %2899 = arith.subf %2898, %2503 : vector<8x128xf32>
    %2900 = math.absf %2899 : vector<8x128xf32>
    %cst_699 = arith.constant 1.000000e+00 : f32
    %2901 = vector.broadcast %cst_699 : f32 to vector<8x128xf32>
    %2902 = arith.subf %2901, %2900 : vector<8x128xf32>
    %cst_700 = arith.constant 0.000000e+00 : f32
    %2903 = vector.broadcast %cst_700 : f32 to vector<8x128xf32>
    %2904 = arith.maximumf %2902, %2903 : vector<8x128xf32>
    %2905 = arith.mulf %2904, %2894 : vector<8x128xf32>
    %2906 = arith.addf %2892, %2905 : vector<8x128xf32>
    %2907 = vector.extract_strided_slice %2749 {offsets = [11, 0, 0], sizes = [1, 8, 128], strides = [1, 1, 1]} : vector<16x8x128xf32> to vector<1x8x128xf32>
    %2908 = vector.shape_cast %2907 : vector<1x8x128xf32> to vector<8x128xf32>
    %2909 = arith.subf %2908, %2750 : vector<8x128xf32>
    %2910 = math.exp %2909 : vector<8x128xf32>
    %2911 = arith.addf %2897, %2910 : vector<8x128xf32>
    %cst_701 = arith.constant 1.100000e+01 : f32
    %2912 = vector.broadcast %cst_701 : f32 to vector<8x128xf32>
    %2913 = arith.subf %2912, %2503 : vector<8x128xf32>
    %2914 = math.absf %2913 : vector<8x128xf32>
    %cst_702 = arith.constant 1.000000e+00 : f32
    %2915 = vector.broadcast %cst_702 : f32 to vector<8x128xf32>
    %2916 = arith.subf %2915, %2914 : vector<8x128xf32>
    %cst_703 = arith.constant 0.000000e+00 : f32
    %2917 = vector.broadcast %cst_703 : f32 to vector<8x128xf32>
    %2918 = arith.maximumf %2916, %2917 : vector<8x128xf32>
    %2919 = arith.mulf %2918, %2908 : vector<8x128xf32>
    %2920 = arith.addf %2906, %2919 : vector<8x128xf32>
    %2921 = vector.extract_strided_slice %2749 {offsets = [12, 0, 0], sizes = [1, 8, 128], strides = [1, 1, 1]} : vector<16x8x128xf32> to vector<1x8x128xf32>
    %2922 = vector.shape_cast %2921 : vector<1x8x128xf32> to vector<8x128xf32>
    %2923 = arith.subf %2922, %2750 : vector<8x128xf32>
    %2924 = math.exp %2923 : vector<8x128xf32>
    %2925 = arith.addf %2911, %2924 : vector<8x128xf32>
    %cst_704 = arith.constant 1.200000e+01 : f32
    %2926 = vector.broadcast %cst_704 : f32 to vector<8x128xf32>
    %2927 = arith.subf %2926, %2503 : vector<8x128xf32>
    %2928 = math.absf %2927 : vector<8x128xf32>
    %cst_705 = arith.constant 1.000000e+00 : f32
    %2929 = vector.broadcast %cst_705 : f32 to vector<8x128xf32>
    %2930 = arith.subf %2929, %2928 : vector<8x128xf32>
    %cst_706 = arith.constant 0.000000e+00 : f32
    %2931 = vector.broadcast %cst_706 : f32 to vector<8x128xf32>
    %2932 = arith.maximumf %2930, %2931 : vector<8x128xf32>
    %2933 = arith.mulf %2932, %2922 : vector<8x128xf32>
    %2934 = arith.addf %2920, %2933 : vector<8x128xf32>
    %2935 = vector.extract_strided_slice %2749 {offsets = [13, 0, 0], sizes = [1, 8, 128], strides = [1, 1, 1]} : vector<16x8x128xf32> to vector<1x8x128xf32>
    %2936 = vector.shape_cast %2935 : vector<1x8x128xf32> to vector<8x128xf32>
    %2937 = arith.subf %2936, %2750 : vector<8x128xf32>
    %2938 = math.exp %2937 : vector<8x128xf32>
    %2939 = arith.addf %2925, %2938 : vector<8x128xf32>
    %cst_707 = arith.constant 1.300000e+01 : f32
    %2940 = vector.broadcast %cst_707 : f32 to vector<8x128xf32>
    %2941 = arith.subf %2940, %2503 : vector<8x128xf32>
    %2942 = math.absf %2941 : vector<8x128xf32>
    %cst_708 = arith.constant 1.000000e+00 : f32
    %2943 = vector.broadcast %cst_708 : f32 to vector<8x128xf32>
    %2944 = arith.subf %2943, %2942 : vector<8x128xf32>
    %cst_709 = arith.constant 0.000000e+00 : f32
    %2945 = vector.broadcast %cst_709 : f32 to vector<8x128xf32>
    %2946 = arith.maximumf %2944, %2945 : vector<8x128xf32>
    %2947 = arith.mulf %2946, %2936 : vector<8x128xf32>
    %2948 = arith.addf %2934, %2947 : vector<8x128xf32>
    %2949 = vector.extract_strided_slice %2749 {offsets = [14, 0, 0], sizes = [1, 8, 128], strides = [1, 1, 1]} : vector<16x8x128xf32> to vector<1x8x128xf32>
    %2950 = vector.shape_cast %2949 : vector<1x8x128xf32> to vector<8x128xf32>
    %2951 = arith.subf %2950, %2750 : vector<8x128xf32>
    %2952 = math.exp %2951 : vector<8x128xf32>
    %2953 = arith.addf %2939, %2952 : vector<8x128xf32>
    %cst_710 = arith.constant 1.400000e+01 : f32
    %2954 = vector.broadcast %cst_710 : f32 to vector<8x128xf32>
    %2955 = arith.subf %2954, %2503 : vector<8x128xf32>
    %2956 = math.absf %2955 : vector<8x128xf32>
    %cst_711 = arith.constant 1.000000e+00 : f32
    %2957 = vector.broadcast %cst_711 : f32 to vector<8x128xf32>
    %2958 = arith.subf %2957, %2956 : vector<8x128xf32>
    %cst_712 = arith.constant 0.000000e+00 : f32
    %2959 = vector.broadcast %cst_712 : f32 to vector<8x128xf32>
    %2960 = arith.maximumf %2958, %2959 : vector<8x128xf32>
    %2961 = arith.mulf %2960, %2950 : vector<8x128xf32>
    %2962 = arith.addf %2948, %2961 : vector<8x128xf32>
    %2963 = vector.extract_strided_slice %2749 {offsets = [15, 0, 0], sizes = [1, 8, 128], strides = [1, 1, 1]} : vector<16x8x128xf32> to vector<1x8x128xf32>
    %2964 = vector.shape_cast %2963 : vector<1x8x128xf32> to vector<8x128xf32>
    %2965 = arith.subf %2964, %2750 : vector<8x128xf32>
    %2966 = math.exp %2965 : vector<8x128xf32>
    %2967 = arith.addf %2953, %2966 : vector<8x128xf32>
    %cst_713 = arith.constant 1.500000e+01 : f32
    %2968 = vector.broadcast %cst_713 : f32 to vector<8x128xf32>
    %2969 = arith.subf %2968, %2503 : vector<8x128xf32>
    %2970 = math.absf %2969 : vector<8x128xf32>
    %cst_714 = arith.constant 1.000000e+00 : f32
    %2971 = vector.broadcast %cst_714 : f32 to vector<8x128xf32>
    %2972 = arith.subf %2971, %2970 : vector<8x128xf32>
    %cst_715 = arith.constant 0.000000e+00 : f32
    %2973 = vector.broadcast %cst_715 : f32 to vector<8x128xf32>
    %2974 = arith.maximumf %2972, %2973 : vector<8x128xf32>
    %2975 = arith.mulf %2974, %2964 : vector<8x128xf32>
    %2976 = arith.addf %2962, %2975 : vector<8x128xf32>
    %2977 = math.log %2967 : vector<8x128xf32>
    %2978 = arith.addf %2750, %2977 : vector<8x128xf32>
    %2979 = arith.subf %2978, %2976 : vector<8x128xf32>
    %2980 = arith.addf %2747, %2979 : vector<8x128xf32>
    %c32_716 = arith.constant 32 : index
    %c16_717 = arith.constant 16 : index
    %c0_718 = arith.constant 0 : index
    %2981 = vector.load %arg2[%c32_716, %c16_717, %c0_718] : memref<64x24x128xbf16, #tpu.memory_space<vmem>>, vector<16x8x128xbf16>
    %2982 = arith.extf %2981 : vector<16x8x128xbf16> to vector<16x8x128xf32>
    %cst_719 = arith.constant dense<0xFF800000> : vector<8x128xf32>
    %2983 = vector.multi_reduction <maximumf>, %2982, %cst_719 [0] : vector<16x8x128xf32> to vector<8x128xf32>
    %cst_720 = arith.constant 0.000000e+00 : f32
    %2984 = vector.broadcast %cst_720 : f32 to vector<8x128xf32>
    %cst_721 = arith.constant 0.000000e+00 : f32
    %2985 = vector.broadcast %cst_721 : f32 to vector<8x128xf32>
    %2986 = vector.extract_strided_slice %2982 {offsets = [0, 0, 0], sizes = [1, 8, 128], strides = [1, 1, 1]} : vector<16x8x128xf32> to vector<1x8x128xf32>
    %2987 = vector.shape_cast %2986 : vector<1x8x128xf32> to vector<8x128xf32>
    %2988 = arith.subf %2987, %2983 : vector<8x128xf32>
    %2989 = math.exp %2988 : vector<8x128xf32>
    %2990 = arith.addf %2984, %2989 : vector<8x128xf32>
    %cst_722 = arith.constant 0.000000e+00 : f32
    %2991 = vector.broadcast %cst_722 : f32 to vector<8x128xf32>
    %2992 = arith.subf %2991, %2508 : vector<8x128xf32>
    %2993 = math.absf %2992 : vector<8x128xf32>
    %cst_723 = arith.constant 1.000000e+00 : f32
    %2994 = vector.broadcast %cst_723 : f32 to vector<8x128xf32>
    %2995 = arith.subf %2994, %2993 : vector<8x128xf32>
    %cst_724 = arith.constant 0.000000e+00 : f32
    %2996 = vector.broadcast %cst_724 : f32 to vector<8x128xf32>
    %2997 = arith.maximumf %2995, %2996 : vector<8x128xf32>
    %2998 = arith.mulf %2997, %2987 : vector<8x128xf32>
    %2999 = arith.addf %2985, %2998 : vector<8x128xf32>
    %3000 = vector.extract_strided_slice %2982 {offsets = [1, 0, 0], sizes = [1, 8, 128], strides = [1, 1, 1]} : vector<16x8x128xf32> to vector<1x8x128xf32>
    %3001 = vector.shape_cast %3000 : vector<1x8x128xf32> to vector<8x128xf32>
    %3002 = arith.subf %3001, %2983 : vector<8x128xf32>
    %3003 = math.exp %3002 : vector<8x128xf32>
    %3004 = arith.addf %2990, %3003 : vector<8x128xf32>
    %cst_725 = arith.constant 1.000000e+00 : f32
    %3005 = vector.broadcast %cst_725 : f32 to vector<8x128xf32>
    %3006 = arith.subf %3005, %2508 : vector<8x128xf32>
    %3007 = math.absf %3006 : vector<8x128xf32>
    %cst_726 = arith.constant 1.000000e+00 : f32
    %3008 = vector.broadcast %cst_726 : f32 to vector<8x128xf32>
    %3009 = arith.subf %3008, %3007 : vector<8x128xf32>
    %cst_727 = arith.constant 0.000000e+00 : f32
    %3010 = vector.broadcast %cst_727 : f32 to vector<8x128xf32>
    %3011 = arith.maximumf %3009, %3010 : vector<8x128xf32>
    %3012 = arith.mulf %3011, %3001 : vector<8x128xf32>
    %3013 = arith.addf %2999, %3012 : vector<8x128xf32>
    %3014 = vector.extract_strided_slice %2982 {offsets = [2, 0, 0], sizes = [1, 8, 128], strides = [1, 1, 1]} : vector<16x8x128xf32> to vector<1x8x128xf32>
    %3015 = vector.shape_cast %3014 : vector<1x8x128xf32> to vector<8x128xf32>
    %3016 = arith.subf %3015, %2983 : vector<8x128xf32>
    %3017 = math.exp %3016 : vector<8x128xf32>
    %3018 = arith.addf %3004, %3017 : vector<8x128xf32>
    %cst_728 = arith.constant 2.000000e+00 : f32
    %3019 = vector.broadcast %cst_728 : f32 to vector<8x128xf32>
    %3020 = arith.subf %3019, %2508 : vector<8x128xf32>
    %3021 = math.absf %3020 : vector<8x128xf32>
    %cst_729 = arith.constant 1.000000e+00 : f32
    %3022 = vector.broadcast %cst_729 : f32 to vector<8x128xf32>
    %3023 = arith.subf %3022, %3021 : vector<8x128xf32>
    %cst_730 = arith.constant 0.000000e+00 : f32
    %3024 = vector.broadcast %cst_730 : f32 to vector<8x128xf32>
    %3025 = arith.maximumf %3023, %3024 : vector<8x128xf32>
    %3026 = arith.mulf %3025, %3015 : vector<8x128xf32>
    %3027 = arith.addf %3013, %3026 : vector<8x128xf32>
    %3028 = vector.extract_strided_slice %2982 {offsets = [3, 0, 0], sizes = [1, 8, 128], strides = [1, 1, 1]} : vector<16x8x128xf32> to vector<1x8x128xf32>
    %3029 = vector.shape_cast %3028 : vector<1x8x128xf32> to vector<8x128xf32>
    %3030 = arith.subf %3029, %2983 : vector<8x128xf32>
    %3031 = math.exp %3030 : vector<8x128xf32>
    %3032 = arith.addf %3018, %3031 : vector<8x128xf32>
    %cst_731 = arith.constant 3.000000e+00 : f32
    %3033 = vector.broadcast %cst_731 : f32 to vector<8x128xf32>
    %3034 = arith.subf %3033, %2508 : vector<8x128xf32>
    %3035 = math.absf %3034 : vector<8x128xf32>
    %cst_732 = arith.constant 1.000000e+00 : f32
    %3036 = vector.broadcast %cst_732 : f32 to vector<8x128xf32>
    %3037 = arith.subf %3036, %3035 : vector<8x128xf32>
    %cst_733 = arith.constant 0.000000e+00 : f32
    %3038 = vector.broadcast %cst_733 : f32 to vector<8x128xf32>
    %3039 = arith.maximumf %3037, %3038 : vector<8x128xf32>
    %3040 = arith.mulf %3039, %3029 : vector<8x128xf32>
    %3041 = arith.addf %3027, %3040 : vector<8x128xf32>
    %3042 = vector.extract_strided_slice %2982 {offsets = [4, 0, 0], sizes = [1, 8, 128], strides = [1, 1, 1]} : vector<16x8x128xf32> to vector<1x8x128xf32>
    %3043 = vector.shape_cast %3042 : vector<1x8x128xf32> to vector<8x128xf32>
    %3044 = arith.subf %3043, %2983 : vector<8x128xf32>
    %3045 = math.exp %3044 : vector<8x128xf32>
    %3046 = arith.addf %3032, %3045 : vector<8x128xf32>
    %cst_734 = arith.constant 4.000000e+00 : f32
    %3047 = vector.broadcast %cst_734 : f32 to vector<8x128xf32>
    %3048 = arith.subf %3047, %2508 : vector<8x128xf32>
    %3049 = math.absf %3048 : vector<8x128xf32>
    %cst_735 = arith.constant 1.000000e+00 : f32
    %3050 = vector.broadcast %cst_735 : f32 to vector<8x128xf32>
    %3051 = arith.subf %3050, %3049 : vector<8x128xf32>
    %cst_736 = arith.constant 0.000000e+00 : f32
    %3052 = vector.broadcast %cst_736 : f32 to vector<8x128xf32>
    %3053 = arith.maximumf %3051, %3052 : vector<8x128xf32>
    %3054 = arith.mulf %3053, %3043 : vector<8x128xf32>
    %3055 = arith.addf %3041, %3054 : vector<8x128xf32>
    %3056 = vector.extract_strided_slice %2982 {offsets = [5, 0, 0], sizes = [1, 8, 128], strides = [1, 1, 1]} : vector<16x8x128xf32> to vector<1x8x128xf32>
    %3057 = vector.shape_cast %3056 : vector<1x8x128xf32> to vector<8x128xf32>
    %3058 = arith.subf %3057, %2983 : vector<8x128xf32>
    %3059 = math.exp %3058 : vector<8x128xf32>
    %3060 = arith.addf %3046, %3059 : vector<8x128xf32>
    %cst_737 = arith.constant 5.000000e+00 : f32
    %3061 = vector.broadcast %cst_737 : f32 to vector<8x128xf32>
    %3062 = arith.subf %3061, %2508 : vector<8x128xf32>
    %3063 = math.absf %3062 : vector<8x128xf32>
    %cst_738 = arith.constant 1.000000e+00 : f32
    %3064 = vector.broadcast %cst_738 : f32 to vector<8x128xf32>
    %3065 = arith.subf %3064, %3063 : vector<8x128xf32>
    %cst_739 = arith.constant 0.000000e+00 : f32
    %3066 = vector.broadcast %cst_739 : f32 to vector<8x128xf32>
    %3067 = arith.maximumf %3065, %3066 : vector<8x128xf32>
    %3068 = arith.mulf %3067, %3057 : vector<8x128xf32>
    %3069 = arith.addf %3055, %3068 : vector<8x128xf32>
    %3070 = vector.extract_strided_slice %2982 {offsets = [6, 0, 0], sizes = [1, 8, 128], strides = [1, 1, 1]} : vector<16x8x128xf32> to vector<1x8x128xf32>
    %3071 = vector.shape_cast %3070 : vector<1x8x128xf32> to vector<8x128xf32>
    %3072 = arith.subf %3071, %2983 : vector<8x128xf32>
    %3073 = math.exp %3072 : vector<8x128xf32>
    %3074 = arith.addf %3060, %3073 : vector<8x128xf32>
    %cst_740 = arith.constant 6.000000e+00 : f32
    %3075 = vector.broadcast %cst_740 : f32 to vector<8x128xf32>
    %3076 = arith.subf %3075, %2508 : vector<8x128xf32>
    %3077 = math.absf %3076 : vector<8x128xf32>
    %cst_741 = arith.constant 1.000000e+00 : f32
    %3078 = vector.broadcast %cst_741 : f32 to vector<8x128xf32>
    %3079 = arith.subf %3078, %3077 : vector<8x128xf32>
    %cst_742 = arith.constant 0.000000e+00 : f32
    %3080 = vector.broadcast %cst_742 : f32 to vector<8x128xf32>
    %3081 = arith.maximumf %3079, %3080 : vector<8x128xf32>
    %3082 = arith.mulf %3081, %3071 : vector<8x128xf32>
    %3083 = arith.addf %3069, %3082 : vector<8x128xf32>
    %3084 = vector.extract_strided_slice %2982 {offsets = [7, 0, 0], sizes = [1, 8, 128], strides = [1, 1, 1]} : vector<16x8x128xf32> to vector<1x8x128xf32>
    %3085 = vector.shape_cast %3084 : vector<1x8x128xf32> to vector<8x128xf32>
    %3086 = arith.subf %3085, %2983 : vector<8x128xf32>
    %3087 = math.exp %3086 : vector<8x128xf32>
    %3088 = arith.addf %3074, %3087 : vector<8x128xf32>
    %cst_743 = arith.constant 7.000000e+00 : f32
    %3089 = vector.broadcast %cst_743 : f32 to vector<8x128xf32>
    %3090 = arith.subf %3089, %2508 : vector<8x128xf32>
    %3091 = math.absf %3090 : vector<8x128xf32>
    %cst_744 = arith.constant 1.000000e+00 : f32
    %3092 = vector.broadcast %cst_744 : f32 to vector<8x128xf32>
    %3093 = arith.subf %3092, %3091 : vector<8x128xf32>
    %cst_745 = arith.constant 0.000000e+00 : f32
    %3094 = vector.broadcast %cst_745 : f32 to vector<8x128xf32>
    %3095 = arith.maximumf %3093, %3094 : vector<8x128xf32>
    %3096 = arith.mulf %3095, %3085 : vector<8x128xf32>
    %3097 = arith.addf %3083, %3096 : vector<8x128xf32>
    %3098 = vector.extract_strided_slice %2982 {offsets = [8, 0, 0], sizes = [1, 8, 128], strides = [1, 1, 1]} : vector<16x8x128xf32> to vector<1x8x128xf32>
    %3099 = vector.shape_cast %3098 : vector<1x8x128xf32> to vector<8x128xf32>
    %3100 = arith.subf %3099, %2983 : vector<8x128xf32>
    %3101 = math.exp %3100 : vector<8x128xf32>
    %3102 = arith.addf %3088, %3101 : vector<8x128xf32>
    %cst_746 = arith.constant 8.000000e+00 : f32
    %3103 = vector.broadcast %cst_746 : f32 to vector<8x128xf32>
    %3104 = arith.subf %3103, %2508 : vector<8x128xf32>
    %3105 = math.absf %3104 : vector<8x128xf32>
    %cst_747 = arith.constant 1.000000e+00 : f32
    %3106 = vector.broadcast %cst_747 : f32 to vector<8x128xf32>
    %3107 = arith.subf %3106, %3105 : vector<8x128xf32>
    %cst_748 = arith.constant 0.000000e+00 : f32
    %3108 = vector.broadcast %cst_748 : f32 to vector<8x128xf32>
    %3109 = arith.maximumf %3107, %3108 : vector<8x128xf32>
    %3110 = arith.mulf %3109, %3099 : vector<8x128xf32>
    %3111 = arith.addf %3097, %3110 : vector<8x128xf32>
    %3112 = vector.extract_strided_slice %2982 {offsets = [9, 0, 0], sizes = [1, 8, 128], strides = [1, 1, 1]} : vector<16x8x128xf32> to vector<1x8x128xf32>
    %3113 = vector.shape_cast %3112 : vector<1x8x128xf32> to vector<8x128xf32>
    %3114 = arith.subf %3113, %2983 : vector<8x128xf32>
    %3115 = math.exp %3114 : vector<8x128xf32>
    %3116 = arith.addf %3102, %3115 : vector<8x128xf32>
    %cst_749 = arith.constant 9.000000e+00 : f32
    %3117 = vector.broadcast %cst_749 : f32 to vector<8x128xf32>
    %3118 = arith.subf %3117, %2508 : vector<8x128xf32>
    %3119 = math.absf %3118 : vector<8x128xf32>
    %cst_750 = arith.constant 1.000000e+00 : f32
    %3120 = vector.broadcast %cst_750 : f32 to vector<8x128xf32>
    %3121 = arith.subf %3120, %3119 : vector<8x128xf32>
    %cst_751 = arith.constant 0.000000e+00 : f32
    %3122 = vector.broadcast %cst_751 : f32 to vector<8x128xf32>
    %3123 = arith.maximumf %3121, %3122 : vector<8x128xf32>
    %3124 = arith.mulf %3123, %3113 : vector<8x128xf32>
    %3125 = arith.addf %3111, %3124 : vector<8x128xf32>
    %3126 = vector.extract_strided_slice %2982 {offsets = [10, 0, 0], sizes = [1, 8, 128], strides = [1, 1, 1]} : vector<16x8x128xf32> to vector<1x8x128xf32>
    %3127 = vector.shape_cast %3126 : vector<1x8x128xf32> to vector<8x128xf32>
    %3128 = arith.subf %3127, %2983 : vector<8x128xf32>
    %3129 = math.exp %3128 : vector<8x128xf32>
    %3130 = arith.addf %3116, %3129 : vector<8x128xf32>
    %cst_752 = arith.constant 1.000000e+01 : f32
    %3131 = vector.broadcast %cst_752 : f32 to vector<8x128xf32>
    %3132 = arith.subf %3131, %2508 : vector<8x128xf32>
    %3133 = math.absf %3132 : vector<8x128xf32>
    %cst_753 = arith.constant 1.000000e+00 : f32
    %3134 = vector.broadcast %cst_753 : f32 to vector<8x128xf32>
    %3135 = arith.subf %3134, %3133 : vector<8x128xf32>
    %cst_754 = arith.constant 0.000000e+00 : f32
    %3136 = vector.broadcast %cst_754 : f32 to vector<8x128xf32>
    %3137 = arith.maximumf %3135, %3136 : vector<8x128xf32>
    %3138 = arith.mulf %3137, %3127 : vector<8x128xf32>
    %3139 = arith.addf %3125, %3138 : vector<8x128xf32>
    %3140 = vector.extract_strided_slice %2982 {offsets = [11, 0, 0], sizes = [1, 8, 128], strides = [1, 1, 1]} : vector<16x8x128xf32> to vector<1x8x128xf32>
    %3141 = vector.shape_cast %3140 : vector<1x8x128xf32> to vector<8x128xf32>
    %3142 = arith.subf %3141, %2983 : vector<8x128xf32>
    %3143 = math.exp %3142 : vector<8x128xf32>
    %3144 = arith.addf %3130, %3143 : vector<8x128xf32>
    %cst_755 = arith.constant 1.100000e+01 : f32
    %3145 = vector.broadcast %cst_755 : f32 to vector<8x128xf32>
    %3146 = arith.subf %3145, %2508 : vector<8x128xf32>
    %3147 = math.absf %3146 : vector<8x128xf32>
    %cst_756 = arith.constant 1.000000e+00 : f32
    %3148 = vector.broadcast %cst_756 : f32 to vector<8x128xf32>
    %3149 = arith.subf %3148, %3147 : vector<8x128xf32>
    %cst_757 = arith.constant 0.000000e+00 : f32
    %3150 = vector.broadcast %cst_757 : f32 to vector<8x128xf32>
    %3151 = arith.maximumf %3149, %3150 : vector<8x128xf32>
    %3152 = arith.mulf %3151, %3141 : vector<8x128xf32>
    %3153 = arith.addf %3139, %3152 : vector<8x128xf32>
    %3154 = vector.extract_strided_slice %2982 {offsets = [12, 0, 0], sizes = [1, 8, 128], strides = [1, 1, 1]} : vector<16x8x128xf32> to vector<1x8x128xf32>
    %3155 = vector.shape_cast %3154 : vector<1x8x128xf32> to vector<8x128xf32>
    %3156 = arith.subf %3155, %2983 : vector<8x128xf32>
    %3157 = math.exp %3156 : vector<8x128xf32>
    %3158 = arith.addf %3144, %3157 : vector<8x128xf32>
    %cst_758 = arith.constant 1.200000e+01 : f32
    %3159 = vector.broadcast %cst_758 : f32 to vector<8x128xf32>
    %3160 = arith.subf %3159, %2508 : vector<8x128xf32>
    %3161 = math.absf %3160 : vector<8x128xf32>
    %cst_759 = arith.constant 1.000000e+00 : f32
    %3162 = vector.broadcast %cst_759 : f32 to vector<8x128xf32>
    %3163 = arith.subf %3162, %3161 : vector<8x128xf32>
    %cst_760 = arith.constant 0.000000e+00 : f32
    %3164 = vector.broadcast %cst_760 : f32 to vector<8x128xf32>
    %3165 = arith.maximumf %3163, %3164 : vector<8x128xf32>
    %3166 = arith.mulf %3165, %3155 : vector<8x128xf32>
    %3167 = arith.addf %3153, %3166 : vector<8x128xf32>
    %3168 = vector.extract_strided_slice %2982 {offsets = [13, 0, 0], sizes = [1, 8, 128], strides = [1, 1, 1]} : vector<16x8x128xf32> to vector<1x8x128xf32>
    %3169 = vector.shape_cast %3168 : vector<1x8x128xf32> to vector<8x128xf32>
    %3170 = arith.subf %3169, %2983 : vector<8x128xf32>
    %3171 = math.exp %3170 : vector<8x128xf32>
    %3172 = arith.addf %3158, %3171 : vector<8x128xf32>
    %cst_761 = arith.constant 1.300000e+01 : f32
    %3173 = vector.broadcast %cst_761 : f32 to vector<8x128xf32>
    %3174 = arith.subf %3173, %2508 : vector<8x128xf32>
    %3175 = math.absf %3174 : vector<8x128xf32>
    %cst_762 = arith.constant 1.000000e+00 : f32
    %3176 = vector.broadcast %cst_762 : f32 to vector<8x128xf32>
    %3177 = arith.subf %3176, %3175 : vector<8x128xf32>
    %cst_763 = arith.constant 0.000000e+00 : f32
    %3178 = vector.broadcast %cst_763 : f32 to vector<8x128xf32>
    %3179 = arith.maximumf %3177, %3178 : vector<8x128xf32>
    %3180 = arith.mulf %3179, %3169 : vector<8x128xf32>
    %3181 = arith.addf %3167, %3180 : vector<8x128xf32>
    %3182 = vector.extract_strided_slice %2982 {offsets = [14, 0, 0], sizes = [1, 8, 128], strides = [1, 1, 1]} : vector<16x8x128xf32> to vector<1x8x128xf32>
    %3183 = vector.shape_cast %3182 : vector<1x8x128xf32> to vector<8x128xf32>
    %3184 = arith.subf %3183, %2983 : vector<8x128xf32>
    %3185 = math.exp %3184 : vector<8x128xf32>
    %3186 = arith.addf %3172, %3185 : vector<8x128xf32>
    %cst_764 = arith.constant 1.400000e+01 : f32
    %3187 = vector.broadcast %cst_764 : f32 to vector<8x128xf32>
    %3188 = arith.subf %3187, %2508 : vector<8x128xf32>
    %3189 = math.absf %3188 : vector<8x128xf32>
    %cst_765 = arith.constant 1.000000e+00 : f32
    %3190 = vector.broadcast %cst_765 : f32 to vector<8x128xf32>
    %3191 = arith.subf %3190, %3189 : vector<8x128xf32>
    %cst_766 = arith.constant 0.000000e+00 : f32
    %3192 = vector.broadcast %cst_766 : f32 to vector<8x128xf32>
    %3193 = arith.maximumf %3191, %3192 : vector<8x128xf32>
    %3194 = arith.mulf %3193, %3183 : vector<8x128xf32>
    %3195 = arith.addf %3181, %3194 : vector<8x128xf32>
    %3196 = vector.extract_strided_slice %2982 {offsets = [15, 0, 0], sizes = [1, 8, 128], strides = [1, 1, 1]} : vector<16x8x128xf32> to vector<1x8x128xf32>
    %3197 = vector.shape_cast %3196 : vector<1x8x128xf32> to vector<8x128xf32>
    %3198 = arith.subf %3197, %2983 : vector<8x128xf32>
    %3199 = math.exp %3198 : vector<8x128xf32>
    %3200 = arith.addf %3186, %3199 : vector<8x128xf32>
    %cst_767 = arith.constant 1.500000e+01 : f32
    %3201 = vector.broadcast %cst_767 : f32 to vector<8x128xf32>
    %3202 = arith.subf %3201, %2508 : vector<8x128xf32>
    %3203 = math.absf %3202 : vector<8x128xf32>
    %cst_768 = arith.constant 1.000000e+00 : f32
    %3204 = vector.broadcast %cst_768 : f32 to vector<8x128xf32>
    %3205 = arith.subf %3204, %3203 : vector<8x128xf32>
    %cst_769 = arith.constant 0.000000e+00 : f32
    %3206 = vector.broadcast %cst_769 : f32 to vector<8x128xf32>
    %3207 = arith.maximumf %3205, %3206 : vector<8x128xf32>
    %3208 = arith.mulf %3207, %3197 : vector<8x128xf32>
    %3209 = arith.addf %3195, %3208 : vector<8x128xf32>
    %3210 = math.log %3200 : vector<8x128xf32>
    %3211 = arith.addf %2983, %3210 : vector<8x128xf32>
    %3212 = arith.subf %3211, %3209 : vector<8x128xf32>
    %3213 = arith.addf %2980, %3212 : vector<8x128xf32>
    %c48_770 = arith.constant 48 : index
    %c16_771 = arith.constant 16 : index
    %c0_772 = arith.constant 0 : index
    %3214 = vector.load %arg2[%c48_770, %c16_771, %c0_772] : memref<64x24x128xbf16, #tpu.memory_space<vmem>>, vector<16x8x128xbf16>
    %3215 = arith.extf %3214 : vector<16x8x128xbf16> to vector<16x8x128xf32>
    %cst_773 = arith.constant dense<0xFF800000> : vector<8x128xf32>
    %3216 = vector.multi_reduction <maximumf>, %3215, %cst_773 [0] : vector<16x8x128xf32> to vector<8x128xf32>
    %cst_774 = arith.constant 0.000000e+00 : f32
    %3217 = vector.broadcast %cst_774 : f32 to vector<8x128xf32>
    %cst_775 = arith.constant 0.000000e+00 : f32
    %3218 = vector.broadcast %cst_775 : f32 to vector<8x128xf32>
    %3219 = vector.extract_strided_slice %3215 {offsets = [0, 0, 0], sizes = [1, 8, 128], strides = [1, 1, 1]} : vector<16x8x128xf32> to vector<1x8x128xf32>
    %3220 = vector.shape_cast %3219 : vector<1x8x128xf32> to vector<8x128xf32>
    %3221 = arith.subf %3220, %3216 : vector<8x128xf32>
    %3222 = math.exp %3221 : vector<8x128xf32>
    %3223 = arith.addf %3217, %3222 : vector<8x128xf32>
    %cst_776 = arith.constant 0.000000e+00 : f32
    %3224 = vector.broadcast %cst_776 : f32 to vector<8x128xf32>
    %3225 = arith.subf %3224, %2513 : vector<8x128xf32>
    %3226 = math.absf %3225 : vector<8x128xf32>
    %cst_777 = arith.constant 1.000000e+00 : f32
    %3227 = vector.broadcast %cst_777 : f32 to vector<8x128xf32>
    %3228 = arith.subf %3227, %3226 : vector<8x128xf32>
    %cst_778 = arith.constant 0.000000e+00 : f32
    %3229 = vector.broadcast %cst_778 : f32 to vector<8x128xf32>
    %3230 = arith.maximumf %3228, %3229 : vector<8x128xf32>
    %3231 = arith.mulf %3230, %3220 : vector<8x128xf32>
    %3232 = arith.addf %3218, %3231 : vector<8x128xf32>
    %3233 = vector.extract_strided_slice %3215 {offsets = [1, 0, 0], sizes = [1, 8, 128], strides = [1, 1, 1]} : vector<16x8x128xf32> to vector<1x8x128xf32>
    %3234 = vector.shape_cast %3233 : vector<1x8x128xf32> to vector<8x128xf32>
    %3235 = arith.subf %3234, %3216 : vector<8x128xf32>
    %3236 = math.exp %3235 : vector<8x128xf32>
    %3237 = arith.addf %3223, %3236 : vector<8x128xf32>
    %cst_779 = arith.constant 1.000000e+00 : f32
    %3238 = vector.broadcast %cst_779 : f32 to vector<8x128xf32>
    %3239 = arith.subf %3238, %2513 : vector<8x128xf32>
    %3240 = math.absf %3239 : vector<8x128xf32>
    %cst_780 = arith.constant 1.000000e+00 : f32
    %3241 = vector.broadcast %cst_780 : f32 to vector<8x128xf32>
    %3242 = arith.subf %3241, %3240 : vector<8x128xf32>
    %cst_781 = arith.constant 0.000000e+00 : f32
    %3243 = vector.broadcast %cst_781 : f32 to vector<8x128xf32>
    %3244 = arith.maximumf %3242, %3243 : vector<8x128xf32>
    %3245 = arith.mulf %3244, %3234 : vector<8x128xf32>
    %3246 = arith.addf %3232, %3245 : vector<8x128xf32>
    %3247 = vector.extract_strided_slice %3215 {offsets = [2, 0, 0], sizes = [1, 8, 128], strides = [1, 1, 1]} : vector<16x8x128xf32> to vector<1x8x128xf32>
    %3248 = vector.shape_cast %3247 : vector<1x8x128xf32> to vector<8x128xf32>
    %3249 = arith.subf %3248, %3216 : vector<8x128xf32>
    %3250 = math.exp %3249 : vector<8x128xf32>
    %3251 = arith.addf %3237, %3250 : vector<8x128xf32>
    %cst_782 = arith.constant 2.000000e+00 : f32
    %3252 = vector.broadcast %cst_782 : f32 to vector<8x128xf32>
    %3253 = arith.subf %3252, %2513 : vector<8x128xf32>
    %3254 = math.absf %3253 : vector<8x128xf32>
    %cst_783 = arith.constant 1.000000e+00 : f32
    %3255 = vector.broadcast %cst_783 : f32 to vector<8x128xf32>
    %3256 = arith.subf %3255, %3254 : vector<8x128xf32>
    %cst_784 = arith.constant 0.000000e+00 : f32
    %3257 = vector.broadcast %cst_784 : f32 to vector<8x128xf32>
    %3258 = arith.maximumf %3256, %3257 : vector<8x128xf32>
    %3259 = arith.mulf %3258, %3248 : vector<8x128xf32>
    %3260 = arith.addf %3246, %3259 : vector<8x128xf32>
    %3261 = vector.extract_strided_slice %3215 {offsets = [3, 0, 0], sizes = [1, 8, 128], strides = [1, 1, 1]} : vector<16x8x128xf32> to vector<1x8x128xf32>
    %3262 = vector.shape_cast %3261 : vector<1x8x128xf32> to vector<8x128xf32>
    %3263 = arith.subf %3262, %3216 : vector<8x128xf32>
    %3264 = math.exp %3263 : vector<8x128xf32>
    %3265 = arith.addf %3251, %3264 : vector<8x128xf32>
    %cst_785 = arith.constant 3.000000e+00 : f32
    %3266 = vector.broadcast %cst_785 : f32 to vector<8x128xf32>
    %3267 = arith.subf %3266, %2513 : vector<8x128xf32>
    %3268 = math.absf %3267 : vector<8x128xf32>
    %cst_786 = arith.constant 1.000000e+00 : f32
    %3269 = vector.broadcast %cst_786 : f32 to vector<8x128xf32>
    %3270 = arith.subf %3269, %3268 : vector<8x128xf32>
    %cst_787 = arith.constant 0.000000e+00 : f32
    %3271 = vector.broadcast %cst_787 : f32 to vector<8x128xf32>
    %3272 = arith.maximumf %3270, %3271 : vector<8x128xf32>
    %3273 = arith.mulf %3272, %3262 : vector<8x128xf32>
    %3274 = arith.addf %3260, %3273 : vector<8x128xf32>
    %3275 = vector.extract_strided_slice %3215 {offsets = [4, 0, 0], sizes = [1, 8, 128], strides = [1, 1, 1]} : vector<16x8x128xf32> to vector<1x8x128xf32>
    %3276 = vector.shape_cast %3275 : vector<1x8x128xf32> to vector<8x128xf32>
    %3277 = arith.subf %3276, %3216 : vector<8x128xf32>
    %3278 = math.exp %3277 : vector<8x128xf32>
    %3279 = arith.addf %3265, %3278 : vector<8x128xf32>
    %cst_788 = arith.constant 4.000000e+00 : f32
    %3280 = vector.broadcast %cst_788 : f32 to vector<8x128xf32>
    %3281 = arith.subf %3280, %2513 : vector<8x128xf32>
    %3282 = math.absf %3281 : vector<8x128xf32>
    %cst_789 = arith.constant 1.000000e+00 : f32
    %3283 = vector.broadcast %cst_789 : f32 to vector<8x128xf32>
    %3284 = arith.subf %3283, %3282 : vector<8x128xf32>
    %cst_790 = arith.constant 0.000000e+00 : f32
    %3285 = vector.broadcast %cst_790 : f32 to vector<8x128xf32>
    %3286 = arith.maximumf %3284, %3285 : vector<8x128xf32>
    %3287 = arith.mulf %3286, %3276 : vector<8x128xf32>
    %3288 = arith.addf %3274, %3287 : vector<8x128xf32>
    %3289 = vector.extract_strided_slice %3215 {offsets = [5, 0, 0], sizes = [1, 8, 128], strides = [1, 1, 1]} : vector<16x8x128xf32> to vector<1x8x128xf32>
    %3290 = vector.shape_cast %3289 : vector<1x8x128xf32> to vector<8x128xf32>
    %3291 = arith.subf %3290, %3216 : vector<8x128xf32>
    %3292 = math.exp %3291 : vector<8x128xf32>
    %3293 = arith.addf %3279, %3292 : vector<8x128xf32>
    %cst_791 = arith.constant 5.000000e+00 : f32
    %3294 = vector.broadcast %cst_791 : f32 to vector<8x128xf32>
    %3295 = arith.subf %3294, %2513 : vector<8x128xf32>
    %3296 = math.absf %3295 : vector<8x128xf32>
    %cst_792 = arith.constant 1.000000e+00 : f32
    %3297 = vector.broadcast %cst_792 : f32 to vector<8x128xf32>
    %3298 = arith.subf %3297, %3296 : vector<8x128xf32>
    %cst_793 = arith.constant 0.000000e+00 : f32
    %3299 = vector.broadcast %cst_793 : f32 to vector<8x128xf32>
    %3300 = arith.maximumf %3298, %3299 : vector<8x128xf32>
    %3301 = arith.mulf %3300, %3290 : vector<8x128xf32>
    %3302 = arith.addf %3288, %3301 : vector<8x128xf32>
    %3303 = vector.extract_strided_slice %3215 {offsets = [6, 0, 0], sizes = [1, 8, 128], strides = [1, 1, 1]} : vector<16x8x128xf32> to vector<1x8x128xf32>
    %3304 = vector.shape_cast %3303 : vector<1x8x128xf32> to vector<8x128xf32>
    %3305 = arith.subf %3304, %3216 : vector<8x128xf32>
    %3306 = math.exp %3305 : vector<8x128xf32>
    %3307 = arith.addf %3293, %3306 : vector<8x128xf32>
    %cst_794 = arith.constant 6.000000e+00 : f32
    %3308 = vector.broadcast %cst_794 : f32 to vector<8x128xf32>
    %3309 = arith.subf %3308, %2513 : vector<8x128xf32>
    %3310 = math.absf %3309 : vector<8x128xf32>
    %cst_795 = arith.constant 1.000000e+00 : f32
    %3311 = vector.broadcast %cst_795 : f32 to vector<8x128xf32>
    %3312 = arith.subf %3311, %3310 : vector<8x128xf32>
    %cst_796 = arith.constant 0.000000e+00 : f32
    %3313 = vector.broadcast %cst_796 : f32 to vector<8x128xf32>
    %3314 = arith.maximumf %3312, %3313 : vector<8x128xf32>
    %3315 = arith.mulf %3314, %3304 : vector<8x128xf32>
    %3316 = arith.addf %3302, %3315 : vector<8x128xf32>
    %3317 = vector.extract_strided_slice %3215 {offsets = [7, 0, 0], sizes = [1, 8, 128], strides = [1, 1, 1]} : vector<16x8x128xf32> to vector<1x8x128xf32>
    %3318 = vector.shape_cast %3317 : vector<1x8x128xf32> to vector<8x128xf32>
    %3319 = arith.subf %3318, %3216 : vector<8x128xf32>
    %3320 = math.exp %3319 : vector<8x128xf32>
    %3321 = arith.addf %3307, %3320 : vector<8x128xf32>
    %cst_797 = arith.constant 7.000000e+00 : f32
    %3322 = vector.broadcast %cst_797 : f32 to vector<8x128xf32>
    %3323 = arith.subf %3322, %2513 : vector<8x128xf32>
    %3324 = math.absf %3323 : vector<8x128xf32>
    %cst_798 = arith.constant 1.000000e+00 : f32
    %3325 = vector.broadcast %cst_798 : f32 to vector<8x128xf32>
    %3326 = arith.subf %3325, %3324 : vector<8x128xf32>
    %cst_799 = arith.constant 0.000000e+00 : f32
    %3327 = vector.broadcast %cst_799 : f32 to vector<8x128xf32>
    %3328 = arith.maximumf %3326, %3327 : vector<8x128xf32>
    %3329 = arith.mulf %3328, %3318 : vector<8x128xf32>
    %3330 = arith.addf %3316, %3329 : vector<8x128xf32>
    %3331 = vector.extract_strided_slice %3215 {offsets = [8, 0, 0], sizes = [1, 8, 128], strides = [1, 1, 1]} : vector<16x8x128xf32> to vector<1x8x128xf32>
    %3332 = vector.shape_cast %3331 : vector<1x8x128xf32> to vector<8x128xf32>
    %3333 = arith.subf %3332, %3216 : vector<8x128xf32>
    %3334 = math.exp %3333 : vector<8x128xf32>
    %3335 = arith.addf %3321, %3334 : vector<8x128xf32>
    %cst_800 = arith.constant 8.000000e+00 : f32
    %3336 = vector.broadcast %cst_800 : f32 to vector<8x128xf32>
    %3337 = arith.subf %3336, %2513 : vector<8x128xf32>
    %3338 = math.absf %3337 : vector<8x128xf32>
    %cst_801 = arith.constant 1.000000e+00 : f32
    %3339 = vector.broadcast %cst_801 : f32 to vector<8x128xf32>
    %3340 = arith.subf %3339, %3338 : vector<8x128xf32>
    %cst_802 = arith.constant 0.000000e+00 : f32
    %3341 = vector.broadcast %cst_802 : f32 to vector<8x128xf32>
    %3342 = arith.maximumf %3340, %3341 : vector<8x128xf32>
    %3343 = arith.mulf %3342, %3332 : vector<8x128xf32>
    %3344 = arith.addf %3330, %3343 : vector<8x128xf32>
    %3345 = vector.extract_strided_slice %3215 {offsets = [9, 0, 0], sizes = [1, 8, 128], strides = [1, 1, 1]} : vector<16x8x128xf32> to vector<1x8x128xf32>
    %3346 = vector.shape_cast %3345 : vector<1x8x128xf32> to vector<8x128xf32>
    %3347 = arith.subf %3346, %3216 : vector<8x128xf32>
    %3348 = math.exp %3347 : vector<8x128xf32>
    %3349 = arith.addf %3335, %3348 : vector<8x128xf32>
    %cst_803 = arith.constant 9.000000e+00 : f32
    %3350 = vector.broadcast %cst_803 : f32 to vector<8x128xf32>
    %3351 = arith.subf %3350, %2513 : vector<8x128xf32>
    %3352 = math.absf %3351 : vector<8x128xf32>
    %cst_804 = arith.constant 1.000000e+00 : f32
    %3353 = vector.broadcast %cst_804 : f32 to vector<8x128xf32>
    %3354 = arith.subf %3353, %3352 : vector<8x128xf32>
    %cst_805 = arith.constant 0.000000e+00 : f32
    %3355 = vector.broadcast %cst_805 : f32 to vector<8x128xf32>
    %3356 = arith.maximumf %3354, %3355 : vector<8x128xf32>
    %3357 = arith.mulf %3356, %3346 : vector<8x128xf32>
    %3358 = arith.addf %3344, %3357 : vector<8x128xf32>
    %3359 = vector.extract_strided_slice %3215 {offsets = [10, 0, 0], sizes = [1, 8, 128], strides = [1, 1, 1]} : vector<16x8x128xf32> to vector<1x8x128xf32>
    %3360 = vector.shape_cast %3359 : vector<1x8x128xf32> to vector<8x128xf32>
    %3361 = arith.subf %3360, %3216 : vector<8x128xf32>
    %3362 = math.exp %3361 : vector<8x128xf32>
    %3363 = arith.addf %3349, %3362 : vector<8x128xf32>
    %cst_806 = arith.constant 1.000000e+01 : f32
    %3364 = vector.broadcast %cst_806 : f32 to vector<8x128xf32>
    %3365 = arith.subf %3364, %2513 : vector<8x128xf32>
    %3366 = math.absf %3365 : vector<8x128xf32>
    %cst_807 = arith.constant 1.000000e+00 : f32
    %3367 = vector.broadcast %cst_807 : f32 to vector<8x128xf32>
    %3368 = arith.subf %3367, %3366 : vector<8x128xf32>
    %cst_808 = arith.constant 0.000000e+00 : f32
    %3369 = vector.broadcast %cst_808 : f32 to vector<8x128xf32>
    %3370 = arith.maximumf %3368, %3369 : vector<8x128xf32>
    %3371 = arith.mulf %3370, %3360 : vector<8x128xf32>
    %3372 = arith.addf %3358, %3371 : vector<8x128xf32>
    %3373 = vector.extract_strided_slice %3215 {offsets = [11, 0, 0], sizes = [1, 8, 128], strides = [1, 1, 1]} : vector<16x8x128xf32> to vector<1x8x128xf32>
    %3374 = vector.shape_cast %3373 : vector<1x8x128xf32> to vector<8x128xf32>
    %3375 = arith.subf %3374, %3216 : vector<8x128xf32>
    %3376 = math.exp %3375 : vector<8x128xf32>
    %3377 = arith.addf %3363, %3376 : vector<8x128xf32>
    %cst_809 = arith.constant 1.100000e+01 : f32
    %3378 = vector.broadcast %cst_809 : f32 to vector<8x128xf32>
    %3379 = arith.subf %3378, %2513 : vector<8x128xf32>
    %3380 = math.absf %3379 : vector<8x128xf32>
    %cst_810 = arith.constant 1.000000e+00 : f32
    %3381 = vector.broadcast %cst_810 : f32 to vector<8x128xf32>
    %3382 = arith.subf %3381, %3380 : vector<8x128xf32>
    %cst_811 = arith.constant 0.000000e+00 : f32
    %3383 = vector.broadcast %cst_811 : f32 to vector<8x128xf32>
    %3384 = arith.maximumf %3382, %3383 : vector<8x128xf32>
    %3385 = arith.mulf %3384, %3374 : vector<8x128xf32>
    %3386 = arith.addf %3372, %3385 : vector<8x128xf32>
    %3387 = vector.extract_strided_slice %3215 {offsets = [12, 0, 0], sizes = [1, 8, 128], strides = [1, 1, 1]} : vector<16x8x128xf32> to vector<1x8x128xf32>
    %3388 = vector.shape_cast %3387 : vector<1x8x128xf32> to vector<8x128xf32>
    %3389 = arith.subf %3388, %3216 : vector<8x128xf32>
    %3390 = math.exp %3389 : vector<8x128xf32>
    %3391 = arith.addf %3377, %3390 : vector<8x128xf32>
    %cst_812 = arith.constant 1.200000e+01 : f32
    %3392 = vector.broadcast %cst_812 : f32 to vector<8x128xf32>
    %3393 = arith.subf %3392, %2513 : vector<8x128xf32>
    %3394 = math.absf %3393 : vector<8x128xf32>
    %cst_813 = arith.constant 1.000000e+00 : f32
    %3395 = vector.broadcast %cst_813 : f32 to vector<8x128xf32>
    %3396 = arith.subf %3395, %3394 : vector<8x128xf32>
    %cst_814 = arith.constant 0.000000e+00 : f32
    %3397 = vector.broadcast %cst_814 : f32 to vector<8x128xf32>
    %3398 = arith.maximumf %3396, %3397 : vector<8x128xf32>
    %3399 = arith.mulf %3398, %3388 : vector<8x128xf32>
    %3400 = arith.addf %3386, %3399 : vector<8x128xf32>
    %3401 = vector.extract_strided_slice %3215 {offsets = [13, 0, 0], sizes = [1, 8, 128], strides = [1, 1, 1]} : vector<16x8x128xf32> to vector<1x8x128xf32>
    %3402 = vector.shape_cast %3401 : vector<1x8x128xf32> to vector<8x128xf32>
    %3403 = arith.subf %3402, %3216 : vector<8x128xf32>
    %3404 = math.exp %3403 : vector<8x128xf32>
    %3405 = arith.addf %3391, %3404 : vector<8x128xf32>
    %cst_815 = arith.constant 1.300000e+01 : f32
    %3406 = vector.broadcast %cst_815 : f32 to vector<8x128xf32>
    %3407 = arith.subf %3406, %2513 : vector<8x128xf32>
    %3408 = math.absf %3407 : vector<8x128xf32>
    %cst_816 = arith.constant 1.000000e+00 : f32
    %3409 = vector.broadcast %cst_816 : f32 to vector<8x128xf32>
    %3410 = arith.subf %3409, %3408 : vector<8x128xf32>
    %cst_817 = arith.constant 0.000000e+00 : f32
    %3411 = vector.broadcast %cst_817 : f32 to vector<8x128xf32>
    %3412 = arith.maximumf %3410, %3411 : vector<8x128xf32>
    %3413 = arith.mulf %3412, %3402 : vector<8x128xf32>
    %3414 = arith.addf %3400, %3413 : vector<8x128xf32>
    %3415 = vector.extract_strided_slice %3215 {offsets = [14, 0, 0], sizes = [1, 8, 128], strides = [1, 1, 1]} : vector<16x8x128xf32> to vector<1x8x128xf32>
    %3416 = vector.shape_cast %3415 : vector<1x8x128xf32> to vector<8x128xf32>
    %3417 = arith.subf %3416, %3216 : vector<8x128xf32>
    %3418 = math.exp %3417 : vector<8x128xf32>
    %3419 = arith.addf %3405, %3418 : vector<8x128xf32>
    %cst_818 = arith.constant 1.400000e+01 : f32
    %3420 = vector.broadcast %cst_818 : f32 to vector<8x128xf32>
    %3421 = arith.subf %3420, %2513 : vector<8x128xf32>
    %3422 = math.absf %3421 : vector<8x128xf32>
    %cst_819 = arith.constant 1.000000e+00 : f32
    %3423 = vector.broadcast %cst_819 : f32 to vector<8x128xf32>
    %3424 = arith.subf %3423, %3422 : vector<8x128xf32>
    %cst_820 = arith.constant 0.000000e+00 : f32
    %3425 = vector.broadcast %cst_820 : f32 to vector<8x128xf32>
    %3426 = arith.maximumf %3424, %3425 : vector<8x128xf32>
    %3427 = arith.mulf %3426, %3416 : vector<8x128xf32>
    %3428 = arith.addf %3414, %3427 : vector<8x128xf32>
    %3429 = vector.extract_strided_slice %3215 {offsets = [15, 0, 0], sizes = [1, 8, 128], strides = [1, 1, 1]} : vector<16x8x128xf32> to vector<1x8x128xf32>
    %3430 = vector.shape_cast %3429 : vector<1x8x128xf32> to vector<8x128xf32>
    %3431 = arith.subf %3430, %3216 : vector<8x128xf32>
    %3432 = math.exp %3431 : vector<8x128xf32>
    %3433 = arith.addf %3419, %3432 : vector<8x128xf32>
    %cst_821 = arith.constant 1.500000e+01 : f32
    %3434 = vector.broadcast %cst_821 : f32 to vector<8x128xf32>
    %3435 = arith.subf %3434, %2513 : vector<8x128xf32>
    %3436 = math.absf %3435 : vector<8x128xf32>
    %cst_822 = arith.constant 1.000000e+00 : f32
    %3437 = vector.broadcast %cst_822 : f32 to vector<8x128xf32>
    %3438 = arith.subf %3437, %3436 : vector<8x128xf32>
    %cst_823 = arith.constant 0.000000e+00 : f32
    %3439 = vector.broadcast %cst_823 : f32 to vector<8x128xf32>
    %3440 = arith.maximumf %3438, %3439 : vector<8x128xf32>
    %3441 = arith.mulf %3440, %3430 : vector<8x128xf32>
    %3442 = arith.addf %3428, %3441 : vector<8x128xf32>
    %3443 = math.log %3433 : vector<8x128xf32>
    %3444 = arith.addf %3216, %3443 : vector<8x128xf32>
    %3445 = arith.subf %3444, %3442 : vector<8x128xf32>
    %3446 = arith.addf %3213, %3445 : vector<8x128xf32>
    %cst_824 = arith.constant 0.000000e+00 : f32
    %3447 = vector.broadcast %cst_824 : f32 to vector<8x128xf32>
    %3448 = arith.cmpf ogt, %2328, %3447 : vector<8x128xf32>
    %cst_825 = arith.constant 2.500000e-01 : f32
    %3449 = vector.broadcast %cst_825 : f32 to vector<8x128xf32>
    %3450 = arith.mulf %3449, %2326 : vector<8x128xf32>
    %3451 = arith.mulf %3446, %3450 : vector<8x128xf32>
    %cst_826 = arith.constant 0.000000e+00 : f32
    %3452 = vector.broadcast %cst_826 : f32 to vector<8x128xf32>
    %3453 = arith.select %3448, %3451, %3452 : vector<8x128xi1>, vector<8x128xf32>
    %3454 = arith.addf %2303, %3453 : vector<8x128xf32>
    %c0_827 = arith.constant 0 : index
    %c0_828 = arith.constant 0 : index
    %3455 = vector.load %arg3[%c0_827, %c0_828] : memref<8x128xf32, #tpu.memory_space<vmem>>, vector<8x128xf32>
    tpu.vector_store %arg3[%c0_827, %c0_828], %2493 {strides = array<i32>} : memref<8x128xf32, #tpu.memory_space<vmem>>, vector<8x128xf32>,
    %c0_829 = arith.constant 0 : index
    %c0_830 = arith.constant 0 : index
    %3456 = vector.load %arg4[%c0_829, %c0_830] : memref<8x128xf32, #tpu.memory_space<vmem>>, vector<8x128xf32>
    tpu.vector_store %arg4[%c0_829, %c0_830], %3454 {strides = array<i32>} : memref<8x128xf32, #tpu.memory_space<vmem>>, vector<8x128xf32>,
    return
  }
  func.func @transform_0(%arg0: i32) -> (i32, i32, i32) {
    %c0_i32 = arith.constant 0 : i32
    %c0_i32_0 = arith.constant 0 : i32
    %c0_i32_1 = arith.constant 0 : i32
    return %c0_i32, %arg0, %c0_i32_0 : i32, i32, i32
  }
  func.func @transform_1(%arg0: i32) -> (i32, i32, i32) {
    %c0_i32 = arith.constant 0 : i32
    %c0_i32_0 = arith.constant 0 : i32
    %c0_i32_1 = arith.constant 0 : i32
    return %c0_i32, %arg0, %c0_i32_0 : i32, i32, i32
  }
  func.func @transform_2(%arg0: i32) -> (i32, i32) {
    %c0_i32 = arith.constant 0 : i32
    %c0_i32_0 = arith.constant 0 : i32
    return %arg0, %c0_i32 : i32, i32
  }
  func.func @transform_3(%arg0: i32) -> (i32, i32) {
    %c0_i32 = arith.constant 0 : i32
    %c0_i32_0 = arith.constant 0 : i32
    return %arg0, %c0_i32 : i32, i32
  }
}

</mosaic_0001>

<llo_original>
// kernel: tpu_custom_call.1
$region0: #{tpu_custom_call.1}
  #allocation0 [shape = 'u32[]', space=smem, size = 0x4, offset = 0x4, fixed_abs, tag = 'smem constant byte address 0x4 - core index']
  #allocation1 [shape = 'u32[144,128]{1,0:T(1,128)}', space=vmem, size = 0x12000, scoped, tag = 'internal scratch']
  %s0 = inlined_call_operand.hbm [shape: f32[12,24,128], index: 0, kind: input, shape index: {}]
  %s1 = inlined_call_operand.hbm [shape: bf16[64,24,128], index: 1, kind: input, shape index: {}]
  %s2 = inlined_call_operand.hbm [shape: f32[8,128], index: 2, kind: output, shape index: {0}]
  %s3 = inlined_call_operand.hbm [shape: f32[8,128], index: 3, kind: output, shape index: {1}]
  %4 = xla_tuple %s2, %s3
  %s5 = sld [smem:[#allocation0]]
  $region34: #{tpu_custom_call.1} parent=0
    _
  %s7 = ssub.s32 1, %s5
  %s8 = scalar_select 0, %s7, %s5
  $region1: #{tpu_custom_call.1} parent=0
    #allocation2 [shape = 'u8[147456]{0}', space=vmem, size = 0x24000, scoped, tag = 'input window, operand 0, single buffered']
    #allocation3 [shape = 's32[1]{0}', space=sflag, size = 0x4, scoped, tag = 'scoped memory for tpu_custom_call.1']
    #allocation4 [shape = 's32[1]{0}', space=sflag, size = 0x4, scoped, tag = 'scoped memory for tpu_custom_call.1']
    #allocation5 [shape = 'u8[393216]{0}', space=vmem, size = 0x60000, scoped, tag = 'input window, operand 1, single buffered']
    #allocation6 [shape = 's32[1]{0}', space=sflag, size = 0x4, scoped, tag = 'scoped memory for tpu_custom_call.1']
    #allocation7 [shape = 'u8[4096]{0}', space=vmem, size = 0x1000, scoped, tag = 'output window, operand 0, single buffered']
    #allocation8 [shape = 'u8[4096]{0}', space=vmem, size = 0x1000, scoped, tag = 'output window, operand 1, single buffered']
    #allocation9 [shape = 's32[1]{0}', space=sflag, size = 0x4, scoped, tag = 'scoped memory for tpu_custom_call.1']
    %9 = vsyncpa [#allocation3], 0
    %10 = vsyncpa [#allocation6], 0
    %11 = vsyncpa [#allocation4], 0
    %12 = vsyncpa [#allocation9], 0
    // Predicated region
    $region2: #{tpu_custom_call.1} parent=1 // pred_check
      _
    $region3: #{tpu_custom_call.1} parent=1 // pred_check_branch
      %14 = sbr.rel (0) target = $region5
    $region4: #{tpu_custom_call.1} parent=1 // pred_region
      %s16 = ssub.s32 4608, 4608
      %17 = vsyncadd [#allocation3], %s16
      %s18 = sshll.u32 [#allocation2], 4
      %s19 = int_to_ptr.vmem [resolvable:$true] %s18
      %24 = dma.hbm_to_vmem [thread:$0]  %s0, 4608, %s19, [#allocation3], 128, 128, 8
    $region5: #{tpu_custom_call.1} parent=1 // pred_fallthru
      _
    // Predicated region
    $region6: #{tpu_custom_call.1} parent=1 // pred_check
      _
    $region7: #{tpu_custom_call.1} parent=1 // pred_check_branch
      %26 = sbr.rel (0) target = $region9
    $region8: #{tpu_custom_call.1} parent=1 // pred_region
      %s28 = ssub.s32 12288, 12288
      %29 = vsyncadd [#allocation6], %s28
      %s30 = sshll.u32 [#allocation5], 4
      %s31 = int_to_ptr.vmem [resolvable:$true] %s30
      %36 = dma.hbm_to_vmem [thread:$0]  %s1, 12288, %s31, [#allocation6], 64, 64, 4
    $region9: #{tpu_custom_call.1} parent=1 // pred_fallthru
      _
    // Predicated region
    $region10: #{tpu_custom_call.1} parent=1 // pred_check
      _
    $region11: #{tpu_custom_call.1} parent=1 // pred_check_branch
      %38 = sbr.rel (0) target = $region13
    $region12: #{tpu_custom_call.1} parent=1 // pred_region
      %39 = dma.done [#allocation3], 4608
    $region13: #{tpu_custom_call.1} parent=1 // pred_fallthru
      _
    // Predicated region
    $region14: #{tpu_custom_call.1} parent=1 // pred_check
      _
    $region15: #{tpu_custom_call.1} parent=1 // pred_check_branch
      %41 = sbr.rel (0) target = $region17
    $region16: #{tpu_custom_call.1} parent=1 // pred_region
      %42 = dma.done [#allocation6], 12288
    $region17: #{tpu_custom_call.1} parent=1 // pred_fallthru
      _
    %v43 = vld [vmem:[#allocation2] sm:$0xff]
    %v44 = vld [vmem:[#allocation2 + $0x18] sm:$0xff]
    %v45 = vld [vmem:[#allocation2 + $0x30] sm:$0xff]
    %v46 = vld [vmem:[#allocation2 + $0x48] sm:$0xff]
    %v47 = vld [vmem:[#allocation2 + $0x60] sm:$0xff]
    %v48 = vld [vmem:[#allocation2 + $0x78] sm:$0xff]
    %v49 = vld [vmem:[#allocation2 + $0x90] sm:$0xff]
    %v50 = vld [vmem:[#allocation2 + $0xa8] sm:$0xff]
    %v51 = vld [vmem:[#allocation2 + $0xc0] sm:$0xff]
    %v52 = vld [vmem:[#allocation2 + $0xd8] sm:$0xff]
    %v53 = vld [vmem:[#allocation2 + $0xf0] sm:$0xff]
    %v54 = vld [vmem:[#allocation2 + $0x108] sm:$0xff]
    %v55 = vsub.f32 %v45, %v43
    %v56 = vsub.f32 %v46, %v44
    %v57 = vadd.f32 %v56, 1e-07
    %v58 = vsub.f32 %v49, %v47
    %v59 = vsub.f32 %v50, %v48
    %v60 = vadd.f32 %v59, 1e-07
    %v61 = vmin.f32 %v45, %v49
    %v62 = vmax.f32 %v43, %v47
    %v63 = vsub.f32 %v61, %v62
    %v64 = vmax.f32 %v63, 0.0
    %v65 = vmin.f32 %v46, %v50
    %v66 = vmax.f32 %v44, %v48
    %v67 = vsub.f32 %v65, %v66
    %v68 = vmax.f32 %v67, 0.0
    %v69 = vmul.f32 %v64, %v68
    %v70 = vmul.f32 %v55, %v57
    %v71 = vmul.f32 %v58, %v60
    %v72 = vadd.f32 %v70, %v71
    %v73 = vsub.f32 %v72, %v69
    %v74 = vadd.f32 %v73, 1e-07
    %v75 = vrcp.pop %v74
    %v76 = vmul.f32 %v69, %v75
    %v77 = vmax.f32 %v45, %v49
    %v78 = vmin.f32 %v43, %v47
    %v79 = vsub.f32 %v77, %v78
    %v80 = vmax.f32 %v46, %v50
    %v81 = vmin.f32 %v44, %v48
    %v82 = vsub.f32 %v80, %v81
    %v83 = vmul.f32 %v79, %v79
    %v84 = vmul.f32 %v82, %v82
    %v85 = vadd.f32 %v83, %v84
    %v86 = vadd.f32 %v85, 1e-07
    %v87 = vadd.f32 %v47, %v49
    %v88 = vsub.f32 %v87, %v43
    %v89 = vsub.f32 %v88, %v45
    %v90 = vmul.f32 %v89, %v89
    %v91 = vadd.f32 %v48, %v50
    %v92 = vsub.f32 %v91, %v44
    %v93 = vsub.f32 %v92, %v46
    %v94 = vmul.f32 %v93, %v93
    %v95 = vadd.f32 %v90, %v94
    %v96 = vmul.f32 %v95, 0.25
    %v97 = vrcp.pop %v60
    %v98 = vmul.f32 %v58, %v97
    %vm99 = vcmp.lt.f32.partialorder %v98, 0.0
    %v100 = vsel %vm99, -1.0, 1.0
    %v101 = vand.u32 2147483647, %v98
    %vm102 = vcmp.gt.f32.partialorder %v101, 2.4142137
    %vm103 = vcmp.gt.f32.partialorder %v101, 0.41421357
    %vm104 = vmxor %vm102, 1
    %vm105 = vmand %vm103, %vm104
    %v106 = vsel %vm105, 0.7853982, 0.0
    %v107 = vsel %vm102, 1.5707964, %v106
    %v108 = vmax.f32 %v101, 1e-30
    %v109 = vrcp.pop %v108
    %v110 = vsub.f32 0.0, %v109
    %v111 = vsub.f32 %v101, 1.0
    %v112 = vadd.f32 %v101, 1.0
    %v113 = vrcp.pop %v112
    %v114 = vmul.f32 %v111, %v113
    %v115 = vsel %vm105, %v114, %v101
    %v116 = vsel %vm102, %v110, %v115
    %v117 = vmul.f32 %v116, %v116
    %v118 = vmul.f32 %v117, 0.080537446
    %v119 = vsub.f32 %v118, 0.13877685
    %v120 = vmul.f32 %v119, %v117
    %v121 = vadd.f32 %v120, 0.19977711
    %v122 = vmul.f32 %v121, %v117
    %v123 = vsub.f32 %v122, 0.3333295
    %v124 = vmul.f32 %v123, %v117
    %v125 = vmul.f32 %v124, %v116
    %v126 = vadd.f32 %v125, %v116
    %v127 = vadd.f32 %v107, %v126
    %v128 = vmul.f32 %v100, %v127
    %v129 = vrcp.pop %v57
    %v130 = vmul.f32 %v55, %v129
    %vm131 = vcmp.lt.f32.partialorder %v130, 0.0
    %v132 = vsel %vm131, -1.0, 1.0
    %v133 = vand.u32 2147483647, %v130
    %vm134 = vcmp.gt.f32.partialorder %v133, 2.4142137
    %vm135 = vcmp.gt.f32.partialorder %v133, 0.41421357
    %vm136 = vmxor %vm134, 1
    %vm137 = vmand %vm135, %vm136
    %v138 = vsel %vm137, 0.7853982, 0.0
    %v139 = vsel %vm134, 1.5707964, %v138
    %v140 = vmax.f32 %v133, 1e-30
    %v141 = vrcp.pop %v140
    %v142 = vsub.f32 0.0, %v141
    %v143 = vsub.f32 %v133, 1.0
    %v144 = vadd.f32 %v133, 1.0
    %v145 = vrcp.pop %v144
    %v146 = vmul.f32 %v143, %v145
    %v147 = vsel %vm137, %v146, %v133
    %v148 = vsel %vm134, %v142, %v147
    %v149 = vmul.f32 %v148, %v148
    %v150 = vmul.f32 %v149, 0.080537446
    %v151 = vsub.f32 %v150, 0.13877685
    %v152 = vmul.f32 %v151, %v149
    %v153 = vadd.f32 %v152, 0.19977711
    %v154 = vmul.f32 %v153, %v149
    %v155 = vsub.f32 %v154, 0.3333295
    %v156 = vmul.f32 %v155, %v149
    %v157 = vmul.f32 %v156, %v148
    %v158 = vadd.f32 %v157, %v148
    %v159 = vadd.f32 %v139, %v158
    %v160 = vmul.f32 %v132, %v159
    %v161 = vsub.f32 %v128, %v160
    %v162 = vmul.f32 %v161, %v161
    %v163 = vmul.f32 %v162, 0.40528473
    %v164 = vsub.f32 %v163, %v76
    %v165 = vadd.f32 %v164, 1.0000001
    %v166 = vrcp.pop %v165
    %v167 = vmul.f32 %v163, %v166
    %v168 = vrcp.pop %v86
    %v169 = vmul.f32 %v96, %v168
    %v170 = vmul.f32 %v163, %v167
    %v171 = vadd.f32 %v169, %v170
    %v172 = vsub.f32 %v76, %v171
    %vm173 = vcmp.gt.f32.partialorder %v54, 0.0
    %v174 = vsub.f32 1.0, %v172
    %v175 = vmul.f32 %v174, %v53
    %v176 = vsel %vm173, %v175, 0.0
    %v177 = vadd.f32 %v176, 0.0
    %v178 = vsub.f32 %v51, %v47
    %v179 = vmax.f32 %v178, 0.0
    %v180 = vmin.f32 %v179, 14.99
    %v181 = vsub.f32 %v52, %v48
    %v182 = vmax.f32 %v181, 0.0
    %v183 = vmin.f32 %v182, 14.99
    %v184 = vsub.f32 %v49, %v51
    %v185 = vmax.f32 %v184, 0.0
    %v186 = vmin.f32 %v185, 14.99
    %v187 = vsub.f32 %v50, %v52
    %v188 = vmax.f32 %v187, 0.0
    %v189 = vmin.f32 %v188, 14.99
    %v190 = vld [vmem:[#allocation5] sm:$0xf]
    %v191 = vld [vmem:[#allocation5 + $0xc] sm:$0xf]
    %v192 = vld [vmem:[#allocation5 + $0x18] sm:$0xf]
    %v193 = vld [vmem:[#allocation5 + $0x24] sm:$0xf]
    %v194 = vld [vmem:[#allocation5 + $0x30] sm:$0xf]
    %v195 = vld [vmem:[#allocation5 + $0x3c] sm:$0xf]
    %v196 = vld [vmem:[#allocation5 + $0x48] sm:$0xf]
    %v197 = vld [vmem:[#allocation5 + $0x54] sm:$0xf]
    %v198 = vld [vmem:[#allocation5 + $0x60] sm:$0xf]
    %v199 = vld [vmem:[#allocation5 + $0x6c] sm:$0xf]
    %v200 = vld [vmem:[#allocation5 + $0x78] sm:$0xf]
    %v201 = vld [vmem:[#allocation5 + $0x84] sm:$0xf]
    %v202 = vld [vmem:[#allocation5 + $0x90] sm:$0xf]
    %v203 = vld [vmem:[#allocation5 + $0x9c] sm:$0xf]
    %v204 = vld [vmem:[#allocation5 + $0xa8] sm:$0xf]
    %v205 = vld [vmem:[#allocation5 + $0xb4] sm:$0xf]
    %v206 = vunpack.c.l.bf16 %v190
    %v207 = vunpack.c.l.bf16 %v191
    %v208 = vunpack.c.l.bf16 %v192
    %v209 = vunpack.c.l.bf16 %v193
    %v210 = vunpack.c.l.bf16 %v194
    %v211 = vunpack.c.l.bf16 %v195
    %v212 = vunpack.c.l.bf16 %v196
    %v213 = vunpack.c.l.bf16 %v197
    %v214 = vunpack.c.l.bf16 %v198
    %v215 = vunpack.c.l.bf16 %v199
    %v216 = vunpack.c.l.bf16 %v200
    %v217 = vunpack.c.l.bf16 %v201
    %v218 = vunpack.c.l.bf16 %v202
    %v219 = vunpack.c.l.bf16 %v203
    %v220 = vunpack.c.l.bf16 %v204
    %v221 = vunpack.c.l.bf16 %v205
    %v222 = vmax.f32 %v206, %v210
    %v223 = vmax.f32 %v207, %v211
    %v224 = vmax.f32 %v208, %v212
    %v225 = vmax.f32 %v209, %v213
    %v226 = vmax.f32 %v222, %v214
    %v227 = vmax.f32 %v223, %v215
    %v228 = vmax.f32 %v224, %v216
    %v229 = vmax.f32 %v225, %v217
    %v230 = vmax.f32 %v226, %v218
    %v231 = vmax.f32 %v227, %v219
    %v232 = vmax.f32 %v228, %v220
    %v233 = vmax.f32 %v229, %v221
    %v234 = vmax.f32 %v230, %v231
    %v235 = vmax.f32 %v232, %v233
    %v236 = vmax.f32 %v234, %v235
    %v237 = vsub.f32 %v206, %v236
    %v238 = vmul.f32 %v237, 1.442695
    %v239 = vpow.pop %v238
    %v240 = vadd.f32 %v239, 0.0
    %v241 = vsub.f32 0.0, %v180
    %v242 = vand.u32 2147483647, %v241
    %v243 = vsub.f32 1.0, %v242
    %v244 = vmax.f32 %v243, 0.0
    %v245 = vmul.f32 %v244, %v206
    %v246 = vadd.f32 %v245, 0.0
    %v247 = vsub.f32 %v207, %v236
    %v248 = vmul.f32 %v247, 1.442695
    %v249 = vpow.pop %v248
    %v250 = vadd.f32 %v240, %v249
    %v251 = vsub.f32 1.0, %v180
    %v252 = vand.u32 2147483647, %v251
    %v253 = vsub.f32 1.0, %v252
    %v254 = vmax.f32 %v253, 0.0
    %v255 = vmul.f32 %v254, %v207
    %v256 = vadd.f32 %v246, %v255
    %v257 = vsub.f32 %v208, %v236
    %v258 = vmul.f32 %v257, 1.442695
    %v259 = vpow.pop %v258
    %v260 = vadd.f32 %v250, %v259
    %v261 = vsub.f32 2.0, %v180
    %v262 = vand.u32 2147483647, %v261
    %v263 = vsub.f32 1.0, %v262
    %v264 = vmax.f32 %v263, 0.0
    %v265 = vmul.f32 %v264, %v208
    %v266 = vadd.f32 %v256, %v265
    %v267 = vsub.f32 %v209, %v236
    %v268 = vmul.f32 %v267, 1.442695
    %v269 = vpow.pop %v268
    %v270 = vadd.f32 %v260, %v269
    %v271 = vsub.f32 3.0, %v180
    %v272 = vand.u32 2147483647, %v271
    %v273 = vsub.f32 1.0, %v272
    %v274 = vmax.f32 %v273, 0.0
    %v275 = vmul.f32 %v274, %v209
    %v276 = vadd.f32 %v266, %v275
    %v277 = vsub.f32 %v210, %v236
    %v278 = vmul.f32 %v277, 1.442695
    %v279 = vpow.pop %v278
    %v280 = vadd.f32 %v270, %v279
    %v281 = vsub.f32 4.0, %v180
    %v282 = vand.u32 2147483647, %v281
    %v283 = vsub.f32 1.0, %v282
    %v284 = vmax.f32 %v283, 0.0
    %v285 = vmul.f32 %v284, %v210
    %v286 = vadd.f32 %v276, %v285
    %v287 = vsub.f32 %v211, %v236
    %v288 = vmul.f32 %v287, 1.442695
    %v289 = vpow.pop %v288
    %v290 = vadd.f32 %v280, %v289
    %v291 = vsub.f32 5.0, %v180
    %v292 = vand.u32 2147483647, %v291
    %v293 = vsub.f32 1.0, %v292
    %v294 = vmax.f32 %v293, 0.0
    %v295 = vmul.f32 %v294, %v211
    %v296 = vadd.f32 %v286, %v295
    %v297 = vsub.f32 %v212, %v236
    %v298 = vmul.f32 %v297, 1.442695
    %v299 = vpow.pop %v298
    %v300 = vadd.f32 %v290, %v299
    %v301 = vsub.f32 6.0, %v180
    %v302 = vand.u32 2147483647, %v301
    %v303 = vsub.f32 1.0, %v302
    %v304 = vmax.f32 %v303, 0.0
    %v305 = vmul.f32 %v304, %v212
    %v306 = vadd.f32 %v296, %v305
    %v307 = vsub.f32 %v213, %v236
    %v308 = vmul.f32 %v307, 1.442695
    %v309 = vpow.pop %v308
    %v310 = vadd.f32 %v300, %v309
    %v311 = vsub.f32 7.0, %v180
    %v312 = vand.u32 2147483647, %v311
    %v313 = vsub.f32 1.0, %v312
    %v314 = vmax.f32 %v313, 0.0
    %v315 = vmul.f32 %v314, %v213
    %v316 = vadd.f32 %v306, %v315
    %v317 = vsub.f32 %v214, %v236
    %v318 = vmul.f32 %v317, 1.442695
    %v319 = vpow.pop %v318
    %v320 = vadd.f32 %v310, %v319
    %v321 = vsub.f32 8.0, %v180
    %v322 = vand.u32 2147483647, %v321
    %v323 = vsub.f32 1.0, %v322
    %v324 = vmax.f32 %v323, 0.0
    %v325 = vmul.f32 %v324, %v214
    %v326 = vadd.f32 %v316, %v325
    %v327 = vsub.f32 %v215, %v236
    %v328 = vmul.f32 %v327, 1.442695
    %v329 = vpow.pop %v328
    %v330 = vadd.f32 %v320, %v329
    %v331 = vsub.f32 9.0, %v180
    %v332 = vand.u32 2147483647, %v331
    %v333 = vsub.f32 1.0, %v332
    %v334 = vmax.f32 %v333, 0.0
    %v335 = vmul.f32 %v334, %v215
    %v336 = vadd.f32 %v326, %v335
    %v337 = vsub.f32 %v216, %v236
    %v338 = vmul.f32 %v337, 1.442695
    %v339 = vpow.pop %v338
    %v340 = vadd.f32 %v330, %v339
    %v341 = vsub.f32 10.0, %v180
    %v342 = vand.u32 2147483647, %v341
    %v343 = vsub.f32 1.0, %v342
    %v344 = vmax.f32 %v343, 0.0
    %v345 = vmul.f32 %v344, %v216
    %v346 = vadd.f32 %v336, %v345
    %v347 = vsub.f32 %v217, %v236
    %v348 = vmul.f32 %v347, 1.442695
    %v349 = vpow.pop %v348
    %v350 = vadd.f32 %v340, %v349
    %v351 = vsub.f32 11.0, %v180
    %v352 = vand.u32 2147483647, %v351
    %v353 = vsub.f32 1.0, %v352
    %v354 = vmax.f32 %v353, 0.0
    %v355 = vmul.f32 %v354, %v217
    %v356 = vadd.f32 %v346, %v355
    %v357 = vsub.f32 %v218, %v236
    %v358 = vmul.f32 %v357, 1.442695
    %v359 = vpow.pop %v358
    %v360 = vadd.f32 %v350, %v359
    %v361 = vsub.f32 12.0, %v180
    %v362 = vand.u32 2147483647, %v361
    %v363 = vsub.f32 1.0, %v362
    %v364 = vmax.f32 %v363, 0.0
    %v365 = vmul.f32 %v364, %v218
    %v366 = vadd.f32 %v356, %v365
    %v367 = vsub.f32 %v219, %v236
    %v368 = vmul.f32 %v367, 1.442695
    %v369 = vpow.pop %v368
    %v370 = vadd.f32 %v360, %v369
    %v371 = vsub.f32 13.0, %v180
    %v372 = vand.u32 2147483647, %v371
    %v373 = vsub.f32 1.0, %v372
    %v374 = vmax.f32 %v373, 0.0
    %v375 = vmul.f32 %v374, %v219
    %v376 = vadd.f32 %v366, %v375
    %v377 = vsub.f32 %v220, %v236
    %v378 = vmul.f32 %v377, 1.442695
    %v379 = vpow.pop %v378
    %v380 = vadd.f32 %v370, %v379
    %v381 = vsub.f32 14.0, %v180
    %v382 = vand.u32 2147483647, %v381
    %v383 = vsub.f32 1.0, %v382
    %v384 = vmax.f32 %v383, 0.0
    %v385 = vmul.f32 %v384, %v220
    %v386 = vadd.f32 %v376, %v385
    %v387 = vsub.f32 %v221, %v236
    %v388 = vmul.f32 %v387, 1.442695
    %v389 = vpow.pop %v388
    %v390 = vadd.f32 %v380, %v389
    %v391 = vsub.f32 15.0, %v180
    %v392 = vand.u32 2147483647, %v391
    %v393 = vsub.f32 1.0, %v392
    %v394 = vmax.f32 %v393, 0.0
    %v395 = vmul.f32 %v394, %v221
    %v396 = vadd.f32 %v386, %v395
    %v397 = vlog2.pop %v390
    %v398 = vmul.f32 %v397, 0.6931472
    %v399 = vadd.f32 %v236, %v398
    %v400 = vsub.f32 %v399, %v396
    %v401 = vadd.f32 %v400, 0.0
    %s402 = scalar_lea.vmem [#allocation5], 192
    %v403 = vld [vmem:[%s402] sm:$0xf]
    %v404 = vld [vmem:[%s402 + $0xc] sm:$0xf]
    %v405 = vld [vmem:[%s402 + $0x18] sm:$0xf]
    %v406 = vld [vmem:[%s402 + $0x24] sm:$0xf]
    %v407 = vld [vmem:[%s402 + $0x30] sm:$0xf]
    %v408 = vld [vmem:[%s402 + $0x3c] sm:$0xf]
    %v409 = vld [vmem:[%s402 + $0x48] sm:$0xf]
    %v410 = vld [vmem:[%s402 + $0x54] sm:$0xf]
    %v411 = vld [vmem:[%s402 + $0x60] sm:$0xf]
    %v412 = vld [vmem:[%s402 + $0x6c] sm:$0xf]
    %v413 = vld [vmem:[%s402 + $0x78] sm:$0xf]
    %v414 = vld [vmem:[%s402 + $0x84] sm:$0xf]
    %v415 = vld [vmem:[%s402 + $0x90] sm:$0xf]
    %v416 = vld [vmem:[%s402 + $0x9c] sm:$0xf]
    %v417 = vld [vmem:[%s402 + $0xa8] sm:$0xf]
    %v418 = vld [vmem:[%s402 + $0xb4] sm:$0xf]
    %v419 = vunpack.c.l.bf16 %v403
    %v420 = vunpack.c.l.bf16 %v404
    %v421 = vunpack.c.l.bf16 %v405
    %v422 = vunpack.c.l.bf16 %v406
    %v423 = vunpack.c.l.bf16 %v407
    %v424 = vunpack.c.l.bf16 %v408
    %v425 = vunpack.c.l.bf16 %v409
    %v426 = vunpack.c.l.bf16 %v410
    %v427 = vunpack.c.l.bf16 %v411
    %v428 = vunpack.c.l.bf16 %v412
    %v429 = vunpack.c.l.bf16 %v413
    %v430 = vunpack.c.l.bf16 %v414
    %v431 = vunpack.c.l.bf16 %v415
    %v432 = vunpack.c.l.bf16 %v416
    %v433 = vunpack.c.l.bf16 %v417
    %v434 = vunpack.c.l.bf16 %v418
    %v435 = vmax.f32 %v419, %v423
    %v436 = vmax.f32 %v420, %v424
    %v437 = vmax.f32 %v421, %v425
    %v438 = vmax.f32 %v422, %v426
    %v439 = vmax.f32 %v435, %v427
    %v440 = vmax.f32 %v436, %v428
    %v441 = vmax.f32 %v437, %v429
    %v442 = vmax.f32 %v438, %v430
    %v443 = vmax.f32 %v439, %v431
    %v444 = vmax.f32 %v440, %v432
    %v445 = vmax.f32 %v441, %v433
    %v446 = vmax.f32 %v442, %v434
    %v447 = vmax.f32 %v443, %v444
    %v448 = vmax.f32 %v445, %v446
    %v449 = vmax.f32 %v447, %v448
    %v450 = vsub.f32 %v419, %v449
    %v451 = vmul.f32 %v450, 1.442695
    %v452 = vpow.pop %v451
    %v453 = vadd.f32 %v452, 0.0
    %v454 = vsub.f32 0.0, %v183
    %v455 = vand.u32 2147483647, %v454
    %v456 = vsub.f32 1.0, %v455
    %v457 = vmax.f32 %v456, 0.0
    %v458 = vmul.f32 %v457, %v419
    %v459 = vadd.f32 %v458, 0.0
    %v460 = vsub.f32 %v420, %v449
    %v461 = vmul.f32 %v460, 1.442695
    %v462 = vpow.pop %v461
    %v463 = vadd.f32 %v453, %v462
    %v464 = vsub.f32 1.0, %v183
    %v465 = vand.u32 2147483647, %v464
    %v466 = vsub.f32 1.0, %v465
    %v467 = vmax.f32 %v466, 0.0
    %v468 = vmul.f32 %v467, %v420
    %v469 = vadd.f32 %v459, %v468
    %v470 = vsub.f32 %v421, %v449
    %v471 = vmul.f32 %v470, 1.442695
    %v472 = vpow.pop %v471
    %v473 = vadd.f32 %v463, %v472
    %v474 = vsub.f32 2.0, %v183
    %v475 = vand.u32 2147483647, %v474
    %v476 = vsub.f32 1.0, %v475
    %v477 = vmax.f32 %v476, 0.0
    %v478 = vmul.f32 %v477, %v421
    %v479 = vadd.f32 %v469, %v478
    %v480 = vsub.f32 %v422, %v449
    %v481 = vmul.f32 %v480, 1.442695
    %v482 = vpow.pop %v481
    %v483 = vadd.f32 %v473, %v482
    %v484 = vsub.f32 3.0, %v183
    %v485 = vand.u32 2147483647, %v484
    %v486 = vsub.f32 1.0, %v485
    %v487 = vmax.f32 %v486, 0.0
    %v488 = vmul.f32 %v487, %v422
    %v489 = vadd.f32 %v479, %v488
    %v490 = vsub.f32 %v423, %v449
    %v491 = vmul.f32 %v490, 1.442695
    %v492 = vpow.pop %v491
    %v493 = vadd.f32 %v483, %v492
    %v494 = vsub.f32 4.0, %v183
    %v495 = vand.u32 2147483647, %v494
    %v496 = vsub.f32 1.0, %v495
    %v497 = vmax.f32 %v496, 0.0
    %v498 = vmul.f32 %v497, %v423
    %v499 = vadd.f32 %v489, %v498
    %v500 = vsub.f32 %v424, %v449
    %v501 = vmul.f32 %v500, 1.442695
    %v502 = vpow.pop %v501
    %v503 = vadd.f32 %v493, %v502
    %v504 = vsub.f32 5.0, %v183
    %v505 = vand.u32 2147483647, %v504
    %v506 = vsub.f32 1.0, %v505
    %v507 = vmax.f32 %v506, 0.0
    %v508 = vmul.f32 %v507, %v424
    %v509 = vadd.f32 %v499, %v508
    %v510 = vsub.f32 %v425, %v449
    %v511 = vmul.f32 %v510, 1.442695
    %v512 = vpow.pop %v511
    %v513 = vadd.f32 %v503, %v512
    %v514 = vsub.f32 6.0, %v183
    %v515 = vand.u32 2147483647, %v514
    %v516 = vsub.f32 1.0, %v515
    %v517 = vmax.f32 %v516, 0.0
    %v518 = vmul.f32 %v517, %v425
    %v519 = vadd.f32 %v509, %v518
    %v520 = vsub.f32 %v426, %v449
    %v521 = vmul.f32 %v520, 1.442695
    %v522 = vpow.pop %v521
    %v523 = vadd.f32 %v513, %v522
    %v524 = vsub.f32 7.0, %v183
    %v525 = vand.u32 2147483647, %v524
    %v526 = vsub.f32 1.0, %v525
    %v527 = vmax.f32 %v526, 0.0
    %v528 = vmul.f32 %v527, %v426
    %v529 = vadd.f32 %v519, %v528
    %v530 = vsub.f32 %v427, %v449
    %v531 = vmul.f32 %v530, 1.442695
    %v532 = vpow.pop %v531
    %v533 = vadd.f32 %v523, %v532
    %v534 = vsub.f32 8.0, %v183
    %v535 = vand.u32 2147483647, %v534
    %v536 = vsub.f32 1.0, %v535
    %v537 = vmax.f32 %v536, 0.0
    %v538 = vmul.f32 %v537, %v427
    %v539 = vadd.f32 %v529, %v538
    %v540 = vsub.f32 %v428, %v449
    %v541 = vmul.f32 %v540, 1.442695
    %v542 = vpow.pop %v541
    %v543 = vadd.f32 %v533, %v542
    %v544 = vsub.f32 9.0, %v183
    %v545 = vand.u32 2147483647, %v544
    %v546 = vsub.f32 1.0, %v545
    %v547 = vmax.f32 %v546, 0.0
    %v548 = vmul.f32 %v547, %v428
    %v549 = vadd.f32 %v539, %v548
    %v550 = vsub.f32 %v429, %v449
    %v551 = vmul.f32 %v550, 1.442695
    %v552 = vpow.pop %v551
    %v553 = vadd.f32 %v543, %v552
    %v554 = vsub.f32 10.0, %v183
    %v555 = vand.u32 2147483647, %v554
    %v556 = vsub.f32 1.0, %v555
    %v557 = vmax.f32 %v556, 0.0
    %v558 = vmul.f32 %v557, %v429
    %v559 = vadd.f32 %v549, %v558
    %v560 = vsub.f32 %v430, %v449
    %v561 = vmul.f32 %v560, 1.442695
    %v562 = vpow.pop %v561
    %v563 = vadd.f32 %v553, %v562
    %v564 = vsub.f32 11.0, %v183
    %v565 = vand.u32 2147483647, %v564
    %v566 = vsub.f32 1.0, %v565
    %v567 = vmax.f32 %v566, 0.0
    %v568 = vmul.f32 %v567, %v430
    %v569 = vadd.f32 %v559, %v568
    %v570 = vsub.f32 %v431, %v449
    %v571 = vmul.f32 %v570, 1.442695
    %v572 = vpow.pop %v571
    %v573 = vadd.f32 %v563, %v572
    %v574 = vsub.f32 12.0, %v183
    %v575 = vand.u32 2147483647, %v574
    %v576 = vsub.f32 1.0, %v575
    %v577 = vmax.f32 %v576, 0.0
    %v578 = vmul.f32 %v577, %v431
    %v579 = vadd.f32 %v569, %v578
    %v580 = vsub.f32 %v432, %v449
    %v581 = vmul.f32 %v580, 1.442695
    %v582 = vpow.pop %v581
    %v583 = vadd.f32 %v573, %v582
    %v584 = vsub.f32 13.0, %v183
    %v585 = vand.u32 2147483647, %v584
    %v586 = vsub.f32 1.0, %v585
    %v587 = vmax.f32 %v586, 0.0
    %v588 = vmul.f32 %v587, %v432
    %v589 = vadd.f32 %v579, %v588
    %v590 = vsub.f32 %v433, %v449
    %v591 = vmul.f32 %v590, 1.442695
    %v592 = vpow.pop %v591
    %v593 = vadd.f32 %v583, %v592
    %v594 = vsub.f32 14.0, %v183
    %v595 = vand.u32 2147483647, %v594
    %v596 = vsub.f32 1.0, %v595
    %v597 = vmax.f32 %v596, 0.0
    %v598 = vmul.f32 %v597, %v433
    %v599 = vadd.f32 %v589, %v598
    %v600 = vsub.f32 %v434, %v449
    %v601 = vmul.f32 %v600, 1.442695
    %v602 = vpow.pop %v601
    %v603 = vadd.f32 %v593, %v602
    %v604 = vsub.f32 15.0, %v183
    %v605 = vand.u32 2147483647, %v604
    %v606 = vsub.f32 1.0, %v605
    %v607 = vmax.f32 %v606, 0.0
    %v608 = vmul.f32 %v607, %v434
    %v609 = vadd.f32 %v599, %v608
    %v610 = vlog2.pop %v603
    %v611 = vmul.f32 %v610, 0.6931472
    %v612 = vadd.f32 %v449, %v611
    %v613 = vsub.f32 %v612, %v609
    %v614 = vadd.f32 %v401, %v613
    %s615 = scalar_lea.vmem [#allocation5], 384
    %v616 = vld [vmem:[%s615] sm:$0xf]
    %v617 = vld [vmem:[%s615 + $0xc] sm:$0xf]
    %v618 = vld [vmem:[%s615 + $0x18] sm:$0xf]
    %v619 = vld [vmem:[%s615 + $0x24] sm:$0xf]
    %v620 = vld [vmem:[%s615 + $0x30] sm:$0xf]
    %v621 = vld [vmem:[%s615 + $0x3c] sm:$0xf]
    %v622 = vld [vmem:[%s615 + $0x48] sm:$0xf]
    %v623 = vld [vmem:[%s615 + $0x54] sm:$0xf]
    %v624 = vld [vmem:[%s615 + $0x60] sm:$0xf]
    %v625 = vld [vmem:[%s615 + $0x6c] sm:$0xf]
    %v626 = vld [vmem:[%s615 + $0x78] sm:$0xf]
    %v627 = vld [vmem:[%s615 + $0x84] sm:$0xf]
    %v628 = vld [vmem:[%s615 + $0x90] sm:$0xf]
    %v629 = vld [vmem:[%s615 + $0x9c] sm:$0xf]
    %v630 = vld [vmem:[%s615 + $0xa8] sm:$0xf]
    %v631 = vld [vmem:[%s615 + $0xb4] sm:$0xf]
    %v632 = vunpack.c.l.bf16 %v616
    %v633 = vunpack.c.l.bf16 %v617
    %v634 = vunpack.c.l.bf16 %v618
    %v635 = vunpack.c.l.bf16 %v619
    %v636 = vunpack.c.l.bf16 %v620
    %v637 = vunpack.c.l.bf16 %v621
    %v638 = vunpack.c.l.bf16 %v622
    %v639 = vunpack.c.l.bf16 %v623
    %v640 = vunpack.c.l.bf16 %v624
    %v641 = vunpack.c.l.bf16 %v625
    %v642 = vunpack.c.l.bf16 %v626
    %v643 = vunpack.c.l.bf16 %v627
    %v644 = vunpack.c.l.bf16 %v628
    %v645 = vunpack.c.l.bf16 %v629
    %v646 = vunpack.c.l.bf16 %v630
    %v647 = vunpack.c.l.bf16 %v631
    %v648 = vmax.f32 %v632, %v636
    %v649 = vmax.f32 %v633, %v637
    %v650 = vmax.f32 %v634, %v638
    %v651 = vmax.f32 %v635, %v639
    %v652 = vmax.f32 %v648, %v640
    %v653 = vmax.f32 %v649, %v641
    %v654 = vmax.f32 %v650, %v642
    %v655 = vmax.f32 %v651, %v643
    %v656 = vmax.f32 %v652, %v644
    %v657 = vmax.f32 %v653, %v645
    %v658 = vmax.f32 %v654, %v646
    %v659 = vmax.f32 %v655, %v647
    %v660 = vmax.f32 %v656, %v657
    %v661 = vmax.f32 %v658, %v659
    %v662 = vmax.f32 %v660, %v661
    %v663 = vsub.f32 %v632, %v662
    %v664 = vmul.f32 %v663, 1.442695
    %v665 = vpow.pop %v664
    %v666 = vadd.f32 %v665, 0.0
    %v667 = vsub.f32 0.0, %v186
    %v668 = vand.u32 2147483647, %v667
    %v669 = vsub.f32 1.0, %v668
    %v670 = vmax.f32 %v669, 0.0
    %v671 = vmul.f32 %v670, %v632
    %v672 = vadd.f32 %v671, 0.0
    %v673 = vsub.f32 %v633, %v662
    %v674 = vmul.f32 %v673, 1.442695
    %v675 = vpow.pop %v674
    %v676 = vadd.f32 %v666, %v675
    %v677 = vsub.f32 1.0, %v186
    %v678 = vand.u32 2147483647, %v677
    %v679 = vsub.f32 1.0, %v678
    %v680 = vmax.f32 %v679, 0.0
    %v681 = vmul.f32 %v680, %v633
    %v682 = vadd.f32 %v672, %v681
    %v683 = vsub.f32 %v634, %v662
    %v684 = vmul.f32 %v683, 1.442695
    %v685 = vpow.pop %v684
    %v686 = vadd.f32 %v676, %v685
    %v687 = vsub.f32 2.0, %v186
    %v688 = vand.u32 2147483647, %v687
    %v689 = vsub.f32 1.0, %v688
    %v690 = vmax.f32 %v689, 0.0
    %v691 = vmul.f32 %v690, %v634
    %v692 = vadd.f32 %v682, %v691
    %v693 = vsub.f32 %v635, %v662
    %v694 = vmul.f32 %v693, 1.442695
    %v695 = vpow.pop %v694
    %v696 = vadd.f32 %v686, %v695
    %v697 = vsub.f32 3.0, %v186
    %v698 = vand.u32 2147483647, %v697
    %v699 = vsub.f32 1.0, %v698
    %v700 = vmax.f32 %v699, 0.0
    %v701 = vmul.f32 %v700, %v635
    %v702 = vadd.f32 %v692, %v701
    %v703 = vsub.f32 %v636, %v662
    %v704 = vmul.f32 %v703, 1.442695
    %v705 = vpow.pop %v704
    %v706 = vadd.f32 %v696, %v705
    %v707 = vsub.f32 4.0, %v186
    %v708 = vand.u32 2147483647, %v707
    %v709 = vsub.f32 1.0, %v708
    %v710 = vmax.f32 %v709, 0.0
    %v711 = vmul.f32 %v710, %v636
    %v712 = vadd.f32 %v702, %v711
    %v713 = vsub.f32 %v637, %v662
    %v714 = vmul.f32 %v713, 1.442695
    %v715 = vpow.pop %v714
    %v716 = vadd.f32 %v706, %v715
    %v717 = vsub.f32 5.0, %v186
    %v718 = vand.u32 2147483647, %v717
    %v719 = vsub.f32 1.0, %v718
    %v720 = vmax.f32 %v719, 0.0
    %v721 = vmul.f32 %v720, %v637
    %v722 = vadd.f32 %v712, %v721
    %v723 = vsub.f32 %v638, %v662
    %v724 = vmul.f32 %v723, 1.442695
    %v725 = vpow.pop %v724
    %v726 = vadd.f32 %v716, %v725
    %v727 = vsub.f32 6.0, %v186
    %v728 = vand.u32 2147483647, %v727
    %v729 = vsub.f32 1.0, %v728
    %v730 = vmax.f32 %v729, 0.0
    %v731 = vmul.f32 %v730, %v638
    %v732 = vadd.f32 %v722, %v731
    %v733 = vsub.f32 %v639, %v662
    %v734 = vmul.f32 %v733, 1.442695
    %v735 = vpow.pop %v734
    %v736 = vadd.f32 %v726, %v735
    %v737 = vsub.f32 7.0, %v186
    %v738 = vand.u32 2147483647, %v737
    %v739 = vsub.f32 1.0, %v738
    %v740 = vmax.f32 %v739, 0.0
    %v741 = vmul.f32 %v740, %v639
    %v742 = vadd.f32 %v732, %v741
    %v743 = vsub.f32 %v640, %v662
    %v744 = vmul.f32 %v743, 1.442695
    %v745 = vpow.pop %v744
    %v746 = vadd.f32 %v736, %v745
    %v747 = vsub.f32 8.0, %v186
    %v748 = vand.u32 2147483647, %v747
    %v749 = vsub.f32 1.0, %v748
    %v750 = vmax.f32 %v749, 0.0
    %v751 = vmul.f32 %v750, %v640
    %v752 = vadd.f32 %v742, %v751
    %v753 = vsub.f32 %v641, %v662
    %v754 = vmul.f32 %v753, 1.442695
    %v755 = vpow.pop %v754
    %v756 = vadd.f32 %v746, %v755
    %v757 = vsub.f32 9.0, %v186
    %v758 = vand.u32 2147483647, %v757
    %v759 = vsub.f32 1.0, %v758
    %v760 = vmax.f32 %v759, 0.0
    %v761 = vmul.f32 %v760, %v641
    %v762 = vadd.f32 %v752, %v761
    %v763 = vsub.f32 %v642, %v662
    %v764 = vmul.f32 %v763, 1.442695
    %v765 = vpow.pop %v764
    %v766 = vadd.f32 %v756, %v765
    %v767 = vsub.f32 10.0, %v186
    %v768 = vand.u32 2147483647, %v767
    %v769 = vsub.f32 1.0, %v768
    %v770 = vmax.f32 %v769, 0.0
    %v771 = vmul.f32 %v770, %v642
    %v772 = vadd.f32 %v762, %v771
    %v773 = vsub.f32 %v643, %v662
    %v774 = vmul.f32 %v773, 1.442695
    %v775 = vpow.pop %v774
    %v776 = vadd.f32 %v766, %v775
    %v777 = vsub.f32 11.0, %v186
    %v778 = vand.u32 2147483647, %v777
    %v779 = vsub.f32 1.0, %v778
    %v780 = vmax.f32 %v779, 0.0
    %v781 = vmul.f32 %v780, %v643
    %v782 = vadd.f32 %v772, %v781
    %v783 = vsub.f32 %v644, %v662
    %v784 = vmul.f32 %v783, 1.442695
    %v785 = vpow.pop %v784
    %v786 = vadd.f32 %v776, %v785
    %v787 = vsub.f32 12.0, %v186
    %v788 = vand.u32 2147483647, %v787
    %v789 = vsub.f32 1.0, %v788
    %v790 = vmax.f32 %v789, 0.0
    %v791 = vmul.f32 %v790, %v644
    %v792 = vadd.f32 %v782, %v791
    %v793 = vsub.f32 %v645, %v662
    %v794 = vmul.f32 %v793, 1.442695
    %v795 = vpow.pop %v794
    %v796 = vadd.f32 %v786, %v795
    %v797 = vsub.f32 13.0, %v186
    %v798 = vand.u32 2147483647, %v797
    %v799 = vsub.f32 1.0, %v798
    %v800 = vmax.f32 %v799, 0.0
    %v801 = vmul.f32 %v800, %v645
    %v802 = vadd.f32 %v792, %v801
    %v803 = vsub.f32 %v646, %v662
    %v804 = vmul.f32 %v803, 1.442695
    %v805 = vpow.pop %v804
    %v806 = vadd.f32 %v796, %v805
    %v807 = vsub.f32 14.0, %v186
    %v808 = vand.u32 2147483647, %v807
    %v809 = vsub.f32 1.0, %v808
    %v810 = vmax.f32 %v809, 0.0
    %v811 = vmul.f32 %v810, %v646
    %v812 = vadd.f32 %v802, %v811
    %v813 = vsub.f32 %v647, %v662
    %v814 = vmul.f32 %v813, 1.442695
    %v815 = vpow.pop %v814
    %v816 = vadd.f32 %v806, %v815
    %v817 = vsub.f32 15.0, %v186
    %v818 = vand.u32 2147483647, %v817
    %v819 = vsub.f32 1.0, %v818
    %v820 = vmax.f32 %v819, 0.0
    %v821 = vmul.f32 %v820, %v647
    %v822 = vadd.f32 %v812, %v821
    %v823 = vlog2.pop %v816
    %v824 = vmul.f32 %v823, 0.6931472
    %v825 = vadd.f32 %v662, %v824
    %v826 = vsub.f32 %v825, %v822
    %v827 = vadd.f32 %v614, %v826
    %s828 = scalar_lea.vmem [#allocation5], 576
    %v829 = vld [vmem:[%s828] sm:$0xf]
    %v830 = vld [vmem:[%s828 + $0xc] sm:$0xf]
    %v831 = vld [vmem:[%s828 + $0x18] sm:$0xf]
    %v832 = vld [vmem:[%s828 + $0x24] sm:$0xf]
    %v833 = vld [vmem:[%s828 + $0x30] sm:$0xf]
    %v834 = vld [vmem:[%s828 + $0x3c] sm:$0xf]
    %v835 = vld [vmem:[%s828 + $0x48] sm:$0xf]
    %v836 = vld [vmem:[%s828 + $0x54] sm:$0xf]
    %v837 = vld [vmem:[%s828 + $0x60] sm:$0xf]
    %v838 = vld [vmem:[%s828 + $0x6c] sm:$0xf]
    %v839 = vld [vmem:[%s828 + $0x78] sm:$0xf]
    %v840 = vld [vmem:[%s828 + $0x84] sm:$0xf]
    %v841 = vld [vmem:[%s828 + $0x90] sm:$0xf]
    %v842 = vld [vmem:[%s828 + $0x9c] sm:$0xf]
    %v843 = vld [vmem:[%s828 + $0xa8] sm:$0xf]
    %v844 = vld [vmem:[%s828 + $0xb4] sm:$0xf]
    %v845 = vunpack.c.l.bf16 %v829
    %v846 = vunpack.c.l.bf16 %v830
    %v847 = vunpack.c.l.bf16 %v831
    %v848 = vunpack.c.l.bf16 %v832
    %v849 = vunpack.c.l.bf16 %v833
    %v850 = vunpack.c.l.bf16 %v834
    %v851 = vunpack.c.l.bf16 %v835
    %v852 = vunpack.c.l.bf16 %v836
    %v853 = vunpack.c.l.bf16 %v837
    %v854 = vunpack.c.l.bf16 %v838
    %v855 = vunpack.c.l.bf16 %v839
    %v856 = vunpack.c.l.bf16 %v840
    %v857 = vunpack.c.l.bf16 %v841
    %v858 = vunpack.c.l.bf16 %v842
    %v859 = vunpack.c.l.bf16 %v843
    %v860 = vunpack.c.l.bf16 %v844
    %v861 = vmax.f32 %v845, %v849
    %v862 = vmax.f32 %v846, %v850
    %v863 = vmax.f32 %v847, %v851
    %v864 = vmax.f32 %v848, %v852
    %v865 = vmax.f32 %v861, %v853
    %v866 = vmax.f32 %v862, %v854
    %v867 = vmax.f32 %v863, %v855
    %v868 = vmax.f32 %v864, %v856
    %v869 = vmax.f32 %v865, %v857
    %v870 = vmax.f32 %v866, %v858
    %v871 = vmax.f32 %v867, %v859
    %v872 = vmax.f32 %v868, %v860
    %v873 = vmax.f32 %v869, %v870
    %v874 = vmax.f32 %v871, %v872
    %v875 = vmax.f32 %v873, %v874
    %v876 = vsub.f32 %v845, %v875
    %v877 = vmul.f32 %v876, 1.442695
    %v878 = vpow.pop %v877
    %v879 = vadd.f32 %v878, 0.0
    %v880 = vsub.f32 0.0, %v189
    %v881 = vand.u32 2147483647, %v880
    %v882 = vsub.f32 1.0, %v881
    %v883 = vmax.f32 %v882, 0.0
    %v884 = vmul.f32 %v883, %v845
    %v885 = vadd.f32 %v884, 0.0
    %v886 = vsub.f32 %v846, %v875
    %v887 = vmul.f32 %v886, 1.442695
    %v888 = vpow.pop %v887
    %v889 = vadd.f32 %v879, %v888
    %v890 = vsub.f32 1.0, %v189
    %v891 = vand.u32 2147483647, %v890
    %v892 = vsub.f32 1.0, %v891
    %v893 = vmax.f32 %v892, 0.0
    %v894 = vmul.f32 %v893, %v846
    %v895 = vadd.f32 %v885, %v894
    %v896 = vsub.f32 %v847, %v875
    %v897 = vmul.f32 %v896, 1.442695
    %v898 = vpow.pop %v897
    %v899 = vadd.f32 %v889, %v898
    %v900 = vsub.f32 2.0, %v189
    %v901 = vand.u32 2147483647, %v900
    %v902 = vsub.f32 1.0, %v901
    %v903 = vmax.f32 %v902, 0.0
    %v904 = vmul.f32 %v903, %v847
    %v905 = vadd.f32 %v895, %v904
    %v906 = vsub.f32 %v848, %v875
    %v907 = vmul.f32 %v906, 1.442695
    %v908 = vpow.pop %v907
    %v909 = vadd.f32 %v899, %v908
    %v910 = vsub.f32 3.0, %v189
    %v911 = vand.u32 2147483647, %v910
    %v912 = vsub.f32 1.0, %v911
    %v913 = vmax.f32 %v912, 0.0
    %v914 = vmul.f32 %v913, %v848
    %v915 = vadd.f32 %v905, %v914
    %v916 = vsub.f32 %v849, %v875
    %v917 = vmul.f32 %v916, 1.442695
    %v918 = vpow.pop %v917
    %v919 = vadd.f32 %v909, %v918
    %v920 = vsub.f32 4.0, %v189
    %v921 = vand.u32 2147483647, %v920
    %v922 = vsub.f32 1.0, %v921
    %v923 = vmax.f32 %v922, 0.0
    %v924 = vmul.f32 %v923, %v849
    %v925 = vadd.f32 %v915, %v924
    %v926 = vsub.f32 %v850, %v875
    %v927 = vmul.f32 %v926, 1.442695
    %v928 = vpow.pop %v927
    %v929 = vadd.f32 %v919, %v928
    %v930 = vsub.f32 5.0, %v189
    %v931 = vand.u32 2147483647, %v930
    %v932 = vsub.f32 1.0, %v931
    %v933 = vmax.f32 %v932, 0.0
    %v934 = vmul.f32 %v933, %v850
    %v935 = vadd.f32 %v925, %v934
    %v936 = vsub.f32 %v851, %v875
    %v937 = vmul.f32 %v936, 1.442695
    %v938 = vpow.pop %v937
    %v939 = vadd.f32 %v929, %v938
    %v940 = vsub.f32 6.0, %v189
    %v941 = vand.u32 2147483647, %v940
    %v942 = vsub.f32 1.0, %v941
    %v943 = vmax.f32 %v942, 0.0
    %v944 = vmul.f32 %v943, %v851
    %v945 = vadd.f32 %v935, %v944
    %v946 = vsub.f32 %v852, %v875
    %v947 = vmul.f32 %v946, 1.442695
    %v948 = vpow.pop %v947
    %v949 = vadd.f32 %v939, %v948
    %v950 = vsub.f32 7.0, %v189
    %v951 = vand.u32 2147483647, %v950
    %v952 = vsub.f32 1.0, %v951
    %v953 = vmax.f32 %v952, 0.0
    %v954 = vmul.f32 %v953, %v852
    %v955 = vadd.f32 %v945, %v954
    %v956 = vsub.f32 %v853, %v875
    %v957 = vmul.f32 %v956, 1.442695
    %v958 = vpow.pop %v957
    %v959 = vadd.f32 %v949, %v958
    %v960 = vsub.f32 8.0, %v189
    %v961 = vand.u32 2147483647, %v960
    %v962 = vsub.f32 1.0, %v961
    %v963 = vmax.f32 %v962, 0.0
    %v964 = vmul.f32 %v963, %v853
    %v965 = vadd.f32 %v955, %v964
    %v966 = vsub.f32 %v854, %v875
    %v967 = vmul.f32 %v966, 1.442695
    %v968 = vpow.pop %v967
    %v969 = vadd.f32 %v959, %v968
    %v970 = vsub.f32 9.0, %v189
    %v971 = vand.u32 2147483647, %v970
    %v972 = vsub.f32 1.0, %v971
    %v973 = vmax.f32 %v972, 0.0
    %v974 = vmul.f32 %v973, %v854
    %v975 = vadd.f32 %v965, %v974
    %v976 = vsub.f32 %v855, %v875
    %v977 = vmul.f32 %v976, 1.442695
    %v978 = vpow.pop %v977
    %v979 = vadd.f32 %v969, %v978
    %v980 = vsub.f32 10.0, %v189
    %v981 = vand.u32 2147483647, %v980
    %v982 = vsub.f32 1.0, %v981
    %v983 = vmax.f32 %v982, 0.0
    %v984 = vmul.f32 %v983, %v855
    %v985 = vadd.f32 %v975, %v984
    %v986 = vsub.f32 %v856, %v875
    %v987 = vmul.f32 %v986, 1.442695
    %v988 = vpow.pop %v987
    %v989 = vadd.f32 %v979, %v988
    %v990 = vsub.f32 11.0, %v189
    %v991 = vand.u32 2147483647, %v990
    %v992 = vsub.f32 1.0, %v991
    %v993 = vmax.f32 %v992, 0.0
    %v994 = vmul.f32 %v993, %v856
    %v995 = vadd.f32 %v985, %v994
    %v996 = vsub.f32 %v857, %v875
    %v997 = vmul.f32 %v996, 1.442695
    %v998 = vpow.pop %v997
    %v999 = vadd.f32 %v989, %v998
    %v1000 = vsub.f32 12.0, %v189
    %v1001 = vand.u32 2147483647, %v1000
    %v1002 = vsub.f32 1.0, %v1001
    %v1003 = vmax.f32 %v1002, 0.0
    %v1004 = vmul.f32 %v1003, %v857
    %v1005 = vadd.f32 %v995, %v1004
    %v1006 = vsub.f32 %v858, %v875
    %v1007 = vmul.f32 %v1006, 1.442695
    %v1008 = vpow.pop %v1007
    %v1009 = vadd.f32 %v999, %v1008
    %v1010 = vsub.f32 13.0, %v189
    %v1011 = vand.u32 2147483647, %v1010
    %v1012 = vsub.f32 1.0, %v1011
    %v1013 = vmax.f32 %v1012, 0.0
    %v1014 = vmul.f32 %v1013, %v858
    %v1015 = vadd.f32 %v1005, %v1014
    %v1016 = vsub.f32 %v859, %v875
    %v1017 = vmul.f32 %v1016, 1.442695
    %v1018 = vpow.pop %v1017
    %v1019 = vadd.f32 %v1009, %v1018
    %v1020 = vsub.f32 14.0, %v189
    %v1021 = vand.u32 2147483647, %v1020
    %v1022 = vsub.f32 1.0, %v1021
    %v1023 = vmax.f32 %v1022, 0.0
    %v1024 = vmul.f32 %v1023, %v859
    %v1025 = vadd.f32 %v1015, %v1024
    %v1026 = vsub.f32 %v860, %v875
    %v1027 = vmul.f32 %v1026, 1.442695
    %v1028 = vpow.pop %v1027
    %v1029 = vadd.f32 %v1019, %v1028
    %v1030 = vsub.f32 15.0, %v189
    %v1031 = vand.u32 2147483647, %v1030
    %v1032 = vsub.f32 1.0, %v1031
    %v1033 = vmax.f32 %v1032, 0.0
    %v1034 = vmul.f32 %v1033, %v860
    %v1035 = vadd.f32 %v1025, %v1034
    %v1036 = vlog2.pop %v1029
    %v1037 = vmul.f32 %v1036, 0.6931472
    %v1038 = vadd.f32 %v875, %v1037
    %v1039 = vsub.f32 %v1038, %v1035
    %v1040 = vadd.f32 %v827, %v1039
    %v1041 = vmul.f32 %v53, 0.25
    %v1042 = vmul.f32 %v1040, %v1041
    %v1043 = vsel %vm173, %v1042, 0.0
    %v1044 = vadd.f32 %v1043, 0.0
    %v1045 = vld [vmem:[#allocation2 + $0x8] sm:$0xff]
    %v1046 = vld [vmem:[#allocation2 + $0x20] sm:$0xff]
    %v1047 = vld [vmem:[#allocation2 + $0x38] sm:$0xff]
    %v1048 = vld [vmem:[#allocation2 + $0x50] sm:$0xff]
    %v1049 = vld [vmem:[#allocation2 + $0x68] sm:$0xff]
    %v1050 = vld [vmem:[#allocation2 + $0x80] sm:$0xff]
    %v1051 = vld [vmem:[#allocation2 + $0x98] sm:$0xff]
    %v1052 = vld [vmem:[#allocation2 + $0xb0] sm:$0xff]
    %v1053 = vld [vmem:[#allocation2 + $0xc8] sm:$0xff]
    %v1054 = vld [vmem:[#allocation2 + $0xe0] sm:$0xff]
    %v1055 = vld [vmem:[#allocation2 + $0xf8] sm:$0xff]
    %v1056 = vld [vmem:[#allocation2 + $0x110] sm:$0xff]
    %v1057 = vsub.f32 %v1047, %v1045
    %v1058 = vsub.f32 %v1048, %v1046
    %v1059 = vadd.f32 %v1058, 1e-07
    %v1060 = vsub.f32 %v1051, %v1049
    %v1061 = vsub.f32 %v1052, %v1050
    %v1062 = vadd.f32 %v1061, 1e-07
    %v1063 = vmin.f32 %v1047, %v1051
    %v1064 = vmax.f32 %v1045, %v1049
    %v1065 = vsub.f32 %v1063, %v1064
    %v1066 = vmax.f32 %v1065, 0.0
    %v1067 = vmin.f32 %v1048, %v1052
    %v1068 = vmax.f32 %v1046, %v1050
    %v1069 = vsub.f32 %v1067, %v1068
    %v1070 = vmax.f32 %v1069, 0.0
    %v1071 = vmul.f32 %v1066, %v1070
    %v1072 = vmul.f32 %v1057, %v1059
    %v1073 = vmul.f32 %v1060, %v1062
    %v1074 = vadd.f32 %v1072, %v1073
    %v1075 = vsub.f32 %v1074, %v1071
    %v1076 = vadd.f32 %v1075, 1e-07
    %v1077 = vrcp.pop %v1076
    %v1078 = vmul.f32 %v1071, %v1077
    %v1079 = vmax.f32 %v1047, %v1051
    %v1080 = vmin.f32 %v1045, %v1049
    %v1081 = vsub.f32 %v1079, %v1080
    %v1082 = vmax.f32 %v1048, %v1052
    %v1083 = vmin.f32 %v1046, %v1050
    %v1084 = vsub.f32 %v1082, %v1083
    %v1085 = vmul.f32 %v1081, %v1081
    %v1086 = vmul.f32 %v1084, %v1084
    %v1087 = vadd.f32 %v1085, %v1086
    %v1088 = vadd.f32 %v1087, 1e-07
    %v1089 = vadd.f32 %v1049, %v1051
    %v1090 = vsub.f32 %v1089, %v1045
    %v1091 = vsub.f32 %v1090, %v1047
    %v1092 = vmul.f32 %v1091, %v1091
    %v1093 = vadd.f32 %v1050, %v1052
    %v1094 = vsub.f32 %v1093, %v1046
    %v1095 = vsub.f32 %v1094, %v1048
    %v1096 = vmul.f32 %v1095, %v1095
    %v1097 = vadd.f32 %v1092, %v1096
    %v1098 = vmul.f32 %v1097, 0.25
    %v1099 = vrcp.pop %v1062
    %v1100 = vmul.f32 %v1060, %v1099
    %vm1101 = vcmp.lt.f32.partialorder %v1100, 0.0
    %v1102 = vsel %vm1101, -1.0, 1.0
    %v1103 = vand.u32 2147483647, %v1100
    %vm1104 = vcmp.gt.f32.partialorder %v1103, 2.4142137
    %vm1105 = vcmp.gt.f32.partialorder %v1103, 0.41421357
    %vm1106 = vmxor %vm1104, 1
    %vm1107 = vmand %vm1105, %vm1106
    %v1108 = vsel %vm1107, 0.7853982, 0.0
    %v1109 = vsel %vm1104, 1.5707964, %v1108
    %v1110 = vmax.f32 %v1103, 1e-30
    %v1111 = vrcp.pop %v1110
    %v1112 = vsub.f32 0.0, %v1111
    %v1113 = vsub.f32 %v1103, 1.0
    %v1114 = vadd.f32 %v1103, 1.0
    %v1115 = vrcp.pop %v1114
    %v1116 = vmul.f32 %v1113, %v1115
    %v1117 = vsel %vm1107, %v1116, %v1103
    %v1118 = vsel %vm1104, %v1112, %v1117
    %v1119 = vmul.f32 %v1118, %v1118
    %v1120 = vmul.f32 %v1119, 0.080537446
    %v1121 = vsub.f32 %v1120, 0.13877685
    %v1122 = vmul.f32 %v1121, %v1119
    %v1123 = vadd.f32 %v1122, 0.19977711
    %v1124 = vmul.f32 %v1123, %v1119
    %v1125 = vsub.f32 %v1124, 0.3333295
    %v1126 = vmul.f32 %v1125, %v1119
    %v1127 = vmul.f32 %v1126, %v1118
    %v1128 = vadd.f32 %v1127, %v1118
    %v1129 = vadd.f32 %v1109, %v1128
    %v1130 = vmul.f32 %v1102, %v1129
    %v1131 = vrcp.pop %v1059
    %v1132 = vmul.f32 %v1057, %v1131
    %vm1133 = vcmp.lt.f32.partialorder %v1132, 0.0
    %v1134 = vsel %vm1133, -1.0, 1.0
    %v1135 = vand.u32 2147483647, %v1132
    %vm1136 = vcmp.gt.f32.partialorder %v1135, 2.4142137
    %vm1137 = vcmp.gt.f32.partialorder %v1135, 0.41421357
    %vm1138 = vmxor %vm1136, 1
    %vm1139 = vmand %vm1137, %vm1138
    %v1140 = vsel %vm1139, 0.7853982, 0.0
    %v1141 = vsel %vm1136, 1.5707964, %v1140
    %v1142 = vmax.f32 %v1135, 1e-30
    %v1143 = vrcp.pop %v1142
    %v1144 = vsub.f32 0.0, %v1143
    %v1145 = vsub.f32 %v1135, 1.0
    %v1146 = vadd.f32 %v1135, 1.0
    %v1147 = vrcp.pop %v1146
    %v1148 = vmul.f32 %v1145, %v1147
    %v1149 = vsel %vm1139, %v1148, %v1135
    %v1150 = vsel %vm1136, %v1144, %v1149
    %v1151 = vmul.f32 %v1150, %v1150
    %v1152 = vmul.f32 %v1151, 0.080537446
    %v1153 = vsub.f32 %v1152, 0.13877685
    %v1154 = vmul.f32 %v1153, %v1151
    %v1155 = vadd.f32 %v1154, 0.19977711
    %v1156 = vmul.f32 %v1155, %v1151
    %v1157 = vsub.f32 %v1156, 0.3333295
    %v1158 = vmul.f32 %v1157, %v1151
    %v1159 = vmul.f32 %v1158, %v1150
    %v1160 = vadd.f32 %v1159, %v1150
    %v1161 = vadd.f32 %v1141, %v1160
    %v1162 = vmul.f32 %v1134, %v1161
    %v1163 = vsub.f32 %v1130, %v1162
    %v1164 = vmul.f32 %v1163, %v1163
    %v1165 = vmul.f32 %v1164, 0.40528473
    %v1166 = vsub.f32 %v1165, %v1078
    %v1167 = vadd.f32 %v1166, 1.0000001
    %v1168 = vrcp.pop %v1167
    %v1169 = vmul.f32 %v1165, %v1168
    %v1170 = vrcp.pop %v1088
    %v1171 = vmul.f32 %v1098, %v1170
    %v1172 = vmul.f32 %v1165, %v1169
    %v1173 = vadd.f32 %v1171, %v1172
    %v1174 = vsub.f32 %v1078, %v1173
    %vm1175 = vcmp.gt.f32.partialorder %v1056, 0.0
    %v1176 = vsub.f32 1.0, %v1174
    %v1177 = vmul.f32 %v1176, %v1055
    %v1178 = vsel %vm1175, %v1177, 0.0
    %v1179 = vadd.f32 %v177, %v1178
    %v1180 = vsub.f32 %v1053, %v1049
    %v1181 = vmax.f32 %v1180, 0.0
    %v1182 = vmin.f32 %v1181, 14.99
    %v1183 = vsub.f32 %v1054, %v1050
    %v1184 = vmax.f32 %v1183, 0.0
    %v1185 = vmin.f32 %v1184, 14.99
    %v1186 = vsub.f32 %v1051, %v1053
    %v1187 = vmax.f32 %v1186, 0.0
    %v1188 = vmin.f32 %v1187, 14.99
    %v1189 = vsub.f32 %v1052, %v1054
    %v1190 = vmax.f32 %v1189, 0.0
    %v1191 = vmin.f32 %v1190, 14.99
    %v1192 = vld [vmem:[#allocation5 + $0x4] sm:$0xf]
    %v1193 = vld [vmem:[#allocation5 + $0x10] sm:$0xf]
    %v1194 = vld [vmem:[#allocation5 + $0x1c] sm:$0xf]
    %v1195 = vld [vmem:[#allocation5 + $0x28] sm:$0xf]
    %v1196 = vld [vmem:[#allocation5 + $0x34] sm:$0xf]
    %v1197 = vld [vmem:[#allocation5 + $0x40] sm:$0xf]
    %v1198 = vld [vmem:[#allocation5 + $0x4c] sm:$0xf]
    %v1199 = vld [vmem:[#allocation5 + $0x58] sm:$0xf]
    %v1200 = vld [vmem:[#allocation5 + $0x64] sm:$0xf]
    %v1201 = vld [vmem:[#allocation5 + $0x70] sm:$0xf]
    %v1202 = vld [vmem:[#allocation5 + $0x7c] sm:$0xf]
    %v1203 = vld [vmem:[#allocation5 + $0x88] sm:$0xf]
    %v1204 = vld [vmem:[#allocation5 + $0x94] sm:$0xf]
    %v1205 = vld [vmem:[#allocation5 + $0xa0] sm:$0xf]
    %v1206 = vld [vmem:[#allocation5 + $0xac] sm:$0xf]
    %v1207 = vld [vmem:[#allocation5 + $0xb8] sm:$0xf]
    %v1208 = vunpack.c.l.bf16 %v1192
    %v1209 = vunpack.c.l.bf16 %v1193
    %v1210 = vunpack.c.l.bf16 %v1194
    %v1211 = vunpack.c.l.bf16 %v1195
    %v1212 = vunpack.c.l.bf16 %v1196
    %v1213 = vunpack.c.l.bf16 %v1197
    %v1214 = vunpack.c.l.bf16 %v1198
    %v1215 = vunpack.c.l.bf16 %v1199
    %v1216 = vunpack.c.l.bf16 %v1200
    %v1217 = vunpack.c.l.bf16 %v1201
    %v1218 = vunpack.c.l.bf16 %v1202
    %v1219 = vunpack.c.l.bf16 %v1203
    %v1220 = vunpack.c.l.bf16 %v1204
    %v1221 = vunpack.c.l.bf16 %v1205
    %v1222 = vunpack.c.l.bf16 %v1206
    %v1223 = vunpack.c.l.bf16 %v1207
    %v1224 = vmax.f32 %v1208, %v1212
    %v1225 = vmax.f32 %v1209, %v1213
    %v1226 = vmax.f32 %v1210, %v1214
    %v1227 = vmax.f32 %v1211, %v1215
    %v1228 = vmax.f32 %v1224, %v1216
    %v1229 = vmax.f32 %v1225, %v1217
    %v1230 = vmax.f32 %v1226, %v1218
    %v1231 = vmax.f32 %v1227, %v1219
    %v1232 = vmax.f32 %v1228, %v1220
    %v1233 = vmax.f32 %v1229, %v1221
    %v1234 = vmax.f32 %v1230, %v1222
    %v1235 = vmax.f32 %v1231, %v1223
    %v1236 = vmax.f32 %v1232, %v1233
    %v1237 = vmax.f32 %v1234, %v1235
    %v1238 = vmax.f32 %v1236, %v1237
    %v1239 = vsub.f32 %v1208, %v1238
    %v1240 = vmul.f32 %v1239, 1.442695
    %v1241 = vpow.pop %v1240
    %v1242 = vadd.f32 %v1241, 0.0
    %v1243 = vsub.f32 0.0, %v1182
    %v1244 = vand.u32 2147483647, %v1243
    %v1245 = vsub.f32 1.0, %v1244
    %v1246 = vmax.f32 %v1245, 0.0
    %v1247 = vmul.f32 %v1246, %v1208
    %v1248 = vadd.f32 %v1247, 0.0
    %v1249 = vsub.f32 %v1209, %v1238
    %v1250 = vmul.f32 %v1249, 1.442695
    %v1251 = vpow.pop %v1250
    %v1252 = vadd.f32 %v1242, %v1251
    %v1253 = vsub.f32 1.0, %v1182
    %v1254 = vand.u32 2147483647, %v1253
    %v1255 = vsub.f32 1.0, %v1254
    %v1256 = vmax.f32 %v1255, 0.0
    %v1257 = vmul.f32 %v1256, %v1209
    %v1258 = vadd.f32 %v1248, %v1257
    %v1259 = vsub.f32 %v1210, %v1238
    %v1260 = vmul.f32 %v1259, 1.442695
    %v1261 = vpow.pop %v1260
    %v1262 = vadd.f32 %v1252, %v1261
    %v1263 = vsub.f32 2.0, %v1182
    %v1264 = vand.u32 2147483647, %v1263
    %v1265 = vsub.f32 1.0, %v1264
    %v1266 = vmax.f32 %v1265, 0.0
    %v1267 = vmul.f32 %v1266, %v1210
    %v1268 = vadd.f32 %v1258, %v1267
    %v1269 = vsub.f32 %v1211, %v1238
    %v1270 = vmul.f32 %v1269, 1.442695
    %v1271 = vpow.pop %v1270
    %v1272 = vadd.f32 %v1262, %v1271
    %v1273 = vsub.f32 3.0, %v1182
    %v1274 = vand.u32 2147483647, %v1273
    %v1275 = vsub.f32 1.0, %v1274
    %v1276 = vmax.f32 %v1275, 0.0
    %v1277 = vmul.f32 %v1276, %v1211
    %v1278 = vadd.f32 %v1268, %v1277
    %v1279 = vsub.f32 %v1212, %v1238
    %v1280 = vmul.f32 %v1279, 1.442695
    %v1281 = vpow.pop %v1280
    %v1282 = vadd.f32 %v1272, %v1281
    %v1283 = vsub.f32 4.0, %v1182
    %v1284 = vand.u32 2147483647, %v1283
    %v1285 = vsub.f32 1.0, %v1284
    %v1286 = vmax.f32 %v1285, 0.0
    %v1287 = vmul.f32 %v1286, %v1212
    %v1288 = vadd.f32 %v1278, %v1287
    %v1289 = vsub.f32 %v1213, %v1238
    %v1290 = vmul.f32 %v1289, 1.442695
    %v1291 = vpow.pop %v1290
    %v1292 = vadd.f32 %v1282, %v1291
    %v1293 = vsub.f32 5.0, %v1182
    %v1294 = vand.u32 2147483647, %v1293
    %v1295 = vsub.f32 1.0, %v1294
    %v1296 = vmax.f32 %v1295, 0.0
    %v1297 = vmul.f32 %v1296, %v1213
    %v1298 = vadd.f32 %v1288, %v1297
    %v1299 = vsub.f32 %v1214, %v1238
    %v1300 = vmul.f32 %v1299, 1.442695
    %v1301 = vpow.pop %v1300
    %v1302 = vadd.f32 %v1292, %v1301
    %v1303 = vsub.f32 6.0, %v1182
    %v1304 = vand.u32 2147483647, %v1303
    %v1305 = vsub.f32 1.0, %v1304
    %v1306 = vmax.f32 %v1305, 0.0
    %v1307 = vmul.f32 %v1306, %v1214
    %v1308 = vadd.f32 %v1298, %v1307
    %v1309 = vsub.f32 %v1215, %v1238
    %v1310 = vmul.f32 %v1309, 1.442695
    %v1311 = vpow.pop %v1310
    %v1312 = vadd.f32 %v1302, %v1311
    %v1313 = vsub.f32 7.0, %v1182
    %v1314 = vand.u32 2147483647, %v1313
    %v1315 = vsub.f32 1.0, %v1314
    %v1316 = vmax.f32 %v1315, 0.0
    %v1317 = vmul.f32 %v1316, %v1215
    %v1318 = vadd.f32 %v1308, %v1317
    %v1319 = vsub.f32 %v1216, %v1238
    %v1320 = vmul.f32 %v1319, 1.442695
    %v1321 = vpow.pop %v1320
    %v1322 = vadd.f32 %v1312, %v1321
    %v1323 = vsub.f32 8.0, %v1182
    %v1324 = vand.u32 2147483647, %v1323
    %v1325 = vsub.f32 1.0, %v1324
    %v1326 = vmax.f32 %v1325, 0.0
    %v1327 = vmul.f32 %v1326, %v1216
    %v1328 = vadd.f32 %v1318, %v1327
    %v1329 = vsub.f32 %v1217, %v1238
    %v1330 = vmul.f32 %v1329, 1.442695
    %v1331 = vpow.pop %v1330
    %v1332 = vadd.f32 %v1322, %v1331
    %v1333 = vsub.f32 9.0, %v1182
    %v1334 = vand.u32 2147483647, %v1333
    %v1335 = vsub.f32 1.0, %v1334
    %v1336 = vmax.f32 %v1335, 0.0
    %v1337 = vmul.f32 %v1336, %v1217
    %v1338 = vadd.f32 %v1328, %v1337
    %v1339 = vsub.f32 %v1218, %v1238
    %v1340 = vmul.f32 %v1339, 1.442695
    %v1341 = vpow.pop %v1340
    %v1342 = vadd.f32 %v1332, %v1341
    %v1343 = vsub.f32 10.0, %v1182
    %v1344 = vand.u32 2147483647, %v1343
    %v1345 = vsub.f32 1.0, %v1344
    %v1346 = vmax.f32 %v1345, 0.0
    %v1347 = vmul.f32 %v1346, %v1218
    %v1348 = vadd.f32 %v1338, %v1347
    %v1349 = vsub.f32 %v1219, %v1238
    %v1350 = vmul.f32 %v1349, 1.442695
    %v1351 = vpow.pop %v1350
    %v1352 = vadd.f32 %v1342, %v1351
    %v1353 = vsub.f32 11.0, %v1182
    %v1354 = vand.u32 2147483647, %v1353
    %v1355 = vsub.f32 1.0, %v1354
    %v1356 = vmax.f32 %v1355, 0.0
    %v1357 = vmul.f32 %v1356, %v1219
    %v1358 = vadd.f32 %v1348, %v1357
    %v1359 = vsub.f32 %v1220, %v1238
    %v1360 = vmul.f32 %v1359, 1.442695
    %v1361 = vpow.pop %v1360
    %v1362 = vadd.f32 %v1352, %v1361
    %v1363 = vsub.f32 12.0, %v1182
    %v1364 = vand.u32 2147483647, %v1363
    %v1365 = vsub.f32 1.0, %v1364
    %v1366 = vmax.f32 %v1365, 0.0
    %v1367 = vmul.f32 %v1366, %v1220
    %v1368 = vadd.f32 %v1358, %v1367
    %v1369 = vsub.f32 %v1221, %v1238
    %v1370 = vmul.f32 %v1369, 1.442695
    %v1371 = vpow.pop %v1370
    %v1372 = vadd.f32 %v1362, %v1371
    %v1373 = vsub.f32 13.0, %v1182
    %v1374 = vand.u32 2147483647, %v1373
    %v1375 = vsub.f32 1.0, %v1374
    %v1376 = vmax.f32 %v1375, 0.0
    %v1377 = vmul.f32 %v1376, %v1221
    %v1378 = vadd.f32 %v1368, %v1377
    %v1379 = vsub.f32 %v1222, %v1238
    %v1380 = vmul.f32 %v1379, 1.442695
    %v1381 = vpow.pop %v1380
    %v1382 = vadd.f32 %v1372, %v1381
    %v1383 = vsub.f32 14.0, %v1182
    %v1384 = vand.u32 2147483647, %v1383
    %v1385 = vsub.f32 1.0, %v1384
    %v1386 = vmax.f32 %v1385, 0.0
    %v1387 = vmul.f32 %v1386, %v1222
    %v1388 = vadd.f32 %v1378, %v1387
    %v1389 = vsub.f32 %v1223, %v1238
    %v1390 = vmul.f32 %v1389, 1.442695
    %v1391 = vpow.pop %v1390
    %v1392 = vadd.f32 %v1382, %v1391
    %v1393 = vsub.f32 15.0, %v1182
    %v1394 = vand.u32 2147483647, %v1393
    %v1395 = vsub.f32 1.0, %v1394
    %v1396 = vmax.f32 %v1395, 0.0
    %v1397 = vmul.f32 %v1396, %v1223
    %v1398 = vadd.f32 %v1388, %v1397
    %v1399 = vlog2.pop %v1392
    %v1400 = vmul.f32 %v1399, 0.6931472
    %v1401 = vadd.f32 %v1238, %v1400
    %v1402 = vsub.f32 %v1401, %v1398
    %v1403 = vadd.f32 %v1402, 0.0
    %v1404 = vld [vmem:[%s402 + $0x4] sm:$0xf]
    %v1405 = vld [vmem:[%s402 + $0x10] sm:$0xf]
    %v1406 = vld [vmem:[%s402 + $0x1c] sm:$0xf]
    %v1407 = vld [vmem:[%s402 + $0x28] sm:$0xf]
    %v1408 = vld [vmem:[%s402 + $0x34] sm:$0xf]
    %v1409 = vld [vmem:[%s402 + $0x40] sm:$0xf]
    %v1410 = vld [vmem:[%s402 + $0x4c] sm:$0xf]
    %v1411 = vld [vmem:[%s402 + $0x58] sm:$0xf]
    %v1412 = vld [vmem:[%s402 + $0x64] sm:$0xf]
    %v1413 = vld [vmem:[%s402 + $0x70] sm:$0xf]
    %v1414 = vld [vmem:[%s402 + $0x7c] sm:$0xf]
    %v1415 = vld [vmem:[%s402 + $0x88] sm:$0xf]
    %v1416 = vld [vmem:[%s402 + $0x94] sm:$0xf]
    %v1417 = vld [vmem:[%s402 + $0xa0] sm:$0xf]
    %v1418 = vld [vmem:[%s402 + $0xac] sm:$0xf]
    %v1419 = vld [vmem:[%s402 + $0xb8] sm:$0xf]
    %v1420 = vunpack.c.l.bf16 %v1404
    %v1421 = vunpack.c.l.bf16 %v1405
    %v1422 = vunpack.c.l.bf16 %v1406
    %v1423 = vunpack.c.l.bf16 %v1407
    %v1424 = vunpack.c.l.bf16 %v1408
    %v1425 = vunpack.c.l.bf16 %v1409
    %v1426 = vunpack.c.l.bf16 %v1410
    %v1427 = vunpack.c.l.bf16 %v1411
    %v1428 = vunpack.c.l.bf16 %v1412
    %v1429 = vunpack.c.l.bf16 %v1413
    %v1430 = vunpack.c.l.bf16 %v1414
    %v1431 = vunpack.c.l.bf16 %v1415
    %v1432 = vunpack.c.l.bf16 %v1416
    %v1433 = vunpack.c.l.bf16 %v1417
    %v1434 = vunpack.c.l.bf16 %v1418
    %v1435 = vunpack.c.l.bf16 %v1419
    %v1436 = vmax.f32 %v1420, %v1424
    %v1437 = vmax.f32 %v1421, %v1425
    %v1438 = vmax.f32 %v1422, %v1426
    %v1439 = vmax.f32 %v1423, %v1427
    %v1440 = vmax.f32 %v1436, %v1428
    %v1441 = vmax.f32 %v1437, %v1429
    %v1442 = vmax.f32 %v1438, %v1430
    %v1443 = vmax.f32 %v1439, %v1431
    %v1444 = vmax.f32 %v1440, %v1432
    %v1445 = vmax.f32 %v1441, %v1433
    %v1446 = vmax.f32 %v1442, %v1434
    %v1447 = vmax.f32 %v1443, %v1435
    %v1448 = vmax.f32 %v1444, %v1445
    %v1449 = vmax.f32 %v1446, %v1447
    %v1450 = vmax.f32 %v1448, %v1449
    %v1451 = vsub.f32 %v1420, %v1450
    %v1452 = vmul.f32 %v1451, 1.442695
    %v1453 = vpow.pop %v1452
    %v1454 = vadd.f32 %v1453, 0.0
    %v1455 = vsub.f32 0.0, %v1185
    %v1456 = vand.u32 2147483647, %v1455
    %v1457 = vsub.f32 1.0, %v1456
    %v1458 = vmax.f32 %v1457, 0.0
    %v1459 = vmul.f32 %v1458, %v1420
    %v1460 = vadd.f32 %v1459, 0.0
    %v1461 = vsub.f32 %v1421, %v1450
    %v1462 = vmul.f32 %v1461, 1.442695
    %v1463 = vpow.pop %v1462
    %v1464 = vadd.f32 %v1454, %v1463
    %v1465 = vsub.f32 1.0, %v1185
    %v1466 = vand.u32 2147483647, %v1465
    %v1467 = vsub.f32 1.0, %v1466
    %v1468 = vmax.f32 %v1467, 0.0
    %v1469 = vmul.f32 %v1468, %v1421
    %v1470 = vadd.f32 %v1460, %v1469
    %v1471 = vsub.f32 %v1422, %v1450
    %v1472 = vmul.f32 %v1471, 1.442695
    %v1473 = vpow.pop %v1472
    %v1474 = vadd.f32 %v1464, %v1473
    %v1475 = vsub.f32 2.0, %v1185
    %v1476 = vand.u32 2147483647, %v1475
    %v1477 = vsub.f32 1.0, %v1476
    %v1478 = vmax.f32 %v1477, 0.0
    %v1479 = vmul.f32 %v1478, %v1422
    %v1480 = vadd.f32 %v1470, %v1479
    %v1481 = vsub.f32 %v1423, %v1450
    %v1482 = vmul.f32 %v1481, 1.442695
    %v1483 = vpow.pop %v1482
    %v1484 = vadd.f32 %v1474, %v1483
    %v1485 = vsub.f32 3.0, %v1185
    %v1486 = vand.u32 2147483647, %v1485
    %v1487 = vsub.f32 1.0, %v1486
    %v1488 = vmax.f32 %v1487, 0.0
    %v1489 = vmul.f32 %v1488, %v1423
    %v1490 = vadd.f32 %v1480, %v1489
    %v1491 = vsub.f32 %v1424, %v1450
    %v1492 = vmul.f32 %v1491, 1.442695
    %v1493 = vpow.pop %v1492
    %v1494 = vadd.f32 %v1484, %v1493
    %v1495 = vsub.f32 4.0, %v1185
    %v1496 = vand.u32 2147483647, %v1495
    %v1497 = vsub.f32 1.0, %v1496
    %v1498 = vmax.f32 %v1497, 0.0
    %v1499 = vmul.f32 %v1498, %v1424
    %v1500 = vadd.f32 %v1490, %v1499
    %v1501 = vsub.f32 %v1425, %v1450
    %v1502 = vmul.f32 %v1501, 1.442695
    %v1503 = vpow.pop %v1502
    %v1504 = vadd.f32 %v1494, %v1503
    %v1505 = vsub.f32 5.0, %v1185
    %v1506 = vand.u32 2147483647, %v1505
    %v1507 = vsub.f32 1.0, %v1506
    %v1508 = vmax.f32 %v1507, 0.0
    %v1509 = vmul.f32 %v1508, %v1425
    %v1510 = vadd.f32 %v1500, %v1509
    %v1511 = vsub.f32 %v1426, %v1450
    %v1512 = vmul.f32 %v1511, 1.442695
    %v1513 = vpow.pop %v1512
    %v1514 = vadd.f32 %v1504, %v1513
    %v1515 = vsub.f32 6.0, %v1185
    %v1516 = vand.u32 2147483647, %v1515
    %v1517 = vsub.f32 1.0, %v1516
    %v1518 = vmax.f32 %v1517, 0.0
    %v1519 = vmul.f32 %v1518, %v1426
    %v1520 = vadd.f32 %v1510, %v1519
    %v1521 = vsub.f32 %v1427, %v1450
    %v1522 = vmul.f32 %v1521, 1.442695
    %v1523 = vpow.pop %v1522
    %v1524 = vadd.f32 %v1514, %v1523
    %v1525 = vsub.f32 7.0, %v1185
    %v1526 = vand.u32 2147483647, %v1525
    %v1527 = vsub.f32 1.0, %v1526
    %v1528 = vmax.f32 %v1527, 0.0
    %v1529 = vmul.f32 %v1528, %v1427
    %v1530 = vadd.f32 %v1520, %v1529
    %v1531 = vsub.f32 %v1428, %v1450
    %v1532 = vmul.f32 %v1531, 1.442695
    %v1533 = vpow.pop %v1532
    %v1534 = vadd.f32 %v1524, %v1533
    %v1535 = vsub.f32 8.0, %v1185
    %v1536 = vand.u32 2147483647, %v1535
    %v1537 = vsub.f32 1.0, %v1536
    %v1538 = vmax.f32 %v1537, 0.0
    %v1539 = vmul.f32 %v1538, %v1428
    %v1540 = vadd.f32 %v1530, %v1539
    %v1541 = vsub.f32 %v1429, %v1450
    %v1542 = vmul.f32 %v1541, 1.442695
    %v1543 = vpow.pop %v1542
    %v1544 = vadd.f32 %v1534, %v1543
    %v1545 = vsub.f32 9.0, %v1185
    %v1546 = vand.u32 2147483647, %v1545
    %v1547 = vsub.f32 1.0, %v1546
    %v1548 = vmax.f32 %v1547, 0.0
    %v1549 = vmul.f32 %v1548, %v1429
    %v1550 = vadd.f32 %v1540, %v1549
    %v1551 = vsub.f32 %v1430, %v1450
    %v1552 = vmul.f32 %v1551, 1.442695
    %v1553 = vpow.pop %v1552
    %v1554 = vadd.f32 %v1544, %v1553
    %v1555 = vsub.f32 10.0, %v1185
    %v1556 = vand.u32 2147483647, %v1555
    %v1557 = vsub.f32 1.0, %v1556
    %v1558 = vmax.f32 %v1557, 0.0
    %v1559 = vmul.f32 %v1558, %v1430
    %v1560 = vadd.f32 %v1550, %v1559
    %v1561 = vsub.f32 %v1431, %v1450
    %v1562 = vmul.f32 %v1561, 1.442695
    %v1563 = vpow.pop %v1562
    %v1564 = vadd.f32 %v1554, %v1563
    %v1565 = vsub.f32 11.0, %v1185
    %v1566 = vand.u32 2147483647, %v1565
    %v1567 = vsub.f32 1.0, %v1566
    %v1568 = vmax.f32 %v1567, 0.0
    %v1569 = vmul.f32 %v1568, %v1431
    %v1570 = vadd.f32 %v1560, %v1569
    %v1571 = vsub.f32 %v1432, %v1450
    %v1572 = vmul.f32 %v1571, 1.442695
    %v1573 = vpow.pop %v1572
    %v1574 = vadd.f32 %v1564, %v1573
    %v1575 = vsub.f32 12.0, %v1185
    %v1576 = vand.u32 2147483647, %v1575
    %v1577 = vsub.f32 1.0, %v1576
    %v1578 = vmax.f32 %v1577, 0.0
    %v1579 = vmul.f32 %v1578, %v1432
    %v1580 = vadd.f32 %v1570, %v1579
    %v1581 = vsub.f32 %v1433, %v1450
    %v1582 = vmul.f32 %v1581, 1.442695
    %v1583 = vpow.pop %v1582
    %v1584 = vadd.f32 %v1574, %v1583
    %v1585 = vsub.f32 13.0, %v1185
    %v1586 = vand.u32 2147483647, %v1585
    %v1587 = vsub.f32 1.0, %v1586
    %v1588 = vmax.f32 %v1587, 0.0
    %v1589 = vmul.f32 %v1588, %v1433
    %v1590 = vadd.f32 %v1580, %v1589
    %v1591 = vsub.f32 %v1434, %v1450
    %v1592 = vmul.f32 %v1591, 1.442695
    %v1593 = vpow.pop %v1592
    %v1594 = vadd.f32 %v1584, %v1593
    %v1595 = vsub.f32 14.0, %v1185
    %v1596 = vand.u32 2147483647, %v1595
    %v1597 = vsub.f32 1.0, %v1596
    %v1598 = vmax.f32 %v1597, 0.0
    %v1599 = vmul.f32 %v1598, %v1434
    %v1600 = vadd.f32 %v1590, %v1599
    %v1601 = vsub.f32 %v1435, %v1450
    %v1602 = vmul.f32 %v1601, 1.442695
    %v1603 = vpow.pop %v1602
    %v1604 = vadd.f32 %v1594, %v1603
    %v1605 = vsub.f32 15.0, %v1185
    %v1606 = vand.u32 2147483647, %v1605
    %v1607 = vsub.f32 1.0, %v1606
    %v1608 = vmax.f32 %v1607, 0.0
    %v1609 = vmul.f32 %v1608, %v1435
    %v1610 = vadd.f32 %v1600, %v1609
    %v1611 = vlog2.pop %v1604
    %v1612 = vmul.f32 %v1611, 0.6931472
    %v1613 = vadd.f32 %v1450, %v1612
    %v1614 = vsub.f32 %v1613, %v1610
    %v1615 = vadd.f32 %v1403, %v1614
    %v1616 = vld [vmem:[%s615 + $0x4] sm:$0xf]
    %v1617 = vld [vmem:[%s615 + $0x10] sm:$0xf]
    %v1618 = vld [vmem:[%s615 + $0x1c] sm:$0xf]
    %v1619 = vld [vmem:[%s615 + $0x28] sm:$0xf]
    %v1620 = vld [vmem:[%s615 + $0x34] sm:$0xf]
    %v1621 = vld [vmem:[%s615 + $0x40] sm:$0xf]
    %v1622 = vld [vmem:[%s615 + $0x4c] sm:$0xf]
    %v1623 = vld [vmem:[%s615 + $0x58] sm:$0xf]
    %v1624 = vld [vmem:[%s615 + $0x64] sm:$0xf]
    %v1625 = vld [vmem:[%s615 + $0x70] sm:$0xf]
    %v1626 = vld [vmem:[%s615 + $0x7c] sm:$0xf]
    %v1627 = vld [vmem:[%s615 + $0x88] sm:$0xf]
    %v1628 = vld [vmem:[%s615 + $0x94] sm:$0xf]
    %v1629 = vld [vmem:[%s615 + $0xa0] sm:$0xf]
    %v1630 = vld [vmem:[%s615 + $0xac] sm:$0xf]
    %v1631 = vld [vmem:[%s615 + $0xb8] sm:$0xf]
    %v1632 = vunpack.c.l.bf16 %v1616
    %v1633 = vunpack.c.l.bf16 %v1617
    %v1634 = vunpack.c.l.bf16 %v1618
    %v1635 = vunpack.c.l.bf16 %v1619
    %v1636 = vunpack.c.l.bf16 %v1620
    %v1637 = vunpack.c.l.bf16 %v1621
    %v1638 = vunpack.c.l.bf16 %v1622
    %v1639 = vunpack.c.l.bf16 %v1623
    %v1640 = vunpack.c.l.bf16 %v1624
    %v1641 = vunpack.c.l.bf16 %v1625
    %v1642 = vunpack.c.l.bf16 %v1626
    %v1643 = vunpack.c.l.bf16 %v1627
    %v1644 = vunpack.c.l.bf16 %v1628
    %v1645 = vunpack.c.l.bf16 %v1629
    %v1646 = vunpack.c.l.bf16 %v1630
    %v1647 = vunpack.c.l.bf16 %v1631
    %v1648 = vmax.f32 %v1632, %v1636
    %v1649 = vmax.f32 %v1633, %v1637
    %v1650 = vmax.f32 %v1634, %v1638
    %v1651 = vmax.f32 %v1635, %v1639
    %v1652 = vmax.f32 %v1648, %v1640
    %v1653 = vmax.f32 %v1649, %v1641
    %v1654 = vmax.f32 %v1650, %v1642
    %v1655 = vmax.f32 %v1651, %v1643
    %v1656 = vmax.f32 %v1652, %v1644
    %v1657 = vmax.f32 %v1653, %v1645
    %v1658 = vmax.f32 %v1654, %v1646
    %v1659 = vmax.f32 %v1655, %v1647
    %v1660 = vmax.f32 %v1656, %v1657
    %v1661 = vmax.f32 %v1658, %v1659
    %v1662 = vmax.f32 %v1660, %v1661
    %v1663 = vsub.f32 %v1632, %v1662
    %v1664 = vmul.f32 %v1663, 1.442695
    %v1665 = vpow.pop %v1664
    %v1666 = vadd.f32 %v1665, 0.0
    %v1667 = vsub.f32 0.0, %v1188
    %v1668 = vand.u32 2147483647, %v1667
    %v1669 = vsub.f32 1.0, %v1668
    %v1670 = vmax.f32 %v1669, 0.0
    %v1671 = vmul.f32 %v1670, %v1632
    %v1672 = vadd.f32 %v1671, 0.0
    %v1673 = vsub.f32 %v1633, %v1662
    %v1674 = vmul.f32 %v1673, 1.442695
    %v1675 = vpow.pop %v1674
    %v1676 = vadd.f32 %v1666, %v1675
    %v1677 = vsub.f32 1.0, %v1188
    %v1678 = vand.u32 2147483647, %v1677
    %v1679 = vsub.f32 1.0, %v1678
    %v1680 = vmax.f32 %v1679, 0.0
    %v1681 = vmul.f32 %v1680, %v1633
    %v1682 = vadd.f32 %v1672, %v1681
    %v1683 = vsub.f32 %v1634, %v1662
    %v1684 = vmul.f32 %v1683, 1.442695
    %v1685 = vpow.pop %v1684
    %v1686 = vadd.f32 %v1676, %v1685
    %v1687 = vsub.f32 2.0, %v1188
    %v1688 = vand.u32 2147483647, %v1687
    %v1689 = vsub.f32 1.0, %v1688
    %v1690 = vmax.f32 %v1689, 0.0
    %v1691 = vmul.f32 %v1690, %v1634
    %v1692 = vadd.f32 %v1682, %v1691
    %v1693 = vsub.f32 %v1635, %v1662
    %v1694 = vmul.f32 %v1693, 1.442695
    %v1695 = vpow.pop %v1694
    %v1696 = vadd.f32 %v1686, %v1695
    %v1697 = vsub.f32 3.0, %v1188
    %v1698 = vand.u32 2147483647, %v1697
    %v1699 = vsub.f32 1.0, %v1698
    %v1700 = vmax.f32 %v1699, 0.0
    %v1701 = vmul.f32 %v1700, %v1635
    %v1702 = vadd.f32 %v1692, %v1701
    %v1703 = vsub.f32 %v1636, %v1662
    %v1704 = vmul.f32 %v1703, 1.442695
    %v1705 = vpow.pop %v1704
    %v1706 = vadd.f32 %v1696, %v1705
    %v1707 = vsub.f32 4.0, %v1188
    %v1708 = vand.u32 2147483647, %v1707
    %v1709 = vsub.f32 1.0, %v1708
    %v1710 = vmax.f32 %v1709, 0.0
    %v1711 = vmul.f32 %v1710, %v1636
    %v1712 = vadd.f32 %v1702, %v1711
    %v1713 = vsub.f32 %v1637, %v1662
    %v1714 = vmul.f32 %v1713, 1.442695
    %v1715 = vpow.pop %v1714
    %v1716 = vadd.f32 %v1706, %v1715
    %v1717 = vsub.f32 5.0, %v1188
    %v1718 = vand.u32 2147483647, %v1717
    %v1719 = vsub.f32 1.0, %v1718
    %v1720 = vmax.f32 %v1719, 0.0
    %v1721 = vmul.f32 %v1720, %v1637
    %v1722 = vadd.f32 %v1712, %v1721
    %v1723 = vsub.f32 %v1638, %v1662
    %v1724 = vmul.f32 %v1723, 1.442695
    %v1725 = vpow.pop %v1724
    %v1726 = vadd.f32 %v1716, %v1725
    %v1727 = vsub.f32 6.0, %v1188
    %v1728 = vand.u32 2147483647, %v1727
    %v1729 = vsub.f32 1.0, %v1728
    %v1730 = vmax.f32 %v1729, 0.0
    %v1731 = vmul.f32 %v1730, %v1638
    %v1732 = vadd.f32 %v1722, %v1731
    %v1733 = vsub.f32 %v1639, %v1662
    %v1734 = vmul.f32 %v1733, 1.442695
    %v1735 = vpow.pop %v1734
    %v1736 = vadd.f32 %v1726, %v1735
    %v1737 = vsub.f32 7.0, %v1188
    %v1738 = vand.u32 2147483647, %v1737
    %v1739 = vsub.f32 1.0, %v1738
    %v1740 = vmax.f32 %v1739, 0.0
    %v1741 = vmul.f32 %v1740, %v1639
    %v1742 = vadd.f32 %v1732, %v1741
    %v1743 = vsub.f32 %v1640, %v1662
    %v1744 = vmul.f32 %v1743, 1.442695
    %v1745 = vpow.pop %v1744
    %v1746 = vadd.f32 %v1736, %v1745
    %v1747 = vsub.f32 8.0, %v1188
    %v1748 = vand.u32 2147483647, %v1747
    %v1749 = vsub.f32 1.0, %v1748
    %v1750 = vmax.f32 %v1749, 0.0
    %v1751 = vmul.f32 %v1750, %v1640
    %v1752 = vadd.f32 %v1742, %v1751
    %v1753 = vsub.f32 %v1641, %v1662
    %v1754 = vmul.f32 %v1753, 1.442695
    %v1755 = vpow.pop %v1754
    %v1756 = vadd.f32 %v1746, %v1755
    %v1757 = vsub.f32 9.0, %v1188
    %v1758 = vand.u32 2147483647, %v1757
    %v1759 = vsub.f32 1.0, %v1758
    %v1760 = vmax.f32 %v1759, 0.0
    %v1761 = vmul.f32 %v1760, %v1641
    %v1762 = vadd.f32 %v1752, %v1761
    %v1763 = vsub.f32 %v1642, %v1662
    %v1764 = vmul.f32 %v1763, 1.442695
    %v1765 = vpow.pop %v1764
    %v1766 = vadd.f32 %v1756, %v1765
    %v1767 = vsub.f32 10.0, %v1188
    %v1768 = vand.u32 2147483647, %v1767
    %v1769 = vsub.f32 1.0, %v1768
    %v1770 = vmax.f32 %v1769, 0.0
    %v1771 = vmul.f32 %v1770, %v1642
    %v1772 = vadd.f32 %v1762, %v1771
    %v1773 = vsub.f32 %v1643, %v1662
    %v1774 = vmul.f32 %v1773, 1.442695
    %v1775 = vpow.pop %v1774
    %v1776 = vadd.f32 %v1766, %v1775
    %v1777 = vsub.f32 11.0, %v1188
    %v1778 = vand.u32 2147483647, %v1777
    %v1779 = vsub.f32 1.0, %v1778
    %v1780 = vmax.f32 %v1779, 0.0
    %v1781 = vmul.f32 %v1780, %v1643
    %v1782 = vadd.f32 %v1772, %v1781
    %v1783 = vsub.f32 %v1644, %v1662
    %v1784 = vmul.f32 %v1783, 1.442695
    %v1785 = vpow.pop %v1784
    %v1786 = vadd.f32 %v1776, %v1785
    %v1787 = vsub.f32 12.0, %v1188
    %v1788 = vand.u32 2147483647, %v1787
    %v1789 = vsub.f32 1.0, %v1788
    %v1790 = vmax.f32 %v1789, 0.0
    %v1791 = vmul.f32 %v1790, %v1644
    %v1792 = vadd.f32 %v1782, %v1791
    %v1793 = vsub.f32 %v1645, %v1662
    %v1794 = vmul.f32 %v1793, 1.442695
    %v1795 = vpow.pop %v1794
    %v1796 = vadd.f32 %v1786, %v1795
    %v1797 = vsub.f32 13.0, %v1188
    %v1798 = vand.u32 2147483647, %v1797
    %v1799 = vsub.f32 1.0, %v1798
    %v1800 = vmax.f32 %v1799, 0.0
    %v1801 = vmul.f32 %v1800, %v1645
    %v1802 = vadd.f32 %v1792, %v1801
    %v1803 = vsub.f32 %v1646, %v1662
    %v1804 = vmul.f32 %v1803, 1.442695
    %v1805 = vpow.pop %v1804
    %v1806 = vadd.f32 %v1796, %v1805
    %v1807 = vsub.f32 14.0, %v1188
    %v1808 = vand.u32 2147483647, %v1807
    %v1809 = vsub.f32 1.0, %v1808
    %v1810 = vmax.f32 %v1809, 0.0
    %v1811 = vmul.f32 %v1810, %v1646
    %v1812 = vadd.f32 %v1802, %v1811
    %v1813 = vsub.f32 %v1647, %v1662
    %v1814 = vmul.f32 %v1813, 1.442695
    %v1815 = vpow.pop %v1814
    %v1816 = vadd.f32 %v1806, %v1815
    %v1817 = vsub.f32 15.0, %v1188
    %v1818 = vand.u32 2147483647, %v1817
    %v1819 = vsub.f32 1.0, %v1818
    %v1820 = vmax.f32 %v1819, 0.0
    %v1821 = vmul.f32 %v1820, %v1647
    %v1822 = vadd.f32 %v1812, %v1821
    %v1823 = vlog2.pop %v1816
    %v1824 = vmul.f32 %v1823, 0.6931472
    %v1825 = vadd.f32 %v1662, %v1824
    %v1826 = vsub.f32 %v1825, %v1822
    %v1827 = vadd.f32 %v1615, %v1826
    %v1828 = vld [vmem:[%s828 + $0x4] sm:$0xf]
    %v1829 = vld [vmem:[%s828 + $0x10] sm:$0xf]
    %v1830 = vld [vmem:[%s828 + $0x1c] sm:$0xf]
    %v1831 = vld [vmem:[%s828 + $0x28] sm:$0xf]
    %v1832 = vld [vmem:[%s828 + $0x34] sm:$0xf]
    %v1833 = vld [vmem:[%s828 + $0x40] sm:$0xf]
    %v1834 = vld [vmem:[%s828 + $0x4c] sm:$0xf]
    %v1835 = vld [vmem:[%s828 + $0x58] sm:$0xf]
    %v1836 = vld [vmem:[%s828 + $0x64] sm:$0xf]
    %v1837 = vld [vmem:[%s828 + $0x70] sm:$0xf]
    %v1838 = vld [vmem:[%s828 + $0x7c] sm:$0xf]
    %v1839 = vld [vmem:[%s828 + $0x88] sm:$0xf]
    %v1840 = vld [vmem:[%s828 + $0x94] sm:$0xf]
    %v1841 = vld [vmem:[%s828 + $0xa0] sm:$0xf]
    %v1842 = vld [vmem:[%s828 + $0xac] sm:$0xf]
    %v1843 = vld [vmem:[%s828 + $0xb8] sm:$0xf]
    %v1844 = vunpack.c.l.bf16 %v1828
    %v1845 = vunpack.c.l.bf16 %v1829
    %v1846 = vunpack.c.l.bf16 %v1830
    %v1847 = vunpack.c.l.bf16 %v1831
    %v1848 = vunpack.c.l.bf16 %v1832
    %v1849 = vunpack.c.l.bf16 %v1833
    %v1850 = vunpack.c.l.bf16 %v1834
    %v1851 = vunpack.c.l.bf16 %v1835
    %v1852 = vunpack.c.l.bf16 %v1836
    %v1853 = vunpack.c.l.bf16 %v1837
    %v1854 = vunpack.c.l.bf16 %v1838
    %v1855 = vunpack.c.l.bf16 %v1839
    %v1856 = vunpack.c.l.bf16 %v1840
    %v1857 = vunpack.c.l.bf16 %v1841
    %v1858 = vunpack.c.l.bf16 %v1842
    %v1859 = vunpack.c.l.bf16 %v1843
    %v1860 = vmax.f32 %v1844, %v1848
    %v1861 = vmax.f32 %v1845, %v1849
    %v1862 = vmax.f32 %v1846, %v1850
    %v1863 = vmax.f32 %v1847, %v1851
    %v1864 = vmax.f32 %v1860, %v1852
    %v1865 = vmax.f32 %v1861, %v1853
    %v1866 = vmax.f32 %v1862, %v1854
    %v1867 = vmax.f32 %v1863, %v1855
    %v1868 = vmax.f32 %v1864, %v1856
    %v1869 = vmax.f32 %v1865, %v1857
    %v1870 = vmax.f32 %v1866, %v1858
    %v1871 = vmax.f32 %v1867, %v1859
    %v1872 = vmax.f32 %v1868, %v1869
    %v1873 = vmax.f32 %v1870, %v1871
    %v1874 = vmax.f32 %v1872, %v1873
    %v1875 = vsub.f32 %v1844, %v1874
    %v1876 = vmul.f32 %v1875, 1.442695
    %v1877 = vpow.pop %v1876
    %v1878 = vadd.f32 %v1877, 0.0
    %v1879 = vsub.f32 0.0, %v1191
    %v1880 = vand.u32 2147483647, %v1879
    %v1881 = vsub.f32 1.0, %v1880
    %v1882 = vmax.f32 %v1881, 0.0
    %v1883 = vmul.f32 %v1882, %v1844
    %v1884 = vadd.f32 %v1883, 0.0
    %v1885 = vsub.f32 %v1845, %v1874
    %v1886 = vmul.f32 %v1885, 1.442695
    %v1887 = vpow.pop %v1886
    %v1888 = vadd.f32 %v1878, %v1887
    %v1889 = vsub.f32 1.0, %v1191
    %v1890 = vand.u32 2147483647, %v1889
    %v1891 = vsub.f32 1.0, %v1890
    %v1892 = vmax.f32 %v1891, 0.0
    %v1893 = vmul.f32 %v1892, %v1845
    %v1894 = vadd.f32 %v1884, %v1893
    %v1895 = vsub.f32 %v1846, %v1874
    %v1896 = vmul.f32 %v1895, 1.442695
    %v1897 = vpow.pop %v1896
    %v1898 = vadd.f32 %v1888, %v1897
    %v1899 = vsub.f32 2.0, %v1191
    %v1900 = vand.u32 2147483647, %v1899
    %v1901 = vsub.f32 1.0, %v1900
    %v1902 = vmax.f32 %v1901, 0.0
    %v1903 = vmul.f32 %v1902, %v1846
    %v1904 = vadd.f32 %v1894, %v1903
    %v1905 = vsub.f32 %v1847, %v1874
    %v1906 = vmul.f32 %v1905, 1.442695
    %v1907 = vpow.pop %v1906
    %v1908 = vadd.f32 %v1898, %v1907
    %v1909 = vsub.f32 3.0, %v1191
    %v1910 = vand.u32 2147483647, %v1909
    %v1911 = vsub.f32 1.0, %v1910
    %v1912 = vmax.f32 %v1911, 0.0
    %v1913 = vmul.f32 %v1912, %v1847
    %v1914 = vadd.f32 %v1904, %v1913
    %v1915 = vsub.f32 %v1848, %v1874
    %v1916 = vmul.f32 %v1915, 1.442695
    %v1917 = vpow.pop %v1916
    %v1918 = vadd.f32 %v1908, %v1917
    %v1919 = vsub.f32 4.0, %v1191
    %v1920 = vand.u32 2147483647, %v1919
    %v1921 = vsub.f32 1.0, %v1920
    %v1922 = vmax.f32 %v1921, 0.0
    %v1923 = vmul.f32 %v1922, %v1848
    %v1924 = vadd.f32 %v1914, %v1923
    %v1925 = vsub.f32 %v1849, %v1874
    %v1926 = vmul.f32 %v1925, 1.442695
    %v1927 = vpow.pop %v1926
    %v1928 = vadd.f32 %v1918, %v1927
    %v1929 = vsub.f32 5.0, %v1191
    %v1930 = vand.u32 2147483647, %v1929
    %v1931 = vsub.f32 1.0, %v1930
    %v1932 = vmax.f32 %v1931, 0.0
    %v1933 = vmul.f32 %v1932, %v1849
    %v1934 = vadd.f32 %v1924, %v1933
    %v1935 = vsub.f32 %v1850, %v1874
    %v1936 = vmul.f32 %v1935, 1.442695
    %v1937 = vpow.pop %v1936
    %v1938 = vadd.f32 %v1928, %v1937
    %v1939 = vsub.f32 6.0, %v1191
    %v1940 = vand.u32 2147483647, %v1939
    %v1941 = vsub.f32 1.0, %v1940
    %v1942 = vmax.f32 %v1941, 0.0
    %v1943 = vmul.f32 %v1942, %v1850
    %v1944 = vadd.f32 %v1934, %v1943
    %v1945 = vsub.f32 %v1851, %v1874
    %v1946 = vmul.f32 %v1945, 1.442695
    %v1947 = vpow.pop %v1946
    %v1948 = vadd.f32 %v1938, %v1947
    %v1949 = vsub.f32 7.0, %v1191
    %v1950 = vand.u32 2147483647, %v1949
    %v1951 = vsub.f32 1.0, %v1950
    %v1952 = vmax.f32 %v1951, 0.0
    %v1953 = vmul.f32 %v1952, %v1851
    %v1954 = vadd.f32 %v1944, %v1953
    %v1955 = vsub.f32 %v1852, %v1874
    %v1956 = vmul.f32 %v1955, 1.442695
    %v1957 = vpow.pop %v1956
    %v1958 = vadd.f32 %v1948, %v1957
    %v1959 = vsub.f32 8.0, %v1191
    %v1960 = vand.u32 2147483647, %v1959
    %v1961 = vsub.f32 1.0, %v1960
    %v1962 = vmax.f32 %v1961, 0.0
    %v1963 = vmul.f32 %v1962, %v1852
    %v1964 = vadd.f32 %v1954, %v1963
    %v1965 = vsub.f32 %v1853, %v1874
    %v1966 = vmul.f32 %v1965, 1.442695
    %v1967 = vpow.pop %v1966
    %v1968 = vadd.f32 %v1958, %v1967
    %v1969 = vsub.f32 9.0, %v1191
    %v1970 = vand.u32 2147483647, %v1969
    %v1971 = vsub.f32 1.0, %v1970
    %v1972 = vmax.f32 %v1971, 0.0
    %v1973 = vmul.f32 %v1972, %v1853
    %v1974 = vadd.f32 %v1964, %v1973
    %v1975 = vsub.f32 %v1854, %v1874
    %v1976 = vmul.f32 %v1975, 1.442695
    %v1977 = vpow.pop %v1976
    %v1978 = vadd.f32 %v1968, %v1977
    %v1979 = vsub.f32 10.0, %v1191
    %v1980 = vand.u32 2147483647, %v1979
    %v1981 = vsub.f32 1.0, %v1980
    %v1982 = vmax.f32 %v1981, 0.0
    %v1983 = vmul.f32 %v1982, %v1854
    %v1984 = vadd.f32 %v1974, %v1983
    %v1985 = vsub.f32 %v1855, %v1874
    %v1986 = vmul.f32 %v1985, 1.442695
    %v1987 = vpow.pop %v1986
    %v1988 = vadd.f32 %v1978, %v1987
    %v1989 = vsub.f32 11.0, %v1191
    %v1990 = vand.u32 2147483647, %v1989
    %v1991 = vsub.f32 1.0, %v1990
    %v1992 = vmax.f32 %v1991, 0.0
    %v1993 = vmul.f32 %v1992, %v1855
    %v1994 = vadd.f32 %v1984, %v1993
    %v1995 = vsub.f32 %v1856, %v1874
    %v1996 = vmul.f32 %v1995, 1.442695
    %v1997 = vpow.pop %v1996
    %v1998 = vadd.f32 %v1988, %v1997
    %v1999 = vsub.f32 12.0, %v1191
    %v2000 = vand.u32 2147483647, %v1999
    %v2001 = vsub.f32 1.0, %v2000
    %v2002 = vmax.f32 %v2001, 0.0
    %v2003 = vmul.f32 %v2002, %v1856
    %v2004 = vadd.f32 %v1994, %v2003
    %v2005 = vsub.f32 %v1857, %v1874
    %v2006 = vmul.f32 %v2005, 1.442695
    %v2007 = vpow.pop %v2006
    %v2008 = vadd.f32 %v1998, %v2007
    %v2009 = vsub.f32 13.0, %v1191
    %v2010 = vand.u32 2147483647, %v2009
    %v2011 = vsub.f32 1.0, %v2010
    %v2012 = vmax.f32 %v2011, 0.0
    %v2013 = vmul.f32 %v2012, %v1857
    %v2014 = vadd.f32 %v2004, %v2013
    %v2015 = vsub.f32 %v1858, %v1874
    %v2016 = vmul.f32 %v2015, 1.442695
    %v2017 = vpow.pop %v2016
    %v2018 = vadd.f32 %v2008, %v2017
    %v2019 = vsub.f32 14.0, %v1191
    %v2020 = vand.u32 2147483647, %v2019
    %v2021 = vsub.f32 1.0, %v2020
    %v2022 = vmax.f32 %v2021, 0.0
    %v2023 = vmul.f32 %v2022, %v1858
    %v2024 = vadd.f32 %v2014, %v2023
    %v2025 = vsub.f32 %v1859, %v1874
    %v2026 = vmul.f32 %v2025, 1.442695
    %v2027 = vpow.pop %v2026
    %v2028 = vadd.f32 %v2018, %v2027
    %v2029 = vsub.f32 15.0, %v1191
    %v2030 = vand.u32 2147483647, %v2029
    %v2031 = vsub.f32 1.0, %v2030
    %v2032 = vmax.f32 %v2031, 0.0
    %v2033 = vmul.f32 %v2032, %v1859
    %v2034 = vadd.f32 %v2024, %v2033
    %v2035 = vlog2.pop %v2028
    %v2036 = vmul.f32 %v2035, 0.6931472
    %v2037 = vadd.f32 %v1874, %v2036
    %v2038 = vsub.f32 %v2037, %v2034
    %v2039 = vadd.f32 %v1827, %v2038
    %v2040 = vmul.f32 %v1055, 0.25
    %v2041 = vmul.f32 %v2039, %v2040
    %v2042 = vsel %vm1175, %v2041, 0.0
    %v2043 = vadd.f32 %v1044, %v2042
    %v2044 = vld [vmem:[#allocation2 + $0x10] sm:$0xff]
    %v2045 = vld [vmem:[#allocation2 + $0x28] sm:$0xff]
    %v2046 = vld [vmem:[#allocation2 + $0x40] sm:$0xff]
    %v2047 = vld [vmem:[#allocation2 + $0x58] sm:$0xff]
    %v2048 = vld [vmem:[#allocation2 + $0x70] sm:$0xff]
    %v2049 = vld [vmem:[#allocation2 + $0x88] sm:$0xff]
    %v2050 = vld [vmem:[#allocation2 + $0xa0] sm:$0xff]
    %v2051 = vld [vmem:[#allocation2 + $0xb8] sm:$0xff]
    %v2052 = vld [vmem:[#allocation2 + $0xd0] sm:$0xff]
    %v2053 = vld [vmem:[#allocation2 + $0xe8] sm:$0xff]
    %v2054 = vld [vmem:[#allocation2 + $0x100] sm:$0xff]
    %v2055 = vld [vmem:[#allocation2 + $0x118] sm:$0xff]
    %v2056 = vsub.f32 %v2046, %v2044
    %v2057 = vsub.f32 %v2047, %v2045
    %v2058 = vadd.f32 %v2057, 1e-07
    %v2059 = vsub.f32 %v2050, %v2048
    %v2060 = vsub.f32 %v2051, %v2049
    %v2061 = vadd.f32 %v2060, 1e-07
    %v2062 = vmin.f32 %v2046, %v2050
    %v2063 = vmax.f32 %v2044, %v2048
    %v2064 = vsub.f32 %v2062, %v2063
    %v2065 = vmax.f32 %v2064, 0.0
    %v2066 = vmin.f32 %v2047, %v2051
    %v2067 = vmax.f32 %v2045, %v2049
    %v2068 = vsub.f32 %v2066, %v2067
    %v2069 = vmax.f32 %v2068, 0.0
    %v2070 = vmul.f32 %v2065, %v2069
    %v2071 = vmul.f32 %v2056, %v2058
    %v2072 = vmul.f32 %v2059, %v2061
    %v2073 = vadd.f32 %v2071, %v2072
    %v2074 = vsub.f32 %v2073, %v2070
    %v2075 = vadd.f32 %v2074, 1e-07
    %v2076 = vrcp.pop %v2075
    %v2077 = vmul.f32 %v2070, %v2076
    %v2078 = vmax.f32 %v2046, %v2050
    %v2079 = vmin.f32 %v2044, %v2048
    %v2080 = vsub.f32 %v2078, %v2079
    %v2081 = vmax.f32 %v2047, %v2051
    %v2082 = vmin.f32 %v2045, %v2049
    %v2083 = vsub.f32 %v2081, %v2082
    %v2084 = vmul.f32 %v2080, %v2080
    %v2085 = vmul.f32 %v2083, %v2083
    %v2086 = vadd.f32 %v2084, %v2085
    %v2087 = vadd.f32 %v2086, 1e-07
    %v2088 = vadd.f32 %v2048, %v2050
    %v2089 = vsub.f32 %v2088, %v2044
    %v2090 = vsub.f32 %v2089, %v2046
    %v2091 = vmul.f32 %v2090, %v2090
    %v2092 = vadd.f32 %v2049, %v2051
    %v2093 = vsub.f32 %v2092, %v2045
    %v2094 = vsub.f32 %v2093, %v2047
    %v2095 = vmul.f32 %v2094, %v2094
    %v2096 = vadd.f32 %v2091, %v2095
    %v2097 = vmul.f32 %v2096, 0.25
    %v2098 = vrcp.pop %v2061
    %v2099 = vmul.f32 %v2059, %v2098
    %vm2100 = vcmp.lt.f32.partialorder %v2099, 0.0
    %v2101 = vsel %vm2100, -1.0, 1.0
    %v2102 = vand.u32 2147483647, %v2099
    %vm2103 = vcmp.gt.f32.partialorder %v2102, 2.4142137
    %vm2104 = vcmp.gt.f32.partialorder %v2102, 0.41421357
    %vm2105 = vmxor %vm2103, 1
    %vm2106 = vmand %vm2104, %vm2105
    %v2107 = vsel %vm2106, 0.7853982, 0.0
    %v2108 = vsel %vm2103, 1.5707964, %v2107
    %v2109 = vmax.f32 %v2102, 1e-30
    %v2110 = vrcp.pop %v2109
    %v2111 = vsub.f32 0.0, %v2110
    %v2112 = vsub.f32 %v2102, 1.0
    %v2113 = vadd.f32 %v2102, 1.0
    %v2114 = vrcp.pop %v2113
    %v2115 = vmul.f32 %v2112, %v2114
    %v2116 = vsel %vm2106, %v2115, %v2102
    %v2117 = vsel %vm2103, %v2111, %v2116
    %v2118 = vmul.f32 %v2117, %v2117
    %v2119 = vmul.f32 %v2118, 0.080537446
    %v2120 = vsub.f32 %v2119, 0.13877685
    %v2121 = vmul.f32 %v2120, %v2118
    %v2122 = vadd.f32 %v2121, 0.19977711
    %v2123 = vmul.f32 %v2122, %v2118
    %v2124 = vsub.f32 %v2123, 0.3333295
    %v2125 = vmul.f32 %v2124, %v2118
    %v2126 = vmul.f32 %v2125, %v2117
    %v2127 = vadd.f32 %v2126, %v2117
    %v2128 = vadd.f32 %v2108, %v2127
    %v2129 = vmul.f32 %v2101, %v2128
    %v2130 = vrcp.pop %v2058
    %v2131 = vmul.f32 %v2056, %v2130
    %vm2132 = vcmp.lt.f32.partialorder %v2131, 0.0
    %v2133 = vsel %vm2132, -1.0, 1.0
    %v2134 = vand.u32 2147483647, %v2131
    %vm2135 = vcmp.gt.f32.partialorder %v2134, 2.4142137
    %vm2136 = vcmp.gt.f32.partialorder %v2134, 0.41421357
    %vm2137 = vmxor %vm2135, 1
    %vm2138 = vmand %vm2136, %vm2137
    %v2139 = vsel %vm2138, 0.7853982, 0.0
    %v2140 = vsel %vm2135, 1.5707964, %v2139
    %v2141 = vmax.f32 %v2134, 1e-30
    %v2142 = vrcp.pop %v2141
    %v2143 = vsub.f32 0.0, %v2142
    %v2144 = vsub.f32 %v2134, 1.0
    %v2145 = vadd.f32 %v2134, 1.0
    %v2146 = vrcp.pop %v2145
    %v2147 = vmul.f32 %v2144, %v2146
    %v2148 = vsel %vm2138, %v2147, %v2134
    %v2149 = vsel %vm2135, %v2143, %v2148
    %v2150 = vmul.f32 %v2149, %v2149
    %v2151 = vmul.f32 %v2150, 0.080537446
    %v2152 = vsub.f32 %v2151, 0.13877685
    %v2153 = vmul.f32 %v2152, %v2150
    %v2154 = vadd.f32 %v2153, 0.19977711
    %v2155 = vmul.f32 %v2154, %v2150
    %v2156 = vsub.f32 %v2155, 0.3333295
    %v2157 = vmul.f32 %v2156, %v2150
    %v2158 = vmul.f32 %v2157, %v2149
    %v2159 = vadd.f32 %v2158, %v2149
    %v2160 = vadd.f32 %v2140, %v2159
    %v2161 = vmul.f32 %v2133, %v2160
    %v2162 = vsub.f32 %v2129, %v2161
    %v2163 = vmul.f32 %v2162, %v2162
    %v2164 = vmul.f32 %v2163, 0.40528473
    %v2165 = vsub.f32 %v2164, %v2077
    %v2166 = vadd.f32 %v2165, 1.0000001
    %v2167 = vrcp.pop %v2166
    %v2168 = vmul.f32 %v2164, %v2167
    %v2169 = vrcp.pop %v2087
    %v2170 = vmul.f32 %v2097, %v2169
    %v2171 = vmul.f32 %v2164, %v2168
    %v2172 = vadd.f32 %v2170, %v2171
    %v2173 = vsub.f32 %v2077, %v2172
    %vm2174 = vcmp.gt.f32.partialorder %v2055, 0.0
    %v2175 = vsub.f32 1.0, %v2173
    %v2176 = vmul.f32 %v2175, %v2054
    %v2177 = vsel %vm2174, %v2176, 0.0
    %v2178 = vadd.f32 %v1179, %v2177
    %v2179 = vsub.f32 %v2052, %v2048
    %v2180 = vmax.f32 %v2179, 0.0
    %v2181 = vmin.f32 %v2180, 14.99
    %v2182 = vsub.f32 %v2053, %v2049
    %v2183 = vmax.f32 %v2182, 0.0
    %v2184 = vmin.f32 %v2183, 14.99
    %v2185 = vsub.f32 %v2050, %v2052
    %v2186 = vmax.f32 %v2185, 0.0
    %v2187 = vmin.f32 %v2186, 14.99
    %v2188 = vsub.f32 %v2051, %v2053
    %v2189 = vmax.f32 %v2188, 0.0
    %v2190 = vmin.f32 %v2189, 14.99
    %v2191 = vld [vmem:[#allocation5 + $0x8] sm:$0xf]
    %v2192 = vld [vmem:[#allocation5 + $0x14] sm:$0xf]
    %v2193 = vld [vmem:[#allocation5 + $0x20] sm:$0xf]
    %v2194 = vld [vmem:[#allocation5 + $0x2c] sm:$0xf]
    %v2195 = vld [vmem:[#allocation5 + $0x38] sm:$0xf]
    %v2196 = vld [vmem:[#allocation5 + $0x44] sm:$0xf]
    %v2197 = vld [vmem:[#allocation5 + $0x50] sm:$0xf]
    %v2198 = vld [vmem:[#allocation5 + $0x5c] sm:$0xf]
    %v2199 = vld [vmem:[#allocation5 + $0x68] sm:$0xf]
    %v2200 = vld [vmem:[#allocation5 + $0x74] sm:$0xf]
    %v2201 = vld [vmem:[#allocation5 + $0x80] sm:$0xf]
    %v2202 = vld [vmem:[#allocation5 + $0x8c] sm:$0xf]
    %v2203 = vld [vmem:[#allocation5 + $0x98] sm:$0xf]
    %v2204 = vld [vmem:[#allocation5 + $0xa4] sm:$0xf]
    %v2205 = vld [vmem:[#allocation5 + $0xb0] sm:$0xf]
    %v2206 = vld [vmem:[#allocation5 + $0xbc] sm:$0xf]
    %v2207 = vunpack.c.l.bf16 %v2191
    %v2208 = vunpack.c.l.bf16 %v2192
    %v2209 = vunpack.c.l.bf16 %v2193
    %v2210 = vunpack.c.l.bf16 %v2194
    %v2211 = vunpack.c.l.bf16 %v2195
    %v2212 = vunpack.c.l.bf16 %v2196
    %v2213 = vunpack.c.l.bf16 %v2197
    %v2214 = vunpack.c.l.bf16 %v2198
    %v2215 = vunpack.c.l.bf16 %v2199
    %v2216 = vunpack.c.l.bf16 %v2200
    %v2217 = vunpack.c.l.bf16 %v2201
    %v2218 = vunpack.c.l.bf16 %v2202
    %v2219 = vunpack.c.l.bf16 %v2203
    %v2220 = vunpack.c.l.bf16 %v2204
    %v2221 = vunpack.c.l.bf16 %v2205
    %v2222 = vunpack.c.l.bf16 %v2206
    %v2223 = vmax.f32 %v2207, %v2211
    %v2224 = vmax.f32 %v2208, %v2212
    %v2225 = vmax.f32 %v2209, %v2213
    %v2226 = vmax.f32 %v2210, %v2214
    %v2227 = vmax.f32 %v2223, %v2215
    %v2228 = vmax.f32 %v2224, %v2216
    %v2229 = vmax.f32 %v2225, %v2217
    %v2230 = vmax.f32 %v2226, %v2218
    %v2231 = vmax.f32 %v2227, %v2219
    %v2232 = vmax.f32 %v2228, %v2220
    %v2233 = vmax.f32 %v2229, %v2221
    %v2234 = vmax.f32 %v2230, %v2222
    %v2235 = vmax.f32 %v2231, %v2232
    %v2236 = vmax.f32 %v2233, %v2234
    %v2237 = vmax.f32 %v2235, %v2236
    %v2238 = vsub.f32 %v2207, %v2237
    %v2239 = vmul.f32 %v2238, 1.442695
    %v2240 = vpow.pop %v2239
    %v2241 = vadd.f32 %v2240, 0.0
    %v2242 = vsub.f32 0.0, %v2181
    %v2243 = vand.u32 2147483647, %v2242
    %v2244 = vsub.f32 1.0, %v2243
    %v2245 = vmax.f32 %v2244, 0.0
    %v2246 = vmul.f32 %v2245, %v2207
    %v2247 = vadd.f32 %v2246, 0.0
    %v2248 = vsub.f32 %v2208, %v2237
    %v2249 = vmul.f32 %v2248, 1.442695
    %v2250 = vpow.pop %v2249
    %v2251 = vadd.f32 %v2241, %v2250
    %v2252 = vsub.f32 1.0, %v2181
    %v2253 = vand.u32 2147483647, %v2252
    %v2254 = vsub.f32 1.0, %v2253
    %v2255 = vmax.f32 %v2254, 0.0
    %v2256 = vmul.f32 %v2255, %v2208
    %v2257 = vadd.f32 %v2247, %v2256
    %v2258 = vsub.f32 %v2209, %v2237
    %v2259 = vmul.f32 %v2258, 1.442695
    %v2260 = vpow.pop %v2259
    %v2261 = vadd.f32 %v2251, %v2260
    %v2262 = vsub.f32 2.0, %v2181
    %v2263 = vand.u32 2147483647, %v2262
    %v2264 = vsub.f32 1.0, %v2263
    %v2265 = vmax.f32 %v2264, 0.0
    %v2266 = vmul.f32 %v2265, %v2209
    %v2267 = vadd.f32 %v2257, %v2266
    %v2268 = vsub.f32 %v2210, %v2237
    %v2269 = vmul.f32 %v2268, 1.442695
    %v2270 = vpow.pop %v2269
    %v2271 = vadd.f32 %v2261, %v2270
    %v2272 = vsub.f32 3.0, %v2181
    %v2273 = vand.u32 2147483647, %v2272
    %v2274 = vsub.f32 1.0, %v2273
    %v2275 = vmax.f32 %v2274, 0.0
    %v2276 = vmul.f32 %v2275, %v2210
    %v2277 = vadd.f32 %v2267, %v2276
    %v2278 = vsub.f32 %v2211, %v2237
    %v2279 = vmul.f32 %v2278, 1.442695
    %v2280 = vpow.pop %v2279
    %v2281 = vadd.f32 %v2271, %v2280
    %v2282 = vsub.f32 4.0, %v2181
    %v2283 = vand.u32 2147483647, %v2282
    %v2284 = vsub.f32 1.0, %v2283
    %v2285 = vmax.f32 %v2284, 0.0
    %v2286 = vmul.f32 %v2285, %v2211
    %v2287 = vadd.f32 %v2277, %v2286
    %v2288 = vsub.f32 %v2212, %v2237
    %v2289 = vmul.f32 %v2288, 1.442695
    %v2290 = vpow.pop %v2289
    %v2291 = vadd.f32 %v2281, %v2290
    %v2292 = vsub.f32 5.0, %v2181
    %v2293 = vand.u32 2147483647, %v2292
    %v2294 = vsub.f32 1.0, %v2293
    %v2295 = vmax.f32 %v2294, 0.0
    %v2296 = vmul.f32 %v2295, %v2212
    %v2297 = vadd.f32 %v2287, %v2296
    %v2298 = vsub.f32 %v2213, %v2237
    %v2299 = vmul.f32 %v2298, 1.442695
    %v2300 = vpow.pop %v2299
    %v2301 = vadd.f32 %v2291, %v2300
    %v2302 = vsub.f32 6.0, %v2181
    %v2303 = vand.u32 2147483647, %v2302
    %v2304 = vsub.f32 1.0, %v2303
    %v2305 = vmax.f32 %v2304, 0.0
    %v2306 = vmul.f32 %v2305, %v2213
    %v2307 = vadd.f32 %v2297, %v2306
    %v2308 = vsub.f32 %v2214, %v2237
    %v2309 = vmul.f32 %v2308, 1.442695
    %v2310 = vpow.pop %v2309
    %v2311 = vadd.f32 %v2301, %v2310
    %v2312 = vsub.f32 7.0, %v2181
    %v2313 = vand.u32 2147483647, %v2312
    %v2314 = vsub.f32 1.0, %v2313
    %v2315 = vmax.f32 %v2314, 0.0
    %v2316 = vmul.f32 %v2315, %v2214
    %v2317 = vadd.f32 %v2307, %v2316
    %v2318 = vsub.f32 %v2215, %v2237
    %v2319 = vmul.f32 %v2318, 1.442695
    %v2320 = vpow.pop %v2319
    %v2321 = vadd.f32 %v2311, %v2320
    %v2322 = vsub.f32 8.0, %v2181
    %v2323 = vand.u32 2147483647, %v2322
    %v2324 = vsub.f32 1.0, %v2323
    %v2325 = vmax.f32 %v2324, 0.0
    %v2326 = vmul.f32 %v2325, %v2215
    %v2327 = vadd.f32 %v2317, %v2326
    %v2328 = vsub.f32 %v2216, %v2237
    %v2329 = vmul.f32 %v2328, 1.442695
    %v2330 = vpow.pop %v2329
    %v2331 = vadd.f32 %v2321, %v2330
    %v2332 = vsub.f32 9.0, %v2181
    %v2333 = vand.u32 2147483647, %v2332
    %v2334 = vsub.f32 1.0, %v2333
    %v2335 = vmax.f32 %v2334, 0.0
    %v2336 = vmul.f32 %v2335, %v2216
    %v2337 = vadd.f32 %v2327, %v2336
    %v2338 = vsub.f32 %v2217, %v2237
    %v2339 = vmul.f32 %v2338, 1.442695
    %v2340 = vpow.pop %v2339
    %v2341 = vadd.f32 %v2331, %v2340
    %v2342 = vsub.f32 10.0, %v2181
    %v2343 = vand.u32 2147483647, %v2342
    %v2344 = vsub.f32 1.0, %v2343
    %v2345 = vmax.f32 %v2344, 0.0
    %v2346 = vmul.f32 %v2345, %v2217
    %v2347 = vadd.f32 %v2337, %v2346
    %v2348 = vsub.f32 %v2218, %v2237
    %v2349 = vmul.f32 %v2348, 1.442695
    %v2350 = vpow.pop %v2349
    %v2351 = vadd.f32 %v2341, %v2350
    %v2352 = vsub.f32 11.0, %v2181
    %v2353 = vand.u32 2147483647, %v2352
    %v2354 = vsub.f32 1.0, %v2353
    %v2355 = vmax.f32 %v2354, 0.0
    %v2356 = vmul.f32 %v2355, %v2218
    %v2357 = vadd.f32 %v2347, %v2356
    %v2358 = vsub.f32 %v2219, %v2237
    %v2359 = vmul.f32 %v2358, 1.442695
    %v2360 = vpow.pop %v2359
    %v2361 = vadd.f32 %v2351, %v2360
    %v2362 = vsub.f32 12.0, %v2181
    %v2363 = vand.u32 2147483647, %v2362
    %v2364 = vsub.f32 1.0, %v2363
    %v2365 = vmax.f32 %v2364, 0.0
    %v2366 = vmul.f32 %v2365, %v2219
    %v2367 = vadd.f32 %v2357, %v2366
    %v2368 = vsub.f32 %v2220, %v2237
    %v2369 = vmul.f32 %v2368, 1.442695
    %v2370 = vpow.pop %v2369
    %v2371 = vadd.f32 %v2361, %v2370
    %v2372 = vsub.f32 13.0, %v2181
    %v2373 = vand.u32 2147483647, %v2372
    %v2374 = vsub.f32 1.0, %v2373
    %v2375 = vmax.f32 %v2374, 0.0
    %v2376 = vmul.f32 %v2375, %v2220
    %v2377 = vadd.f32 %v2367, %v2376
    %v2378 = vsub.f32 %v2221, %v2237
    %v2379 = vmul.f32 %v2378, 1.442695
    %v2380 = vpow.pop %v2379
    %v2381 = vadd.f32 %v2371, %v2380
    %v2382 = vsub.f32 14.0, %v2181
    %v2383 = vand.u32 2147483647, %v2382
    %v2384 = vsub.f32 1.0, %v2383
    %v2385 = vmax.f32 %v2384, 0.0
    %v2386 = vmul.f32 %v2385, %v2221
    %v2387 = vadd.f32 %v2377, %v2386
    %v2388 = vsub.f32 %v2222, %v2237
    %v2389 = vmul.f32 %v2388, 1.442695
    %v2390 = vpow.pop %v2389
    %v2391 = vadd.f32 %v2381, %v2390
    %v2392 = vsub.f32 15.0, %v2181
    %v2393 = vand.u32 2147483647, %v2392
    %v2394 = vsub.f32 1.0, %v2393
    %v2395 = vmax.f32 %v2394, 0.0
    %v2396 = vmul.f32 %v2395, %v2222
    %v2397 = vadd.f32 %v2387, %v2396
    %v2398 = vlog2.pop %v2391
    %v2399 = vmul.f32 %v2398, 0.6931472
    %v2400 = vadd.f32 %v2237, %v2399
    %v2401 = vsub.f32 %v2400, %v2397
    %v2402 = vadd.f32 %v2401, 0.0
    %v2403 = vld [vmem:[%s402 + $0x8] sm:$0xf]
    %v2404 = vld [vmem:[%s402 + $0x14] sm:$0xf]
    %v2405 = vld [vmem:[%s402 + $0x20] sm:$0xf]
    %v2406 = vld [vmem:[%s402 + $0x2c] sm:$0xf]
    %v2407 = vld [vmem:[%s402 + $0x38] sm:$0xf]
    %v2408 = vld [vmem:[%s402 + $0x44] sm:$0xf]
    %v2409 = vld [vmem:[%s402 + $0x50] sm:$0xf]
    %v2410 = vld [vmem:[%s402 + $0x5c] sm:$0xf]
    %v2411 = vld [vmem:[%s402 + $0x68] sm:$0xf]
    %v2412 = vld [vmem:[%s402 + $0x74] sm:$0xf]
    %v2413 = vld [vmem:[%s402 + $0x80] sm:$0xf]
    %v2414 = vld [vmem:[%s402 + $0x8c] sm:$0xf]
    %v2415 = vld [vmem:[%s402 + $0x98] sm:$0xf]
    %v2416 = vld [vmem:[%s402 + $0xa4] sm:$0xf]
    %v2417 = vld [vmem:[%s402 + $0xb0] sm:$0xf]
    %v2418 = vld [vmem:[%s402 + $0xbc] sm:$0xf]
    %v2419 = vunpack.c.l.bf16 %v2403
    %v2420 = vunpack.c.l.bf16 %v2404
    %v2421 = vunpack.c.l.bf16 %v2405
    %v2422 = vunpack.c.l.bf16 %v2406
    %v2423 = vunpack.c.l.bf16 %v2407
    %v2424 = vunpack.c.l.bf16 %v2408
    %v2425 = vunpack.c.l.bf16 %v2409
    %v2426 = vunpack.c.l.bf16 %v2410
    %v2427 = vunpack.c.l.bf16 %v2411
    %v2428 = vunpack.c.l.bf16 %v2412
    %v2429 = vunpack.c.l.bf16 %v2413
    %v2430 = vunpack.c.l.bf16 %v2414
    %v2431 = vunpack.c.l.bf16 %v2415
    %v2432 = vunpack.c.l.bf16 %v2416
    %v2433 = vunpack.c.l.bf16 %v2417
    %v2434 = vunpack.c.l.bf16 %v2418
    %v2435 = vmax.f32 %v2419, %v2423
    %v2436 = vmax.f32 %v2420, %v2424
    %v2437 = vmax.f32 %v2421, %v2425
    %v2438 = vmax.f32 %v2422, %v2426
    %v2439 = vmax.f32 %v2435, %v2427
    %v2440 = vmax.f32 %v2436, %v2428
    %v2441 = vmax.f32 %v2437, %v2429
    %v2442 = vmax.f32 %v2438, %v2430
    %v2443 = vmax.f32 %v2439, %v2431
    %v2444 = vmax.f32 %v2440, %v2432
    %v2445 = vmax.f32 %v2441, %v2433
    %v2446 = vmax.f32 %v2442, %v2434
    %v2447 = vmax.f32 %v2443, %v2444
    %v2448 = vmax.f32 %v2445, %v2446
    %v2449 = vmax.f32 %v2447, %v2448
    %v2450 = vsub.f32 %v2419, %v2449
    %v2451 = vmul.f32 %v2450, 1.442695
    %v2452 = vpow.pop %v2451
    %v2453 = vadd.f32 %v2452, 0.0
    %v2454 = vsub.f32 0.0, %v2184
    %v2455 = vand.u32 2147483647, %v2454
    %v2456 = vsub.f32 1.0, %v2455
    %v2457 = vmax.f32 %v2456, 0.0
    %v2458 = vmul.f32 %v2457, %v2419
    %v2459 = vadd.f32 %v2458, 0.0
    %v2460 = vsub.f32 %v2420, %v2449
    %v2461 = vmul.f32 %v2460, 1.442695
    %v2462 = vpow.pop %v2461
    %v2463 = vadd.f32 %v2453, %v2462
    %v2464 = vsub.f32 1.0, %v2184
    %v2465 = vand.u32 2147483647, %v2464
    %v2466 = vsub.f32 1.0, %v2465
    %v2467 = vmax.f32 %v2466, 0.0
    %v2468 = vmul.f32 %v2467, %v2420
    %v2469 = vadd.f32 %v2459, %v2468
    %v2470 = vsub.f32 %v2421, %v2449
    %v2471 = vmul.f32 %v2470, 1.442695
    %v2472 = vpow.pop %v2471
    %v2473 = vadd.f32 %v2463, %v2472
    %v2474 = vsub.f32 2.0, %v2184
    %v2475 = vand.u32 2147483647, %v2474
    %v2476 = vsub.f32 1.0, %v2475
    %v2477 = vmax.f32 %v2476, 0.0
    %v2478 = vmul.f32 %v2477, %v2421
    %v2479 = vadd.f32 %v2469, %v2478
    %v2480 = vsub.f32 %v2422, %v2449
    %v2481 = vmul.f32 %v2480, 1.442695
    %v2482 = vpow.pop %v2481
    %v2483 = vadd.f32 %v2473, %v2482
    %v2484 = vsub.f32 3.0, %v2184
    %v2485 = vand.u32 2147483647, %v2484
    %v2486 = vsub.f32 1.0, %v2485
    %v2487 = vmax.f32 %v2486, 0.0
    %v2488 = vmul.f32 %v2487, %v2422
    %v2489 = vadd.f32 %v2479, %v2488
    %v2490 = vsub.f32 %v2423, %v2449
    %v2491 = vmul.f32 %v2490, 1.442695
    %v2492 = vpow.pop %v2491
    %v2493 = vadd.f32 %v2483, %v2492
    %v2494 = vsub.f32 4.0, %v2184
    %v2495 = vand.u32 2147483647, %v2494
    %v2496 = vsub.f32 1.0, %v2495
    %v2497 = vmax.f32 %v2496, 0.0
    %v2498 = vmul.f32 %v2497, %v2423
    %v2499 = vadd.f32 %v2489, %v2498
    %v2500 = vsub.f32 %v2424, %v2449
    %v2501 = vmul.f32 %v2500, 1.442695
    %v2502 = vpow.pop %v2501
    %v2503 = vadd.f32 %v2493, %v2502
    %v2504 = vsub.f32 5.0, %v2184
    %v2505 = vand.u32 2147483647, %v2504
    %v2506 = vsub.f32 1.0, %v2505
    %v2507 = vmax.f32 %v2506, 0.0
    %v2508 = vmul.f32 %v2507, %v2424
    %v2509 = vadd.f32 %v2499, %v2508
    %v2510 = vsub.f32 %v2425, %v2449
    %v2511 = vmul.f32 %v2510, 1.442695
    %v2512 = vpow.pop %v2511
    %v2513 = vadd.f32 %v2503, %v2512
    %v2514 = vsub.f32 6.0, %v2184
    %v2515 = vand.u32 2147483647, %v2514
    %v2516 = vsub.f32 1.0, %v2515
    %v2517 = vmax.f32 %v2516, 0.0
    %v2518 = vmul.f32 %v2517, %v2425
    %v2519 = vadd.f32 %v2509, %v2518
    %v2520 = vsub.f32 %v2426, %v2449
    %v2521 = vmul.f32 %v2520, 1.442695
    %v2522 = vpow.pop %v2521
    %v2523 = vadd.f32 %v2513, %v2522
    %v2524 = vsub.f32 7.0, %v2184
    %v2525 = vand.u32 2147483647, %v2524
    %v2526 = vsub.f32 1.0, %v2525
    %v2527 = vmax.f32 %v2526, 0.0
    %v2528 = vmul.f32 %v2527, %v2426
    %v2529 = vadd.f32 %v2519, %v2528
    %v2530 = vsub.f32 %v2427, %v2449
    %v2531 = vmul.f32 %v2530, 1.442695
    %v2532 = vpow.pop %v2531
    %v2533 = vadd.f32 %v2523, %v2532
    %v2534 = vsub.f32 8.0, %v2184
    %v2535 = vand.u32 2147483647, %v2534
    %v2536 = vsub.f32 1.0, %v2535
    %v2537 = vmax.f32 %v2536, 0.0
    %v2538 = vmul.f32 %v2537, %v2427
    %v2539 = vadd.f32 %v2529, %v2538
    %v2540 = vsub.f32 %v2428, %v2449
    %v2541 = vmul.f32 %v2540, 1.442695
    %v2542 = vpow.pop %v2541
    %v2543 = vadd.f32 %v2533, %v2542
    %v2544 = vsub.f32 9.0, %v2184
    %v2545 = vand.u32 2147483647, %v2544
    %v2546 = vsub.f32 1.0, %v2545
    %v2547 = vmax.f32 %v2546, 0.0
    %v2548 = vmul.f32 %v2547, %v2428
    %v2549 = vadd.f32 %v2539, %v2548
    %v2550 = vsub.f32 %v2429, %v2449
    %v2551 = vmul.f32 %v2550, 1.442695
    %v2552 = vpow.pop %v2551
    %v2553 = vadd.f32 %v2543, %v2552
    %v2554 = vsub.f32 10.0, %v2184
    %v2555 = vand.u32 2147483647, %v2554
    %v2556 = vsub.f32 1.0, %v2555
    %v2557 = vmax.f32 %v2556, 0.0
    %v2558 = vmul.f32 %v2557, %v2429
    %v2559 = vadd.f32 %v2549, %v2558
    %v2560 = vsub.f32 %v2430, %v2449
    %v2561 = vmul.f32 %v2560, 1.442695
    %v2562 = vpow.pop %v2561
    %v2563 = vadd.f32 %v2553, %v2562
    %v2564 = vsub.f32 11.0, %v2184
    %v2565 = vand.u32 2147483647, %v2564
    %v2566 = vsub.f32 1.0, %v2565
    %v2567 = vmax.f32 %v2566, 0.0
    %v2568 = vmul.f32 %v2567, %v2430
    %v2569 = vadd.f32 %v2559, %v2568
    %v2570 = vsub.f32 %v2431, %v2449
    %v2571 = vmul.f32 %v2570, 1.442695
    %v2572 = vpow.pop %v2571
    %v2573 = vadd.f32 %v2563, %v2572
    %v2574 = vsub.f32 12.0, %v2184
    %v2575 = vand.u32 2147483647, %v2574
    %v2576 = vsub.f32 1.0, %v2575
    %v2577 = vmax.f32 %v2576, 0.0
    %v2578 = vmul.f32 %v2577, %v2431
    %v2579 = vadd.f32 %v2569, %v2578
    %v2580 = vsub.f32 %v2432, %v2449
    %v2581 = vmul.f32 %v2580, 1.442695
    %v2582 = vpow.pop %v2581
    %v2583 = vadd.f32 %v2573, %v2582
    %v2584 = vsub.f32 13.0, %v2184
    %v2585 = vand.u32 2147483647, %v2584
    %v2586 = vsub.f32 1.0, %v2585
    %v2587 = vmax.f32 %v2586, 0.0
    %v2588 = vmul.f32 %v2587, %v2432
    %v2589 = vadd.f32 %v2579, %v2588
    %v2590 = vsub.f32 %v2433, %v2449
    %v2591 = vmul.f32 %v2590, 1.442695
    %v2592 = vpow.pop %v2591
    %v2593 = vadd.f32 %v2583, %v2592
    %v2594 = vsub.f32 14.0, %v2184
    %v2595 = vand.u32 2147483647, %v2594
    %v2596 = vsub.f32 1.0, %v2595
    %v2597 = vmax.f32 %v2596, 0.0
    %v2598 = vmul.f32 %v2597, %v2433
    %v2599 = vadd.f32 %v2589, %v2598
    %v2600 = vsub.f32 %v2434, %v2449
    %v2601 = vmul.f32 %v2600, 1.442695
    %v2602 = vpow.pop %v2601
    %v2603 = vadd.f32 %v2593, %v2602
    %v2604 = vsub.f32 15.0, %v2184
    %v2605 = vand.u32 2147483647, %v2604
    %v2606 = vsub.f32 1.0, %v2605
    %v2607 = vmax.f32 %v2606, 0.0
    %v2608 = vmul.f32 %v2607, %v2434
    %v2609 = vadd.f32 %v2599, %v2608
    %v2610 = vlog2.pop %v2603
    %v2611 = vmul.f32 %v2610, 0.6931472
    %v2612 = vadd.f32 %v2449, %v2611
    %v2613 = vsub.f32 %v2612, %v2609
    %v2614 = vadd.f32 %v2402, %v2613
    %v2615 = vld [vmem:[%s615 + $0x8] sm:$0xf]
    %v2616 = vld [vmem:[%s615 + $0x14] sm:$0xf]
    %v2617 = vld [vmem:[%s615 + $0x20] sm:$0xf]
    %v2618 = vld [vmem:[%s615 + $0x2c] sm:$0xf]
    %v2619 = vld [vmem:[%s615 + $0x38] sm:$0xf]
    %v2620 = vld [vmem:[%s615 + $0x44] sm:$0xf]
    %v2621 = vld [vmem:[%s615 + $0x50] sm:$0xf]
    %v2622 = vld [vmem:[%s615 + $0x5c] sm:$0xf]
    %v2623 = vld [vmem:[%s615 + $0x68] sm:$0xf]
    %v2624 = vld [vmem:[%s615 + $0x74] sm:$0xf]
    %v2625 = vld [vmem:[%s615 + $0x80] sm:$0xf]
    %v2626 = vld [vmem:[%s615 + $0x8c] sm:$0xf]
    %v2627 = vld [vmem:[%s615 + $0x98] sm:$0xf]
    %v2628 = vld [vmem:[%s615 + $0xa4] sm:$0xf]
    %v2629 = vld [vmem:[%s615 + $0xb0] sm:$0xf]
    %v2630 = vld [vmem:[%s615 + $0xbc] sm:$0xf]
    %v2631 = vunpack.c.l.bf16 %v2615
    %v2632 = vunpack.c.l.bf16 %v2616
    %v2633 = vunpack.c.l.bf16 %v2617
    %v2634 = vunpack.c.l.bf16 %v2618
    %v2635 = vunpack.c.l.bf16 %v2619
    %v2636 = vunpack.c.l.bf16 %v2620
    %v2637 = vunpack.c.l.bf16 %v2621
    %v2638 = vunpack.c.l.bf16 %v2622
    %v2639 = vunpack.c.l.bf16 %v2623
    %v2640 = vunpack.c.l.bf16 %v2624
    %v2641 = vunpack.c.l.bf16 %v2625
    %v2642 = vunpack.c.l.bf16 %v2626
    %v2643 = vunpack.c.l.bf16 %v2627
    %v2644 = vunpack.c.l.bf16 %v2628
    %v2645 = vunpack.c.l.bf16 %v2629
    %v2646 = vunpack.c.l.bf16 %v2630
    %v2647 = vmax.f32 %v2631, %v2635
    %v2648 = vmax.f32 %v2632, %v2636
    %v2649 = vmax.f32 %v2633, %v2637
    %v2650 = vmax.f32 %v2634, %v2638
    %v2651 = vmax.f32 %v2647, %v2639
    %v2652 = vmax.f32 %v2648, %v2640
    %v2653 = vmax.f32 %v2649, %v2641
    %v2654 = vmax.f32 %v2650, %v2642
    %v2655 = vmax.f32 %v2651, %v2643
    %v2656 = vmax.f32 %v2652, %v2644
    %v2657 = vmax.f32 %v2653, %v2645
    %v2658 = vmax.f32 %v2654, %v2646
    %v2659 = vmax.f32 %v2655, %v2656
    %v2660 = vmax.f32 %v2657, %v2658
    %v2661 = vmax.f32 %v2659, %v2660
    %v2662 = vsub.f32 %v2631, %v2661
    %v2663 = vmul.f32 %v2662, 1.442695
    %v2664 = vpow.pop %v2663
    %v2665 = vadd.f32 %v2664, 0.0
    %v2666 = vsub.f32 0.0, %v2187
    %v2667 = vand.u32 2147483647, %v2666
    %v2668 = vsub.f32 1.0, %v2667
    %v2669 = vmax.f32 %v2668, 0.0
    %v2670 = vmul.f32 %v2669, %v2631
    %v2671 = vadd.f32 %v2670, 0.0
    %v2672 = vsub.f32 %v2632, %v2661
    %v2673 = vmul.f32 %v2672, 1.442695
    %v2674 = vpow.pop %v2673
    %v2675 = vadd.f32 %v2665, %v2674
    %v2676 = vsub.f32 1.0, %v2187
    %v2677 = vand.u32 2147483647, %v2676
    %v2678 = vsub.f32 1.0, %v2677
    %v2679 = vmax.f32 %v2678, 0.0
    %v2680 = vmul.f32 %v2679, %v2632
    %v2681 = vadd.f32 %v2671, %v2680
    %v2682 = vsub.f32 %v2633, %v2661
    %v2683 = vmul.f32 %v2682, 1.442695
    %v2684 = vpow.pop %v2683
    %v2685 = vadd.f32 %v2675, %v2684
    %v2686 = vsub.f32 2.0, %v2187
    %v2687 = vand.u32 2147483647, %v2686
    %v2688 = vsub.f32 1.0, %v2687
    %v2689 = vmax.f32 %v2688, 0.0
    %v2690 = vmul.f32 %v2689, %v2633
    %v2691 = vadd.f32 %v2681, %v2690
    %v2692 = vsub.f32 %v2634, %v2661
    %v2693 = vmul.f32 %v2692, 1.442695
    %v2694 = vpow.pop %v2693
    %v2695 = vadd.f32 %v2685, %v2694
    %v2696 = vsub.f32 3.0, %v2187
    %v2697 = vand.u32 2147483647, %v2696
    %v2698 = vsub.f32 1.0, %v2697
    %v2699 = vmax.f32 %v2698, 0.0
    %v2700 = vmul.f32 %v2699, %v2634
    %v2701 = vadd.f32 %v2691, %v2700
    %v2702 = vsub.f32 %v2635, %v2661
    %v2703 = vmul.f32 %v2702, 1.442695
    %v2704 = vpow.pop %v2703
    %v2705 = vadd.f32 %v2695, %v2704
    %v2706 = vsub.f32 4.0, %v2187
    %v2707 = vand.u32 2147483647, %v2706
    %v2708 = vsub.f32 1.0, %v2707
    %v2709 = vmax.f32 %v2708, 0.0
    %v2710 = vmul.f32 %v2709, %v2635
    %v2711 = vadd.f32 %v2701, %v2710
    %v2712 = vsub.f32 %v2636, %v2661
    %v2713 = vmul.f32 %v2712, 1.442695
    %v2714 = vpow.pop %v2713
    %v2715 = vadd.f32 %v2705, %v2714
    %v2716 = vsub.f32 5.0, %v2187
    %v2717 = vand.u32 2147483647, %v2716
    %v2718 = vsub.f32 1.0, %v2717
    %v2719 = vmax.f32 %v2718, 0.0
    %v2720 = vmul.f32 %v2719, %v2636
    %v2721 = vadd.f32 %v2711, %v2720
    %v2722 = vsub.f32 %v2637, %v2661
    %v2723 = vmul.f32 %v2722, 1.442695
    %v2724 = vpow.pop %v2723
    %v2725 = vadd.f32 %v2715, %v2724
    %v2726 = vsub.f32 6.0, %v2187
    %v2727 = vand.u32 2147483647, %v2726
    %v2728 = vsub.f32 1.0, %v2727
    %v2729 = vmax.f32 %v2728, 0.0
    %v2730 = vmul.f32 %v2729, %v2637
    %v2731 = vadd.f32 %v2721, %v2730
    %v2732 = vsub.f32 %v2638, %v2661
    %v2733 = vmul.f32 %v2732, 1.442695
    %v2734 = vpow.pop %v2733
    %v2735 = vadd.f32 %v2725, %v2734
    %v2736 = vsub.f32 7.0, %v2187
    %v2737 = vand.u32 2147483647, %v2736
    %v2738 = vsub.f32 1.0, %v2737
    %v2739 = vmax.f32 %v2738, 0.0
    %v2740 = vmul.f32 %v2739, %v2638
    %v2741 = vadd.f32 %v2731, %v2740
    %v2742 = vsub.f32 %v2639, %v2661
    %v2743 = vmul.f32 %v2742, 1.442695
    %v2744 = vpow.pop %v2743
    %v2745 = vadd.f32 %v2735, %v2744
    %v2746 = vsub.f32 8.0, %v2187
    %v2747 = vand.u32 2147483647, %v2746
    %v2748 = vsub.f32 1.0, %v2747
    %v2749 = vmax.f32 %v2748, 0.0
    %v2750 = vmul.f32 %v2749, %v2639
    %v2751 = vadd.f32 %v2741, %v2750
    %v2752 = vsub.f32 %v2640, %v2661
    %v2753 = vmul.f32 %v2752, 1.442695
    %v2754 = vpow.pop %v2753
    %v2755 = vadd.f32 %v2745, %v2754
    %v2756 = vsub.f32 9.0, %v2187
    %v2757 = vand.u32 2147483647, %v2756
    %v2758 = vsub.f32 1.0, %v2757
    %v2759 = vmax.f32 %v2758, 0.0
    %v2760 = vmul.f32 %v2759, %v2640
    %v2761 = vadd.f32 %v2751, %v2760
    %v2762 = vsub.f32 %v2641, %v2661
    %v2763 = vmul.f32 %v2762, 1.442695
    %v2764 = vpow.pop %v2763
    %v2765 = vadd.f32 %v2755, %v2764
    %v2766 = vsub.f32 10.0, %v2187
    %v2767 = vand.u32 2147483647, %v2766
    %v2768 = vsub.f32 1.0, %v2767
    %v2769 = vmax.f32 %v2768, 0.0
    %v2770 = vmul.f32 %v2769, %v2641
    %v2771 = vadd.f32 %v2761, %v2770
    %v2772 = vsub.f32 %v2642, %v2661
    %v2773 = vmul.f32 %v2772, 1.442695
    %v2774 = vpow.pop %v2773
    %v2775 = vadd.f32 %v2765, %v2774
    %v2776 = vsub.f32 11.0, %v2187
    %v2777 = vand.u32 2147483647, %v2776
    %v2778 = vsub.f32 1.0, %v2777
    %v2779 = vmax.f32 %v2778, 0.0
    %v2780 = vmul.f32 %v2779, %v2642
    %v2781 = vadd.f32 %v2771, %v2780
    %v2782 = vsub.f32 %v2643, %v2661
    %v2783 = vmul.f32 %v2782, 1.442695
    %v2784 = vpow.pop %v2783
    %v2785 = vadd.f32 %v2775, %v2784
    %v2786 = vsub.f32 12.0, %v2187
    %v2787 = vand.u32 2147483647, %v2786
    %v2788 = vsub.f32 1.0, %v2787
    %v2789 = vmax.f32 %v2788, 0.0
    %v2790 = vmul.f32 %v2789, %v2643
    %v2791 = vadd.f32 %v2781, %v2790
    %v2792 = vsub.f32 %v2644, %v2661
    %v2793 = vmul.f32 %v2792, 1.442695
    %v2794 = vpow.pop %v2793
    %v2795 = vadd.f32 %v2785, %v2794
    %v2796 = vsub.f32 13.0, %v2187
    %v2797 = vand.u32 2147483647, %v2796
    %v2798 = vsub.f32 1.0, %v2797
    %v2799 = vmax.f32 %v2798, 0.0
    %v2800 = vmul.f32 %v2799, %v2644
    %v2801 = vadd.f32 %v2791, %v2800
    %v2802 = vsub.f32 %v2645, %v2661
    %v2803 = vmul.f32 %v2802, 1.442695
    %v2804 = vpow.pop %v2803
    %v2805 = vadd.f32 %v2795, %v2804
    %v2806 = vsub.f32 14.0, %v2187
    %v2807 = vand.u32 2147483647, %v2806
    %v2808 = vsub.f32 1.0, %v2807
    %v2809 = vmax.f32 %v2808, 0.0
    %v2810 = vmul.f32 %v2809, %v2645
    %v2811 = vadd.f32 %v2801, %v2810
    %v2812 = vsub.f32 %v2646, %v2661
    %v2813 = vmul.f32 %v2812, 1.442695
    %v2814 = vpow.pop %v2813
    %v2815 = vadd.f32 %v2805, %v2814
    %v2816 = vsub.f32 15.0, %v2187
    %v2817 = vand.u32 2147483647, %v2816
    %v2818 = vsub.f32 1.0, %v2817
    %v2819 = vmax.f32 %v2818, 0.0
    %v2820 = vmul.f32 %v2819, %v2646
    %v2821 = vadd.f32 %v2811, %v2820
    %v2822 = vlog2.pop %v2815
    %v2823 = vmul.f32 %v2822, 0.6931472
    %v2824 = vadd.f32 %v2661, %v2823
    %v2825 = vsub.f32 %v2824, %v2821
    %v2826 = vadd.f32 %v2614, %v2825
    %v2827 = vld [vmem:[%s828 + $0x8] sm:$0xf]
    %v2828 = vld [vmem:[%s828 + $0x14] sm:$0xf]
    %v2829 = vld [vmem:[%s828 + $0x20] sm:$0xf]
    %v2830 = vld [vmem:[%s828 + $0x2c] sm:$0xf]
    %v2831 = vld [vmem:[%s828 + $0x38] sm:$0xf]
    %v2832 = vld [vmem:[%s828 + $0x44] sm:$0xf]
    %v2833 = vld [vmem:[%s828 + $0x50] sm:$0xf]
    %v2834 = vld [vmem:[%s828 + $0x5c] sm:$0xf]
    %v2835 = vld [vmem:[%s828 + $0x68] sm:$0xf]
    %v2836 = vld [vmem:[%s828 + $0x74] sm:$0xf]
    %v2837 = vld [vmem:[%s828 + $0x80] sm:$0xf]
    %v2838 = vld [vmem:[%s828 + $0x8c] sm:$0xf]
    %v2839 = vld [vmem:[%s828 + $0x98] sm:$0xf]
    %v2840 = vld [vmem:[%s828 + $0xa4] sm:$0xf]
    %v2841 = vld [vmem:[%s828 + $0xb0] sm:$0xf]
    %v2842 = vld [vmem:[%s828 + $0xbc] sm:$0xf]
    %v2843 = vunpack.c.l.bf16 %v2827
    %v2844 = vunpack.c.l.bf16 %v2828
    %v2845 = vunpack.c.l.bf16 %v2829
    %v2846 = vunpack.c.l.bf16 %v2830
    %v2847 = vunpack.c.l.bf16 %v2831
    %v2848 = vunpack.c.l.bf16 %v2832
    %v2849 = vunpack.c.l.bf16 %v2833
    %v2850 = vunpack.c.l.bf16 %v2834
    %v2851 = vunpack.c.l.bf16 %v2835
    %v2852 = vunpack.c.l.bf16 %v2836
    %v2853 = vunpack.c.l.bf16 %v2837
    %v2854 = vunpack.c.l.bf16 %v2838
    %v2855 = vunpack.c.l.bf16 %v2839
    %v2856 = vunpack.c.l.bf16 %v2840
    %v2857 = vunpack.c.l.bf16 %v2841
    %v2858 = vunpack.c.l.bf16 %v2842
    %v2859 = vmax.f32 %v2843, %v2847
    %v2860 = vmax.f32 %v2844, %v2848
    %v2861 = vmax.f32 %v2845, %v2849
    %v2862 = vmax.f32 %v2846, %v2850
    %v2863 = vmax.f32 %v2859, %v2851
    %v2864 = vmax.f32 %v2860, %v2852
    %v2865 = vmax.f32 %v2861, %v2853
    %v2866 = vmax.f32 %v2862, %v2854
    %v2867 = vmax.f32 %v2863, %v2855
    %v2868 = vmax.f32 %v2864, %v2856
    %v2869 = vmax.f32 %v2865, %v2857
    %v2870 = vmax.f32 %v2866, %v2858
    %v2871 = vmax.f32 %v2867, %v2868
    %v2872 = vmax.f32 %v2869, %v2870
    %v2873 = vmax.f32 %v2871, %v2872
    %v2874 = vsub.f32 %v2843, %v2873
    %v2875 = vmul.f32 %v2874, 1.442695
    %v2876 = vpow.pop %v2875
    %v2877 = vadd.f32 %v2876, 0.0
    %v2878 = vsub.f32 0.0, %v2190
    %v2879 = vand.u32 2147483647, %v2878
    %v2880 = vsub.f32 1.0, %v2879
    %v2881 = vmax.f32 %v2880, 0.0
    %v2882 = vmul.f32 %v2881, %v2843
    %v2883 = vadd.f32 %v2882, 0.0
    %v2884 = vsub.f32 %v2844, %v2873
    %v2885 = vmul.f32 %v2884, 1.442695
    %v2886 = vpow.pop %v2885
    %v2887 = vadd.f32 %v2877, %v2886
    %v2888 = vsub.f32 1.0, %v2190
    %v2889 = vand.u32 2147483647, %v2888
    %v2890 = vsub.f32 1.0, %v2889
    %v2891 = vmax.f32 %v2890, 0.0
    %v2892 = vmul.f32 %v2891, %v2844
    %v2893 = vadd.f32 %v2883, %v2892
    %v2894 = vsub.f32 %v2845, %v2873
    %v2895 = vmul.f32 %v2894, 1.442695
    %v2896 = vpow.pop %v2895
    %v2897 = vadd.f32 %v2887, %v2896
    %v2898 = vsub.f32 2.0, %v2190
    %v2899 = vand.u32 2147483647, %v2898
    %v2900 = vsub.f32 1.0, %v2899
    %v2901 = vmax.f32 %v2900, 0.0
    %v2902 = vmul.f32 %v2901, %v2845
    %v2903 = vadd.f32 %v2893, %v2902
    %v2904 = vsub.f32 %v2846, %v2873
    %v2905 = vmul.f32 %v2904, 1.442695
    %v2906 = vpow.pop %v2905
    %v2907 = vadd.f32 %v2897, %v2906
    %v2908 = vsub.f32 3.0, %v2190
    %v2909 = vand.u32 2147483647, %v2908
    %v2910 = vsub.f32 1.0, %v2909
    %v2911 = vmax.f32 %v2910, 0.0
    %v2912 = vmul.f32 %v2911, %v2846
    %v2913 = vadd.f32 %v2903, %v2912
    %v2914 = vsub.f32 %v2847, %v2873
    %v2915 = vmul.f32 %v2914, 1.442695
    %v2916 = vpow.pop %v2915
    %v2917 = vadd.f32 %v2907, %v2916
    %v2918 = vsub.f32 4.0, %v2190
    %v2919 = vand.u32 2147483647, %v2918
    %v2920 = vsub.f32 1.0, %v2919
    %v2921 = vmax.f32 %v2920, 0.0
    %v2922 = vmul.f32 %v2921, %v2847
    %v2923 = vadd.f32 %v2913, %v2922
    %v2924 = vsub.f32 %v2848, %v2873
    %v2925 = vmul.f32 %v2924, 1.442695
    %v2926 = vpow.pop %v2925
    %v2927 = vadd.f32 %v2917, %v2926
    %v2928 = vsub.f32 5.0, %v2190
    %v2929 = vand.u32 2147483647, %v2928
    %v2930 = vsub.f32 1.0, %v2929
    %v2931 = vmax.f32 %v2930, 0.0
    %v2932 = vmul.f32 %v2931, %v2848
    %v2933 = vadd.f32 %v2923, %v2932
    %v2934 = vsub.f32 %v2849, %v2873
    %v2935 = vmul.f32 %v2934, 1.442695
    %v2936 = vpow.pop %v2935
    %v2937 = vadd.f32 %v2927, %v2936
    %v2938 = vsub.f32 6.0, %v2190
    %v2939 = vand.u32 2147483647, %v2938
    %v2940 = vsub.f32 1.0, %v2939
    %v2941 = vmax.f32 %v2940, 0.0
    %v2942 = vmul.f32 %v2941, %v2849
    %v2943 = vadd.f32 %v2933, %v2942
    %v2944 = vsub.f32 %v2850, %v2873
    %v2945 = vmul.f32 %v2944, 1.442695
    %v2946 = vpow.pop %v2945
    %v2947 = vadd.f32 %v2937, %v2946
    %v2948 = vsub.f32 7.0, %v2190
    %v2949 = vand.u32 2147483647, %v2948
    %v2950 = vsub.f32 1.0, %v2949
    %v2951 = vmax.f32 %v2950, 0.0
    %v2952 = vmul.f32 %v2951, %v2850
    %v2953 = vadd.f32 %v2943, %v2952
    %v2954 = vsub.f32 %v2851, %v2873
    %v2955 = vmul.f32 %v2954, 1.442695
    %v2956 = vpow.pop %v2955
    %v2957 = vadd.f32 %v2947, %v2956
    %v2958 = vsub.f32 8.0, %v2190
    %v2959 = vand.u32 2147483647, %v2958
    %v2960 = vsub.f32 1.0, %v2959
    %v2961 = vmax.f32 %v2960, 0.0
    %v2962 = vmul.f32 %v2961, %v2851
    %v2963 = vadd.f32 %v2953, %v2962
    %v2964 = vsub.f32 %v2852, %v2873
    %v2965 = vmul.f32 %v2964, 1.442695
    %v2966 = vpow.pop %v2965
    %v2967 = vadd.f32 %v2957, %v2966
    %v2968 = vsub.f32 9.0, %v2190
    %v2969 = vand.u32 2147483647, %v2968
    %v2970 = vsub.f32 1.0, %v2969
    %v2971 = vmax.f32 %v2970, 0.0
    %v2972 = vmul.f32 %v2971, %v2852
    %v2973 = vadd.f32 %v2963, %v2972
    %v2974 = vsub.f32 %v2853, %v2873
    %v2975 = vmul.f32 %v2974, 1.442695
    %v2976 = vpow.pop %v2975
    %v2977 = vadd.f32 %v2967, %v2976
    %v2978 = vsub.f32 10.0, %v2190
    %v2979 = vand.u32 2147483647, %v2978
    %v2980 = vsub.f32 1.0, %v2979
    %v2981 = vmax.f32 %v2980, 0.0
    %v2982 = vmul.f32 %v2981, %v2853
    %v2983 = vadd.f32 %v2973, %v2982
    %v2984 = vsub.f32 %v2854, %v2873
    %v2985 = vmul.f32 %v2984, 1.442695
    %v2986 = vpow.pop %v2985
    %v2987 = vadd.f32 %v2977, %v2986
    %v2988 = vsub.f32 11.0, %v2190
    %v2989 = vand.u32 2147483647, %v2988
    %v2990 = vsub.f32 1.0, %v2989
    %v2991 = vmax.f32 %v2990, 0.0
    %v2992 = vmul.f32 %v2991, %v2854
    %v2993 = vadd.f32 %v2983, %v2992
    %v2994 = vsub.f32 %v2855, %v2873
    %v2995 = vmul.f32 %v2994, 1.442695
    %v2996 = vpow.pop %v2995
    %v2997 = vadd.f32 %v2987, %v2996
    %v2998 = vsub.f32 12.0, %v2190
    %v2999 = vand.u32 2147483647, %v2998
    %v3000 = vsub.f32 1.0, %v2999
    %v3001 = vmax.f32 %v3000, 0.0
    %v3002 = vmul.f32 %v3001, %v2855
    %v3003 = vadd.f32 %v2993, %v3002
    %v3004 = vsub.f32 %v2856, %v2873
    %v3005 = vmul.f32 %v3004, 1.442695
    %v3006 = vpow.pop %v3005
    %v3007 = vadd.f32 %v2997, %v3006
    %v3008 = vsub.f32 13.0, %v2190
    %v3009 = vand.u32 2147483647, %v3008
    %v3010 = vsub.f32 1.0, %v3009
    %v3011 = vmax.f32 %v3010, 0.0
    %v3012 = vmul.f32 %v3011, %v2856
    %v3013 = vadd.f32 %v3003, %v3012
    %v3014 = vsub.f32 %v2857, %v2873
    %v3015 = vmul.f32 %v3014, 1.442695
    %v3016 = vpow.pop %v3015
    %v3017 = vadd.f32 %v3007, %v3016
    %v3018 = vsub.f32 14.0, %v2190
    %v3019 = vand.u32 2147483647, %v3018
    %v3020 = vsub.f32 1.0, %v3019
    %v3021 = vmax.f32 %v3020, 0.0
    %v3022 = vmul.f32 %v3021, %v2857
    %v3023 = vadd.f32 %v3013, %v3022
    %v3024 = vsub.f32 %v2858, %v2873
    %v3025 = vmul.f32 %v3024, 1.442695
    %v3026 = vpow.pop %v3025
    %v3027 = vadd.f32 %v3017, %v3026
    %v3028 = vsub.f32 15.0, %v2190
    %v3029 = vand.u32 2147483647, %v3028
    %v3030 = vsub.f32 1.0, %v3029
    %v3031 = vmax.f32 %v3030, 0.0
    %v3032 = vmul.f32 %v3031, %v2858
    %v3033 = vadd.f32 %v3023, %v3032
    %v3034 = vlog2.pop %v3027
    %v3035 = vmul.f32 %v3034, 0.6931472
    %v3036 = vadd.f32 %v2873, %v3035
    %v3037 = vsub.f32 %v3036, %v3033
    %v3038 = vadd.f32 %v2826, %v3037
    %v3039 = vmul.f32 %v2054, 0.25
    %v3040 = vmul.f32 %v3038, %v3039
    %v3041 = vsel %vm2174, %v3040, 0.0
    %v3042 = vadd.f32 %v2043, %v3041
    %3043 = vst [vmem:[#allocation7] sm:$0xff] %v2178
    %3044 = vst [vmem:[#allocation8] sm:$0xff] %v3042
    // Predicated region
    $region18: #{tpu_custom_call.1} parent=1 // pred_check
      _
    $region19: #{tpu_custom_call.1} parent=1 // pred_check_branch
      %3046 = sbr.rel (0) target = $region21
    $region20: #{tpu_custom_call.1} parent=1 // pred_region
      %s3048 = ssub.s32 128, 128
      %3049 = vsyncadd [#allocation4], %s3048
      %s3051 = sshll.u32 [#allocation7], 4
      %s3052 = int_to_ptr.vmem [resolvable:$true] %s3051
      %3054 = dma.vmem_to_hbm [thread:$0]  %s3052, 128, %s2, [#allocation4]
    $region21: #{tpu_custom_call.1} parent=1 // pred_fallthru
      _
    // Predicated region
    $region22: #{tpu_custom_call.1} parent=1 // pred_check
      _
    $region23: #{tpu_custom_call.1} parent=1 // pred_check_branch
      %3056 = sbr.rel (0) target = $region25
    $region24: #{tpu_custom_call.1} parent=1 // pred_region
      %s3058 = ssub.s32 128, 128
      %3059 = vsyncadd [#allocation9], %s3058
      %s3061 = sshll.u32 [#allocation8], 4
      %s3062 = int_to_ptr.vmem [resolvable:$true] %s3061
      %3064 = dma.vmem_to_hbm [thread:$0]  %s3062, 128, %s3, [#allocation9]
    $region25: #{tpu_custom_call.1} parent=1 // pred_fallthru
      _
    // Predicated region
    $region26: #{tpu_custom_call.1} parent=1 // pred_check
      _
    $region27: #{tpu_custom_call.1} parent=1 // pred_check_branch
      %3066 = sbr.rel (0) target = $region29
    $region28: #{tpu_custom_call.1} parent=1 // pred_region
      %3067 = dma.done [#allocation4], 128
    $region29: #{tpu_custom_call.1} parent=1 // pred_fallthru
      _
    // Predicated region
    $region30: #{tpu_custom_call.1} parent=1 // pred_check
      _
    $region31: #{tpu_custom_call.1} parent=1 // pred_check_branch
      %3069 = sbr.rel (0) target = $region33
    $region32: #{tpu_custom_call.1} parent=1 // pred_region
      %3070 = dma.done [#allocation9], 128
    $region33: #{tpu_custom_call.1} parent=1 // pred_fallthru
      _
    %3071 = vsyncpa [#allocation3], 1
    %3072 = vsyncpa [#allocation6], 1
    %3073 = vsyncpa [#allocation4], 1
    %3074 = vsyncpa [#allocation9], 1

</llo_original>
